<compile_context>
chip_gen: v5e
topology: v5e:2x2
jax: 0.10.0
libtpu: 0.0.40
codegen_flags: <defaults>
</compile_context>

<pallas_src>
import math
import numpy as np
import jax
import jax.numpy as jnp
from jax.experimental import pallas as pl
from jax.experimental.pallas import tpu as pltpu

# ----------------------- synthetic config (stands in for cfg) -----------------------
ORIG_FREQ = 16000          # cfg.dataset.block_size_speaker
NEW_FREQ = 8000            # self.embedder.get_target_sample_rate()
LOWPASS_WIDTH = 64
ROLLOFF = 0.9475937167399596
BETA = 14.769656459379492

WAV_LEN = 1024             # toy waveform length used in __main__
N_FFT = 64                 # TODO(synk): exact AudioHelper mel params are not in the source; small synthetic STFT/mel config used.
HOP = 32
N_MELS = 16
N_BINS = N_FFT // 2 + 1    # 33
N_BINS_PAD = 64            # cos / sin halves each padded to 64 lanes -> stacked (64, 128) DFT matrix
LSTM_HIDDEN = 32           # TODO(synk): real SpeechEmbedder is a pretrained 3-layer LSTM(768)+proj(256); synthetic 1-layer LSTM used.
EMB_DIM = 32

L_RS = (NEW_FREQ * WAV_LEN + ORIG_FREQ - 1) // ORIG_FREQ   # 512 resampled samples (ceil(new*L/orig))
NF = (L_RS - N_FFT) // HOP + 1                             # 15 mel frames / LSTM steps


# =============================== fused Pallas kernel =================================

def _emb_loss_fused_kernel(wav_ref, rsT_ref, dft_ref, fb_ref,
                           wih_ref, b_ref,
                           whh_i_ref, whh_f_ref, whh_g_ref, whh_o_ref,
                           wproj_ref, bproj_ref, tgt_ref, out_ref):
    B = wav_ref.shape[0]
    H = whh_i_ref.shape[0]

    # --- Stage 1: sinc/Kaiser resample as ONE banded-Toeplitz matmul -> lane-dense (B, L_RS).
    rs = jnp.dot(wav_ref[...], rsT_ref[...], preferred_element_type=jnp.float32)   # (B, 512)

    # --- Stage 2 + 3a: per-frame windowed DFT -> power -> mel -> log -> LSTM input
    # projection. None of this depends on the recurrent state, so it is all hoisted
    # off the serial recurrence (and the per-gate lane splits happen here, not in-loop).
    dft = dft_ref[...]            # (N_FFT, 2*N_BINS_PAD) = [win*cos | win*sin], lane-padded
    fb = fb_ref[...]              # (N_BINS_PAD, N_MELS)
    wih = wih_ref[...]            # (N_MELS, 4H)
    bias = b_ref[...]             # (1, 4H)

    gates_x = []
    for t in range(NF):                                   # static trip count -> fully unrolled
        fr = rs[:, t * HOP: t * HOP + N_FFT]              # (B, N_FFT) static lane slice (no gather)
        y = jnp.dot(fr, dft, preferred_element_type=jnp.float32)       # (B, 128) single MXU pass
        p2 = y * y
        power = p2[:, :N_BINS_PAD] + p2[:, N_BINS_PAD:]                # |STFT|^2, (B, 64)
        mel = jnp.dot(power, fb, preferred_element_type=jnp.float32)   # (B, N_MELS)
        lm = jnp.log(mel + 1e-6)                                       # log-mel
        gx = jnp.dot(lm, wih, preferred_element_type=jnp.float32) + bias   # (B, 4H) hoisted proj
        # pre-split per gate so the recurrence never lane-slices at 32-lane offsets
        gates_x.append((gx[:, 0:H], gx[:, H:2 * H], gx[:, 2 * H:3 * H], gx[:, 3 * H:4 * H]))

    # --- Stage 3b: LSTM recurrence, fully unrolled; only lane-aligned per-gate matmuls inside.
    whh_i = whh_i_ref[...]; whh_f = whh_f_ref[...]
    whh_g = whh_g_ref[...]; whh_o = whh_o_ref[...]
    h = jnp.zeros((B, H), jnp.float32)
    c = jnp.zeros((B, H), jnp.float32)
    for t in range(NF):
        gxi, gxf, gxg, gxo = gates_x[t]
        ig = jax.nn.sigmoid(gxi + jnp.dot(h, whh_i, preferred_element_type=jnp.float32))
        fg = jax.nn.sigmoid(gxf + jnp.dot(h, whh_f, preferred_element_type=jnp.float32))
        gg = jnp.tanh(gxg + jnp.dot(h, whh_g, preferred_element_type=jnp.float32))
        og = jax.nn.sigmoid(gxo + jnp.dot(h, whh_o, preferred_element_type=jnp.float32))
        c = fg * c + ig * gg
        h = og * jnp.tanh(c)

    # --- Stage 4: projection, L2 normalize (rsqrt -> EUP), MSE vs target d-vector.
    dvec = jnp.dot(h, wproj_ref[...], preferred_element_type=jnp.float32) + bproj_ref[...]
    inv_norm = jax.lax.rsqrt(jnp.sum(dvec * dvec, axis=-1, keepdims=True) + 1e-12)
    dvec = dvec * inv_norm                                 # ~F.normalize(dvec, dim=-1)
    diff = dvec - tgt_ref[...]
    # (1,1) VMEM output -> a single masked-lane store; 4 bytes once per call, negligible.
    out_ref[...] = jnp.sum(diff * diff, keepdims=True) * (1.0 / float(B * EMB_DIM))


# =============================== host-side constants =================================

def sinc_resample_kernel_np(orig_freq, new_freq, lowpass_filter_width, rolloff, beta):
    """Exact torchaudio sinc_interp_kaiser kernel, built in numpy. Returns (kern (new, W), width, orig, new)."""
    g = math.gcd(orig_freq, new_freq)
    orig = orig_freq // g
    new = new_freq // g
    base_freq = min(orig, new) * rolloff
    width = math.ceil(lowpass_filter_width * orig / base_freq)
    idx = np.arange(-width, width + orig, dtype=np.float64)[None, :] / orig
    t = np.arange(0, -new, -1, dtype=np.float64)[:, None] / new + idx
    t = t * base_freq
    t = np.clip(t, -lowpass_filter_width, lowpass_filter_width)
    window = np.i0(beta * np.sqrt(1.0 - (t / lowpass_filter_width) ** 2)) / np.i0(beta)
    t = t * math.pi
    scale = base_freq / orig
    safe_t = np.where(t == 0.0, 1.0, t)
    kern = np.where(t == 0.0, 1.0, np.sin(safe_t) / safe_t)
    kern = kern * window * scale                           # (new, 2*width + orig)
    return kern, width, orig, new


def build_resample_toeplitz(L, kern, width, orig, new):
    """Banded (L, target_len) matrix so wav (B, L) @ T == torchaudio-resampled (B, target_len).

    The (width, width+orig) zero padding of the waveform is folded into the band structure, so
    no host-side padding or framing gather is needed and the kernel's output is lane-dense.
    TODO(synk): at production waveform lengths this dense O(L^2) matrix should become a grid
    over output tiles with a compact block-Toeplitz weight (N=128/256 per MXU pass).
    """
    U, W = kern.shape
    target_len = int(math.ceil(new * L / orig))
    Lp = L + 2 * width + orig
    F = (Lp - W) // orig + 1
    assert F * U >= target_len, "resample kernel does not cover the requested output length"
    T = np.zeros((L, target_len), dtype=np.float64)
    j = np.arange(L)
    for m in range(target_len):
        f, u = divmod(m, new)
        w = j + width - f * orig                           # tap index into kern row u
        valid = (w >= 0) & (w < W)
        T[valid, m] = kern[u, w[valid]]
    return T


def build_windowed_dft(n_fft, n_bins_pad):
    """(n_fft, 2*n_bins_pad) matrix = [win*cos | win*sin], each half lane-padded with zeros."""
    n_bins = n_fft // 2 + 1
    n = np.arange(n_fft)
    win = 0.5 - 0.5 * np.cos(2.0 * np.pi * n / n_fft)      # periodic hann
    ang = 2.0 * np.pi * np.outer(n, np.arange(n_bins)) / n_fft
    D = np.zeros((n_fft, 2 * n_bins_pad), dtype=np.float64)
    D[:, :n_bins] = win[:, None] * np.cos(ang)
    D[:, n_bins_pad:n_bins_pad + n_bins] = win[:, None] * np.sin(ang)
    return D


def _mel_filterbank(sr, n_fft, n_mels):
    n_bins = n_fft // 2 + 1
    hz_to_mel = lambda f: 2595.0 * np.log10(1.0 + f / 700.0)
    mel_to_hz = lambda m: 700.0 * (10.0 ** (m / 2595.0) - 1.0)
    mels = np.linspace(hz_to_mel(0.0), hz_to_mel(sr / 2.0), n_mels + 2)
    bins = np.floor((n_fft + 1) * mel_to_hz(mels) / sr).astype(int)
    fb = np.zeros((n_mels, n_bins), dtype=np.float64)
    for m in range(1, n_mels + 1):
        l, c, r = bins[m - 1], bins[m], bins[m + 1]
        for k in range(l, c):
            fb[m - 1, k] = (k - l) / max(c - l, 1)
        for k in range(c, r):
            fb[m - 1, k] = (r - k) / max(r - c, 1)
    return fb


def build_mel_fb(sr, n_fft, n_mels, n_bins_pad):
    fb = _mel_filterbank(sr, n_fft, n_mels)                # (n_mels, n_bins)
    out = np.zeros((n_bins_pad, n_mels), dtype=np.float64)
    out[: fb.shape[1], :] = fb.T                           # zero rows for the padded bins
    return out


def build_constants(L):
    kern, width, orig, new = sinc_resample_kernel_np(
        ORIG_FREQ, NEW_FREQ, LOWPASS_WIDTH, ROLLOFF, BETA)
    T = build_resample_toeplitz(L, kern, width, orig, new)             # (L, L_RS)
    D = build_windowed_dft(N_FFT, N_BINS_PAD)                          # (N_FFT, 128)
    FB = build_mel_fb(NEW_FREQ, N_FFT, N_MELS, N_BINS_PAD)             # (64, N_MELS)
    return {
        "rs_toeplitz": jnp.asarray(T, jnp.float32),
        "dft": jnp.asarray(D, jnp.float32),
        "mel_fb": jnp.asarray(FB, jnp.float32),
    }


def make_params(key):
    """Deterministic synthetic SpeechEmbedder weights (per-gate split for the kernel)."""
    k1, k2, k3, k4 = jax.random.split(key, 4)
    H, M, E = LSTM_HIDDEN, N_MELS, EMB_DIM
    w_ih = jax.random.normal(k1, (M, 4 * H), jnp.float32) / np.sqrt(M)
    w_hh = jax.random.normal(k2, (H, 4 * H), jnp.float32) / np.sqrt(H)
    b = jnp.zeros((1, 4 * H), jnp.float32)
    w_proj = jax.random.normal(k3, (H, E), jnp.float32) / np.sqrt(H)
    b_proj = 0.01 * jax.random.normal(k4, (1, E), jnp.float32)
    return {
        "w_ih": w_ih, "b": b,                              # gate order [i | f | g | o]
        "w_hh_i": w_hh[:, 0:H], "w_hh_f": w_hh[:, H:2 * H],
        "w_hh_g": w_hh[:, 2 * H:3 * H], "w_hh_o": w_hh[:, 3 * H:4 * H],
        "w_proj": w_proj, "b_proj": b_proj,
    }


# ================================ wrapper / forward ==================================

def emb_loss_forward(pred, target_dvec, params, consts):
    """pred: (B, 1, L) float32, target_dvec: (B, EMB_DIM) -> scalar MSE loss."""
    wav = pred[:, 0, :]                                    # squeeze(dim=1)
    # TODO(synk): for production batch sizes add a grid=(B,) 'parallel' axis so v7x's two
    # TensorCores split the batch; at B=2 the pipeline is launch-latency bound and a single
    # fused invocation (one launch, zero HBM round-trips of intermediates) is fastest.
    out = pl.pallas_call(
        _emb_loss_fused_kernel,
        in_specs=[pl.BlockSpec(memory_space=pltpu.MemorySpace.VMEM)] * 13,
        out_specs=pl.BlockSpec(memory_space=pltpu.MemorySpace.VMEM),
        out_shape=jax.ShapeDtypeStruct((1, 1), jnp.float32),
    )(wav, consts["rs_toeplitz"], consts["dft"], consts["mel_fb"],
      params["w_ih"], params["b"],
      params["w_hh_i"], params["w_hh_f"], params["w_hh_g"], params["w_hh_o"],
      params["w_proj"], params["b_proj"], target_dvec)
    return out[0, 0]


# ======================================= main ========================================

if __name__ == "__main__":
    B, L = 2, WAV_LEN
    key = jax.random.PRNGKey(0)
    k_pred, k_tgt, k_par = jax.random.split(key, 3)

    pred = 0.1 * jax.random.normal(k_pred, (B, 1, L), jnp.float32)
    tgt = jax.random.normal(k_tgt, (B, EMB_DIM), jnp.float32)
    target_dvec = tgt / (jnp.linalg.norm(tgt, axis=-1, keepdims=True) + 1e-6)

    params = make_params(k_par)
    consts = build_constants(L)

    loss = emb_loss_forward(pred, target_dvec, params, consts)
    loss = jax.block_until_ready(loss)
    assert np.isfinite(float(loss))
    print("KERNEL_OK")
</pallas_src>

<mosaic_0001>
module attributes {stable_mosaic.version = 11 : i64} {
  func.func @_emb_loss_fused_kernel(%arg0: memref<2x1024xf32, #tpu.memory_space<vmem>>, %arg1: memref<1024x512xf32, #tpu.memory_space<vmem>>, %arg2: memref<64x128xf32, #tpu.memory_space<vmem>>, %arg3: memref<64x16xf32, #tpu.memory_space<vmem>>, %arg4: memref<16x128xf32, #tpu.memory_space<vmem>>, %arg5: memref<1x128xf32, #tpu.memory_space<vmem>>, %arg6: memref<32x32xf32, #tpu.memory_space<vmem>>, %arg7: memref<32x32xf32, #tpu.memory_space<vmem>>, %arg8: memref<32x32xf32, #tpu.memory_space<vmem>>, %arg9: memref<32x32xf32, #tpu.memory_space<vmem>>, %arg10: memref<32x32xf32, #tpu.memory_space<vmem>>, %arg11: memref<1x32xf32, #tpu.memory_space<vmem>>, %arg12: memref<2x32xf32, #tpu.memory_space<vmem>>, %arg13: memref<1x1xf32, #tpu.memory_space<vmem>>) attributes {dimension_semantics = [], scalar_prefetch = 0 : i64, scratch_operands = 0 : i64, tpu.core_type = #tpu.core_type<tc>} {
    %c0 = arith.constant 0 : index
    %c0_0 = arith.constant 0 : index
    %0 = vector.load %arg0[%c0, %c0_0] : memref<2x1024xf32, #tpu.memory_space<vmem>>, vector<2x1024xf32>
    %c0_1 = arith.constant 0 : index
    %c0_2 = arith.constant 0 : index
    %1 = vector.load %arg1[%c0_1, %c0_2] : memref<1024x512xf32, #tpu.memory_space<vmem>>, vector<1024x512xf32>
    %cst = arith.constant dense<0.000000e+00> : vector<2x512xf32>
    %2 = tpu.matmul %0, %1, %cst {dimension_numbers = #tpu.dot_dimension_numbers<[1], [0], [0], [1], [0, 0, 1, 1], [], []>} : vector<2x1024xf32>, vector<1024x512xf32>, vector<2x512xf32> -> vector<2x512xf32>
    %c0_3 = arith.constant 0 : index
    %c0_4 = arith.constant 0 : index
    %3 = vector.load %arg2[%c0_3, %c0_4] : memref<64x128xf32, #tpu.memory_space<vmem>>, vector<64x128xf32>
    %c0_5 = arith.constant 0 : index
    %c0_6 = arith.constant 0 : index
    %4 = vector.load %arg3[%c0_5, %c0_6] : memref<64x16xf32, #tpu.memory_space<vmem>>, vector<64x16xf32>
    %c0_7 = arith.constant 0 : index
    %c0_8 = arith.constant 0 : index
    %5 = vector.load %arg4[%c0_7, %c0_8] : memref<16x128xf32, #tpu.memory_space<vmem>>, vector<16x128xf32>
    %c0_9 = arith.constant 0 : index
    %c0_10 = arith.constant 0 : index
    %6 = vector.load %arg5[%c0_9, %c0_10] : memref<1x128xf32, #tpu.memory_space<vmem>>, vector<1x128xf32>
    %7 = vector.extract_strided_slice %2 {offsets = [0, 0], sizes = [2, 64], strides = [1, 1]} : vector<2x512xf32> to vector<2x64xf32>
    %cst_11 = arith.constant dense<0.000000e+00> : vector<2x128xf32>
    %8 = tpu.matmul %7, %3, %cst_11 {dimension_numbers = #tpu.dot_dimension_numbers<[1], [0], [0], [1], [0, 0, 1, 1], [], []>} : vector<2x64xf32>, vector<64x128xf32>, vector<2x128xf32> -> vector<2x128xf32>
    %9 = arith.mulf %8, %8 : vector<2x128xf32>
    %10 = vector.extract_strided_slice %9 {offsets = [0, 0], sizes = [2, 64], strides = [1, 1]} : vector<2x128xf32> to vector<2x64xf32>
    %11 = vector.extract_strided_slice %9 {offsets = [0, 64], sizes = [2, 64], strides = [1, 1]} : vector<2x128xf32> to vector<2x64xf32>
    %12 = arith.addf %10, %11 : vector<2x64xf32>
    %cst_12 = arith.constant dense<0.000000e+00> : vector<2x16xf32>
    %13 = tpu.matmul %12, %4, %cst_12 {dimension_numbers = #tpu.dot_dimension_numbers<[1], [0], [0], [1], [0, 0, 1, 1], [], []>} : vector<2x64xf32>, vector<64x16xf32>, vector<2x16xf32> -> vector<2x16xf32>
    %cst_13 = arith.constant 9.99999997E-7 : f32
    %14 = vector.broadcast %cst_13 : f32 to vector<2x16xf32>
    %15 = arith.addf %13, %14 : vector<2x16xf32>
    %16 = math.log %15 : vector<2x16xf32>
    %cst_14 = arith.constant dense<0.000000e+00> : vector<2x128xf32>
    %17 = tpu.matmul %16, %5, %cst_14 {dimension_numbers = #tpu.dot_dimension_numbers<[1], [0], [0], [1], [0, 0, 1, 1], [], []>} : vector<2x16xf32>, vector<16x128xf32>, vector<2x128xf32> -> vector<2x128xf32>
    %18 = vector.broadcast %6 : vector<1x128xf32> to vector<2x128xf32>
    %19 = arith.addf %17, %18 : vector<2x128xf32>
    %20 = vector.extract_strided_slice %19 {offsets = [0, 0], sizes = [2, 32], strides = [1, 1]} : vector<2x128xf32> to vector<2x32xf32>
    %21 = vector.extract_strided_slice %19 {offsets = [0, 32], sizes = [2, 32], strides = [1, 1]} : vector<2x128xf32> to vector<2x32xf32>
    %22 = vector.extract_strided_slice %19 {offsets = [0, 64], sizes = [2, 32], strides = [1, 1]} : vector<2x128xf32> to vector<2x32xf32>
    %23 = vector.extract_strided_slice %19 {offsets = [0, 96], sizes = [2, 32], strides = [1, 1]} : vector<2x128xf32> to vector<2x32xf32>
    %24 = vector.extract_strided_slice %2 {offsets = [0, 32], sizes = [2, 64], strides = [1, 1]} : vector<2x512xf32> to vector<2x64xf32>
    %cst_15 = arith.constant dense<0.000000e+00> : vector<2x128xf32>
    %25 = tpu.matmul %24, %3, %cst_15 {dimension_numbers = #tpu.dot_dimension_numbers<[1], [0], [0], [1], [0, 0, 1, 1], [], []>} : vector<2x64xf32>, vector<64x128xf32>, vector<2x128xf32> -> vector<2x128xf32>
    %26 = arith.mulf %25, %25 : vector<2x128xf32>
    %27 = vector.extract_strided_slice %26 {offsets = [0, 0], sizes = [2, 64], strides = [1, 1]} : vector<2x128xf32> to vector<2x64xf32>
    %28 = vector.extract_strided_slice %26 {offsets = [0, 64], sizes = [2, 64], strides = [1, 1]} : vector<2x128xf32> to vector<2x64xf32>
    %29 = arith.addf %27, %28 : vector<2x64xf32>
    %cst_16 = arith.constant dense<0.000000e+00> : vector<2x16xf32>
    %30 = tpu.matmul %29, %4, %cst_16 {dimension_numbers = #tpu.dot_dimension_numbers<[1], [0], [0], [1], [0, 0, 1, 1], [], []>} : vector<2x64xf32>, vector<64x16xf32>, vector<2x16xf32> -> vector<2x16xf32>
    %cst_17 = arith.constant 9.99999997E-7 : f32
    %31 = vector.broadcast %cst_17 : f32 to vector<2x16xf32>
    %32 = arith.addf %30, %31 : vector<2x16xf32>
    %33 = math.log %32 : vector<2x16xf32>
    %cst_18 = arith.constant dense<0.000000e+00> : vector<2x128xf32>
    %34 = tpu.matmul %33, %5, %cst_18 {dimension_numbers = #tpu.dot_dimension_numbers<[1], [0], [0], [1], [0, 0, 1, 1], [], []>} : vector<2x16xf32>, vector<16x128xf32>, vector<2x128xf32> -> vector<2x128xf32>
    %35 = vector.broadcast %6 : vector<1x128xf32> to vector<2x128xf32>
    %36 = arith.addf %34, %35 : vector<2x128xf32>
    %37 = vector.extract_strided_slice %36 {offsets = [0, 0], sizes = [2, 32], strides = [1, 1]} : vector<2x128xf32> to vector<2x32xf32>
    %38 = vector.extract_strided_slice %36 {offsets = [0, 32], sizes = [2, 32], strides = [1, 1]} : vector<2x128xf32> to vector<2x32xf32>
    %39 = vector.extract_strided_slice %36 {offsets = [0, 64], sizes = [2, 32], strides = [1, 1]} : vector<2x128xf32> to vector<2x32xf32>
    %40 = vector.extract_strided_slice %36 {offsets = [0, 96], sizes = [2, 32], strides = [1, 1]} : vector<2x128xf32> to vector<2x32xf32>
    %41 = vector.extract_strided_slice %2 {offsets = [0, 64], sizes = [2, 64], strides = [1, 1]} : vector<2x512xf32> to vector<2x64xf32>
    %cst_19 = arith.constant dense<0.000000e+00> : vector<2x128xf32>
    %42 = tpu.matmul %41, %3, %cst_19 {dimension_numbers = #tpu.dot_dimension_numbers<[1], [0], [0], [1], [0, 0, 1, 1], [], []>} : vector<2x64xf32>, vector<64x128xf32>, vector<2x128xf32> -> vector<2x128xf32>
    %43 = arith.mulf %42, %42 : vector<2x128xf32>
    %44 = vector.extract_strided_slice %43 {offsets = [0, 0], sizes = [2, 64], strides = [1, 1]} : vector<2x128xf32> to vector<2x64xf32>
    %45 = vector.extract_strided_slice %43 {offsets = [0, 64], sizes = [2, 64], strides = [1, 1]} : vector<2x128xf32> to vector<2x64xf32>
    %46 = arith.addf %44, %45 : vector<2x64xf32>
    %cst_20 = arith.constant dense<0.000000e+00> : vector<2x16xf32>
    %47 = tpu.matmul %46, %4, %cst_20 {dimension_numbers = #tpu.dot_dimension_numbers<[1], [0], [0], [1], [0, 0, 1, 1], [], []>} : vector<2x64xf32>, vector<64x16xf32>, vector<2x16xf32> -> vector<2x16xf32>
    %cst_21 = arith.constant 9.99999997E-7 : f32
    %48 = vector.broadcast %cst_21 : f32 to vector<2x16xf32>
    %49 = arith.addf %47, %48 : vector<2x16xf32>
    %50 = math.log %49 : vector<2x16xf32>
    %cst_22 = arith.constant dense<0.000000e+00> : vector<2x128xf32>
    %51 = tpu.matmul %50, %5, %cst_22 {dimension_numbers = #tpu.dot_dimension_numbers<[1], [0], [0], [1], [0, 0, 1, 1], [], []>} : vector<2x16xf32>, vector<16x128xf32>, vector<2x128xf32> -> vector<2x128xf32>
    %52 = vector.broadcast %6 : vector<1x128xf32> to vector<2x128xf32>
    %53 = arith.addf %51, %52 : vector<2x128xf32>
    %54 = vector.extract_strided_slice %53 {offsets = [0, 0], sizes = [2, 32], strides = [1, 1]} : vector<2x128xf32> to vector<2x32xf32>
    %55 = vector.extract_strided_slice %53 {offsets = [0, 32], sizes = [2, 32], strides = [1, 1]} : vector<2x128xf32> to vector<2x32xf32>
    %56 = vector.extract_strided_slice %53 {offsets = [0, 64], sizes = [2, 32], strides = [1, 1]} : vector<2x128xf32> to vector<2x32xf32>
    %57 = vector.extract_strided_slice %53 {offsets = [0, 96], sizes = [2, 32], strides = [1, 1]} : vector<2x128xf32> to vector<2x32xf32>
    %58 = vector.extract_strided_slice %2 {offsets = [0, 96], sizes = [2, 64], strides = [1, 1]} : vector<2x512xf32> to vector<2x64xf32>
    %cst_23 = arith.constant dense<0.000000e+00> : vector<2x128xf32>
    %59 = tpu.matmul %58, %3, %cst_23 {dimension_numbers = #tpu.dot_dimension_numbers<[1], [0], [0], [1], [0, 0, 1, 1], [], []>} : vector<2x64xf32>, vector<64x128xf32>, vector<2x128xf32> -> vector<2x128xf32>
    %60 = arith.mulf %59, %59 : vector<2x128xf32>
    %61 = vector.extract_strided_slice %60 {offsets = [0, 0], sizes = [2, 64], strides = [1, 1]} : vector<2x128xf32> to vector<2x64xf32>
    %62 = vector.extract_strided_slice %60 {offsets = [0, 64], sizes = [2, 64], strides = [1, 1]} : vector<2x128xf32> to vector<2x64xf32>
    %63 = arith.addf %61, %62 : vector<2x64xf32>
    %cst_24 = arith.constant dense<0.000000e+00> : vector<2x16xf32>
    %64 = tpu.matmul %63, %4, %cst_24 {dimension_numbers = #tpu.dot_dimension_numbers<[1], [0], [0], [1], [0, 0, 1, 1], [], []>} : vector<2x64xf32>, vector<64x16xf32>, vector<2x16xf32> -> vector<2x16xf32>
    %cst_25 = arith.constant 9.99999997E-7 : f32
    %65 = vector.broadcast %cst_25 : f32 to vector<2x16xf32>
    %66 = arith.addf %64, %65 : vector<2x16xf32>
    %67 = math.log %66 : vector<2x16xf32>
    %cst_26 = arith.constant dense<0.000000e+00> : vector<2x128xf32>
    %68 = tpu.matmul %67, %5, %cst_26 {dimension_numbers = #tpu.dot_dimension_numbers<[1], [0], [0], [1], [0, 0, 1, 1], [], []>} : vector<2x16xf32>, vector<16x128xf32>, vector<2x128xf32> -> vector<2x128xf32>
    %69 = vector.broadcast %6 : vector<1x128xf32> to vector<2x128xf32>
    %70 = arith.addf %68, %69 : vector<2x128xf32>
    %71 = vector.extract_strided_slice %70 {offsets = [0, 0], sizes = [2, 32], strides = [1, 1]} : vector<2x128xf32> to vector<2x32xf32>
    %72 = vector.extract_strided_slice %70 {offsets = [0, 32], sizes = [2, 32], strides = [1, 1]} : vector<2x128xf32> to vector<2x32xf32>
    %73 = vector.extract_strided_slice %70 {offsets = [0, 64], sizes = [2, 32], strides = [1, 1]} : vector<2x128xf32> to vector<2x32xf32>
    %74 = vector.extract_strided_slice %70 {offsets = [0, 96], sizes = [2, 32], strides = [1, 1]} : vector<2x128xf32> to vector<2x32xf32>
    %75 = vector.extract_strided_slice %2 {offsets = [0, 128], sizes = [2, 64], strides = [1, 1]} : vector<2x512xf32> to vector<2x64xf32>
    %cst_27 = arith.constant dense<0.000000e+00> : vector<2x128xf32>
    %76 = tpu.matmul %75, %3, %cst_27 {dimension_numbers = #tpu.dot_dimension_numbers<[1], [0], [0], [1], [0, 0, 1, 1], [], []>} : vector<2x64xf32>, vector<64x128xf32>, vector<2x128xf32> -> vector<2x128xf32>
    %77 = arith.mulf %76, %76 : vector<2x128xf32>
    %78 = vector.extract_strided_slice %77 {offsets = [0, 0], sizes = [2, 64], strides = [1, 1]} : vector<2x128xf32> to vector<2x64xf32>
    %79 = vector.extract_strided_slice %77 {offsets = [0, 64], sizes = [2, 64], strides = [1, 1]} : vector<2x128xf32> to vector<2x64xf32>
    %80 = arith.addf %78, %79 : vector<2x64xf32>
    %cst_28 = arith.constant dense<0.000000e+00> : vector<2x16xf32>
    %81 = tpu.matmul %80, %4, %cst_28 {dimension_numbers = #tpu.dot_dimension_numbers<[1], [0], [0], [1], [0, 0, 1, 1], [], []>} : vector<2x64xf32>, vector<64x16xf32>, vector<2x16xf32> -> vector<2x16xf32>
    %cst_29 = arith.constant 9.99999997E-7 : f32
    %82 = vector.broadcast %cst_29 : f32 to vector<2x16xf32>
    %83 = arith.addf %81, %82 : vector<2x16xf32>
    %84 = math.log %83 : vector<2x16xf32>
    %cst_30 = arith.constant dense<0.000000e+00> : vector<2x128xf32>
    %85 = tpu.matmul %84, %5, %cst_30 {dimension_numbers = #tpu.dot_dimension_numbers<[1], [0], [0], [1], [0, 0, 1, 1], [], []>} : vector<2x16xf32>, vector<16x128xf32>, vector<2x128xf32> -> vector<2x128xf32>
    %86 = vector.broadcast %6 : vector<1x128xf32> to vector<2x128xf32>
    %87 = arith.addf %85, %86 : vector<2x128xf32>
    %88 = vector.extract_strided_slice %87 {offsets = [0, 0], sizes = [2, 32], strides = [1, 1]} : vector<2x128xf32> to vector<2x32xf32>
    %89 = vector.extract_strided_slice %87 {offsets = [0, 32], sizes = [2, 32], strides = [1, 1]} : vector<2x128xf32> to vector<2x32xf32>
    %90 = vector.extract_strided_slice %87 {offsets = [0, 64], sizes = [2, 32], strides = [1, 1]} : vector<2x128xf32> to vector<2x32xf32>
    %91 = vector.extract_strided_slice %87 {offsets = [0, 96], sizes = [2, 32], strides = [1, 1]} : vector<2x128xf32> to vector<2x32xf32>
    %92 = vector.extract_strided_slice %2 {offsets = [0, 160], sizes = [2, 64], strides = [1, 1]} : vector<2x512xf32> to vector<2x64xf32>
    %cst_31 = arith.constant dense<0.000000e+00> : vector<2x128xf32>
    %93 = tpu.matmul %92, %3, %cst_31 {dimension_numbers = #tpu.dot_dimension_numbers<[1], [0], [0], [1], [0, 0, 1, 1], [], []>} : vector<2x64xf32>, vector<64x128xf32>, vector<2x128xf32> -> vector<2x128xf32>
    %94 = arith.mulf %93, %93 : vector<2x128xf32>
    %95 = vector.extract_strided_slice %94 {offsets = [0, 0], sizes = [2, 64], strides = [1, 1]} : vector<2x128xf32> to vector<2x64xf32>
    %96 = vector.extract_strided_slice %94 {offsets = [0, 64], sizes = [2, 64], strides = [1, 1]} : vector<2x128xf32> to vector<2x64xf32>
    %97 = arith.addf %95, %96 : vector<2x64xf32>
    %cst_32 = arith.constant dense<0.000000e+00> : vector<2x16xf32>
    %98 = tpu.matmul %97, %4, %cst_32 {dimension_numbers = #tpu.dot_dimension_numbers<[1], [0], [0], [1], [0, 0, 1, 1], [], []>} : vector<2x64xf32>, vector<64x16xf32>, vector<2x16xf32> -> vector<2x16xf32>
    %cst_33 = arith.constant 9.99999997E-7 : f32
    %99 = vector.broadcast %cst_33 : f32 to vector<2x16xf32>
    %100 = arith.addf %98, %99 : vector<2x16xf32>
    %101 = math.log %100 : vector<2x16xf32>
    %cst_34 = arith.constant dense<0.000000e+00> : vector<2x128xf32>
    %102 = tpu.matmul %101, %5, %cst_34 {dimension_numbers = #tpu.dot_dimension_numbers<[1], [0], [0], [1], [0, 0, 1, 1], [], []>} : vector<2x16xf32>, vector<16x128xf32>, vector<2x128xf32> -> vector<2x128xf32>
    %103 = vector.broadcast %6 : vector<1x128xf32> to vector<2x128xf32>
    %104 = arith.addf %102, %103 : vector<2x128xf32>
    %105 = vector.extract_strided_slice %104 {offsets = [0, 0], sizes = [2, 32], strides = [1, 1]} : vector<2x128xf32> to vector<2x32xf32>
    %106 = vector.extract_strided_slice %104 {offsets = [0, 32], sizes = [2, 32], strides = [1, 1]} : vector<2x128xf32> to vector<2x32xf32>
    %107 = vector.extract_strided_slice %104 {offsets = [0, 64], sizes = [2, 32], strides = [1, 1]} : vector<2x128xf32> to vector<2x32xf32>
    %108 = vector.extract_strided_slice %104 {offsets = [0, 96], sizes = [2, 32], strides = [1, 1]} : vector<2x128xf32> to vector<2x32xf32>
    %109 = vector.extract_strided_slice %2 {offsets = [0, 192], sizes = [2, 64], strides = [1, 1]} : vector<2x512xf32> to vector<2x64xf32>
    %cst_35 = arith.constant dense<0.000000e+00> : vector<2x128xf32>
    %110 = tpu.matmul %109, %3, %cst_35 {dimension_numbers = #tpu.dot_dimension_numbers<[1], [0], [0], [1], [0, 0, 1, 1], [], []>} : vector<2x64xf32>, vector<64x128xf32>, vector<2x128xf32> -> vector<2x128xf32>
    %111 = arith.mulf %110, %110 : vector<2x128xf32>
    %112 = vector.extract_strided_slice %111 {offsets = [0, 0], sizes = [2, 64], strides = [1, 1]} : vector<2x128xf32> to vector<2x64xf32>
    %113 = vector.extract_strided_slice %111 {offsets = [0, 64], sizes = [2, 64], strides = [1, 1]} : vector<2x128xf32> to vector<2x64xf32>
    %114 = arith.addf %112, %113 : vector<2x64xf32>
    %cst_36 = arith.constant dense<0.000000e+00> : vector<2x16xf32>
    %115 = tpu.matmul %114, %4, %cst_36 {dimension_numbers = #tpu.dot_dimension_numbers<[1], [0], [0], [1], [0, 0, 1, 1], [], []>} : vector<2x64xf32>, vector<64x16xf32>, vector<2x16xf32> -> vector<2x16xf32>
    %cst_37 = arith.constant 9.99999997E-7 : f32
    %116 = vector.broadcast %cst_37 : f32 to vector<2x16xf32>
    %117 = arith.addf %115, %116 : vector<2x16xf32>
    %118 = math.log %117 : vector<2x16xf32>
    %cst_38 = arith.constant dense<0.000000e+00> : vector<2x128xf32>
    %119 = tpu.matmul %118, %5, %cst_38 {dimension_numbers = #tpu.dot_dimension_numbers<[1], [0], [0], [1], [0, 0, 1, 1], [], []>} : vector<2x16xf32>, vector<16x128xf32>, vector<2x128xf32> -> vector<2x128xf32>
    %120 = vector.broadcast %6 : vector<1x128xf32> to vector<2x128xf32>
    %121 = arith.addf %119, %120 : vector<2x128xf32>
    %122 = vector.extract_strided_slice %121 {offsets = [0, 0], sizes = [2, 32], strides = [1, 1]} : vector<2x128xf32> to vector<2x32xf32>
    %123 = vector.extract_strided_slice %121 {offsets = [0, 32], sizes = [2, 32], strides = [1, 1]} : vector<2x128xf32> to vector<2x32xf32>
    %124 = vector.extract_strided_slice %121 {offsets = [0, 64], sizes = [2, 32], strides = [1, 1]} : vector<2x128xf32> to vector<2x32xf32>
    %125 = vector.extract_strided_slice %121 {offsets = [0, 96], sizes = [2, 32], strides = [1, 1]} : vector<2x128xf32> to vector<2x32xf32>
    %126 = vector.extract_strided_slice %2 {offsets = [0, 224], sizes = [2, 64], strides = [1, 1]} : vector<2x512xf32> to vector<2x64xf32>
    %cst_39 = arith.constant dense<0.000000e+00> : vector<2x128xf32>
    %127 = tpu.matmul %126, %3, %cst_39 {dimension_numbers = #tpu.dot_dimension_numbers<[1], [0], [0], [1], [0, 0, 1, 1], [], []>} : vector<2x64xf32>, vector<64x128xf32>, vector<2x128xf32> -> vector<2x128xf32>
    %128 = arith.mulf %127, %127 : vector<2x128xf32>
    %129 = vector.extract_strided_slice %128 {offsets = [0, 0], sizes = [2, 64], strides = [1, 1]} : vector<2x128xf32> to vector<2x64xf32>
    %130 = vector.extract_strided_slice %128 {offsets = [0, 64], sizes = [2, 64], strides = [1, 1]} : vector<2x128xf32> to vector<2x64xf32>
    %131 = arith.addf %129, %130 : vector<2x64xf32>
    %cst_40 = arith.constant dense<0.000000e+00> : vector<2x16xf32>
    %132 = tpu.matmul %131, %4, %cst_40 {dimension_numbers = #tpu.dot_dimension_numbers<[1], [0], [0], [1], [0, 0, 1, 1], [], []>} : vector<2x64xf32>, vector<64x16xf32>, vector<2x16xf32> -> vector<2x16xf32>
    %cst_41 = arith.constant 9.99999997E-7 : f32
    %133 = vector.broadcast %cst_41 : f32 to vector<2x16xf32>
    %134 = arith.addf %132, %133 : vector<2x16xf32>
    %135 = math.log %134 : vector<2x16xf32>
    %cst_42 = arith.constant dense<0.000000e+00> : vector<2x128xf32>
    %136 = tpu.matmul %135, %5, %cst_42 {dimension_numbers = #tpu.dot_dimension_numbers<[1], [0], [0], [1], [0, 0, 1, 1], [], []>} : vector<2x16xf32>, vector<16x128xf32>, vector<2x128xf32> -> vector<2x128xf32>
    %137 = vector.broadcast %6 : vector<1x128xf32> to vector<2x128xf32>
    %138 = arith.addf %136, %137 : vector<2x128xf32>
    %139 = vector.extract_strided_slice %138 {offsets = [0, 0], sizes = [2, 32], strides = [1, 1]} : vector<2x128xf32> to vector<2x32xf32>
    %140 = vector.extract_strided_slice %138 {offsets = [0, 32], sizes = [2, 32], strides = [1, 1]} : vector<2x128xf32> to vector<2x32xf32>
    %141 = vector.extract_strided_slice %138 {offsets = [0, 64], sizes = [2, 32], strides = [1, 1]} : vector<2x128xf32> to vector<2x32xf32>
    %142 = vector.extract_strided_slice %138 {offsets = [0, 96], sizes = [2, 32], strides = [1, 1]} : vector<2x128xf32> to vector<2x32xf32>
    %143 = vector.extract_strided_slice %2 {offsets = [0, 256], sizes = [2, 64], strides = [1, 1]} : vector<2x512xf32> to vector<2x64xf32>
    %cst_43 = arith.constant dense<0.000000e+00> : vector<2x128xf32>
    %144 = tpu.matmul %143, %3, %cst_43 {dimension_numbers = #tpu.dot_dimension_numbers<[1], [0], [0], [1], [0, 0, 1, 1], [], []>} : vector<2x64xf32>, vector<64x128xf32>, vector<2x128xf32> -> vector<2x128xf32>
    %145 = arith.mulf %144, %144 : vector<2x128xf32>
    %146 = vector.extract_strided_slice %145 {offsets = [0, 0], sizes = [2, 64], strides = [1, 1]} : vector<2x128xf32> to vector<2x64xf32>
    %147 = vector.extract_strided_slice %145 {offsets = [0, 64], sizes = [2, 64], strides = [1, 1]} : vector<2x128xf32> to vector<2x64xf32>
    %148 = arith.addf %146, %147 : vector<2x64xf32>
    %cst_44 = arith.constant dense<0.000000e+00> : vector<2x16xf32>
    %149 = tpu.matmul %148, %4, %cst_44 {dimension_numbers = #tpu.dot_dimension_numbers<[1], [0], [0], [1], [0, 0, 1, 1], [], []>} : vector<2x64xf32>, vector<64x16xf32>, vector<2x16xf32> -> vector<2x16xf32>
    %cst_45 = arith.constant 9.99999997E-7 : f32
    %150 = vector.broadcast %cst_45 : f32 to vector<2x16xf32>
    %151 = arith.addf %149, %150 : vector<2x16xf32>
    %152 = math.log %151 : vector<2x16xf32>
    %cst_46 = arith.constant dense<0.000000e+00> : vector<2x128xf32>
    %153 = tpu.matmul %152, %5, %cst_46 {dimension_numbers = #tpu.dot_dimension_numbers<[1], [0], [0], [1], [0, 0, 1, 1], [], []>} : vector<2x16xf32>, vector<16x128xf32>, vector<2x128xf32> -> vector<2x128xf32>
    %154 = vector.broadcast %6 : vector<1x128xf32> to vector<2x128xf32>
    %155 = arith.addf %153, %154 : vector<2x128xf32>
    %156 = vector.extract_strided_slice %155 {offsets = [0, 0], sizes = [2, 32], strides = [1, 1]} : vector<2x128xf32> to vector<2x32xf32>
    %157 = vector.extract_strided_slice %155 {offsets = [0, 32], sizes = [2, 32], strides = [1, 1]} : vector<2x128xf32> to vector<2x32xf32>
    %158 = vector.extract_strided_slice %155 {offsets = [0, 64], sizes = [2, 32], strides = [1, 1]} : vector<2x128xf32> to vector<2x32xf32>
    %159 = vector.extract_strided_slice %155 {offsets = [0, 96], sizes = [2, 32], strides = [1, 1]} : vector<2x128xf32> to vector<2x32xf32>
    %160 = vector.extract_strided_slice %2 {offsets = [0, 288], sizes = [2, 64], strides = [1, 1]} : vector<2x512xf32> to vector<2x64xf32>
    %cst_47 = arith.constant dense<0.000000e+00> : vector<2x128xf32>
    %161 = tpu.matmul %160, %3, %cst_47 {dimension_numbers = #tpu.dot_dimension_numbers<[1], [0], [0], [1], [0, 0, 1, 1], [], []>} : vector<2x64xf32>, vector<64x128xf32>, vector<2x128xf32> -> vector<2x128xf32>
    %162 = arith.mulf %161, %161 : vector<2x128xf32>
    %163 = vector.extract_strided_slice %162 {offsets = [0, 0], sizes = [2, 64], strides = [1, 1]} : vector<2x128xf32> to vector<2x64xf32>
    %164 = vector.extract_strided_slice %162 {offsets = [0, 64], sizes = [2, 64], strides = [1, 1]} : vector<2x128xf32> to vector<2x64xf32>
    %165 = arith.addf %163, %164 : vector<2x64xf32>
    %cst_48 = arith.constant dense<0.000000e+00> : vector<2x16xf32>
    %166 = tpu.matmul %165, %4, %cst_48 {dimension_numbers = #tpu.dot_dimension_numbers<[1], [0], [0], [1], [0, 0, 1, 1], [], []>} : vector<2x64xf32>, vector<64x16xf32>, vector<2x16xf32> -> vector<2x16xf32>
    %cst_49 = arith.constant 9.99999997E-7 : f32
    %167 = vector.broadcast %cst_49 : f32 to vector<2x16xf32>
    %168 = arith.addf %166, %167 : vector<2x16xf32>
    %169 = math.log %168 : vector<2x16xf32>
    %cst_50 = arith.constant dense<0.000000e+00> : vector<2x128xf32>
    %170 = tpu.matmul %169, %5, %cst_50 {dimension_numbers = #tpu.dot_dimension_numbers<[1], [0], [0], [1], [0, 0, 1, 1], [], []>} : vector<2x16xf32>, vector<16x128xf32>, vector<2x128xf32> -> vector<2x128xf32>
    %171 = vector.broadcast %6 : vector<1x128xf32> to vector<2x128xf32>
    %172 = arith.addf %170, %171 : vector<2x128xf32>
    %173 = vector.extract_strided_slice %172 {offsets = [0, 0], sizes = [2, 32], strides = [1, 1]} : vector<2x128xf32> to vector<2x32xf32>
    %174 = vector.extract_strided_slice %172 {offsets = [0, 32], sizes = [2, 32], strides = [1, 1]} : vector<2x128xf32> to vector<2x32xf32>
    %175 = vector.extract_strided_slice %172 {offsets = [0, 64], sizes = [2, 32], strides = [1, 1]} : vector<2x128xf32> to vector<2x32xf32>
    %176 = vector.extract_strided_slice %172 {offsets = [0, 96], sizes = [2, 32], strides = [1, 1]} : vector<2x128xf32> to vector<2x32xf32>
    %177 = vector.extract_strided_slice %2 {offsets = [0, 320], sizes = [2, 64], strides = [1, 1]} : vector<2x512xf32> to vector<2x64xf32>
    %cst_51 = arith.constant dense<0.000000e+00> : vector<2x128xf32>
    %178 = tpu.matmul %177, %3, %cst_51 {dimension_numbers = #tpu.dot_dimension_numbers<[1], [0], [0], [1], [0, 0, 1, 1], [], []>} : vector<2x64xf32>, vector<64x128xf32>, vector<2x128xf32> -> vector<2x128xf32>
    %179 = arith.mulf %178, %178 : vector<2x128xf32>
    %180 = vector.extract_strided_slice %179 {offsets = [0, 0], sizes = [2, 64], strides = [1, 1]} : vector<2x128xf32> to vector<2x64xf32>
    %181 = vector.extract_strided_slice %179 {offsets = [0, 64], sizes = [2, 64], strides = [1, 1]} : vector<2x128xf32> to vector<2x64xf32>
    %182 = arith.addf %180, %181 : vector<2x64xf32>
    %cst_52 = arith.constant dense<0.000000e+00> : vector<2x16xf32>
    %183 = tpu.matmul %182, %4, %cst_52 {dimension_numbers = #tpu.dot_dimension_numbers<[1], [0], [0], [1], [0, 0, 1, 1], [], []>} : vector<2x64xf32>, vector<64x16xf32>, vector<2x16xf32> -> vector<2x16xf32>
    %cst_53 = arith.constant 9.99999997E-7 : f32
    %184 = vector.broadcast %cst_53 : f32 to vector<2x16xf32>
    %185 = arith.addf %183, %184 : vector<2x16xf32>
    %186 = math.log %185 : vector<2x16xf32>
    %cst_54 = arith.constant dense<0.000000e+00> : vector<2x128xf32>
    %187 = tpu.matmul %186, %5, %cst_54 {dimension_numbers = #tpu.dot_dimension_numbers<[1], [0], [0], [1], [0, 0, 1, 1], [], []>} : vector<2x16xf32>, vector<16x128xf32>, vector<2x128xf32> -> vector<2x128xf32>
    %188 = vector.broadcast %6 : vector<1x128xf32> to vector<2x128xf32>
    %189 = arith.addf %187, %188 : vector<2x128xf32>
    %190 = vector.extract_strided_slice %189 {offsets = [0, 0], sizes = [2, 32], strides = [1, 1]} : vector<2x128xf32> to vector<2x32xf32>
    %191 = vector.extract_strided_slice %189 {offsets = [0, 32], sizes = [2, 32], strides = [1, 1]} : vector<2x128xf32> to vector<2x32xf32>
    %192 = vector.extract_strided_slice %189 {offsets = [0, 64], sizes = [2, 32], strides = [1, 1]} : vector<2x128xf32> to vector<2x32xf32>
    %193 = vector.extract_strided_slice %189 {offsets = [0, 96], sizes = [2, 32], strides = [1, 1]} : vector<2x128xf32> to vector<2x32xf32>
    %194 = vector.extract_strided_slice %2 {offsets = [0, 352], sizes = [2, 64], strides = [1, 1]} : vector<2x512xf32> to vector<2x64xf32>
    %cst_55 = arith.constant dense<0.000000e+00> : vector<2x128xf32>
    %195 = tpu.matmul %194, %3, %cst_55 {dimension_numbers = #tpu.dot_dimension_numbers<[1], [0], [0], [1], [0, 0, 1, 1], [], []>} : vector<2x64xf32>, vector<64x128xf32>, vector<2x128xf32> -> vector<2x128xf32>
    %196 = arith.mulf %195, %195 : vector<2x128xf32>
    %197 = vector.extract_strided_slice %196 {offsets = [0, 0], sizes = [2, 64], strides = [1, 1]} : vector<2x128xf32> to vector<2x64xf32>
    %198 = vector.extract_strided_slice %196 {offsets = [0, 64], sizes = [2, 64], strides = [1, 1]} : vector<2x128xf32> to vector<2x64xf32>
    %199 = arith.addf %197, %198 : vector<2x64xf32>
    %cst_56 = arith.constant dense<0.000000e+00> : vector<2x16xf32>
    %200 = tpu.matmul %199, %4, %cst_56 {dimension_numbers = #tpu.dot_dimension_numbers<[1], [0], [0], [1], [0, 0, 1, 1], [], []>} : vector<2x64xf32>, vector<64x16xf32>, vector<2x16xf32> -> vector<2x16xf32>
    %cst_57 = arith.constant 9.99999997E-7 : f32
    %201 = vector.broadcast %cst_57 : f32 to vector<2x16xf32>
    %202 = arith.addf %200, %201 : vector<2x16xf32>
    %203 = math.log %202 : vector<2x16xf32>
    %cst_58 = arith.constant dense<0.000000e+00> : vector<2x128xf32>
    %204 = tpu.matmul %203, %5, %cst_58 {dimension_numbers = #tpu.dot_dimension_numbers<[1], [0], [0], [1], [0, 0, 1, 1], [], []>} : vector<2x16xf32>, vector<16x128xf32>, vector<2x128xf32> -> vector<2x128xf32>
    %205 = vector.broadcast %6 : vector<1x128xf32> to vector<2x128xf32>
    %206 = arith.addf %204, %205 : vector<2x128xf32>
    %207 = vector.extract_strided_slice %206 {offsets = [0, 0], sizes = [2, 32], strides = [1, 1]} : vector<2x128xf32> to vector<2x32xf32>
    %208 = vector.extract_strided_slice %206 {offsets = [0, 32], sizes = [2, 32], strides = [1, 1]} : vector<2x128xf32> to vector<2x32xf32>
    %209 = vector.extract_strided_slice %206 {offsets = [0, 64], sizes = [2, 32], strides = [1, 1]} : vector<2x128xf32> to vector<2x32xf32>
    %210 = vector.extract_strided_slice %206 {offsets = [0, 96], sizes = [2, 32], strides = [1, 1]} : vector<2x128xf32> to vector<2x32xf32>
    %211 = vector.extract_strided_slice %2 {offsets = [0, 384], sizes = [2, 64], strides = [1, 1]} : vector<2x512xf32> to vector<2x64xf32>
    %cst_59 = arith.constant dense<0.000000e+00> : vector<2x128xf32>
    %212 = tpu.matmul %211, %3, %cst_59 {dimension_numbers = #tpu.dot_dimension_numbers<[1], [0], [0], [1], [0, 0, 1, 1], [], []>} : vector<2x64xf32>, vector<64x128xf32>, vector<2x128xf32> -> vector<2x128xf32>
    %213 = arith.mulf %212, %212 : vector<2x128xf32>
    %214 = vector.extract_strided_slice %213 {offsets = [0, 0], sizes = [2, 64], strides = [1, 1]} : vector<2x128xf32> to vector<2x64xf32>
    %215 = vector.extract_strided_slice %213 {offsets = [0, 64], sizes = [2, 64], strides = [1, 1]} : vector<2x128xf32> to vector<2x64xf32>
    %216 = arith.addf %214, %215 : vector<2x64xf32>
    %cst_60 = arith.constant dense<0.000000e+00> : vector<2x16xf32>
    %217 = tpu.matmul %216, %4, %cst_60 {dimension_numbers = #tpu.dot_dimension_numbers<[1], [0], [0], [1], [0, 0, 1, 1], [], []>} : vector<2x64xf32>, vector<64x16xf32>, vector<2x16xf32> -> vector<2x16xf32>
    %cst_61 = arith.constant 9.99999997E-7 : f32
    %218 = vector.broadcast %cst_61 : f32 to vector<2x16xf32>
    %219 = arith.addf %217, %218 : vector<2x16xf32>
    %220 = math.log %219 : vector<2x16xf32>
    %cst_62 = arith.constant dense<0.000000e+00> : vector<2x128xf32>
    %221 = tpu.matmul %220, %5, %cst_62 {dimension_numbers = #tpu.dot_dimension_numbers<[1], [0], [0], [1], [0, 0, 1, 1], [], []>} : vector<2x16xf32>, vector<16x128xf32>, vector<2x128xf32> -> vector<2x128xf32>
    %222 = vector.broadcast %6 : vector<1x128xf32> to vector<2x128xf32>
    %223 = arith.addf %221, %222 : vector<2x128xf32>
    %224 = vector.extract_strided_slice %223 {offsets = [0, 0], sizes = [2, 32], strides = [1, 1]} : vector<2x128xf32> to vector<2x32xf32>
    %225 = vector.extract_strided_slice %223 {offsets = [0, 32], sizes = [2, 32], strides = [1, 1]} : vector<2x128xf32> to vector<2x32xf32>
    %226 = vector.extract_strided_slice %223 {offsets = [0, 64], sizes = [2, 32], strides = [1, 1]} : vector<2x128xf32> to vector<2x32xf32>
    %227 = vector.extract_strided_slice %223 {offsets = [0, 96], sizes = [2, 32], strides = [1, 1]} : vector<2x128xf32> to vector<2x32xf32>
    %228 = vector.extract_strided_slice %2 {offsets = [0, 416], sizes = [2, 64], strides = [1, 1]} : vector<2x512xf32> to vector<2x64xf32>
    %cst_63 = arith.constant dense<0.000000e+00> : vector<2x128xf32>
    %229 = tpu.matmul %228, %3, %cst_63 {dimension_numbers = #tpu.dot_dimension_numbers<[1], [0], [0], [1], [0, 0, 1, 1], [], []>} : vector<2x64xf32>, vector<64x128xf32>, vector<2x128xf32> -> vector<2x128xf32>
    %230 = arith.mulf %229, %229 : vector<2x128xf32>
    %231 = vector.extract_strided_slice %230 {offsets = [0, 0], sizes = [2, 64], strides = [1, 1]} : vector<2x128xf32> to vector<2x64xf32>
    %232 = vector.extract_strided_slice %230 {offsets = [0, 64], sizes = [2, 64], strides = [1, 1]} : vector<2x128xf32> to vector<2x64xf32>
    %233 = arith.addf %231, %232 : vector<2x64xf32>
    %cst_64 = arith.constant dense<0.000000e+00> : vector<2x16xf32>
    %234 = tpu.matmul %233, %4, %cst_64 {dimension_numbers = #tpu.dot_dimension_numbers<[1], [0], [0], [1], [0, 0, 1, 1], [], []>} : vector<2x64xf32>, vector<64x16xf32>, vector<2x16xf32> -> vector<2x16xf32>
    %cst_65 = arith.constant 9.99999997E-7 : f32
    %235 = vector.broadcast %cst_65 : f32 to vector<2x16xf32>
    %236 = arith.addf %234, %235 : vector<2x16xf32>
    %237 = math.log %236 : vector<2x16xf32>
    %cst_66 = arith.constant dense<0.000000e+00> : vector<2x128xf32>
    %238 = tpu.matmul %237, %5, %cst_66 {dimension_numbers = #tpu.dot_dimension_numbers<[1], [0], [0], [1], [0, 0, 1, 1], [], []>} : vector<2x16xf32>, vector<16x128xf32>, vector<2x128xf32> -> vector<2x128xf32>
    %239 = vector.broadcast %6 : vector<1x128xf32> to vector<2x128xf32>
    %240 = arith.addf %238, %239 : vector<2x128xf32>
    %241 = vector.extract_strided_slice %240 {offsets = [0, 0], sizes = [2, 32], strides = [1, 1]} : vector<2x128xf32> to vector<2x32xf32>
    %242 = vector.extract_strided_slice %240 {offsets = [0, 32], sizes = [2, 32], strides = [1, 1]} : vector<2x128xf32> to vector<2x32xf32>
    %243 = vector.extract_strided_slice %240 {offsets = [0, 64], sizes = [2, 32], strides = [1, 1]} : vector<2x128xf32> to vector<2x32xf32>
    %244 = vector.extract_strided_slice %240 {offsets = [0, 96], sizes = [2, 32], strides = [1, 1]} : vector<2x128xf32> to vector<2x32xf32>
    %245 = vector.extract_strided_slice %2 {offsets = [0, 448], sizes = [2, 64], strides = [1, 1]} : vector<2x512xf32> to vector<2x64xf32>
    %cst_67 = arith.constant dense<0.000000e+00> : vector<2x128xf32>
    %246 = tpu.matmul %245, %3, %cst_67 {dimension_numbers = #tpu.dot_dimension_numbers<[1], [0], [0], [1], [0, 0, 1, 1], [], []>} : vector<2x64xf32>, vector<64x128xf32>, vector<2x128xf32> -> vector<2x128xf32>
    %247 = arith.mulf %246, %246 : vector<2x128xf32>
    %248 = vector.extract_strided_slice %247 {offsets = [0, 0], sizes = [2, 64], strides = [1, 1]} : vector<2x128xf32> to vector<2x64xf32>
    %249 = vector.extract_strided_slice %247 {offsets = [0, 64], sizes = [2, 64], strides = [1, 1]} : vector<2x128xf32> to vector<2x64xf32>
    %250 = arith.addf %248, %249 : vector<2x64xf32>
    %cst_68 = arith.constant dense<0.000000e+00> : vector<2x16xf32>
    %251 = tpu.matmul %250, %4, %cst_68 {dimension_numbers = #tpu.dot_dimension_numbers<[1], [0], [0], [1], [0, 0, 1, 1], [], []>} : vector<2x64xf32>, vector<64x16xf32>, vector<2x16xf32> -> vector<2x16xf32>
    %cst_69 = arith.constant 9.99999997E-7 : f32
    %252 = vector.broadcast %cst_69 : f32 to vector<2x16xf32>
    %253 = arith.addf %251, %252 : vector<2x16xf32>
    %254 = math.log %253 : vector<2x16xf32>
    %cst_70 = arith.constant dense<0.000000e+00> : vector<2x128xf32>
    %255 = tpu.matmul %254, %5, %cst_70 {dimension_numbers = #tpu.dot_dimension_numbers<[1], [0], [0], [1], [0, 0, 1, 1], [], []>} : vector<2x16xf32>, vector<16x128xf32>, vector<2x128xf32> -> vector<2x128xf32>
    %256 = vector.broadcast %6 : vector<1x128xf32> to vector<2x128xf32>
    %257 = arith.addf %255, %256 : vector<2x128xf32>
    %258 = vector.extract_strided_slice %257 {offsets = [0, 0], sizes = [2, 32], strides = [1, 1]} : vector<2x128xf32> to vector<2x32xf32>
    %259 = vector.extract_strided_slice %257 {offsets = [0, 32], sizes = [2, 32], strides = [1, 1]} : vector<2x128xf32> to vector<2x32xf32>
    %260 = vector.extract_strided_slice %257 {offsets = [0, 64], sizes = [2, 32], strides = [1, 1]} : vector<2x128xf32> to vector<2x32xf32>
    %261 = vector.extract_strided_slice %257 {offsets = [0, 96], sizes = [2, 32], strides = [1, 1]} : vector<2x128xf32> to vector<2x32xf32>
    %c0_71 = arith.constant 0 : index
    %c0_72 = arith.constant 0 : index
    %262 = vector.load %arg6[%c0_71, %c0_72] : memref<32x32xf32, #tpu.memory_space<vmem>>, vector<32x32xf32>
    %c0_73 = arith.constant 0 : index
    %c0_74 = arith.constant 0 : index
    %263 = vector.load %arg7[%c0_73, %c0_74] : memref<32x32xf32, #tpu.memory_space<vmem>>, vector<32x32xf32>
    %c0_75 = arith.constant 0 : index
    %c0_76 = arith.constant 0 : index
    %264 = vector.load %arg8[%c0_75, %c0_76] : memref<32x32xf32, #tpu.memory_space<vmem>>, vector<32x32xf32>
    %c0_77 = arith.constant 0 : index
    %c0_78 = arith.constant 0 : index
    %265 = vector.load %arg9[%c0_77, %c0_78] : memref<32x32xf32, #tpu.memory_space<vmem>>, vector<32x32xf32>
    %cst_79 = arith.constant 0.000000e+00 : f32
    %266 = vector.broadcast %cst_79 : f32 to vector<2x32xf32>
    %cst_80 = arith.constant 0.000000e+00 : f32
    %267 = vector.broadcast %cst_80 : f32 to vector<2x32xf32>
    %cst_81 = arith.constant dense<0.000000e+00> : vector<2x32xf32>
    %268 = tpu.matmul %266, %262, %cst_81 {dimension_numbers = #tpu.dot_dimension_numbers<[1], [0], [0], [1], [0, 0, 1, 1], [], []>} : vector<2x32xf32>, vector<32x32xf32>, vector<2x32xf32> -> vector<2x32xf32>
    %269 = arith.addf %20, %268 : vector<2x32xf32>
    %270 = arith.negf %269 : vector<2x32xf32>
    %271 = math.exp %270 : vector<2x32xf32>
    %cst_82 = arith.constant 1.000000e+00 : f32
    %272 = vector.broadcast %cst_82 : f32 to vector<2x32xf32>
    %273 = arith.addf %272, %271 : vector<2x32xf32>
    %274 = arith.divf %272, %273 : vector<2x32xf32>
    %cst_83 = arith.constant dense<0.000000e+00> : vector<2x32xf32>
    %275 = tpu.matmul %266, %263, %cst_83 {dimension_numbers = #tpu.dot_dimension_numbers<[1], [0], [0], [1], [0, 0, 1, 1], [], []>} : vector<2x32xf32>, vector<32x32xf32>, vector<2x32xf32> -> vector<2x32xf32>
    %276 = arith.addf %21, %275 : vector<2x32xf32>
    %277 = arith.negf %276 : vector<2x32xf32>
    %278 = math.exp %277 : vector<2x32xf32>
    %cst_84 = arith.constant 1.000000e+00 : f32
    %279 = vector.broadcast %cst_84 : f32 to vector<2x32xf32>
    %280 = arith.addf %279, %278 : vector<2x32xf32>
    %281 = arith.divf %279, %280 : vector<2x32xf32>
    %cst_85 = arith.constant dense<0.000000e+00> : vector<2x32xf32>
    %282 = tpu.matmul %266, %264, %cst_85 {dimension_numbers = #tpu.dot_dimension_numbers<[1], [0], [0], [1], [0, 0, 1, 1], [], []>} : vector<2x32xf32>, vector<32x32xf32>, vector<2x32xf32> -> vector<2x32xf32>
    %283 = arith.addf %22, %282 : vector<2x32xf32>
    %284 = math.tanh %283 : vector<2x32xf32>
    %cst_86 = arith.constant dense<0.000000e+00> : vector<2x32xf32>
    %285 = tpu.matmul %266, %265, %cst_86 {dimension_numbers = #tpu.dot_dimension_numbers<[1], [0], [0], [1], [0, 0, 1, 1], [], []>} : vector<2x32xf32>, vector<32x32xf32>, vector<2x32xf32> -> vector<2x32xf32>
    %286 = arith.addf %23, %285 : vector<2x32xf32>
    %287 = arith.negf %286 : vector<2x32xf32>
    %288 = math.exp %287 : vector<2x32xf32>
    %cst_87 = arith.constant 1.000000e+00 : f32
    %289 = vector.broadcast %cst_87 : f32 to vector<2x32xf32>
    %290 = arith.addf %289, %288 : vector<2x32xf32>
    %291 = arith.divf %289, %290 : vector<2x32xf32>
    %292 = arith.mulf %281, %267 : vector<2x32xf32>
    %293 = arith.mulf %274, %284 : vector<2x32xf32>
    %294 = arith.addf %292, %293 : vector<2x32xf32>
    %295 = math.tanh %294 : vector<2x32xf32>
    %296 = arith.mulf %291, %295 : vector<2x32xf32>
    %cst_88 = arith.constant dense<0.000000e+00> : vector<2x32xf32>
    %297 = tpu.matmul %296, %262, %cst_88 {dimension_numbers = #tpu.dot_dimension_numbers<[1], [0], [0], [1], [0, 0, 1, 1], [], []>} : vector<2x32xf32>, vector<32x32xf32>, vector<2x32xf32> -> vector<2x32xf32>
    %298 = arith.addf %37, %297 : vector<2x32xf32>
    %299 = arith.negf %298 : vector<2x32xf32>
    %300 = math.exp %299 : vector<2x32xf32>
    %cst_89 = arith.constant 1.000000e+00 : f32
    %301 = vector.broadcast %cst_89 : f32 to vector<2x32xf32>
    %302 = arith.addf %301, %300 : vector<2x32xf32>
    %303 = arith.divf %301, %302 : vector<2x32xf32>
    %cst_90 = arith.constant dense<0.000000e+00> : vector<2x32xf32>
    %304 = tpu.matmul %296, %263, %cst_90 {dimension_numbers = #tpu.dot_dimension_numbers<[1], [0], [0], [1], [0, 0, 1, 1], [], []>} : vector<2x32xf32>, vector<32x32xf32>, vector<2x32xf32> -> vector<2x32xf32>
    %305 = arith.addf %38, %304 : vector<2x32xf32>
    %306 = arith.negf %305 : vector<2x32xf32>
    %307 = math.exp %306 : vector<2x32xf32>
    %cst_91 = arith.constant 1.000000e+00 : f32
    %308 = vector.broadcast %cst_91 : f32 to vector<2x32xf32>
    %309 = arith.addf %308, %307 : vector<2x32xf32>
    %310 = arith.divf %308, %309 : vector<2x32xf32>
    %cst_92 = arith.constant dense<0.000000e+00> : vector<2x32xf32>
    %311 = tpu.matmul %296, %264, %cst_92 {dimension_numbers = #tpu.dot_dimension_numbers<[1], [0], [0], [1], [0, 0, 1, 1], [], []>} : vector<2x32xf32>, vector<32x32xf32>, vector<2x32xf32> -> vector<2x32xf32>
    %312 = arith.addf %39, %311 : vector<2x32xf32>
    %313 = math.tanh %312 : vector<2x32xf32>
    %cst_93 = arith.constant dense<0.000000e+00> : vector<2x32xf32>
    %314 = tpu.matmul %296, %265, %cst_93 {dimension_numbers = #tpu.dot_dimension_numbers<[1], [0], [0], [1], [0, 0, 1, 1], [], []>} : vector<2x32xf32>, vector<32x32xf32>, vector<2x32xf32> -> vector<2x32xf32>
    %315 = arith.addf %40, %314 : vector<2x32xf32>
    %316 = arith.negf %315 : vector<2x32xf32>
    %317 = math.exp %316 : vector<2x32xf32>
    %cst_94 = arith.constant 1.000000e+00 : f32
    %318 = vector.broadcast %cst_94 : f32 to vector<2x32xf32>
    %319 = arith.addf %318, %317 : vector<2x32xf32>
    %320 = arith.divf %318, %319 : vector<2x32xf32>
    %321 = arith.mulf %310, %294 : vector<2x32xf32>
    %322 = arith.mulf %303, %313 : vector<2x32xf32>
    %323 = arith.addf %321, %322 : vector<2x32xf32>
    %324 = math.tanh %323 : vector<2x32xf32>
    %325 = arith.mulf %320, %324 : vector<2x32xf32>
    %cst_95 = arith.constant dense<0.000000e+00> : vector<2x32xf32>
    %326 = tpu.matmul %325, %262, %cst_95 {dimension_numbers = #tpu.dot_dimension_numbers<[1], [0], [0], [1], [0, 0, 1, 1], [], []>} : vector<2x32xf32>, vector<32x32xf32>, vector<2x32xf32> -> vector<2x32xf32>
    %327 = arith.addf %54, %326 : vector<2x32xf32>
    %328 = arith.negf %327 : vector<2x32xf32>
    %329 = math.exp %328 : vector<2x32xf32>
    %cst_96 = arith.constant 1.000000e+00 : f32
    %330 = vector.broadcast %cst_96 : f32 to vector<2x32xf32>
    %331 = arith.addf %330, %329 : vector<2x32xf32>
    %332 = arith.divf %330, %331 : vector<2x32xf32>
    %cst_97 = arith.constant dense<0.000000e+00> : vector<2x32xf32>
    %333 = tpu.matmul %325, %263, %cst_97 {dimension_numbers = #tpu.dot_dimension_numbers<[1], [0], [0], [1], [0, 0, 1, 1], [], []>} : vector<2x32xf32>, vector<32x32xf32>, vector<2x32xf32> -> vector<2x32xf32>
    %334 = arith.addf %55, %333 : vector<2x32xf32>
    %335 = arith.negf %334 : vector<2x32xf32>
    %336 = math.exp %335 : vector<2x32xf32>
    %cst_98 = arith.constant 1.000000e+00 : f32
    %337 = vector.broadcast %cst_98 : f32 to vector<2x32xf32>
    %338 = arith.addf %337, %336 : vector<2x32xf32>
    %339 = arith.divf %337, %338 : vector<2x32xf32>
    %cst_99 = arith.constant dense<0.000000e+00> : vector<2x32xf32>
    %340 = tpu.matmul %325, %264, %cst_99 {dimension_numbers = #tpu.dot_dimension_numbers<[1], [0], [0], [1], [0, 0, 1, 1], [], []>} : vector<2x32xf32>, vector<32x32xf32>, vector<2x32xf32> -> vector<2x32xf32>
    %341 = arith.addf %56, %340 : vector<2x32xf32>
    %342 = math.tanh %341 : vector<2x32xf32>
    %cst_100 = arith.constant dense<0.000000e+00> : vector<2x32xf32>
    %343 = tpu.matmul %325, %265, %cst_100 {dimension_numbers = #tpu.dot_dimension_numbers<[1], [0], [0], [1], [0, 0, 1, 1], [], []>} : vector<2x32xf32>, vector<32x32xf32>, vector<2x32xf32> -> vector<2x32xf32>
    %344 = arith.addf %57, %343 : vector<2x32xf32>
    %345 = arith.negf %344 : vector<2x32xf32>
    %346 = math.exp %345 : vector<2x32xf32>
    %cst_101 = arith.constant 1.000000e+00 : f32
    %347 = vector.broadcast %cst_101 : f32 to vector<2x32xf32>
    %348 = arith.addf %347, %346 : vector<2x32xf32>
    %349 = arith.divf %347, %348 : vector<2x32xf32>
    %350 = arith.mulf %339, %323 : vector<2x32xf32>
    %351 = arith.mulf %332, %342 : vector<2x32xf32>
    %352 = arith.addf %350, %351 : vector<2x32xf32>
    %353 = math.tanh %352 : vector<2x32xf32>
    %354 = arith.mulf %349, %353 : vector<2x32xf32>
    %cst_102 = arith.constant dense<0.000000e+00> : vector<2x32xf32>
    %355 = tpu.matmul %354, %262, %cst_102 {dimension_numbers = #tpu.dot_dimension_numbers<[1], [0], [0], [1], [0, 0, 1, 1], [], []>} : vector<2x32xf32>, vector<32x32xf32>, vector<2x32xf32> -> vector<2x32xf32>
    %356 = arith.addf %71, %355 : vector<2x32xf32>
    %357 = arith.negf %356 : vector<2x32xf32>
    %358 = math.exp %357 : vector<2x32xf32>
    %cst_103 = arith.constant 1.000000e+00 : f32
    %359 = vector.broadcast %cst_103 : f32 to vector<2x32xf32>
    %360 = arith.addf %359, %358 : vector<2x32xf32>
    %361 = arith.divf %359, %360 : vector<2x32xf32>
    %cst_104 = arith.constant dense<0.000000e+00> : vector<2x32xf32>
    %362 = tpu.matmul %354, %263, %cst_104 {dimension_numbers = #tpu.dot_dimension_numbers<[1], [0], [0], [1], [0, 0, 1, 1], [], []>} : vector<2x32xf32>, vector<32x32xf32>, vector<2x32xf32> -> vector<2x32xf32>
    %363 = arith.addf %72, %362 : vector<2x32xf32>
    %364 = arith.negf %363 : vector<2x32xf32>
    %365 = math.exp %364 : vector<2x32xf32>
    %cst_105 = arith.constant 1.000000e+00 : f32
    %366 = vector.broadcast %cst_105 : f32 to vector<2x32xf32>
    %367 = arith.addf %366, %365 : vector<2x32xf32>
    %368 = arith.divf %366, %367 : vector<2x32xf32>
    %cst_106 = arith.constant dense<0.000000e+00> : vector<2x32xf32>
    %369 = tpu.matmul %354, %264, %cst_106 {dimension_numbers = #tpu.dot_dimension_numbers<[1], [0], [0], [1], [0, 0, 1, 1], [], []>} : vector<2x32xf32>, vector<32x32xf32>, vector<2x32xf32> -> vector<2x32xf32>
    %370 = arith.addf %73, %369 : vector<2x32xf32>
    %371 = math.tanh %370 : vector<2x32xf32>
    %cst_107 = arith.constant dense<0.000000e+00> : vector<2x32xf32>
    %372 = tpu.matmul %354, %265, %cst_107 {dimension_numbers = #tpu.dot_dimension_numbers<[1], [0], [0], [1], [0, 0, 1, 1], [], []>} : vector<2x32xf32>, vector<32x32xf32>, vector<2x32xf32> -> vector<2x32xf32>
    %373 = arith.addf %74, %372 : vector<2x32xf32>
    %374 = arith.negf %373 : vector<2x32xf32>
    %375 = math.exp %374 : vector<2x32xf32>
    %cst_108 = arith.constant 1.000000e+00 : f32
    %376 = vector.broadcast %cst_108 : f32 to vector<2x32xf32>
    %377 = arith.addf %376, %375 : vector<2x32xf32>
    %378 = arith.divf %376, %377 : vector<2x32xf32>
    %379 = arith.mulf %368, %352 : vector<2x32xf32>
    %380 = arith.mulf %361, %371 : vector<2x32xf32>
    %381 = arith.addf %379, %380 : vector<2x32xf32>
    %382 = math.tanh %381 : vector<2x32xf32>
    %383 = arith.mulf %378, %382 : vector<2x32xf32>
    %cst_109 = arith.constant dense<0.000000e+00> : vector<2x32xf32>
    %384 = tpu.matmul %383, %262, %cst_109 {dimension_numbers = #tpu.dot_dimension_numbers<[1], [0], [0], [1], [0, 0, 1, 1], [], []>} : vector<2x32xf32>, vector<32x32xf32>, vector<2x32xf32> -> vector<2x32xf32>
    %385 = arith.addf %88, %384 : vector<2x32xf32>
    %386 = arith.negf %385 : vector<2x32xf32>
    %387 = math.exp %386 : vector<2x32xf32>
    %cst_110 = arith.constant 1.000000e+00 : f32
    %388 = vector.broadcast %cst_110 : f32 to vector<2x32xf32>
    %389 = arith.addf %388, %387 : vector<2x32xf32>
    %390 = arith.divf %388, %389 : vector<2x32xf32>
    %cst_111 = arith.constant dense<0.000000e+00> : vector<2x32xf32>
    %391 = tpu.matmul %383, %263, %cst_111 {dimension_numbers = #tpu.dot_dimension_numbers<[1], [0], [0], [1], [0, 0, 1, 1], [], []>} : vector<2x32xf32>, vector<32x32xf32>, vector<2x32xf32> -> vector<2x32xf32>
    %392 = arith.addf %89, %391 : vector<2x32xf32>
    %393 = arith.negf %392 : vector<2x32xf32>
    %394 = math.exp %393 : vector<2x32xf32>
    %cst_112 = arith.constant 1.000000e+00 : f32
    %395 = vector.broadcast %cst_112 : f32 to vector<2x32xf32>
    %396 = arith.addf %395, %394 : vector<2x32xf32>
    %397 = arith.divf %395, %396 : vector<2x32xf32>
    %cst_113 = arith.constant dense<0.000000e+00> : vector<2x32xf32>
    %398 = tpu.matmul %383, %264, %cst_113 {dimension_numbers = #tpu.dot_dimension_numbers<[1], [0], [0], [1], [0, 0, 1, 1], [], []>} : vector<2x32xf32>, vector<32x32xf32>, vector<2x32xf32> -> vector<2x32xf32>
    %399 = arith.addf %90, %398 : vector<2x32xf32>
    %400 = math.tanh %399 : vector<2x32xf32>
    %cst_114 = arith.constant dense<0.000000e+00> : vector<2x32xf32>
    %401 = tpu.matmul %383, %265, %cst_114 {dimension_numbers = #tpu.dot_dimension_numbers<[1], [0], [0], [1], [0, 0, 1, 1], [], []>} : vector<2x32xf32>, vector<32x32xf32>, vector<2x32xf32> -> vector<2x32xf32>
    %402 = arith.addf %91, %401 : vector<2x32xf32>
    %403 = arith.negf %402 : vector<2x32xf32>
    %404 = math.exp %403 : vector<2x32xf32>
    %cst_115 = arith.constant 1.000000e+00 : f32
    %405 = vector.broadcast %cst_115 : f32 to vector<2x32xf32>
    %406 = arith.addf %405, %404 : vector<2x32xf32>
    %407 = arith.divf %405, %406 : vector<2x32xf32>
    %408 = arith.mulf %397, %381 : vector<2x32xf32>
    %409 = arith.mulf %390, %400 : vector<2x32xf32>
    %410 = arith.addf %408, %409 : vector<2x32xf32>
    %411 = math.tanh %410 : vector<2x32xf32>
    %412 = arith.mulf %407, %411 : vector<2x32xf32>
    %cst_116 = arith.constant dense<0.000000e+00> : vector<2x32xf32>
    %413 = tpu.matmul %412, %262, %cst_116 {dimension_numbers = #tpu.dot_dimension_numbers<[1], [0], [0], [1], [0, 0, 1, 1], [], []>} : vector<2x32xf32>, vector<32x32xf32>, vector<2x32xf32> -> vector<2x32xf32>
    %414 = arith.addf %105, %413 : vector<2x32xf32>
    %415 = arith.negf %414 : vector<2x32xf32>
    %416 = math.exp %415 : vector<2x32xf32>
    %cst_117 = arith.constant 1.000000e+00 : f32
    %417 = vector.broadcast %cst_117 : f32 to vector<2x32xf32>
    %418 = arith.addf %417, %416 : vector<2x32xf32>
    %419 = arith.divf %417, %418 : vector<2x32xf32>
    %cst_118 = arith.constant dense<0.000000e+00> : vector<2x32xf32>
    %420 = tpu.matmul %412, %263, %cst_118 {dimension_numbers = #tpu.dot_dimension_numbers<[1], [0], [0], [1], [0, 0, 1, 1], [], []>} : vector<2x32xf32>, vector<32x32xf32>, vector<2x32xf32> -> vector<2x32xf32>
    %421 = arith.addf %106, %420 : vector<2x32xf32>
    %422 = arith.negf %421 : vector<2x32xf32>
    %423 = math.exp %422 : vector<2x32xf32>
    %cst_119 = arith.constant 1.000000e+00 : f32
    %424 = vector.broadcast %cst_119 : f32 to vector<2x32xf32>
    %425 = arith.addf %424, %423 : vector<2x32xf32>
    %426 = arith.divf %424, %425 : vector<2x32xf32>
    %cst_120 = arith.constant dense<0.000000e+00> : vector<2x32xf32>
    %427 = tpu.matmul %412, %264, %cst_120 {dimension_numbers = #tpu.dot_dimension_numbers<[1], [0], [0], [1], [0, 0, 1, 1], [], []>} : vector<2x32xf32>, vector<32x32xf32>, vector<2x32xf32> -> vector<2x32xf32>
    %428 = arith.addf %107, %427 : vector<2x32xf32>
    %429 = math.tanh %428 : vector<2x32xf32>
    %cst_121 = arith.constant dense<0.000000e+00> : vector<2x32xf32>
    %430 = tpu.matmul %412, %265, %cst_121 {dimension_numbers = #tpu.dot_dimension_numbers<[1], [0], [0], [1], [0, 0, 1, 1], [], []>} : vector<2x32xf32>, vector<32x32xf32>, vector<2x32xf32> -> vector<2x32xf32>
    %431 = arith.addf %108, %430 : vector<2x32xf32>
    %432 = arith.negf %431 : vector<2x32xf32>
    %433 = math.exp %432 : vector<2x32xf32>
    %cst_122 = arith.constant 1.000000e+00 : f32
    %434 = vector.broadcast %cst_122 : f32 to vector<2x32xf32>
    %435 = arith.addf %434, %433 : vector<2x32xf32>
    %436 = arith.divf %434, %435 : vector<2x32xf32>
    %437 = arith.mulf %426, %410 : vector<2x32xf32>
    %438 = arith.mulf %419, %429 : vector<2x32xf32>
    %439 = arith.addf %437, %438 : vector<2x32xf32>
    %440 = math.tanh %439 : vector<2x32xf32>
    %441 = arith.mulf %436, %440 : vector<2x32xf32>
    %cst_123 = arith.constant dense<0.000000e+00> : vector<2x32xf32>
    %442 = tpu.matmul %441, %262, %cst_123 {dimension_numbers = #tpu.dot_dimension_numbers<[1], [0], [0], [1], [0, 0, 1, 1], [], []>} : vector<2x32xf32>, vector<32x32xf32>, vector<2x32xf32> -> vector<2x32xf32>
    %443 = arith.addf %122, %442 : vector<2x32xf32>
    %444 = arith.negf %443 : vector<2x32xf32>
    %445 = math.exp %444 : vector<2x32xf32>
    %cst_124 = arith.constant 1.000000e+00 : f32
    %446 = vector.broadcast %cst_124 : f32 to vector<2x32xf32>
    %447 = arith.addf %446, %445 : vector<2x32xf32>
    %448 = arith.divf %446, %447 : vector<2x32xf32>
    %cst_125 = arith.constant dense<0.000000e+00> : vector<2x32xf32>
    %449 = tpu.matmul %441, %263, %cst_125 {dimension_numbers = #tpu.dot_dimension_numbers<[1], [0], [0], [1], [0, 0, 1, 1], [], []>} : vector<2x32xf32>, vector<32x32xf32>, vector<2x32xf32> -> vector<2x32xf32>
    %450 = arith.addf %123, %449 : vector<2x32xf32>
    %451 = arith.negf %450 : vector<2x32xf32>
    %452 = math.exp %451 : vector<2x32xf32>
    %cst_126 = arith.constant 1.000000e+00 : f32
    %453 = vector.broadcast %cst_126 : f32 to vector<2x32xf32>
    %454 = arith.addf %453, %452 : vector<2x32xf32>
    %455 = arith.divf %453, %454 : vector<2x32xf32>
    %cst_127 = arith.constant dense<0.000000e+00> : vector<2x32xf32>
    %456 = tpu.matmul %441, %264, %cst_127 {dimension_numbers = #tpu.dot_dimension_numbers<[1], [0], [0], [1], [0, 0, 1, 1], [], []>} : vector<2x32xf32>, vector<32x32xf32>, vector<2x32xf32> -> vector<2x32xf32>
    %457 = arith.addf %124, %456 : vector<2x32xf32>
    %458 = math.tanh %457 : vector<2x32xf32>
    %cst_128 = arith.constant dense<0.000000e+00> : vector<2x32xf32>
    %459 = tpu.matmul %441, %265, %cst_128 {dimension_numbers = #tpu.dot_dimension_numbers<[1], [0], [0], [1], [0, 0, 1, 1], [], []>} : vector<2x32xf32>, vector<32x32xf32>, vector<2x32xf32> -> vector<2x32xf32>
    %460 = arith.addf %125, %459 : vector<2x32xf32>
    %461 = arith.negf %460 : vector<2x32xf32>
    %462 = math.exp %461 : vector<2x32xf32>
    %cst_129 = arith.constant 1.000000e+00 : f32
    %463 = vector.broadcast %cst_129 : f32 to vector<2x32xf32>
    %464 = arith.addf %463, %462 : vector<2x32xf32>
    %465 = arith.divf %463, %464 : vector<2x32xf32>
    %466 = arith.mulf %455, %439 : vector<2x32xf32>
    %467 = arith.mulf %448, %458 : vector<2x32xf32>
    %468 = arith.addf %466, %467 : vector<2x32xf32>
    %469 = math.tanh %468 : vector<2x32xf32>
    %470 = arith.mulf %465, %469 : vector<2x32xf32>
    %cst_130 = arith.constant dense<0.000000e+00> : vector<2x32xf32>
    %471 = tpu.matmul %470, %262, %cst_130 {dimension_numbers = #tpu.dot_dimension_numbers<[1], [0], [0], [1], [0, 0, 1, 1], [], []>} : vector<2x32xf32>, vector<32x32xf32>, vector<2x32xf32> -> vector<2x32xf32>
    %472 = arith.addf %139, %471 : vector<2x32xf32>
    %473 = arith.negf %472 : vector<2x32xf32>
    %474 = math.exp %473 : vector<2x32xf32>
    %cst_131 = arith.constant 1.000000e+00 : f32
    %475 = vector.broadcast %cst_131 : f32 to vector<2x32xf32>
    %476 = arith.addf %475, %474 : vector<2x32xf32>
    %477 = arith.divf %475, %476 : vector<2x32xf32>
    %cst_132 = arith.constant dense<0.000000e+00> : vector<2x32xf32>
    %478 = tpu.matmul %470, %263, %cst_132 {dimension_numbers = #tpu.dot_dimension_numbers<[1], [0], [0], [1], [0, 0, 1, 1], [], []>} : vector<2x32xf32>, vector<32x32xf32>, vector<2x32xf32> -> vector<2x32xf32>
    %479 = arith.addf %140, %478 : vector<2x32xf32>
    %480 = arith.negf %479 : vector<2x32xf32>
    %481 = math.exp %480 : vector<2x32xf32>
    %cst_133 = arith.constant 1.000000e+00 : f32
    %482 = vector.broadcast %cst_133 : f32 to vector<2x32xf32>
    %483 = arith.addf %482, %481 : vector<2x32xf32>
    %484 = arith.divf %482, %483 : vector<2x32xf32>
    %cst_134 = arith.constant dense<0.000000e+00> : vector<2x32xf32>
    %485 = tpu.matmul %470, %264, %cst_134 {dimension_numbers = #tpu.dot_dimension_numbers<[1], [0], [0], [1], [0, 0, 1, 1], [], []>} : vector<2x32xf32>, vector<32x32xf32>, vector<2x32xf32> -> vector<2x32xf32>
    %486 = arith.addf %141, %485 : vector<2x32xf32>
    %487 = math.tanh %486 : vector<2x32xf32>
    %cst_135 = arith.constant dense<0.000000e+00> : vector<2x32xf32>
    %488 = tpu.matmul %470, %265, %cst_135 {dimension_numbers = #tpu.dot_dimension_numbers<[1], [0], [0], [1], [0, 0, 1, 1], [], []>} : vector<2x32xf32>, vector<32x32xf32>, vector<2x32xf32> -> vector<2x32xf32>
    %489 = arith.addf %142, %488 : vector<2x32xf32>
    %490 = arith.negf %489 : vector<2x32xf32>
    %491 = math.exp %490 : vector<2x32xf32>
    %cst_136 = arith.constant 1.000000e+00 : f32
    %492 = vector.broadcast %cst_136 : f32 to vector<2x32xf32>
    %493 = arith.addf %492, %491 : vector<2x32xf32>
    %494 = arith.divf %492, %493 : vector<2x32xf32>
    %495 = arith.mulf %484, %468 : vector<2x32xf32>
    %496 = arith.mulf %477, %487 : vector<2x32xf32>
    %497 = arith.addf %495, %496 : vector<2x32xf32>
    %498 = math.tanh %497 : vector<2x32xf32>
    %499 = arith.mulf %494, %498 : vector<2x32xf32>
    %cst_137 = arith.constant dense<0.000000e+00> : vector<2x32xf32>
    %500 = tpu.matmul %499, %262, %cst_137 {dimension_numbers = #tpu.dot_dimension_numbers<[1], [0], [0], [1], [0, 0, 1, 1], [], []>} : vector<2x32xf32>, vector<32x32xf32>, vector<2x32xf32> -> vector<2x32xf32>
    %501 = arith.addf %156, %500 : vector<2x32xf32>
    %502 = arith.negf %501 : vector<2x32xf32>
    %503 = math.exp %502 : vector<2x32xf32>
    %cst_138 = arith.constant 1.000000e+00 : f32
    %504 = vector.broadcast %cst_138 : f32 to vector<2x32xf32>
    %505 = arith.addf %504, %503 : vector<2x32xf32>
    %506 = arith.divf %504, %505 : vector<2x32xf32>
    %cst_139 = arith.constant dense<0.000000e+00> : vector<2x32xf32>
    %507 = tpu.matmul %499, %263, %cst_139 {dimension_numbers = #tpu.dot_dimension_numbers<[1], [0], [0], [1], [0, 0, 1, 1], [], []>} : vector<2x32xf32>, vector<32x32xf32>, vector<2x32xf32> -> vector<2x32xf32>
    %508 = arith.addf %157, %507 : vector<2x32xf32>
    %509 = arith.negf %508 : vector<2x32xf32>
    %510 = math.exp %509 : vector<2x32xf32>
    %cst_140 = arith.constant 1.000000e+00 : f32
    %511 = vector.broadcast %cst_140 : f32 to vector<2x32xf32>
    %512 = arith.addf %511, %510 : vector<2x32xf32>
    %513 = arith.divf %511, %512 : vector<2x32xf32>
    %cst_141 = arith.constant dense<0.000000e+00> : vector<2x32xf32>
    %514 = tpu.matmul %499, %264, %cst_141 {dimension_numbers = #tpu.dot_dimension_numbers<[1], [0], [0], [1], [0, 0, 1, 1], [], []>} : vector<2x32xf32>, vector<32x32xf32>, vector<2x32xf32> -> vector<2x32xf32>
    %515 = arith.addf %158, %514 : vector<2x32xf32>
    %516 = math.tanh %515 : vector<2x32xf32>
    %cst_142 = arith.constant dense<0.000000e+00> : vector<2x32xf32>
    %517 = tpu.matmul %499, %265, %cst_142 {dimension_numbers = #tpu.dot_dimension_numbers<[1], [0], [0], [1], [0, 0, 1, 1], [], []>} : vector<2x32xf32>, vector<32x32xf32>, vector<2x32xf32> -> vector<2x32xf32>
    %518 = arith.addf %159, %517 : vector<2x32xf32>
    %519 = arith.negf %518 : vector<2x32xf32>
    %520 = math.exp %519 : vector<2x32xf32>
    %cst_143 = arith.constant 1.000000e+00 : f32
    %521 = vector.broadcast %cst_143 : f32 to vector<2x32xf32>
    %522 = arith.addf %521, %520 : vector<2x32xf32>
    %523 = arith.divf %521, %522 : vector<2x32xf32>
    %524 = arith.mulf %513, %497 : vector<2x32xf32>
    %525 = arith.mulf %506, %516 : vector<2x32xf32>
    %526 = arith.addf %524, %525 : vector<2x32xf32>
    %527 = math.tanh %526 : vector<2x32xf32>
    %528 = arith.mulf %523, %527 : vector<2x32xf32>
    %cst_144 = arith.constant dense<0.000000e+00> : vector<2x32xf32>
    %529 = tpu.matmul %528, %262, %cst_144 {dimension_numbers = #tpu.dot_dimension_numbers<[1], [0], [0], [1], [0, 0, 1, 1], [], []>} : vector<2x32xf32>, vector<32x32xf32>, vector<2x32xf32> -> vector<2x32xf32>
    %530 = arith.addf %173, %529 : vector<2x32xf32>
    %531 = arith.negf %530 : vector<2x32xf32>
    %532 = math.exp %531 : vector<2x32xf32>
    %cst_145 = arith.constant 1.000000e+00 : f32
    %533 = vector.broadcast %cst_145 : f32 to vector<2x32xf32>
    %534 = arith.addf %533, %532 : vector<2x32xf32>
    %535 = arith.divf %533, %534 : vector<2x32xf32>
    %cst_146 = arith.constant dense<0.000000e+00> : vector<2x32xf32>
    %536 = tpu.matmul %528, %263, %cst_146 {dimension_numbers = #tpu.dot_dimension_numbers<[1], [0], [0], [1], [0, 0, 1, 1], [], []>} : vector<2x32xf32>, vector<32x32xf32>, vector<2x32xf32> -> vector<2x32xf32>
    %537 = arith.addf %174, %536 : vector<2x32xf32>
    %538 = arith.negf %537 : vector<2x32xf32>
    %539 = math.exp %538 : vector<2x32xf32>
    %cst_147 = arith.constant 1.000000e+00 : f32
    %540 = vector.broadcast %cst_147 : f32 to vector<2x32xf32>
    %541 = arith.addf %540, %539 : vector<2x32xf32>
    %542 = arith.divf %540, %541 : vector<2x32xf32>
    %cst_148 = arith.constant dense<0.000000e+00> : vector<2x32xf32>
    %543 = tpu.matmul %528, %264, %cst_148 {dimension_numbers = #tpu.dot_dimension_numbers<[1], [0], [0], [1], [0, 0, 1, 1], [], []>} : vector<2x32xf32>, vector<32x32xf32>, vector<2x32xf32> -> vector<2x32xf32>
    %544 = arith.addf %175, %543 : vector<2x32xf32>
    %545 = math.tanh %544 : vector<2x32xf32>
    %cst_149 = arith.constant dense<0.000000e+00> : vector<2x32xf32>
    %546 = tpu.matmul %528, %265, %cst_149 {dimension_numbers = #tpu.dot_dimension_numbers<[1], [0], [0], [1], [0, 0, 1, 1], [], []>} : vector<2x32xf32>, vector<32x32xf32>, vector<2x32xf32> -> vector<2x32xf32>
    %547 = arith.addf %176, %546 : vector<2x32xf32>
    %548 = arith.negf %547 : vector<2x32xf32>
    %549 = math.exp %548 : vector<2x32xf32>
    %cst_150 = arith.constant 1.000000e+00 : f32
    %550 = vector.broadcast %cst_150 : f32 to vector<2x32xf32>
    %551 = arith.addf %550, %549 : vector<2x32xf32>
    %552 = arith.divf %550, %551 : vector<2x32xf32>
    %553 = arith.mulf %542, %526 : vector<2x32xf32>
    %554 = arith.mulf %535, %545 : vector<2x32xf32>
    %555 = arith.addf %553, %554 : vector<2x32xf32>
    %556 = math.tanh %555 : vector<2x32xf32>
    %557 = arith.mulf %552, %556 : vector<2x32xf32>
    %cst_151 = arith.constant dense<0.000000e+00> : vector<2x32xf32>
    %558 = tpu.matmul %557, %262, %cst_151 {dimension_numbers = #tpu.dot_dimension_numbers<[1], [0], [0], [1], [0, 0, 1, 1], [], []>} : vector<2x32xf32>, vector<32x32xf32>, vector<2x32xf32> -> vector<2x32xf32>
    %559 = arith.addf %190, %558 : vector<2x32xf32>
    %560 = arith.negf %559 : vector<2x32xf32>
    %561 = math.exp %560 : vector<2x32xf32>
    %cst_152 = arith.constant 1.000000e+00 : f32
    %562 = vector.broadcast %cst_152 : f32 to vector<2x32xf32>
    %563 = arith.addf %562, %561 : vector<2x32xf32>
    %564 = arith.divf %562, %563 : vector<2x32xf32>
    %cst_153 = arith.constant dense<0.000000e+00> : vector<2x32xf32>
    %565 = tpu.matmul %557, %263, %cst_153 {dimension_numbers = #tpu.dot_dimension_numbers<[1], [0], [0], [1], [0, 0, 1, 1], [], []>} : vector<2x32xf32>, vector<32x32xf32>, vector<2x32xf32> -> vector<2x32xf32>
    %566 = arith.addf %191, %565 : vector<2x32xf32>
    %567 = arith.negf %566 : vector<2x32xf32>
    %568 = math.exp %567 : vector<2x32xf32>
    %cst_154 = arith.constant 1.000000e+00 : f32
    %569 = vector.broadcast %cst_154 : f32 to vector<2x32xf32>
    %570 = arith.addf %569, %568 : vector<2x32xf32>
    %571 = arith.divf %569, %570 : vector<2x32xf32>
    %cst_155 = arith.constant dense<0.000000e+00> : vector<2x32xf32>
    %572 = tpu.matmul %557, %264, %cst_155 {dimension_numbers = #tpu.dot_dimension_numbers<[1], [0], [0], [1], [0, 0, 1, 1], [], []>} : vector<2x32xf32>, vector<32x32xf32>, vector<2x32xf32> -> vector<2x32xf32>
    %573 = arith.addf %192, %572 : vector<2x32xf32>
    %574 = math.tanh %573 : vector<2x32xf32>
    %cst_156 = arith.constant dense<0.000000e+00> : vector<2x32xf32>
    %575 = tpu.matmul %557, %265, %cst_156 {dimension_numbers = #tpu.dot_dimension_numbers<[1], [0], [0], [1], [0, 0, 1, 1], [], []>} : vector<2x32xf32>, vector<32x32xf32>, vector<2x32xf32> -> vector<2x32xf32>
    %576 = arith.addf %193, %575 : vector<2x32xf32>
    %577 = arith.negf %576 : vector<2x32xf32>
    %578 = math.exp %577 : vector<2x32xf32>
    %cst_157 = arith.constant 1.000000e+00 : f32
    %579 = vector.broadcast %cst_157 : f32 to vector<2x32xf32>
    %580 = arith.addf %579, %578 : vector<2x32xf32>
    %581 = arith.divf %579, %580 : vector<2x32xf32>
    %582 = arith.mulf %571, %555 : vector<2x32xf32>
    %583 = arith.mulf %564, %574 : vector<2x32xf32>
    %584 = arith.addf %582, %583 : vector<2x32xf32>
    %585 = math.tanh %584 : vector<2x32xf32>
    %586 = arith.mulf %581, %585 : vector<2x32xf32>
    %cst_158 = arith.constant dense<0.000000e+00> : vector<2x32xf32>
    %587 = tpu.matmul %586, %262, %cst_158 {dimension_numbers = #tpu.dot_dimension_numbers<[1], [0], [0], [1], [0, 0, 1, 1], [], []>} : vector<2x32xf32>, vector<32x32xf32>, vector<2x32xf32> -> vector<2x32xf32>
    %588 = arith.addf %207, %587 : vector<2x32xf32>
    %589 = arith.negf %588 : vector<2x32xf32>
    %590 = math.exp %589 : vector<2x32xf32>
    %cst_159 = arith.constant 1.000000e+00 : f32
    %591 = vector.broadcast %cst_159 : f32 to vector<2x32xf32>
    %592 = arith.addf %591, %590 : vector<2x32xf32>
    %593 = arith.divf %591, %592 : vector<2x32xf32>
    %cst_160 = arith.constant dense<0.000000e+00> : vector<2x32xf32>
    %594 = tpu.matmul %586, %263, %cst_160 {dimension_numbers = #tpu.dot_dimension_numbers<[1], [0], [0], [1], [0, 0, 1, 1], [], []>} : vector<2x32xf32>, vector<32x32xf32>, vector<2x32xf32> -> vector<2x32xf32>
    %595 = arith.addf %208, %594 : vector<2x32xf32>
    %596 = arith.negf %595 : vector<2x32xf32>
    %597 = math.exp %596 : vector<2x32xf32>
    %cst_161 = arith.constant 1.000000e+00 : f32
    %598 = vector.broadcast %cst_161 : f32 to vector<2x32xf32>
    %599 = arith.addf %598, %597 : vector<2x32xf32>
    %600 = arith.divf %598, %599 : vector<2x32xf32>
    %cst_162 = arith.constant dense<0.000000e+00> : vector<2x32xf32>
    %601 = tpu.matmul %586, %264, %cst_162 {dimension_numbers = #tpu.dot_dimension_numbers<[1], [0], [0], [1], [0, 0, 1, 1], [], []>} : vector<2x32xf32>, vector<32x32xf32>, vector<2x32xf32> -> vector<2x32xf32>
    %602 = arith.addf %209, %601 : vector<2x32xf32>
    %603 = math.tanh %602 : vector<2x32xf32>
    %cst_163 = arith.constant dense<0.000000e+00> : vector<2x32xf32>
    %604 = tpu.matmul %586, %265, %cst_163 {dimension_numbers = #tpu.dot_dimension_numbers<[1], [0], [0], [1], [0, 0, 1, 1], [], []>} : vector<2x32xf32>, vector<32x32xf32>, vector<2x32xf32> -> vector<2x32xf32>
    %605 = arith.addf %210, %604 : vector<2x32xf32>
    %606 = arith.negf %605 : vector<2x32xf32>
    %607 = math.exp %606 : vector<2x32xf32>
    %cst_164 = arith.constant 1.000000e+00 : f32
    %608 = vector.broadcast %cst_164 : f32 to vector<2x32xf32>
    %609 = arith.addf %608, %607 : vector<2x32xf32>
    %610 = arith.divf %608, %609 : vector<2x32xf32>
    %611 = arith.mulf %600, %584 : vector<2x32xf32>
    %612 = arith.mulf %593, %603 : vector<2x32xf32>
    %613 = arith.addf %611, %612 : vector<2x32xf32>
    %614 = math.tanh %613 : vector<2x32xf32>
    %615 = arith.mulf %610, %614 : vector<2x32xf32>
    %cst_165 = arith.constant dense<0.000000e+00> : vector<2x32xf32>
    %616 = tpu.matmul %615, %262, %cst_165 {dimension_numbers = #tpu.dot_dimension_numbers<[1], [0], [0], [1], [0, 0, 1, 1], [], []>} : vector<2x32xf32>, vector<32x32xf32>, vector<2x32xf32> -> vector<2x32xf32>
    %617 = arith.addf %224, %616 : vector<2x32xf32>
    %618 = arith.negf %617 : vector<2x32xf32>
    %619 = math.exp %618 : vector<2x32xf32>
    %cst_166 = arith.constant 1.000000e+00 : f32
    %620 = vector.broadcast %cst_166 : f32 to vector<2x32xf32>
    %621 = arith.addf %620, %619 : vector<2x32xf32>
    %622 = arith.divf %620, %621 : vector<2x32xf32>
    %cst_167 = arith.constant dense<0.000000e+00> : vector<2x32xf32>
    %623 = tpu.matmul %615, %263, %cst_167 {dimension_numbers = #tpu.dot_dimension_numbers<[1], [0], [0], [1], [0, 0, 1, 1], [], []>} : vector<2x32xf32>, vector<32x32xf32>, vector<2x32xf32> -> vector<2x32xf32>
    %624 = arith.addf %225, %623 : vector<2x32xf32>
    %625 = arith.negf %624 : vector<2x32xf32>
    %626 = math.exp %625 : vector<2x32xf32>
    %cst_168 = arith.constant 1.000000e+00 : f32
    %627 = vector.broadcast %cst_168 : f32 to vector<2x32xf32>
    %628 = arith.addf %627, %626 : vector<2x32xf32>
    %629 = arith.divf %627, %628 : vector<2x32xf32>
    %cst_169 = arith.constant dense<0.000000e+00> : vector<2x32xf32>
    %630 = tpu.matmul %615, %264, %cst_169 {dimension_numbers = #tpu.dot_dimension_numbers<[1], [0], [0], [1], [0, 0, 1, 1], [], []>} : vector<2x32xf32>, vector<32x32xf32>, vector<2x32xf32> -> vector<2x32xf32>
    %631 = arith.addf %226, %630 : vector<2x32xf32>
    %632 = math.tanh %631 : vector<2x32xf32>
    %cst_170 = arith.constant dense<0.000000e+00> : vector<2x32xf32>
    %633 = tpu.matmul %615, %265, %cst_170 {dimension_numbers = #tpu.dot_dimension_numbers<[1], [0], [0], [1], [0, 0, 1, 1], [], []>} : vector<2x32xf32>, vector<32x32xf32>, vector<2x32xf32> -> vector<2x32xf32>
    %634 = arith.addf %227, %633 : vector<2x32xf32>
    %635 = arith.negf %634 : vector<2x32xf32>
    %636 = math.exp %635 : vector<2x32xf32>
    %cst_171 = arith.constant 1.000000e+00 : f32
    %637 = vector.broadcast %cst_171 : f32 to vector<2x32xf32>
    %638 = arith.addf %637, %636 : vector<2x32xf32>
    %639 = arith.divf %637, %638 : vector<2x32xf32>
    %640 = arith.mulf %629, %613 : vector<2x32xf32>
    %641 = arith.mulf %622, %632 : vector<2x32xf32>
    %642 = arith.addf %640, %641 : vector<2x32xf32>
    %643 = math.tanh %642 : vector<2x32xf32>
    %644 = arith.mulf %639, %643 : vector<2x32xf32>
    %cst_172 = arith.constant dense<0.000000e+00> : vector<2x32xf32>
    %645 = tpu.matmul %644, %262, %cst_172 {dimension_numbers = #tpu.dot_dimension_numbers<[1], [0], [0], [1], [0, 0, 1, 1], [], []>} : vector<2x32xf32>, vector<32x32xf32>, vector<2x32xf32> -> vector<2x32xf32>
    %646 = arith.addf %241, %645 : vector<2x32xf32>
    %647 = arith.negf %646 : vector<2x32xf32>
    %648 = math.exp %647 : vector<2x32xf32>
    %cst_173 = arith.constant 1.000000e+00 : f32
    %649 = vector.broadcast %cst_173 : f32 to vector<2x32xf32>
    %650 = arith.addf %649, %648 : vector<2x32xf32>
    %651 = arith.divf %649, %650 : vector<2x32xf32>
    %cst_174 = arith.constant dense<0.000000e+00> : vector<2x32xf32>
    %652 = tpu.matmul %644, %263, %cst_174 {dimension_numbers = #tpu.dot_dimension_numbers<[1], [0], [0], [1], [0, 0, 1, 1], [], []>} : vector<2x32xf32>, vector<32x32xf32>, vector<2x32xf32> -> vector<2x32xf32>
    %653 = arith.addf %242, %652 : vector<2x32xf32>
    %654 = arith.negf %653 : vector<2x32xf32>
    %655 = math.exp %654 : vector<2x32xf32>
    %cst_175 = arith.constant 1.000000e+00 : f32
    %656 = vector.broadcast %cst_175 : f32 to vector<2x32xf32>
    %657 = arith.addf %656, %655 : vector<2x32xf32>
    %658 = arith.divf %656, %657 : vector<2x32xf32>
    %cst_176 = arith.constant dense<0.000000e+00> : vector<2x32xf32>
    %659 = tpu.matmul %644, %264, %cst_176 {dimension_numbers = #tpu.dot_dimension_numbers<[1], [0], [0], [1], [0, 0, 1, 1], [], []>} : vector<2x32xf32>, vector<32x32xf32>, vector<2x32xf32> -> vector<2x32xf32>
    %660 = arith.addf %243, %659 : vector<2x32xf32>
    %661 = math.tanh %660 : vector<2x32xf32>
    %cst_177 = arith.constant dense<0.000000e+00> : vector<2x32xf32>
    %662 = tpu.matmul %644, %265, %cst_177 {dimension_numbers = #tpu.dot_dimension_numbers<[1], [0], [0], [1], [0, 0, 1, 1], [], []>} : vector<2x32xf32>, vector<32x32xf32>, vector<2x32xf32> -> vector<2x32xf32>
    %663 = arith.addf %244, %662 : vector<2x32xf32>
    %664 = arith.negf %663 : vector<2x32xf32>
    %665 = math.exp %664 : vector<2x32xf32>
    %cst_178 = arith.constant 1.000000e+00 : f32
    %666 = vector.broadcast %cst_178 : f32 to vector<2x32xf32>
    %667 = arith.addf %666, %665 : vector<2x32xf32>
    %668 = arith.divf %666, %667 : vector<2x32xf32>
    %669 = arith.mulf %658, %642 : vector<2x32xf32>
    %670 = arith.mulf %651, %661 : vector<2x32xf32>
    %671 = arith.addf %669, %670 : vector<2x32xf32>
    %672 = math.tanh %671 : vector<2x32xf32>
    %673 = arith.mulf %668, %672 : vector<2x32xf32>
    %cst_179 = arith.constant dense<0.000000e+00> : vector<2x32xf32>
    %674 = tpu.matmul %673, %262, %cst_179 {dimension_numbers = #tpu.dot_dimension_numbers<[1], [0], [0], [1], [0, 0, 1, 1], [], []>} : vector<2x32xf32>, vector<32x32xf32>, vector<2x32xf32> -> vector<2x32xf32>
    %675 = arith.addf %258, %674 : vector<2x32xf32>
    %676 = arith.negf %675 : vector<2x32xf32>
    %677 = math.exp %676 : vector<2x32xf32>
    %cst_180 = arith.constant 1.000000e+00 : f32
    %678 = vector.broadcast %cst_180 : f32 to vector<2x32xf32>
    %679 = arith.addf %678, %677 : vector<2x32xf32>
    %680 = arith.divf %678, %679 : vector<2x32xf32>
    %cst_181 = arith.constant dense<0.000000e+00> : vector<2x32xf32>
    %681 = tpu.matmul %673, %263, %cst_181 {dimension_numbers = #tpu.dot_dimension_numbers<[1], [0], [0], [1], [0, 0, 1, 1], [], []>} : vector<2x32xf32>, vector<32x32xf32>, vector<2x32xf32> -> vector<2x32xf32>
    %682 = arith.addf %259, %681 : vector<2x32xf32>
    %683 = arith.negf %682 : vector<2x32xf32>
    %684 = math.exp %683 : vector<2x32xf32>
    %cst_182 = arith.constant 1.000000e+00 : f32
    %685 = vector.broadcast %cst_182 : f32 to vector<2x32xf32>
    %686 = arith.addf %685, %684 : vector<2x32xf32>
    %687 = arith.divf %685, %686 : vector<2x32xf32>
    %cst_183 = arith.constant dense<0.000000e+00> : vector<2x32xf32>
    %688 = tpu.matmul %673, %264, %cst_183 {dimension_numbers = #tpu.dot_dimension_numbers<[1], [0], [0], [1], [0, 0, 1, 1], [], []>} : vector<2x32xf32>, vector<32x32xf32>, vector<2x32xf32> -> vector<2x32xf32>
    %689 = arith.addf %260, %688 : vector<2x32xf32>
    %690 = math.tanh %689 : vector<2x32xf32>
    %cst_184 = arith.constant dense<0.000000e+00> : vector<2x32xf32>
    %691 = tpu.matmul %673, %265, %cst_184 {dimension_numbers = #tpu.dot_dimension_numbers<[1], [0], [0], [1], [0, 0, 1, 1], [], []>} : vector<2x32xf32>, vector<32x32xf32>, vector<2x32xf32> -> vector<2x32xf32>
    %692 = arith.addf %261, %691 : vector<2x32xf32>
    %693 = arith.negf %692 : vector<2x32xf32>
    %694 = math.exp %693 : vector<2x32xf32>
    %cst_185 = arith.constant 1.000000e+00 : f32
    %695 = vector.broadcast %cst_185 : f32 to vector<2x32xf32>
    %696 = arith.addf %695, %694 : vector<2x32xf32>
    %697 = arith.divf %695, %696 : vector<2x32xf32>
    %698 = arith.mulf %687, %671 : vector<2x32xf32>
    %699 = arith.mulf %680, %690 : vector<2x32xf32>
    %700 = arith.addf %698, %699 : vector<2x32xf32>
    %701 = math.tanh %700 : vector<2x32xf32>
    %702 = arith.mulf %697, %701 : vector<2x32xf32>
    %c0_186 = arith.constant 0 : index
    %c0_187 = arith.constant 0 : index
    %703 = vector.load %arg10[%c0_186, %c0_187] : memref<32x32xf32, #tpu.memory_space<vmem>>, vector<32x32xf32>
    %cst_188 = arith.constant dense<0.000000e+00> : vector<2x32xf32>
    %704 = tpu.matmul %702, %703, %cst_188 {dimension_numbers = #tpu.dot_dimension_numbers<[1], [0], [0], [1], [0, 0, 1, 1], [], []>} : vector<2x32xf32>, vector<32x32xf32>, vector<2x32xf32> -> vector<2x32xf32>
    %c0_189 = arith.constant 0 : index
    %c0_190 = arith.constant 0 : index
    %705 = vector.load %arg11[%c0_189, %c0_190] : memref<1x32xf32, #tpu.memory_space<vmem>>, vector<1x32xf32>
    %706 = vector.broadcast %705 : vector<1x32xf32> to vector<2x32xf32>
    %707 = arith.addf %704, %706 : vector<2x32xf32>
    %708 = arith.mulf %707, %707 : vector<2x32xf32>
    %cst_191 = arith.constant dense<0.000000e+00> : vector<2xf32>
    %709 = vector.multi_reduction <add>, %708, %cst_191 [1] : vector<2x32xf32> to vector<2xf32>
    %710 = vector.shape_cast %709 : vector<2xf32> to vector<2x1xf32>
    %cst_192 = arith.constant 9.99999996E-13 : f32
    %711 = vector.broadcast %cst_192 : f32 to vector<2x1xf32>
    %712 = arith.addf %710, %711 : vector<2x1xf32>
    %713 = math.rsqrt %712 : vector<2x1xf32>
    %714 = vector.broadcast %713 : vector<2x1xf32> to vector<2x32xf32>
    %715 = arith.mulf %707, %714 : vector<2x32xf32>
    %c0_193 = arith.constant 0 : index
    %c0_194 = arith.constant 0 : index
    %716 = vector.load %arg12[%c0_193, %c0_194] : memref<2x32xf32, #tpu.memory_space<vmem>>, vector<2x32xf32>
    %717 = arith.subf %715, %716 : vector<2x32xf32>
    %718 = arith.mulf %717, %717 : vector<2x32xf32>
    %719 = vector.shape_cast %718 : vector<2x32xf32> to vector<1x2x32xf32>
    %cst_195 = arith.constant dense<0.000000e+00> : vector<1xf32>
    %720 = vector.multi_reduction <add>, %719, %cst_195 [1, 2] : vector<1x2x32xf32> to vector<1xf32>
    %721 = vector.shape_cast %720 : vector<1xf32> to vector<1x1x1xf32>
    %722 = vector.extract %721[0, 0, 0] : f32 from vector<1x1x1xf32>
    %723 = vector.broadcast %722 : f32 to vector<1x1xf32>
    %cst_196 = arith.constant 1.562500e-02 : f32
    %724 = vector.broadcast %cst_196 : f32 to vector<1x1xf32>
    %725 = arith.mulf %723, %724 : vector<1x1xf32>
    %c0_197 = arith.constant 0 : index
    %c0_198 = arith.constant 0 : index
    %726 = vector.load %arg13[%c0_197, %c0_198] : memref<1x1xf32, #tpu.memory_space<vmem>>, vector<1x1xf32>
    tpu.vector_store %arg13[%c0_197, %c0_198], %725 {strides = array<i32>} : memref<1x1xf32, #tpu.memory_space<vmem>>, vector<1x1xf32>,
    return
  }
}

</mosaic_0001>

<llo_original>
// kernel: tpu_custom_call.1
$region0: #{tpu_custom_call.1}
  #allocation0 [shape = 'u32[]', space=smem, size = 0x4, offset = 0x4, fixed_abs, tag = 'smem constant byte address 0x4 - core index']
  #allocation1 [shape = 'u32[72,128]{1,0:T(1,128)}', space=vmem, size = 0x9000, scoped, tag = 'internal scratch']
  %s0 = inlined_call_operand.hbm [shape: f32[2,1024], index: 0, kind: input, shape index: {}]
  %s1 = inlined_call_operand.hbm [shape: f32[1024,512], index: 1, kind: input, shape index: {}]
  %s2 = inlined_call_operand.hbm [shape: f32[64,128], index: 2, kind: input, shape index: {}]
  %s3 = inlined_call_operand.vmem [shape: f32[64,16], index: 3, kind: input, shape index: {}]
  %s4 = inlined_call_operand.hbm [shape: f32[16,128], index: 4, kind: input, shape index: {}]
  %s5 = inlined_call_operand.hbm [shape: f32[1,128], index: 5, kind: input, shape index: {}]
  %s6 = inlined_call_operand.hbm [shape: f32[32,32], index: 6, kind: input, shape index: {}]
  %s7 = inlined_call_operand.hbm [shape: f32[32,32], index: 7, kind: input, shape index: {}]
  %s8 = inlined_call_operand.hbm [shape: f32[32,32], index: 8, kind: input, shape index: {}]
  %s9 = inlined_call_operand.hbm [shape: f32[32,32], index: 9, kind: input, shape index: {}]
  %s10 = inlined_call_operand.hbm [shape: f32[32,32], index: 10, kind: input, shape index: {}]
  %s11 = inlined_call_operand.hbm [shape: f32[1,32], index: 11, kind: input, shape index: {}]
  %s12 = inlined_call_operand.hbm [shape: f32[2,32], index: 12, kind: input, shape index: {}]
  %s13 = inlined_call_operand.hbm [shape: f32[1,1], index: 13, kind: output, shape index: {}]
  %s14 = sld [smem:[#allocation0]]
  $region110: #{tpu_custom_call.1} parent=0
    _
  %s16 = ssub.s32 1, %s14
  %s17 = scalar_select 0, %s16, %s14
  $region1: #{tpu_custom_call.1} parent=0
    #allocation2 [shape = 'u8[8192]{0}', space=vmem, size = 0x2000, scoped, tag = 'input window, operand 0, single buffered']
    #allocation3 [shape = 's32[1]{0}', space=sflag, size = 0x4, scoped, tag = 'scoped memory for tpu_custom_call.1']
    #allocation4 [shape = 's32[1]{0}', space=sflag, size = 0x4, scoped, tag = 'scoped memory for tpu_custom_call.1']
    #allocation5 [shape = 'u8[2097152]{0}', space=vmem, size = 0x200000, scoped, tag = 'input window, operand 1, single buffered']
    #allocation6 [shape = 's32[1]{0}', space=sflag, size = 0x4, scoped, tag = 'scoped memory for tpu_custom_call.1']
    #allocation7 [shape = 'u8[32768]{0}', space=vmem, size = 0x8000, scoped, tag = 'input window, operand 2, single buffered']
    #allocation8 [shape = 'u8[8192]{0}', space=vmem, size = 0x2000, scoped, tag = 'input window, operand 4, single buffered']
    #allocation9 [shape = 's32[1]{0}', space=sflag, size = 0x4, scoped, tag = 'scoped memory for tpu_custom_call.1']
    #allocation10 [shape = 'u8[512]{0}', space=vmem, size = 0x400, scoped, tag = 'input window, operand 5, single buffered']
    #allocation11 [shape = 'u8[16384]{0}', space=vmem, size = 0x4000, scoped, tag = 'input window, operand 6, single buffered']
    #allocation12 [shape = 's32[1]{0}', space=sflag, size = 0x4, scoped, tag = 'scoped memory for tpu_custom_call.1']
    #allocation13 [shape = 'u8[16384]{0}', space=vmem, size = 0x4000, scoped, tag = 'input window, operand 7, single buffered']
    #allocation14 [shape = 'u8[16384]{0}', space=vmem, size = 0x4000, scoped, tag = 'input window, operand 8, single buffered']
    #allocation15 [shape = 's32[1]{0}', space=sflag, size = 0x4, scoped, tag = 'scoped memory for tpu_custom_call.1']
    #allocation16 [shape = 'u8[16384]{0}', space=vmem, size = 0x4000, scoped, tag = 'input window, operand 9, single buffered']
    #allocation17 [shape = 'u8[16384]{0}', space=vmem, size = 0x4000, scoped, tag = 'input window, operand 10, single buffered']
    #allocation18 [shape = 's32[1]{0}', space=sflag, size = 0x4, scoped, tag = 'scoped memory for tpu_custom_call.1']
    #allocation19 [shape = 'u8[512]{0}', space=vmem, size = 0x400, scoped, tag = 'input window, operand 11, single buffered']
    #allocation20 [shape = 'u8[1024]{0}', space=vmem, size = 0x400, scoped, tag = 'input window, operand 12, single buffered']
    #allocation21 [shape = 's32[1]{0}', space=sflag, size = 0x4, scoped, tag = 'scoped memory for tpu_custom_call.1']
    #allocation22 [shape = 'u8[512]{0}', space=vmem, size = 0x400, scoped, tag = 'output window, operand 0, single buffered']
    %18 = vsyncpa [#allocation3], 0
    %19 = vsyncpa [#allocation6], 0
    %20 = vsyncpa [#allocation9], 0
    %21 = vsyncpa [#allocation12], 0
    %22 = vsyncpa [#allocation15], 0
    %23 = vsyncpa [#allocation18], 0
    %24 = vsyncpa [#allocation21], 0
    %25 = vsyncpa [#allocation4], 0
    // Predicated region
    $region2: #{tpu_custom_call.1} parent=1 // pred_check
      _
    $region3: #{tpu_custom_call.1} parent=1 // pred_check_branch
      %27 = sbr.rel (0) target = $region5
    $region4: #{tpu_custom_call.1} parent=1 // pred_region
      %29 = vsyncadd [#allocation3], 0
      %s31 = sshll.u32 %s0, 4
      %s32 = int_to_ptr.hbm [resolvable:$true] %s31
      %s33 = sshll.u32 [#allocation2], 4
      %s34 = int_to_ptr.vmem [resolvable:$true] %s33
      %36 = dma.hbm_to_vmem [thread:$0]  %s32, 256, %s34, [#allocation3]
    $region5: #{tpu_custom_call.1} parent=1 // pred_fallthru
      _
    // Predicated region
    $region6: #{tpu_custom_call.1} parent=1 // pred_check
      _
    $region7: #{tpu_custom_call.1} parent=1 // pred_check_branch
      %38 = sbr.rel (0) target = $region9
    $region8: #{tpu_custom_call.1} parent=1 // pred_region
      %40 = vsyncadd [#allocation6], 0
      %s41 = sshll.u32 %s1, 4
      %s42 = int_to_ptr.hbm [resolvable:$true] %s41
      %s43 = sshll.u32 [#allocation5], 4
      %s44 = int_to_ptr.vmem [resolvable:$true] %s43
      %49 = dma.hbm_to_vmem [thread:$0]  %s42, 65536, %s44, [#allocation6], 512, 512, 32
    $region9: #{tpu_custom_call.1} parent=1 // pred_fallthru
      _
    // Predicated region
    $region10: #{tpu_custom_call.1} parent=1 // pred_check
      _
    $region11: #{tpu_custom_call.1} parent=1 // pred_check_branch
      %51 = sbr.rel (0) target = $region13
    $region12: #{tpu_custom_call.1} parent=1 // pred_region
      %53 = vsyncadd [#allocation6], 0
      %s54 = sshll.u32 %s2, 4
      %s55 = int_to_ptr.hbm [resolvable:$true] %s54
      %s56 = sshll.u32 [#allocation7], 4
      %s57 = int_to_ptr.vmem [resolvable:$true] %s56
      %62 = dma.hbm_to_vmem [thread:$0]  %s55, 1024, %s57, [#allocation6], 128, 128, 8
    $region13: #{tpu_custom_call.1} parent=1 // pred_fallthru
      _
    // Predicated region
    $region14: #{tpu_custom_call.1} parent=1 // pred_check
      _
    $region15: #{tpu_custom_call.1} parent=1 // pred_check_branch
      %64 = sbr.rel (0) target = $region17
    $region16: #{tpu_custom_call.1} parent=1 // pred_region
      _
    $region17: #{tpu_custom_call.1} parent=1 // pred_fallthru
      _
    // Predicated region
    $region18: #{tpu_custom_call.1} parent=1 // pred_check
      _
    $region19: #{tpu_custom_call.1} parent=1 // pred_check_branch
      %66 = sbr.rel (0) target = $region21
    $region20: #{tpu_custom_call.1} parent=1 // pred_region
      %68 = vsyncadd [#allocation9], 0
      %s69 = sshll.u32 %s4, 4
      %s70 = int_to_ptr.hbm [resolvable:$true] %s69
      %s71 = sshll.u32 [#allocation8], 4
      %s72 = int_to_ptr.vmem [resolvable:$true] %s71
      %77 = dma.hbm_to_vmem [thread:$0]  %s70, 256, %s72, [#allocation9], 128, 128, 8
    $region21: #{tpu_custom_call.1} parent=1 // pred_fallthru
      _
    // Predicated region
    $region22: #{tpu_custom_call.1} parent=1 // pred_check
      _
    $region23: #{tpu_custom_call.1} parent=1 // pred_check_branch
      %79 = sbr.rel (0) target = $region25
    $region24: #{tpu_custom_call.1} parent=1 // pred_region
      %81 = vsyncadd [#allocation9], 0
      %s83 = sshll.u32 %s5, 4
      %s84 = int_to_ptr.hbm [resolvable:$true] %s83
      %s85 = sshll.u32 [#allocation10], 4
      %s86 = int_to_ptr.vmem [resolvable:$true] %s85
      %88 = dma.hbm_to_vmem [thread:$0]  %s84, 16, %s86, [#allocation9]
    $region25: #{tpu_custom_call.1} parent=1 // pred_fallthru
      _
    // Predicated region
    $region26: #{tpu_custom_call.1} parent=1 // pred_check
      _
    $region27: #{tpu_custom_call.1} parent=1 // pred_check_branch
      %90 = sbr.rel (0) target = $region29
    $region28: #{tpu_custom_call.1} parent=1 // pred_region
      %92 = vsyncadd [#allocation12], 0
      %s93 = sshll.u32 %s6, 4
      %s94 = int_to_ptr.hbm [resolvable:$true] %s93
      %s95 = sshll.u32 [#allocation11], 4
      %s96 = int_to_ptr.vmem [resolvable:$true] %s95
      %101 = dma.hbm_to_vmem [thread:$0]  %s94, 512, %s96, [#allocation12], 128, 128, 8
    $region29: #{tpu_custom_call.1} parent=1 // pred_fallthru
      _
    // Predicated region
    $region30: #{tpu_custom_call.1} parent=1 // pred_check
      _
    $region31: #{tpu_custom_call.1} parent=1 // pred_check_branch
      %103 = sbr.rel (0) target = $region33
    $region32: #{tpu_custom_call.1} parent=1 // pred_region
      %105 = vsyncadd [#allocation12], 0
      %s106 = sshll.u32 %s7, 4
      %s107 = int_to_ptr.hbm [resolvable:$true] %s106
      %s108 = sshll.u32 [#allocation13], 4
      %s109 = int_to_ptr.vmem [resolvable:$true] %s108
      %114 = dma.hbm_to_vmem [thread:$0]  %s107, 512, %s109, [#allocation12], 128, 128, 8
    $region33: #{tpu_custom_call.1} parent=1 // pred_fallthru
      _
    // Predicated region
    $region34: #{tpu_custom_call.1} parent=1 // pred_check
      _
    $region35: #{tpu_custom_call.1} parent=1 // pred_check_branch
      %116 = sbr.rel (0) target = $region37
    $region36: #{tpu_custom_call.1} parent=1 // pred_region
      %118 = vsyncadd [#allocation15], 0
      %s119 = sshll.u32 %s8, 4
      %s120 = int_to_ptr.hbm [resolvable:$true] %s119
      %s121 = sshll.u32 [#allocation14], 4
      %s122 = int_to_ptr.vmem [resolvable:$true] %s121
      %127 = dma.hbm_to_vmem [thread:$0]  %s120, 512, %s122, [#allocation15], 128, 128, 8
    $region37: #{tpu_custom_call.1} parent=1 // pred_fallthru
      _
    // Predicated region
    $region38: #{tpu_custom_call.1} parent=1 // pred_check
      _
    $region39: #{tpu_custom_call.1} parent=1 // pred_check_branch
      %129 = sbr.rel (0) target = $region41
    $region40: #{tpu_custom_call.1} parent=1 // pred_region
      %131 = vsyncadd [#allocation15], 0
      %s132 = sshll.u32 %s9, 4
      %s133 = int_to_ptr.hbm [resolvable:$true] %s132
      %s134 = sshll.u32 [#allocation16], 4
      %s135 = int_to_ptr.vmem [resolvable:$true] %s134
      %140 = dma.hbm_to_vmem [thread:$0]  %s133, 512, %s135, [#allocation15], 128, 128, 8
    $region41: #{tpu_custom_call.1} parent=1 // pred_fallthru
      _
    // Predicated region
    $region42: #{tpu_custom_call.1} parent=1 // pred_check
      _
    $region43: #{tpu_custom_call.1} parent=1 // pred_check_branch
      %142 = sbr.rel (0) target = $region45
    $region44: #{tpu_custom_call.1} parent=1 // pred_region
      %144 = vsyncadd [#allocation18], 0
      %s145 = sshll.u32 %s10, 4
      %s146 = int_to_ptr.hbm [resolvable:$true] %s145
      %s147 = sshll.u32 [#allocation17], 4
      %s148 = int_to_ptr.vmem [resolvable:$true] %s147
      %153 = dma.hbm_to_vmem [thread:$0]  %s146, 512, %s148, [#allocation18], 128, 128, 8
    $region45: #{tpu_custom_call.1} parent=1 // pred_fallthru
      _
    // Predicated region
    $region46: #{tpu_custom_call.1} parent=1 // pred_check
      _
    $region47: #{tpu_custom_call.1} parent=1 // pred_check_branch
      %155 = sbr.rel (0) target = $region49
    $region48: #{tpu_custom_call.1} parent=1 // pred_region
      %157 = vsyncadd [#allocation18], 0
      %s159 = sshll.u32 %s11, 4
      %s160 = int_to_ptr.hbm [resolvable:$true] %s159
      %s161 = sshll.u32 [#allocation19], 4
      %s162 = int_to_ptr.vmem [resolvable:$true] %s161
      %164 = dma.hbm_to_vmem [thread:$0]  %s160, 16, %s162, [#allocation18]
    $region49: #{tpu_custom_call.1} parent=1 // pred_fallthru
      _
    // Predicated region
    $region50: #{tpu_custom_call.1} parent=1 // pred_check
      _
    $region51: #{tpu_custom_call.1} parent=1 // pred_check_branch
      %166 = sbr.rel (0) target = $region53
    $region52: #{tpu_custom_call.1} parent=1 // pred_region
      %168 = vsyncadd [#allocation21], 0
      %s170 = sshll.u32 %s12, 4
      %s171 = int_to_ptr.hbm [resolvable:$true] %s170
      %s172 = sshll.u32 [#allocation20], 4
      %s173 = int_to_ptr.vmem [resolvable:$true] %s172
      %175 = dma.hbm_to_vmem [thread:$0]  %s171, 32, %s173, [#allocation21]
    $region53: #{tpu_custom_call.1} parent=1 // pred_fallthru
      _
    // Predicated region
    $region54: #{tpu_custom_call.1} parent=1 // pred_check
      _
    $region55: #{tpu_custom_call.1} parent=1 // pred_check_branch
      %177 = sbr.rel (0) target = $region57
    $region56: #{tpu_custom_call.1} parent=1 // pred_region
      %179 = dma.done [#allocation3], 256
    $region57: #{tpu_custom_call.1} parent=1 // pred_fallthru
      _
    // Predicated region
    $region58: #{tpu_custom_call.1} parent=1 // pred_check
      _
    $region59: #{tpu_custom_call.1} parent=1 // pred_check_branch
      %181 = sbr.rel (0) target = $region61
    $region60: #{tpu_custom_call.1} parent=1 // pred_region
      %183 = dma.done [#allocation6], 65536
    $region61: #{tpu_custom_call.1} parent=1 // pred_fallthru
      _
    // Predicated region
    $region62: #{tpu_custom_call.1} parent=1 // pred_check
      _
    $region63: #{tpu_custom_call.1} parent=1 // pred_check_branch
      %185 = sbr.rel (0) target = $region65
    $region64: #{tpu_custom_call.1} parent=1 // pred_region
      %187 = dma.done [#allocation6], 1024
    $region65: #{tpu_custom_call.1} parent=1 // pred_fallthru
      _
    // Predicated region
    $region66: #{tpu_custom_call.1} parent=1 // pred_check
      _
    $region67: #{tpu_custom_call.1} parent=1 // pred_check_branch
      %189 = sbr.rel (0) target = $region69
    $region68: #{tpu_custom_call.1} parent=1 // pred_region
      %191 = dma.done [#allocation9], 256
    $region69: #{tpu_custom_call.1} parent=1 // pred_fallthru
      _
    // Predicated region
    $region70: #{tpu_custom_call.1} parent=1 // pred_check
      _
    $region71: #{tpu_custom_call.1} parent=1 // pred_check_branch
      %193 = sbr.rel (0) target = $region73
    $region72: #{tpu_custom_call.1} parent=1 // pred_region
      %195 = dma.done [#allocation9], 16
    $region73: #{tpu_custom_call.1} parent=1 // pred_fallthru
      _
    // Predicated region
    $region74: #{tpu_custom_call.1} parent=1 // pred_check
      _
    $region75: #{tpu_custom_call.1} parent=1 // pred_check_branch
      %197 = sbr.rel (0) target = $region77
    $region76: #{tpu_custom_call.1} parent=1 // pred_region
      %199 = dma.done [#allocation12], 512
    $region77: #{tpu_custom_call.1} parent=1 // pred_fallthru
      _
    // Predicated region
    $region78: #{tpu_custom_call.1} parent=1 // pred_check
      _
    $region79: #{tpu_custom_call.1} parent=1 // pred_check_branch
      %201 = sbr.rel (0) target = $region81
    $region80: #{tpu_custom_call.1} parent=1 // pred_region
      %203 = dma.done [#allocation12], 512
    $region81: #{tpu_custom_call.1} parent=1 // pred_fallthru
      _
    // Predicated region
    $region82: #{tpu_custom_call.1} parent=1 // pred_check
      _
    $region83: #{tpu_custom_call.1} parent=1 // pred_check_branch
      %205 = sbr.rel (0) target = $region85
    $region84: #{tpu_custom_call.1} parent=1 // pred_region
      %207 = dma.done [#allocation15], 512
    $region85: #{tpu_custom_call.1} parent=1 // pred_fallthru
      _
    // Predicated region
    $region86: #{tpu_custom_call.1} parent=1 // pred_check
      _
    $region87: #{tpu_custom_call.1} parent=1 // pred_check_branch
      %209 = sbr.rel (0) target = $region89
    $region88: #{tpu_custom_call.1} parent=1 // pred_region
      %211 = dma.done [#allocation15], 512
    $region89: #{tpu_custom_call.1} parent=1 // pred_fallthru
      _
    // Predicated region
    $region90: #{tpu_custom_call.1} parent=1 // pred_check
      _
    $region91: #{tpu_custom_call.1} parent=1 // pred_check_branch
      %213 = sbr.rel (0) target = $region93
    $region92: #{tpu_custom_call.1} parent=1 // pred_region
      %215 = dma.done [#allocation18], 512
    $region93: #{tpu_custom_call.1} parent=1 // pred_fallthru
      _
    // Predicated region
    $region94: #{tpu_custom_call.1} parent=1 // pred_check
      _
    $region95: #{tpu_custom_call.1} parent=1 // pred_check_branch
      %217 = sbr.rel (0) target = $region97
    $region96: #{tpu_custom_call.1} parent=1 // pred_region
      %219 = dma.done [#allocation18], 16
    $region97: #{tpu_custom_call.1} parent=1 // pred_fallthru
      _
    // Predicated region
    $region98: #{tpu_custom_call.1} parent=1 // pred_check
      _
    $region99: #{tpu_custom_call.1} parent=1 // pred_check_branch
      %221 = sbr.rel (0) target = $region101
    $region100: #{tpu_custom_call.1} parent=1 // pred_region
      %223 = dma.done [#allocation21], 32
    $region101: #{tpu_custom_call.1} parent=1 // pred_fallthru
      _
    %v224 = vld [vmem:[#allocation2] sm:$0xff]
    %v225 = vld [vmem:[#allocation2 + $0x8] sm:$0xff]
    %v226 = vld [vmem:[#allocation5] sm:$0xff]
    %v227 = vld [vmem:[#allocation5 + $0x8] sm:$0xff]
    %v228 = vld [vmem:[#allocation5 + $0x10] sm:$0xff]
    %v229 = vld [vmem:[#allocation5 + $0x18] sm:$0xff]
    %v230 = vld [vmem:[#allocation5 + $0x20] sm:$0xff]
    %v231 = vld [vmem:[#allocation5 + $0x28] sm:$0xff]
    %v232 = vld [vmem:[#allocation5 + $0x30] sm:$0xff]
    %v233 = vld [vmem:[#allocation5 + $0x38] sm:$0xff]
    %v234 = vld [vmem:[#allocation5 + $0x40] sm:$0xff]
    %v235 = vld [vmem:[#allocation5 + $0x48] sm:$0xff]
    %v236 = vld [vmem:[#allocation5 + $0x50] sm:$0xff]
    %v237 = vld [vmem:[#allocation5 + $0x58] sm:$0xff]
    %v238 = vld [vmem:[#allocation5 + $0x60] sm:$0xff]
    %v239 = vld [vmem:[#allocation5 + $0x68] sm:$0xff]
    %v240 = vld [vmem:[#allocation5 + $0x70] sm:$0xff]
    %v241 = vld [vmem:[#allocation5 + $0x78] sm:$0xff]
    %v242 = vld [vmem:[#allocation5 + $0x80] sm:$0xff]
    %v243 = vld [vmem:[#allocation5 + $0x88] sm:$0xff]
    %v244 = vld [vmem:[#allocation5 + $0x90] sm:$0xff]
    %v245 = vld [vmem:[#allocation5 + $0x98] sm:$0xff]
    %v246 = vld [vmem:[#allocation5 + $0xa0] sm:$0xff]
    %v247 = vld [vmem:[#allocation5 + $0xa8] sm:$0xff]
    %v248 = vld [vmem:[#allocation5 + $0xb0] sm:$0xff]
    %v249 = vld [vmem:[#allocation5 + $0xb8] sm:$0xff]
    %v250 = vld [vmem:[#allocation5 + $0xc0] sm:$0xff]
    %v251 = vld [vmem:[#allocation5 + $0xc8] sm:$0xff]
    %v252 = vld [vmem:[#allocation5 + $0xd0] sm:$0xff]
    %v253 = vld [vmem:[#allocation5 + $0xd8] sm:$0xff]
    %v254 = vld [vmem:[#allocation5 + $0xe0] sm:$0xff]
    %v255 = vld [vmem:[#allocation5 + $0xe8] sm:$0xff]
    %v256 = vld [vmem:[#allocation5 + $0xf0] sm:$0xff]
    %v257 = vld [vmem:[#allocation5 + $0xf8] sm:$0xff]
    %v258 = vld [vmem:[#allocation5 + $0x100] sm:$0xff]
    %v259 = vld [vmem:[#allocation5 + $0x108] sm:$0xff]
    %v260 = vld [vmem:[#allocation5 + $0x110] sm:$0xff]
    %v261 = vld [vmem:[#allocation5 + $0x118] sm:$0xff]
    %v262 = vld [vmem:[#allocation5 + $0x120] sm:$0xff]
    %v263 = vld [vmem:[#allocation5 + $0x128] sm:$0xff]
    %v264 = vld [vmem:[#allocation5 + $0x130] sm:$0xff]
    %v265 = vld [vmem:[#allocation5 + $0x138] sm:$0xff]
    %v266 = vld [vmem:[#allocation5 + $0x140] sm:$0xff]
    %v267 = vld [vmem:[#allocation5 + $0x148] sm:$0xff]
    %v268 = vld [vmem:[#allocation5 + $0x150] sm:$0xff]
    %v269 = vld [vmem:[#allocation5 + $0x158] sm:$0xff]
    %v270 = vld [vmem:[#allocation5 + $0x160] sm:$0xff]
    %v271 = vld [vmem:[#allocation5 + $0x168] sm:$0xff]
    %v272 = vld [vmem:[#allocation5 + $0x170] sm:$0xff]
    %v273 = vld [vmem:[#allocation5 + $0x178] sm:$0xff]
    %v274 = vld [vmem:[#allocation5 + $0x180] sm:$0xff]
    %v275 = vld [vmem:[#allocation5 + $0x188] sm:$0xff]
    %v276 = vld [vmem:[#allocation5 + $0x190] sm:$0xff]
    %v277 = vld [vmem:[#allocation5 + $0x198] sm:$0xff]
    %v278 = vld [vmem:[#allocation5 + $0x1a0] sm:$0xff]
    %v279 = vld [vmem:[#allocation5 + $0x1a8] sm:$0xff]
    %v280 = vld [vmem:[#allocation5 + $0x1b0] sm:$0xff]
    %v281 = vld [vmem:[#allocation5 + $0x1b8] sm:$0xff]
    %v282 = vld [vmem:[#allocation5 + $0x1c0] sm:$0xff]
    %v283 = vld [vmem:[#allocation5 + $0x1c8] sm:$0xff]
    %v284 = vld [vmem:[#allocation5 + $0x1d0] sm:$0xff]
    %v285 = vld [vmem:[#allocation5 + $0x1d8] sm:$0xff]
    %v286 = vld [vmem:[#allocation5 + $0x1e0] sm:$0xff]
    %v287 = vld [vmem:[#allocation5 + $0x1e8] sm:$0xff]
    %v288 = vld [vmem:[#allocation5 + $0x1f0] sm:$0xff]
    %v289 = vld [vmem:[#allocation5 + $0x1f8] sm:$0xff]
    %v290 = vld [vmem:[#allocation5 + $0x200] sm:$0xff]
    %v291 = vld [vmem:[#allocation5 + $0x208] sm:$0xff]
    %v292 = vld [vmem:[#allocation5 + $0x210] sm:$0xff]
    %v293 = vld [vmem:[#allocation5 + $0x218] sm:$0xff]
    %v294 = vld [vmem:[#allocation5 + $0x220] sm:$0xff]
    %v295 = vld [vmem:[#allocation5 + $0x228] sm:$0xff]
    %v296 = vld [vmem:[#allocation5 + $0x230] sm:$0xff]
    %v297 = vld [vmem:[#allocation5 + $0x238] sm:$0xff]
    %v298 = vld [vmem:[#allocation5 + $0x240] sm:$0xff]
    %v299 = vld [vmem:[#allocation5 + $0x248] sm:$0xff]
    %v300 = vld [vmem:[#allocation5 + $0x250] sm:$0xff]
    %v301 = vld [vmem:[#allocation5 + $0x258] sm:$0xff]
    %v302 = vld [vmem:[#allocation5 + $0x260] sm:$0xff]
    %v303 = vld [vmem:[#allocation5 + $0x268] sm:$0xff]
    %v304 = vld [vmem:[#allocation5 + $0x270] sm:$0xff]
    %v305 = vld [vmem:[#allocation5 + $0x278] sm:$0xff]
    %v306 = vld [vmem:[#allocation5 + $0x280] sm:$0xff]
    %v307 = vld [vmem:[#allocation5 + $0x288] sm:$0xff]
    %v308 = vld [vmem:[#allocation5 + $0x290] sm:$0xff]
    %v309 = vld [vmem:[#allocation5 + $0x298] sm:$0xff]
    %v310 = vld [vmem:[#allocation5 + $0x2a0] sm:$0xff]
    %v311 = vld [vmem:[#allocation5 + $0x2a8] sm:$0xff]
    %v312 = vld [vmem:[#allocation5 + $0x2b0] sm:$0xff]
    %v313 = vld [vmem:[#allocation5 + $0x2b8] sm:$0xff]
    %v314 = vld [vmem:[#allocation5 + $0x2c0] sm:$0xff]
    %v315 = vld [vmem:[#allocation5 + $0x2c8] sm:$0xff]
    %v316 = vld [vmem:[#allocation5 + $0x2d0] sm:$0xff]
    %v317 = vld [vmem:[#allocation5 + $0x2d8] sm:$0xff]
    %v318 = vld [vmem:[#allocation5 + $0x2e0] sm:$0xff]
    %v319 = vld [vmem:[#allocation5 + $0x2e8] sm:$0xff]
    %v320 = vld [vmem:[#allocation5 + $0x2f0] sm:$0xff]
    %v321 = vld [vmem:[#allocation5 + $0x2f8] sm:$0xff]
    %v322 = vld [vmem:[#allocation5 + $0x300] sm:$0xff]
    %v323 = vld [vmem:[#allocation5 + $0x308] sm:$0xff]
    %v324 = vld [vmem:[#allocation5 + $0x310] sm:$0xff]
    %v325 = vld [vmem:[#allocation5 + $0x318] sm:$0xff]
    %v326 = vld [vmem:[#allocation5 + $0x320] sm:$0xff]
    %v327 = vld [vmem:[#allocation5 + $0x328] sm:$0xff]
    %v328 = vld [vmem:[#allocation5 + $0x330] sm:$0xff]
    %v329 = vld [vmem:[#allocation5 + $0x338] sm:$0xff]
    %v330 = vld [vmem:[#allocation5 + $0x340] sm:$0xff]
    %v331 = vld [vmem:[#allocation5 + $0x348] sm:$0xff]
    %v332 = vld [vmem:[#allocation5 + $0x350] sm:$0xff]
    %v333 = vld [vmem:[#allocation5 + $0x358] sm:$0xff]
    %v334 = vld [vmem:[#allocation5 + $0x360] sm:$0xff]
    %v335 = vld [vmem:[#allocation5 + $0x368] sm:$0xff]
    %v336 = vld [vmem:[#allocation5 + $0x370] sm:$0xff]
    %v337 = vld [vmem:[#allocation5 + $0x378] sm:$0xff]
    %v338 = vld [vmem:[#allocation5 + $0x380] sm:$0xff]
    %v339 = vld [vmem:[#allocation5 + $0x388] sm:$0xff]
    %v340 = vld [vmem:[#allocation5 + $0x390] sm:$0xff]
    %v341 = vld [vmem:[#allocation5 + $0x398] sm:$0xff]
    %v342 = vld [vmem:[#allocation5 + $0x3a0] sm:$0xff]
    %v343 = vld [vmem:[#allocation5 + $0x3a8] sm:$0xff]
    %v344 = vld [vmem:[#allocation5 + $0x3b0] sm:$0xff]
    %v345 = vld [vmem:[#allocation5 + $0x3b8] sm:$0xff]
    %v346 = vld [vmem:[#allocation5 + $0x3c0] sm:$0xff]
    %v347 = vld [vmem:[#allocation5 + $0x3c8] sm:$0xff]
    %v348 = vld [vmem:[#allocation5 + $0x3d0] sm:$0xff]
    %v349 = vld [vmem:[#allocation5 + $0x3d8] sm:$0xff]
    %v350 = vld [vmem:[#allocation5 + $0x3e0] sm:$0xff]
    %v351 = vld [vmem:[#allocation5 + $0x3e8] sm:$0xff]
    %v352 = vld [vmem:[#allocation5 + $0x3f0] sm:$0xff]
    %v353 = vld [vmem:[#allocation5 + $0x3f8] sm:$0xff]
    %v354 = vld [vmem:[#allocation5 + $0x400] sm:$0xff]
    %v355 = vld [vmem:[#allocation5 + $0x408] sm:$0xff]
    %v356 = vld [vmem:[#allocation5 + $0x410] sm:$0xff]
    %v357 = vld [vmem:[#allocation5 + $0x418] sm:$0xff]
    %v358 = vld [vmem:[#allocation5 + $0x420] sm:$0xff]
    %v359 = vld [vmem:[#allocation5 + $0x428] sm:$0xff]
    %v360 = vld [vmem:[#allocation5 + $0x430] sm:$0xff]
    %v361 = vld [vmem:[#allocation5 + $0x438] sm:$0xff]
    %v362 = vld [vmem:[#allocation5 + $0x440] sm:$0xff]
    %v363 = vld [vmem:[#allocation5 + $0x448] sm:$0xff]
    %v364 = vld [vmem:[#allocation5 + $0x450] sm:$0xff]
    %v365 = vld [vmem:[#allocation5 + $0x458] sm:$0xff]
    %v366 = vld [vmem:[#allocation5 + $0x460] sm:$0xff]
    %v367 = vld [vmem:[#allocation5 + $0x468] sm:$0xff]
    %v368 = vld [vmem:[#allocation5 + $0x470] sm:$0xff]
    %v369 = vld [vmem:[#allocation5 + $0x478] sm:$0xff]
    %v370 = vld [vmem:[#allocation5 + $0x480] sm:$0xff]
    %v371 = vld [vmem:[#allocation5 + $0x488] sm:$0xff]
    %v372 = vld [vmem:[#allocation5 + $0x490] sm:$0xff]
    %v373 = vld [vmem:[#allocation5 + $0x498] sm:$0xff]
    %v374 = vld [vmem:[#allocation5 + $0x4a0] sm:$0xff]
    %v375 = vld [vmem:[#allocation5 + $0x4a8] sm:$0xff]
    %v376 = vld [vmem:[#allocation5 + $0x4b0] sm:$0xff]
    %v377 = vld [vmem:[#allocation5 + $0x4b8] sm:$0xff]
    %v378 = vld [vmem:[#allocation5 + $0x4c0] sm:$0xff]
    %v379 = vld [vmem:[#allocation5 + $0x4c8] sm:$0xff]
    %v380 = vld [vmem:[#allocation5 + $0x4d0] sm:$0xff]
    %v381 = vld [vmem:[#allocation5 + $0x4d8] sm:$0xff]
    %v382 = vld [vmem:[#allocation5 + $0x4e0] sm:$0xff]
    %v383 = vld [vmem:[#allocation5 + $0x4e8] sm:$0xff]
    %v384 = vld [vmem:[#allocation5 + $0x4f0] sm:$0xff]
    %v385 = vld [vmem:[#allocation5 + $0x4f8] sm:$0xff]
    %v386 = vld [vmem:[#allocation5 + $0x500] sm:$0xff]
    %v387 = vld [vmem:[#allocation5 + $0x508] sm:$0xff]
    %v388 = vld [vmem:[#allocation5 + $0x510] sm:$0xff]
    %v389 = vld [vmem:[#allocation5 + $0x518] sm:$0xff]
    %v390 = vld [vmem:[#allocation5 + $0x520] sm:$0xff]
    %v391 = vld [vmem:[#allocation5 + $0x528] sm:$0xff]
    %v392 = vld [vmem:[#allocation5 + $0x530] sm:$0xff]
    %v393 = vld [vmem:[#allocation5 + $0x538] sm:$0xff]
    %v394 = vld [vmem:[#allocation5 + $0x540] sm:$0xff]
    %v395 = vld [vmem:[#allocation5 + $0x548] sm:$0xff]
    %v396 = vld [vmem:[#allocation5 + $0x550] sm:$0xff]
    %v397 = vld [vmem:[#allocation5 + $0x558] sm:$0xff]
    %v398 = vld [vmem:[#allocation5 + $0x560] sm:$0xff]
    %v399 = vld [vmem:[#allocation5 + $0x568] sm:$0xff]
    %v400 = vld [vmem:[#allocation5 + $0x570] sm:$0xff]
    %v401 = vld [vmem:[#allocation5 + $0x578] sm:$0xff]
    %v402 = vld [vmem:[#allocation5 + $0x580] sm:$0xff]
    %v403 = vld [vmem:[#allocation5 + $0x588] sm:$0xff]
    %v404 = vld [vmem:[#allocation5 + $0x590] sm:$0xff]
    %v405 = vld [vmem:[#allocation5 + $0x598] sm:$0xff]
    %v406 = vld [vmem:[#allocation5 + $0x5a0] sm:$0xff]
    %v407 = vld [vmem:[#allocation5 + $0x5a8] sm:$0xff]
    %v408 = vld [vmem:[#allocation5 + $0x5b0] sm:$0xff]
    %v409 = vld [vmem:[#allocation5 + $0x5b8] sm:$0xff]
    %v410 = vld [vmem:[#allocation5 + $0x5c0] sm:$0xff]
    %v411 = vld [vmem:[#allocation5 + $0x5c8] sm:$0xff]
    %v412 = vld [vmem:[#allocation5 + $0x5d0] sm:$0xff]
    %v413 = vld [vmem:[#allocation5 + $0x5d8] sm:$0xff]
    %v414 = vld [vmem:[#allocation5 + $0x5e0] sm:$0xff]
    %v415 = vld [vmem:[#allocation5 + $0x5e8] sm:$0xff]
    %v416 = vld [vmem:[#allocation5 + $0x5f0] sm:$0xff]
    %v417 = vld [vmem:[#allocation5 + $0x5f8] sm:$0xff]
    %v418 = vld [vmem:[#allocation5 + $0x600] sm:$0xff]
    %v419 = vld [vmem:[#allocation5 + $0x608] sm:$0xff]
    %v420 = vld [vmem:[#allocation5 + $0x610] sm:$0xff]
    %v421 = vld [vmem:[#allocation5 + $0x618] sm:$0xff]
    %v422 = vld [vmem:[#allocation5 + $0x620] sm:$0xff]
    %v423 = vld [vmem:[#allocation5 + $0x628] sm:$0xff]
    %v424 = vld [vmem:[#allocation5 + $0x630] sm:$0xff]
    %v425 = vld [vmem:[#allocation5 + $0x638] sm:$0xff]
    %v426 = vld [vmem:[#allocation5 + $0x640] sm:$0xff]
    %v427 = vld [vmem:[#allocation5 + $0x648] sm:$0xff]
    %v428 = vld [vmem:[#allocation5 + $0x650] sm:$0xff]
    %v429 = vld [vmem:[#allocation5 + $0x658] sm:$0xff]
    %v430 = vld [vmem:[#allocation5 + $0x660] sm:$0xff]
    %v431 = vld [vmem:[#allocation5 + $0x668] sm:$0xff]
    %v432 = vld [vmem:[#allocation5 + $0x670] sm:$0xff]
    %v433 = vld [vmem:[#allocation5 + $0x678] sm:$0xff]
    %v434 = vld [vmem:[#allocation5 + $0x680] sm:$0xff]
    %v435 = vld [vmem:[#allocation5 + $0x688] sm:$0xff]
    %v436 = vld [vmem:[#allocation5 + $0x690] sm:$0xff]
    %v437 = vld [vmem:[#allocation5 + $0x698] sm:$0xff]
    %v438 = vld [vmem:[#allocation5 + $0x6a0] sm:$0xff]
    %v439 = vld [vmem:[#allocation5 + $0x6a8] sm:$0xff]
    %v440 = vld [vmem:[#allocation5 + $0x6b0] sm:$0xff]
    %v441 = vld [vmem:[#allocation5 + $0x6b8] sm:$0xff]
    %v442 = vld [vmem:[#allocation5 + $0x6c0] sm:$0xff]
    %v443 = vld [vmem:[#allocation5 + $0x6c8] sm:$0xff]
    %v444 = vld [vmem:[#allocation5 + $0x6d0] sm:$0xff]
    %v445 = vld [vmem:[#allocation5 + $0x6d8] sm:$0xff]
    %v446 = vld [vmem:[#allocation5 + $0x6e0] sm:$0xff]
    %v447 = vld [vmem:[#allocation5 + $0x6e8] sm:$0xff]
    %v448 = vld [vmem:[#allocation5 + $0x6f0] sm:$0xff]
    %v449 = vld [vmem:[#allocation5 + $0x6f8] sm:$0xff]
    %v450 = vld [vmem:[#allocation5 + $0x700] sm:$0xff]
    %v451 = vld [vmem:[#allocation5 + $0x708] sm:$0xff]
    %v452 = vld [vmem:[#allocation5 + $0x710] sm:$0xff]
    %v453 = vld [vmem:[#allocation5 + $0x718] sm:$0xff]
    %v454 = vld [vmem:[#allocation5 + $0x720] sm:$0xff]
    %v455 = vld [vmem:[#allocation5 + $0x728] sm:$0xff]
    %v456 = vld [vmem:[#allocation5 + $0x730] sm:$0xff]
    %v457 = vld [vmem:[#allocation5 + $0x738] sm:$0xff]
    %v458 = vld [vmem:[#allocation5 + $0x740] sm:$0xff]
    %v459 = vld [vmem:[#allocation5 + $0x748] sm:$0xff]
    %v460 = vld [vmem:[#allocation5 + $0x750] sm:$0xff]
    %v461 = vld [vmem:[#allocation5 + $0x758] sm:$0xff]
    %v462 = vld [vmem:[#allocation5 + $0x760] sm:$0xff]
    %v463 = vld [vmem:[#allocation5 + $0x768] sm:$0xff]
    %v464 = vld [vmem:[#allocation5 + $0x770] sm:$0xff]
    %v465 = vld [vmem:[#allocation5 + $0x778] sm:$0xff]
    %v466 = vld [vmem:[#allocation5 + $0x780] sm:$0xff]
    %v467 = vld [vmem:[#allocation5 + $0x788] sm:$0xff]
    %v468 = vld [vmem:[#allocation5 + $0x790] sm:$0xff]
    %v469 = vld [vmem:[#allocation5 + $0x798] sm:$0xff]
    %v470 = vld [vmem:[#allocation5 + $0x7a0] sm:$0xff]
    %v471 = vld [vmem:[#allocation5 + $0x7a8] sm:$0xff]
    %v472 = vld [vmem:[#allocation5 + $0x7b0] sm:$0xff]
    %v473 = vld [vmem:[#allocation5 + $0x7b8] sm:$0xff]
    %v474 = vld [vmem:[#allocation5 + $0x7c0] sm:$0xff]
    %v475 = vld [vmem:[#allocation5 + $0x7c8] sm:$0xff]
    %v476 = vld [vmem:[#allocation5 + $0x7d0] sm:$0xff]
    %v477 = vld [vmem:[#allocation5 + $0x7d8] sm:$0xff]
    %v478 = vld [vmem:[#allocation5 + $0x7e0] sm:$0xff]
    %v479 = vld [vmem:[#allocation5 + $0x7e8] sm:$0xff]
    %v480 = vld [vmem:[#allocation5 + $0x7f0] sm:$0xff]
    %v481 = vld [vmem:[#allocation5 + $0x7f8] sm:$0xff]
    %v482 = vld [vmem:[#allocation5 + $0x800] sm:$0xff]
    %v483 = vld [vmem:[#allocation5 + $0x808] sm:$0xff]
    %v484 = vld [vmem:[#allocation5 + $0x810] sm:$0xff]
    %v485 = vld [vmem:[#allocation5 + $0x818] sm:$0xff]
    %v486 = vld [vmem:[#allocation5 + $0x820] sm:$0xff]
    %v487 = vld [vmem:[#allocation5 + $0x828] sm:$0xff]
    %v488 = vld [vmem:[#allocation5 + $0x830] sm:$0xff]
    %v489 = vld [vmem:[#allocation5 + $0x838] sm:$0xff]
    %v490 = vld [vmem:[#allocation5 + $0x840] sm:$0xff]
    %v491 = vld [vmem:[#allocation5 + $0x848] sm:$0xff]
    %v492 = vld [vmem:[#allocation5 + $0x850] sm:$0xff]
    %v493 = vld [vmem:[#allocation5 + $0x858] sm:$0xff]
    %v494 = vld [vmem:[#allocation5 + $0x860] sm:$0xff]
    %v495 = vld [vmem:[#allocation5 + $0x868] sm:$0xff]
    %v496 = vld [vmem:[#allocation5 + $0x870] sm:$0xff]
    %v497 = vld [vmem:[#allocation5 + $0x878] sm:$0xff]
    %v498 = vld [vmem:[#allocation5 + $0x880] sm:$0xff]
    %v499 = vld [vmem:[#allocation5 + $0x888] sm:$0xff]
    %v500 = vld [vmem:[#allocation5 + $0x890] sm:$0xff]
    %v501 = vld [vmem:[#allocation5 + $0x898] sm:$0xff]
    %v502 = vld [vmem:[#allocation5 + $0x8a0] sm:$0xff]
    %v503 = vld [vmem:[#allocation5 + $0x8a8] sm:$0xff]
    %v504 = vld [vmem:[#allocation5 + $0x8b0] sm:$0xff]
    %v505 = vld [vmem:[#allocation5 + $0x8b8] sm:$0xff]
    %v506 = vld [vmem:[#allocation5 + $0x8c0] sm:$0xff]
    %v507 = vld [vmem:[#allocation5 + $0x8c8] sm:$0xff]
    %v508 = vld [vmem:[#allocation5 + $0x8d0] sm:$0xff]
    %v509 = vld [vmem:[#allocation5 + $0x8d8] sm:$0xff]
    %v510 = vld [vmem:[#allocation5 + $0x8e0] sm:$0xff]
    %v511 = vld [vmem:[#allocation5 + $0x8e8] sm:$0xff]
    %v512 = vld [vmem:[#allocation5 + $0x8f0] sm:$0xff]
    %v513 = vld [vmem:[#allocation5 + $0x8f8] sm:$0xff]
    %v514 = vld [vmem:[#allocation5 + $0x900] sm:$0xff]
    %v515 = vld [vmem:[#allocation5 + $0x908] sm:$0xff]
    %v516 = vld [vmem:[#allocation5 + $0x910] sm:$0xff]
    %v517 = vld [vmem:[#allocation5 + $0x918] sm:$0xff]
    %v518 = vld [vmem:[#allocation5 + $0x920] sm:$0xff]
    %v519 = vld [vmem:[#allocation5 + $0x928] sm:$0xff]
    %v520 = vld [vmem:[#allocation5 + $0x930] sm:$0xff]
    %v521 = vld [vmem:[#allocation5 + $0x938] sm:$0xff]
    %v522 = vld [vmem:[#allocation5 + $0x940] sm:$0xff]
    %v523 = vld [vmem:[#allocation5 + $0x948] sm:$0xff]
    %v524 = vld [vmem:[#allocation5 + $0x950] sm:$0xff]
    %v525 = vld [vmem:[#allocation5 + $0x958] sm:$0xff]
    %v526 = vld [vmem:[#allocation5 + $0x960] sm:$0xff]
    %v527 = vld [vmem:[#allocation5 + $0x968] sm:$0xff]
    %v528 = vld [vmem:[#allocation5 + $0x970] sm:$0xff]
    %v529 = vld [vmem:[#allocation5 + $0x978] sm:$0xff]
    %v530 = vld [vmem:[#allocation5 + $0x980] sm:$0xff]
    %v531 = vld [vmem:[#allocation5 + $0x988] sm:$0xff]
    %v532 = vld [vmem:[#allocation5 + $0x990] sm:$0xff]
    %v533 = vld [vmem:[#allocation5 + $0x998] sm:$0xff]
    %v534 = vld [vmem:[#allocation5 + $0x9a0] sm:$0xff]
    %v535 = vld [vmem:[#allocation5 + $0x9a8] sm:$0xff]
    %v536 = vld [vmem:[#allocation5 + $0x9b0] sm:$0xff]
    %v537 = vld [vmem:[#allocation5 + $0x9b8] sm:$0xff]
    %v538 = vld [vmem:[#allocation5 + $0x9c0] sm:$0xff]
    %v539 = vld [vmem:[#allocation5 + $0x9c8] sm:$0xff]
    %v540 = vld [vmem:[#allocation5 + $0x9d0] sm:$0xff]
    %v541 = vld [vmem:[#allocation5 + $0x9d8] sm:$0xff]
    %v542 = vld [vmem:[#allocation5 + $0x9e0] sm:$0xff]
    %v543 = vld [vmem:[#allocation5 + $0x9e8] sm:$0xff]
    %v544 = vld [vmem:[#allocation5 + $0x9f0] sm:$0xff]
    %v545 = vld [vmem:[#allocation5 + $0x9f8] sm:$0xff]
    %v546 = vld [vmem:[#allocation5 + $0xa00] sm:$0xff]
    %v547 = vld [vmem:[#allocation5 + $0xa08] sm:$0xff]
    %v548 = vld [vmem:[#allocation5 + $0xa10] sm:$0xff]
    %v549 = vld [vmem:[#allocation5 + $0xa18] sm:$0xff]
    %v550 = vld [vmem:[#allocation5 + $0xa20] sm:$0xff]
    %v551 = vld [vmem:[#allocation5 + $0xa28] sm:$0xff]
    %v552 = vld [vmem:[#allocation5 + $0xa30] sm:$0xff]
    %v553 = vld [vmem:[#allocation5 + $0xa38] sm:$0xff]
    %v554 = vld [vmem:[#allocation5 + $0xa40] sm:$0xff]
    %v555 = vld [vmem:[#allocation5 + $0xa48] sm:$0xff]
    %v556 = vld [vmem:[#allocation5 + $0xa50] sm:$0xff]
    %v557 = vld [vmem:[#allocation5 + $0xa58] sm:$0xff]
    %v558 = vld [vmem:[#allocation5 + $0xa60] sm:$0xff]
    %v559 = vld [vmem:[#allocation5 + $0xa68] sm:$0xff]
    %v560 = vld [vmem:[#allocation5 + $0xa70] sm:$0xff]
    %v561 = vld [vmem:[#allocation5 + $0xa78] sm:$0xff]
    %v562 = vld [vmem:[#allocation5 + $0xa80] sm:$0xff]
    %v563 = vld [vmem:[#allocation5 + $0xa88] sm:$0xff]
    %v564 = vld [vmem:[#allocation5 + $0xa90] sm:$0xff]
    %v565 = vld [vmem:[#allocation5 + $0xa98] sm:$0xff]
    %v566 = vld [vmem:[#allocation5 + $0xaa0] sm:$0xff]
    %v567 = vld [vmem:[#allocation5 + $0xaa8] sm:$0xff]
    %v568 = vld [vmem:[#allocation5 + $0xab0] sm:$0xff]
    %v569 = vld [vmem:[#allocation5 + $0xab8] sm:$0xff]
    %v570 = vld [vmem:[#allocation5 + $0xac0] sm:$0xff]
    %v571 = vld [vmem:[#allocation5 + $0xac8] sm:$0xff]
    %v572 = vld [vmem:[#allocation5 + $0xad0] sm:$0xff]
    %v573 = vld [vmem:[#allocation5 + $0xad8] sm:$0xff]
    %v574 = vld [vmem:[#allocation5 + $0xae0] sm:$0xff]
    %v575 = vld [vmem:[#allocation5 + $0xae8] sm:$0xff]
    %v576 = vld [vmem:[#allocation5 + $0xaf0] sm:$0xff]
    %v577 = vld [vmem:[#allocation5 + $0xaf8] sm:$0xff]
    %v578 = vld [vmem:[#allocation5 + $0xb00] sm:$0xff]
    %v579 = vld [vmem:[#allocation5 + $0xb08] sm:$0xff]
    %v580 = vld [vmem:[#allocation5 + $0xb10] sm:$0xff]
    %v581 = vld [vmem:[#allocation5 + $0xb18] sm:$0xff]
    %v582 = vld [vmem:[#allocation5 + $0xb20] sm:$0xff]
    %v583 = vld [vmem:[#allocation5 + $0xb28] sm:$0xff]
    %v584 = vld [vmem:[#allocation5 + $0xb30] sm:$0xff]
    %v585 = vld [vmem:[#allocation5 + $0xb38] sm:$0xff]
    %v586 = vld [vmem:[#allocation5 + $0xb40] sm:$0xff]
    %v587 = vld [vmem:[#allocation5 + $0xb48] sm:$0xff]
    %v588 = vld [vmem:[#allocation5 + $0xb50] sm:$0xff]
    %v589 = vld [vmem:[#allocation5 + $0xb58] sm:$0xff]
    %v590 = vld [vmem:[#allocation5 + $0xb60] sm:$0xff]
    %v591 = vld [vmem:[#allocation5 + $0xb68] sm:$0xff]
    %v592 = vld [vmem:[#allocation5 + $0xb70] sm:$0xff]
    %v593 = vld [vmem:[#allocation5 + $0xb78] sm:$0xff]
    %v594 = vld [vmem:[#allocation5 + $0xb80] sm:$0xff]
    %v595 = vld [vmem:[#allocation5 + $0xb88] sm:$0xff]
    %v596 = vld [vmem:[#allocation5 + $0xb90] sm:$0xff]
    %v597 = vld [vmem:[#allocation5 + $0xb98] sm:$0xff]
    %v598 = vld [vmem:[#allocation5 + $0xba0] sm:$0xff]
    %v599 = vld [vmem:[#allocation5 + $0xba8] sm:$0xff]
    %v600 = vld [vmem:[#allocation5 + $0xbb0] sm:$0xff]
    %v601 = vld [vmem:[#allocation5 + $0xbb8] sm:$0xff]
    %v602 = vld [vmem:[#allocation5 + $0xbc0] sm:$0xff]
    %v603 = vld [vmem:[#allocation5 + $0xbc8] sm:$0xff]
    %v604 = vld [vmem:[#allocation5 + $0xbd0] sm:$0xff]
    %v605 = vld [vmem:[#allocation5 + $0xbd8] sm:$0xff]
    %v606 = vld [vmem:[#allocation5 + $0xbe0] sm:$0xff]
    %v607 = vld [vmem:[#allocation5 + $0xbe8] sm:$0xff]
    %v608 = vld [vmem:[#allocation5 + $0xbf0] sm:$0xff]
    %v609 = vld [vmem:[#allocation5 + $0xbf8] sm:$0xff]
    %v610 = vld [vmem:[#allocation5 + $0xc00] sm:$0xff]
    %v611 = vld [vmem:[#allocation5 + $0xc08] sm:$0xff]
    %v612 = vld [vmem:[#allocation5 + $0xc10] sm:$0xff]
    %v613 = vld [vmem:[#allocation5 + $0xc18] sm:$0xff]
    %v614 = vld [vmem:[#allocation5 + $0xc20] sm:$0xff]
    %v615 = vld [vmem:[#allocation5 + $0xc28] sm:$0xff]
    %v616 = vld [vmem:[#allocation5 + $0xc30] sm:$0xff]
    %v617 = vld [vmem:[#allocation5 + $0xc38] sm:$0xff]
    %v618 = vld [vmem:[#allocation5 + $0xc40] sm:$0xff]
    %v619 = vld [vmem:[#allocation5 + $0xc48] sm:$0xff]
    %v620 = vld [vmem:[#allocation5 + $0xc50] sm:$0xff]
    %v621 = vld [vmem:[#allocation5 + $0xc58] sm:$0xff]
    %v622 = vld [vmem:[#allocation5 + $0xc60] sm:$0xff]
    %v623 = vld [vmem:[#allocation5 + $0xc68] sm:$0xff]
    %v624 = vld [vmem:[#allocation5 + $0xc70] sm:$0xff]
    %v625 = vld [vmem:[#allocation5 + $0xc78] sm:$0xff]
    %v626 = vld [vmem:[#allocation5 + $0xc80] sm:$0xff]
    %v627 = vld [vmem:[#allocation5 + $0xc88] sm:$0xff]
    %v628 = vld [vmem:[#allocation5 + $0xc90] sm:$0xff]
    %v629 = vld [vmem:[#allocation5 + $0xc98] sm:$0xff]
    %v630 = vld [vmem:[#allocation5 + $0xca0] sm:$0xff]
    %v631 = vld [vmem:[#allocation5 + $0xca8] sm:$0xff]
    %v632 = vld [vmem:[#allocation5 + $0xcb0] sm:$0xff]
    %v633 = vld [vmem:[#allocation5 + $0xcb8] sm:$0xff]
    %v634 = vld [vmem:[#allocation5 + $0xcc0] sm:$0xff]
    %v635 = vld [vmem:[#allocation5 + $0xcc8] sm:$0xff]
    %v636 = vld [vmem:[#allocation5 + $0xcd0] sm:$0xff]
    %v637 = vld [vmem:[#allocation5 + $0xcd8] sm:$0xff]
    %v638 = vld [vmem:[#allocation5 + $0xce0] sm:$0xff]
    %v639 = vld [vmem:[#allocation5 + $0xce8] sm:$0xff]
    %v640 = vld [vmem:[#allocation5 + $0xcf0] sm:$0xff]
    %v641 = vld [vmem:[#allocation5 + $0xcf8] sm:$0xff]
    %v642 = vld [vmem:[#allocation5 + $0xd00] sm:$0xff]
    %v643 = vld [vmem:[#allocation5 + $0xd08] sm:$0xff]
    %v644 = vld [vmem:[#allocation5 + $0xd10] sm:$0xff]
    %v645 = vld [vmem:[#allocation5 + $0xd18] sm:$0xff]
    %v646 = vld [vmem:[#allocation5 + $0xd20] sm:$0xff]
    %v647 = vld [vmem:[#allocation5 + $0xd28] sm:$0xff]
    %v648 = vld [vmem:[#allocation5 + $0xd30] sm:$0xff]
    %v649 = vld [vmem:[#allocation5 + $0xd38] sm:$0xff]
    %v650 = vld [vmem:[#allocation5 + $0xd40] sm:$0xff]
    %v651 = vld [vmem:[#allocation5 + $0xd48] sm:$0xff]
    %v652 = vld [vmem:[#allocation5 + $0xd50] sm:$0xff]
    %v653 = vld [vmem:[#allocation5 + $0xd58] sm:$0xff]
    %v654 = vld [vmem:[#allocation5 + $0xd60] sm:$0xff]
    %v655 = vld [vmem:[#allocation5 + $0xd68] sm:$0xff]
    %v656 = vld [vmem:[#allocation5 + $0xd70] sm:$0xff]
    %v657 = vld [vmem:[#allocation5 + $0xd78] sm:$0xff]
    %v658 = vld [vmem:[#allocation5 + $0xd80] sm:$0xff]
    %v659 = vld [vmem:[#allocation5 + $0xd88] sm:$0xff]
    %v660 = vld [vmem:[#allocation5 + $0xd90] sm:$0xff]
    %v661 = vld [vmem:[#allocation5 + $0xd98] sm:$0xff]
    %v662 = vld [vmem:[#allocation5 + $0xda0] sm:$0xff]
    %v663 = vld [vmem:[#allocation5 + $0xda8] sm:$0xff]
    %v664 = vld [vmem:[#allocation5 + $0xdb0] sm:$0xff]
    %v665 = vld [vmem:[#allocation5 + $0xdb8] sm:$0xff]
    %v666 = vld [vmem:[#allocation5 + $0xdc0] sm:$0xff]
    %v667 = vld [vmem:[#allocation5 + $0xdc8] sm:$0xff]
    %v668 = vld [vmem:[#allocation5 + $0xdd0] sm:$0xff]
    %v669 = vld [vmem:[#allocation5 + $0xdd8] sm:$0xff]
    %v670 = vld [vmem:[#allocation5 + $0xde0] sm:$0xff]
    %v671 = vld [vmem:[#allocation5 + $0xde8] sm:$0xff]
    %v672 = vld [vmem:[#allocation5 + $0xdf0] sm:$0xff]
    %v673 = vld [vmem:[#allocation5 + $0xdf8] sm:$0xff]
    %v674 = vld [vmem:[#allocation5 + $0xe00] sm:$0xff]
    %v675 = vld [vmem:[#allocation5 + $0xe08] sm:$0xff]
    %v676 = vld [vmem:[#allocation5 + $0xe10] sm:$0xff]
    %v677 = vld [vmem:[#allocation5 + $0xe18] sm:$0xff]
    %v678 = vld [vmem:[#allocation5 + $0xe20] sm:$0xff]
    %v679 = vld [vmem:[#allocation5 + $0xe28] sm:$0xff]
    %v680 = vld [vmem:[#allocation5 + $0xe30] sm:$0xff]
    %v681 = vld [vmem:[#allocation5 + $0xe38] sm:$0xff]
    %v682 = vld [vmem:[#allocation5 + $0xe40] sm:$0xff]
    %v683 = vld [vmem:[#allocation5 + $0xe48] sm:$0xff]
    %v684 = vld [vmem:[#allocation5 + $0xe50] sm:$0xff]
    %v685 = vld [vmem:[#allocation5 + $0xe58] sm:$0xff]
    %v686 = vld [vmem:[#allocation5 + $0xe60] sm:$0xff]
    %v687 = vld [vmem:[#allocation5 + $0xe68] sm:$0xff]
    %v688 = vld [vmem:[#allocation5 + $0xe70] sm:$0xff]
    %v689 = vld [vmem:[#allocation5 + $0xe78] sm:$0xff]
    %v690 = vld [vmem:[#allocation5 + $0xe80] sm:$0xff]
    %v691 = vld [vmem:[#allocation5 + $0xe88] sm:$0xff]
    %v692 = vld [vmem:[#allocation5 + $0xe90] sm:$0xff]
    %v693 = vld [vmem:[#allocation5 + $0xe98] sm:$0xff]
    %v694 = vld [vmem:[#allocation5 + $0xea0] sm:$0xff]
    %v695 = vld [vmem:[#allocation5 + $0xea8] sm:$0xff]
    %v696 = vld [vmem:[#allocation5 + $0xeb0] sm:$0xff]
    %v697 = vld [vmem:[#allocation5 + $0xeb8] sm:$0xff]
    %v698 = vld [vmem:[#allocation5 + $0xec0] sm:$0xff]
    %v699 = vld [vmem:[#allocation5 + $0xec8] sm:$0xff]
    %v700 = vld [vmem:[#allocation5 + $0xed0] sm:$0xff]
    %v701 = vld [vmem:[#allocation5 + $0xed8] sm:$0xff]
    %v702 = vld [vmem:[#allocation5 + $0xee0] sm:$0xff]
    %v703 = vld [vmem:[#allocation5 + $0xee8] sm:$0xff]
    %v704 = vld [vmem:[#allocation5 + $0xef0] sm:$0xff]
    %v705 = vld [vmem:[#allocation5 + $0xef8] sm:$0xff]
    %v706 = vld [vmem:[#allocation5 + $0xf00] sm:$0xff]
    %v707 = vld [vmem:[#allocation5 + $0xf08] sm:$0xff]
    %v708 = vld [vmem:[#allocation5 + $0xf10] sm:$0xff]
    %v709 = vld [vmem:[#allocation5 + $0xf18] sm:$0xff]
    %v710 = vld [vmem:[#allocation5 + $0xf20] sm:$0xff]
    %v711 = vld [vmem:[#allocation5 + $0xf28] sm:$0xff]
    %v712 = vld [vmem:[#allocation5 + $0xf30] sm:$0xff]
    %v713 = vld [vmem:[#allocation5 + $0xf38] sm:$0xff]
    %v714 = vld [vmem:[#allocation5 + $0xf40] sm:$0xff]
    %v715 = vld [vmem:[#allocation5 + $0xf48] sm:$0xff]
    %v716 = vld [vmem:[#allocation5 + $0xf50] sm:$0xff]
    %v717 = vld [vmem:[#allocation5 + $0xf58] sm:$0xff]
    %v718 = vld [vmem:[#allocation5 + $0xf60] sm:$0xff]
    %v719 = vld [vmem:[#allocation5 + $0xf68] sm:$0xff]
    %v720 = vld [vmem:[#allocation5 + $0xf70] sm:$0xff]
    %v721 = vld [vmem:[#allocation5 + $0xf78] sm:$0xff]
    %v722 = vld [vmem:[#allocation5 + $0xf80] sm:$0xff]
    %v723 = vld [vmem:[#allocation5 + $0xf88] sm:$0xff]
    %v724 = vld [vmem:[#allocation5 + $0xf90] sm:$0xff]
    %v725 = vld [vmem:[#allocation5 + $0xf98] sm:$0xff]
    %v726 = vld [vmem:[#allocation5 + $0xfa0] sm:$0xff]
    %v727 = vld [vmem:[#allocation5 + $0xfa8] sm:$0xff]
    %v728 = vld [vmem:[#allocation5 + $0xfb0] sm:$0xff]
    %v729 = vld [vmem:[#allocation5 + $0xfb8] sm:$0xff]
    %v730 = vld [vmem:[#allocation5 + $0xfc0] sm:$0xff]
    %v731 = vld [vmem:[#allocation5 + $0xfc8] sm:$0xff]
    %v732 = vld [vmem:[#allocation5 + $0xfd0] sm:$0xff]
    %v733 = vld [vmem:[#allocation5 + $0xfd8] sm:$0xff]
    %v734 = vld [vmem:[#allocation5 + $0xfe0] sm:$0xff]
    %v735 = vld [vmem:[#allocation5 + $0xfe8] sm:$0xff]
    %v736 = vld [vmem:[#allocation5 + $0xff0] sm:$0xff]
    %v737 = vld [vmem:[#allocation5 + $0xff8] sm:$0xff]
    %740 = vst [vmem:[#allocation1] ss:$4 sm:$0xff] %v224
    %s741 = scalar_lea.vmem [#allocation1], 32
    %742 = vst [vmem:[%s741] ss:$4 sm:$0xff] %v225
    %v743 = vld.sshfl [vmem:[#allocation1] sm:$0xff pattern:$0x73625140]
    %v744 = vld.sshfl [vmem:[#allocation1 + $0x8] sm:$0xff pattern:$0x73625140]
    %v745 = vld.sshfl [vmem:[#allocation1 + $0x10] sm:$0xff pattern:$0x73625140]
    %v746 = vld.sshfl [vmem:[#allocation1 + $0x18] sm:$0xff pattern:$0x73625140]
    %v747 = vld.sshfl [vmem:[#allocation1 + $0x20] sm:$0xff pattern:$0x73625140]
    %v748 = vld.sshfl [vmem:[#allocation1 + $0x28] sm:$0xff pattern:$0x73625140]
    %v749 = vld.sshfl [vmem:[#allocation1 + $0x30] sm:$0xff pattern:$0x73625140]
    %v750 = vld.sshfl [vmem:[#allocation1 + $0x38] sm:$0xff pattern:$0x73625140]
    %759 = vmatpush.msra.mxu0 %v286
    %760 = vmatpush.msra.mxu0 %v282
    %761 = vmatpush.msra.mxu0 %v278
    %762 = vmatpush.msra.mxu0 %v274
    %763 = vmatpush.msra.mxu0 %v270
    %764 = vmatpush.msra.mxu0 %v266
    %765 = vmatpush.msra.mxu0 %v262
    %766 = vmatpush.msra.mxu0 %v258
    %767 = vmatpush.msra.mxu0 %v254
    %768 = vmatpush.msra.mxu0 %v250
    %769 = vmatpush.msra.mxu0 %v246
    %770 = vmatpush.msra.mxu0 %v242
    %771 = vmatpush.msra.mxu0 %v238
    %772 = vmatpush.msra.mxu0 %v234
    %773 = vmatpush.msra.mxu0 %v230
    %774 = vmatpush.msra.mxu0 %v226
    %775 = vmatmul.f32.gmra.mxu0 %v743
    %v776 = vpop.f32.mrf.mxu0
    %v777 = vadd.f32 0.0, %v776
    %778 = vdwg.mxu0
    %779 = vmatpush.msra.mxu0 %v350
    %780 = vmatpush.msra.mxu0 %v346
    %781 = vmatpush.msra.mxu0 %v342
    %782 = vmatpush.msra.mxu0 %v338
    %783 = vmatpush.msra.mxu0 %v334
    %784 = vmatpush.msra.mxu0 %v330
    %785 = vmatpush.msra.mxu0 %v326
    %786 = vmatpush.msra.mxu0 %v322
    %787 = vmatpush.msra.mxu0 %v318
    %788 = vmatpush.msra.mxu0 %v314
    %789 = vmatpush.msra.mxu0 %v310
    %790 = vmatpush.msra.mxu0 %v306
    %791 = vmatpush.msra.mxu0 %v302
    %792 = vmatpush.msra.mxu0 %v298
    %793 = vmatpush.msra.mxu0 %v294
    %794 = vmatpush.msra.mxu0 %v290
    %795 = vmatmul.f32.gmra.mxu0 %v744
    %v796 = vpop.f32.mrf.mxu0
    %v797 = vadd.f32 %v777, %v796
    %798 = vdwg.mxu0
    %799 = vmatpush.msra.mxu0 %v414
    %800 = vmatpush.msra.mxu0 %v410
    %801 = vmatpush.msra.mxu0 %v406
    %802 = vmatpush.msra.mxu0 %v402
    %803 = vmatpush.msra.mxu0 %v398
    %804 = vmatpush.msra.mxu0 %v394
    %805 = vmatpush.msra.mxu0 %v390
    %806 = vmatpush.msra.mxu0 %v386
    %807 = vmatpush.msra.mxu0 %v382
    %808 = vmatpush.msra.mxu0 %v378
    %809 = vmatpush.msra.mxu0 %v374
    %810 = vmatpush.msra.mxu0 %v370
    %811 = vmatpush.msra.mxu0 %v366
    %812 = vmatpush.msra.mxu0 %v362
    %813 = vmatpush.msra.mxu0 %v358
    %814 = vmatpush.msra.mxu0 %v354
    %815 = vmatmul.f32.gmra.mxu0 %v745
    %v816 = vpop.f32.mrf.mxu0
    %v817 = vadd.f32 %v797, %v816
    %818 = vdwg.mxu0
    %819 = vmatpush.msra.mxu0 %v478
    %820 = vmatpush.msra.mxu0 %v474
    %821 = vmatpush.msra.mxu0 %v470
    %822 = vmatpush.msra.mxu0 %v466
    %823 = vmatpush.msra.mxu0 %v462
    %824 = vmatpush.msra.mxu0 %v458
    %825 = vmatpush.msra.mxu0 %v454
    %826 = vmatpush.msra.mxu0 %v450
    %827 = vmatpush.msra.mxu0 %v446
    %828 = vmatpush.msra.mxu0 %v442
    %829 = vmatpush.msra.mxu0 %v438
    %830 = vmatpush.msra.mxu0 %v434
    %831 = vmatpush.msra.mxu0 %v430
    %832 = vmatpush.msra.mxu0 %v426
    %833 = vmatpush.msra.mxu0 %v422
    %834 = vmatpush.msra.mxu0 %v418
    %835 = vmatmul.f32.gmra.mxu0 %v746
    %v836 = vpop.f32.mrf.mxu0
    %v837 = vadd.f32 %v817, %v836
    %838 = vdwg.mxu0
    %839 = vmatpush.msra.mxu0 %v542
    %840 = vmatpush.msra.mxu0 %v538
    %841 = vmatpush.msra.mxu0 %v534
    %842 = vmatpush.msra.mxu0 %v530
    %843 = vmatpush.msra.mxu0 %v526
    %844 = vmatpush.msra.mxu0 %v522
    %845 = vmatpush.msra.mxu0 %v518
    %846 = vmatpush.msra.mxu0 %v514
    %847 = vmatpush.msra.mxu0 %v510
    %848 = vmatpush.msra.mxu0 %v506
    %849 = vmatpush.msra.mxu0 %v502
    %850 = vmatpush.msra.mxu0 %v498
    %851 = vmatpush.msra.mxu0 %v494
    %852 = vmatpush.msra.mxu0 %v490
    %853 = vmatpush.msra.mxu0 %v486
    %854 = vmatpush.msra.mxu0 %v482
    %855 = vmatmul.f32.gmra.mxu0 %v747
    %v856 = vpop.f32.mrf.mxu0
    %v857 = vadd.f32 %v837, %v856
    %858 = vdwg.mxu0
    %859 = vmatpush.msra.mxu0 %v606
    %860 = vmatpush.msra.mxu0 %v602
    %861 = vmatpush.msra.mxu0 %v598
    %862 = vmatpush.msra.mxu0 %v594
    %863 = vmatpush.msra.mxu0 %v590
    %864 = vmatpush.msra.mxu0 %v586
    %865 = vmatpush.msra.mxu0 %v582
    %866 = vmatpush.msra.mxu0 %v578
    %867 = vmatpush.msra.mxu0 %v574
    %868 = vmatpush.msra.mxu0 %v570
    %869 = vmatpush.msra.mxu0 %v566
    %870 = vmatpush.msra.mxu0 %v562
    %871 = vmatpush.msra.mxu0 %v558
    %872 = vmatpush.msra.mxu0 %v554
    %873 = vmatpush.msra.mxu0 %v550
    %874 = vmatpush.msra.mxu0 %v546
    %875 = vmatmul.f32.gmra.mxu0 %v748
    %v876 = vpop.f32.mrf.mxu0
    %v877 = vadd.f32 %v857, %v876
    %878 = vdwg.mxu0
    %879 = vmatpush.msra.mxu0 %v670
    %880 = vmatpush.msra.mxu0 %v666
    %881 = vmatpush.msra.mxu0 %v662
    %882 = vmatpush.msra.mxu0 %v658
    %883 = vmatpush.msra.mxu0 %v654
    %884 = vmatpush.msra.mxu0 %v650
    %885 = vmatpush.msra.mxu0 %v646
    %886 = vmatpush.msra.mxu0 %v642
    %887 = vmatpush.msra.mxu0 %v638
    %888 = vmatpush.msra.mxu0 %v634
    %889 = vmatpush.msra.mxu0 %v630
    %890 = vmatpush.msra.mxu0 %v626
    %891 = vmatpush.msra.mxu0 %v622
    %892 = vmatpush.msra.mxu0 %v618
    %893 = vmatpush.msra.mxu0 %v614
    %894 = vmatpush.msra.mxu0 %v610
    %895 = vmatmul.f32.gmra.mxu0 %v749
    %v896 = vpop.f32.mrf.mxu0
    %v897 = vadd.f32 %v877, %v896
    %898 = vdwg.mxu0
    %899 = vmatpush.msra.mxu0 %v734
    %900 = vmatpush.msra.mxu0 %v730
    %901 = vmatpush.msra.mxu0 %v726
    %902 = vmatpush.msra.mxu0 %v722
    %903 = vmatpush.msra.mxu0 %v718
    %904 = vmatpush.msra.mxu0 %v714
    %905 = vmatpush.msra.mxu0 %v710
    %906 = vmatpush.msra.mxu0 %v706
    %907 = vmatpush.msra.mxu0 %v702
    %908 = vmatpush.msra.mxu0 %v698
    %909 = vmatpush.msra.mxu0 %v694
    %910 = vmatpush.msra.mxu0 %v690
    %911 = vmatpush.msra.mxu0 %v686
    %912 = vmatpush.msra.mxu0 %v682
    %913 = vmatpush.msra.mxu0 %v678
    %914 = vmatpush.msra.mxu0 %v674
    %915 = vmatmul.f32.gmra.mxu0 %v750
    %v916 = vpop.f32.mrf.mxu0
    %v917 = vadd.f32 %v897, %v916
    %918 = vdwg.mxu0
    %919 = vmatpush.msra.mxu0 %v287
    %920 = vmatpush.msra.mxu0 %v283
    %921 = vmatpush.msra.mxu0 %v279
    %922 = vmatpush.msra.mxu0 %v275
    %923 = vmatpush.msra.mxu0 %v271
    %924 = vmatpush.msra.mxu0 %v267
    %925 = vmatpush.msra.mxu0 %v263
    %926 = vmatpush.msra.mxu0 %v259
    %927 = vmatpush.msra.mxu0 %v255
    %928 = vmatpush.msra.mxu0 %v251
    %929 = vmatpush.msra.mxu0 %v247
    %930 = vmatpush.msra.mxu0 %v243
    %931 = vmatpush.msra.mxu0 %v239
    %932 = vmatpush.msra.mxu0 %v235
    %933 = vmatpush.msra.mxu0 %v231
    %934 = vmatpush.msra.mxu0 %v227
    %935 = vmatmul.f32.gmra.mxu0 %v743
    %v936 = vpop.f32.mrf.mxu0
    %v937 = vadd.f32 0.0, %v936
    %938 = vdwg.mxu0
    %939 = vmatpush.msra.mxu0 %v351
    %940 = vmatpush.msra.mxu0 %v347
    %941 = vmatpush.msra.mxu0 %v343
    %942 = vmatpush.msra.mxu0 %v339
    %943 = vmatpush.msra.mxu0 %v335
    %944 = vmatpush.msra.mxu0 %v331
    %945 = vmatpush.msra.mxu0 %v327
    %946 = vmatpush.msra.mxu0 %v323
    %947 = vmatpush.msra.mxu0 %v319
    %948 = vmatpush.msra.mxu0 %v315
    %949 = vmatpush.msra.mxu0 %v311
    %950 = vmatpush.msra.mxu0 %v307
    %951 = vmatpush.msra.mxu0 %v303
    %952 = vmatpush.msra.mxu0 %v299
    %953 = vmatpush.msra.mxu0 %v295
    %954 = vmatpush.msra.mxu0 %v291
    %955 = vmatmul.f32.gmra.mxu0 %v744
    %v956 = vpop.f32.mrf.mxu0
    %v957 = vadd.f32 %v937, %v956
    %958 = vdwg.mxu0
    %959 = vmatpush.msra.mxu0 %v415
    %960 = vmatpush.msra.mxu0 %v411
    %961 = vmatpush.msra.mxu0 %v407
    %962 = vmatpush.msra.mxu0 %v403
    %963 = vmatpush.msra.mxu0 %v399
    %964 = vmatpush.msra.mxu0 %v395
    %965 = vmatpush.msra.mxu0 %v391
    %966 = vmatpush.msra.mxu0 %v387
    %967 = vmatpush.msra.mxu0 %v383
    %968 = vmatpush.msra.mxu0 %v379
    %969 = vmatpush.msra.mxu0 %v375
    %970 = vmatpush.msra.mxu0 %v371
    %971 = vmatpush.msra.mxu0 %v367
    %972 = vmatpush.msra.mxu0 %v363
    %973 = vmatpush.msra.mxu0 %v359
    %974 = vmatpush.msra.mxu0 %v355
    %975 = vmatmul.f32.gmra.mxu0 %v745
    %v976 = vpop.f32.mrf.mxu0
    %v977 = vadd.f32 %v957, %v976
    %978 = vdwg.mxu0
    %979 = vmatpush.msra.mxu0 %v479
    %980 = vmatpush.msra.mxu0 %v475
    %981 = vmatpush.msra.mxu0 %v471
    %982 = vmatpush.msra.mxu0 %v467
    %983 = vmatpush.msra.mxu0 %v463
    %984 = vmatpush.msra.mxu0 %v459
    %985 = vmatpush.msra.mxu0 %v455
    %986 = vmatpush.msra.mxu0 %v451
    %987 = vmatpush.msra.mxu0 %v447
    %988 = vmatpush.msra.mxu0 %v443
    %989 = vmatpush.msra.mxu0 %v439
    %990 = vmatpush.msra.mxu0 %v435
    %991 = vmatpush.msra.mxu0 %v431
    %992 = vmatpush.msra.mxu0 %v427
    %993 = vmatpush.msra.mxu0 %v423
    %994 = vmatpush.msra.mxu0 %v419
    %995 = vmatmul.f32.gmra.mxu0 %v746
    %v996 = vpop.f32.mrf.mxu0
    %v997 = vadd.f32 %v977, %v996
    %998 = vdwg.mxu0
    %999 = vmatpush.msra.mxu0 %v543
    %1000 = vmatpush.msra.mxu0 %v539
    %1001 = vmatpush.msra.mxu0 %v535
    %1002 = vmatpush.msra.mxu0 %v531
    %1003 = vmatpush.msra.mxu0 %v527
    %1004 = vmatpush.msra.mxu0 %v523
    %1005 = vmatpush.msra.mxu0 %v519
    %1006 = vmatpush.msra.mxu0 %v515
    %1007 = vmatpush.msra.mxu0 %v511
    %1008 = vmatpush.msra.mxu0 %v507
    %1009 = vmatpush.msra.mxu0 %v503
    %1010 = vmatpush.msra.mxu0 %v499
    %1011 = vmatpush.msra.mxu0 %v495
    %1012 = vmatpush.msra.mxu0 %v491
    %1013 = vmatpush.msra.mxu0 %v487
    %1014 = vmatpush.msra.mxu0 %v483
    %1015 = vmatmul.f32.gmra.mxu0 %v747
    %v1016 = vpop.f32.mrf.mxu0
    %v1017 = vadd.f32 %v997, %v1016
    %1018 = vdwg.mxu0
    %1019 = vmatpush.msra.mxu0 %v607
    %1020 = vmatpush.msra.mxu0 %v603
    %1021 = vmatpush.msra.mxu0 %v599
    %1022 = vmatpush.msra.mxu0 %v595
    %1023 = vmatpush.msra.mxu0 %v591
    %1024 = vmatpush.msra.mxu0 %v587
    %1025 = vmatpush.msra.mxu0 %v583
    %1026 = vmatpush.msra.mxu0 %v579
    %1027 = vmatpush.msra.mxu0 %v575
    %1028 = vmatpush.msra.mxu0 %v571
    %1029 = vmatpush.msra.mxu0 %v567
    %1030 = vmatpush.msra.mxu0 %v563
    %1031 = vmatpush.msra.mxu0 %v559
    %1032 = vmatpush.msra.mxu0 %v555
    %1033 = vmatpush.msra.mxu0 %v551
    %1034 = vmatpush.msra.mxu0 %v547
    %1035 = vmatmul.f32.gmra.mxu0 %v748
    %v1036 = vpop.f32.mrf.mxu0
    %v1037 = vadd.f32 %v1017, %v1036
    %1038 = vdwg.mxu0
    %1039 = vmatpush.msra.mxu0 %v671
    %1040 = vmatpush.msra.mxu0 %v667
    %1041 = vmatpush.msra.mxu0 %v663
    %1042 = vmatpush.msra.mxu0 %v659
    %1043 = vmatpush.msra.mxu0 %v655
    %1044 = vmatpush.msra.mxu0 %v651
    %1045 = vmatpush.msra.mxu0 %v647
    %1046 = vmatpush.msra.mxu0 %v643
    %1047 = vmatpush.msra.mxu0 %v639
    %1048 = vmatpush.msra.mxu0 %v635
    %1049 = vmatpush.msra.mxu0 %v631
    %1050 = vmatpush.msra.mxu0 %v627
    %1051 = vmatpush.msra.mxu0 %v623
    %1052 = vmatpush.msra.mxu0 %v619
    %1053 = vmatpush.msra.mxu0 %v615
    %1054 = vmatpush.msra.mxu0 %v611
    %1055 = vmatmul.f32.gmra.mxu0 %v749
    %v1056 = vpop.f32.mrf.mxu0
    %v1057 = vadd.f32 %v1037, %v1056
    %1058 = vdwg.mxu0
    %1059 = vmatpush.msra.mxu0 %v735
    %1060 = vmatpush.msra.mxu0 %v731
    %1061 = vmatpush.msra.mxu0 %v727
    %1062 = vmatpush.msra.mxu0 %v723
    %1063 = vmatpush.msra.mxu0 %v719
    %1064 = vmatpush.msra.mxu0 %v715
    %1065 = vmatpush.msra.mxu0 %v711
    %1066 = vmatpush.msra.mxu0 %v707
    %1067 = vmatpush.msra.mxu0 %v703
    %1068 = vmatpush.msra.mxu0 %v699
    %1069 = vmatpush.msra.mxu0 %v695
    %1070 = vmatpush.msra.mxu0 %v691
    %1071 = vmatpush.msra.mxu0 %v687
    %1072 = vmatpush.msra.mxu0 %v683
    %1073 = vmatpush.msra.mxu0 %v679
    %1074 = vmatpush.msra.mxu0 %v675
    %1075 = vmatmul.f32.gmra.mxu0 %v750
    %v1076 = vpop.f32.mrf.mxu0
    %v1077 = vadd.f32 %v1057, %v1076
    %1078 = vdwg.mxu0
    %1079 = vmatpush.msra.mxu0 %v288
    %1080 = vmatpush.msra.mxu0 %v284
    %1081 = vmatpush.msra.mxu0 %v280
    %1082 = vmatpush.msra.mxu0 %v276
    %1083 = vmatpush.msra.mxu0 %v272
    %1084 = vmatpush.msra.mxu0 %v268
    %1085 = vmatpush.msra.mxu0 %v264
    %1086 = vmatpush.msra.mxu0 %v260
    %1087 = vmatpush.msra.mxu0 %v256
    %1088 = vmatpush.msra.mxu0 %v252
    %1089 = vmatpush.msra.mxu0 %v248
    %1090 = vmatpush.msra.mxu0 %v244
    %1091 = vmatpush.msra.mxu0 %v240
    %1092 = vmatpush.msra.mxu0 %v236
    %1093 = vmatpush.msra.mxu0 %v232
    %1094 = vmatpush.msra.mxu0 %v228
    %1095 = vmatmul.f32.gmra.mxu0 %v743
    %v1096 = vpop.f32.mrf.mxu0
    %v1097 = vadd.f32 0.0, %v1096
    %1098 = vdwg.mxu0
    %1099 = vmatpush.msra.mxu0 %v352
    %1100 = vmatpush.msra.mxu0 %v348
    %1101 = vmatpush.msra.mxu0 %v344
    %1102 = vmatpush.msra.mxu0 %v340
    %1103 = vmatpush.msra.mxu0 %v336
    %1104 = vmatpush.msra.mxu0 %v332
    %1105 = vmatpush.msra.mxu0 %v328
    %1106 = vmatpush.msra.mxu0 %v324
    %1107 = vmatpush.msra.mxu0 %v320
    %1108 = vmatpush.msra.mxu0 %v316
    %1109 = vmatpush.msra.mxu0 %v312
    %1110 = vmatpush.msra.mxu0 %v308
    %1111 = vmatpush.msra.mxu0 %v304
    %1112 = vmatpush.msra.mxu0 %v300
    %1113 = vmatpush.msra.mxu0 %v296
    %1114 = vmatpush.msra.mxu0 %v292
    %1115 = vmatmul.f32.gmra.mxu0 %v744
    %v1116 = vpop.f32.mrf.mxu0
    %v1117 = vadd.f32 %v1097, %v1116
    %1118 = vdwg.mxu0
    %1119 = vmatpush.msra.mxu0 %v416
    %1120 = vmatpush.msra.mxu0 %v412
    %1121 = vmatpush.msra.mxu0 %v408
    %1122 = vmatpush.msra.mxu0 %v404
    %1123 = vmatpush.msra.mxu0 %v400
    %1124 = vmatpush.msra.mxu0 %v396
    %1125 = vmatpush.msra.mxu0 %v392
    %1126 = vmatpush.msra.mxu0 %v388
    %1127 = vmatpush.msra.mxu0 %v384
    %1128 = vmatpush.msra.mxu0 %v380
    %1129 = vmatpush.msra.mxu0 %v376
    %1130 = vmatpush.msra.mxu0 %v372
    %1131 = vmatpush.msra.mxu0 %v368
    %1132 = vmatpush.msra.mxu0 %v364
    %1133 = vmatpush.msra.mxu0 %v360
    %1134 = vmatpush.msra.mxu0 %v356
    %1135 = vmatmul.f32.gmra.mxu0 %v745
    %v1136 = vpop.f32.mrf.mxu0
    %v1137 = vadd.f32 %v1117, %v1136
    %1138 = vdwg.mxu0
    %1139 = vmatpush.msra.mxu0 %v480
    %1140 = vmatpush.msra.mxu0 %v476
    %1141 = vmatpush.msra.mxu0 %v472
    %1142 = vmatpush.msra.mxu0 %v468
    %1143 = vmatpush.msra.mxu0 %v464
    %1144 = vmatpush.msra.mxu0 %v460
    %1145 = vmatpush.msra.mxu0 %v456
    %1146 = vmatpush.msra.mxu0 %v452
    %1147 = vmatpush.msra.mxu0 %v448
    %1148 = vmatpush.msra.mxu0 %v444
    %1149 = vmatpush.msra.mxu0 %v440
    %1150 = vmatpush.msra.mxu0 %v436
    %1151 = vmatpush.msra.mxu0 %v432
    %1152 = vmatpush.msra.mxu0 %v428
    %1153 = vmatpush.msra.mxu0 %v424
    %1154 = vmatpush.msra.mxu0 %v420
    %1155 = vmatmul.f32.gmra.mxu0 %v746
    %v1156 = vpop.f32.mrf.mxu0
    %v1157 = vadd.f32 %v1137, %v1156
    %1158 = vdwg.mxu0
    %1159 = vmatpush.msra.mxu0 %v544
    %1160 = vmatpush.msra.mxu0 %v540
    %1161 = vmatpush.msra.mxu0 %v536
    %1162 = vmatpush.msra.mxu0 %v532
    %1163 = vmatpush.msra.mxu0 %v528
    %1164 = vmatpush.msra.mxu0 %v524
    %1165 = vmatpush.msra.mxu0 %v520
    %1166 = vmatpush.msra.mxu0 %v516
    %1167 = vmatpush.msra.mxu0 %v512
    %1168 = vmatpush.msra.mxu0 %v508
    %1169 = vmatpush.msra.mxu0 %v504
    %1170 = vmatpush.msra.mxu0 %v500
    %1171 = vmatpush.msra.mxu0 %v496
    %1172 = vmatpush.msra.mxu0 %v492
    %1173 = vmatpush.msra.mxu0 %v488
    %1174 = vmatpush.msra.mxu0 %v484
    %1175 = vmatmul.f32.gmra.mxu0 %v747
    %v1176 = vpop.f32.mrf.mxu0
    %v1177 = vadd.f32 %v1157, %v1176
    %1178 = vdwg.mxu0
    %1179 = vmatpush.msra.mxu0 %v608
    %1180 = vmatpush.msra.mxu0 %v604
    %1181 = vmatpush.msra.mxu0 %v600
    %1182 = vmatpush.msra.mxu0 %v596
    %1183 = vmatpush.msra.mxu0 %v592
    %1184 = vmatpush.msra.mxu0 %v588
    %1185 = vmatpush.msra.mxu0 %v584
    %1186 = vmatpush.msra.mxu0 %v580
    %1187 = vmatpush.msra.mxu0 %v576
    %1188 = vmatpush.msra.mxu0 %v572
    %1189 = vmatpush.msra.mxu0 %v568
    %1190 = vmatpush.msra.mxu0 %v564
    %1191 = vmatpush.msra.mxu0 %v560
    %1192 = vmatpush.msra.mxu0 %v556
    %1193 = vmatpush.msra.mxu0 %v552
    %1194 = vmatpush.msra.mxu0 %v548
    %1195 = vmatmul.f32.gmra.mxu0 %v748
    %v1196 = vpop.f32.mrf.mxu0
    %v1197 = vadd.f32 %v1177, %v1196
    %1198 = vdwg.mxu0
    %1199 = vmatpush.msra.mxu0 %v672
    %1200 = vmatpush.msra.mxu0 %v668
    %1201 = vmatpush.msra.mxu0 %v664
    %1202 = vmatpush.msra.mxu0 %v660
    %1203 = vmatpush.msra.mxu0 %v656
    %1204 = vmatpush.msra.mxu0 %v652
    %1205 = vmatpush.msra.mxu0 %v648
    %1206 = vmatpush.msra.mxu0 %v644
    %1207 = vmatpush.msra.mxu0 %v640
    %1208 = vmatpush.msra.mxu0 %v636
    %1209 = vmatpush.msra.mxu0 %v632
    %1210 = vmatpush.msra.mxu0 %v628
    %1211 = vmatpush.msra.mxu0 %v624
    %1212 = vmatpush.msra.mxu0 %v620
    %1213 = vmatpush.msra.mxu0 %v616
    %1214 = vmatpush.msra.mxu0 %v612
    %1215 = vmatmul.f32.gmra.mxu0 %v749
    %v1216 = vpop.f32.mrf.mxu0
    %v1217 = vadd.f32 %v1197, %v1216
    %1218 = vdwg.mxu0
    %1219 = vmatpush.msra.mxu0 %v736
    %1220 = vmatpush.msra.mxu0 %v732
    %1221 = vmatpush.msra.mxu0 %v728
    %1222 = vmatpush.msra.mxu0 %v724
    %1223 = vmatpush.msra.mxu0 %v720
    %1224 = vmatpush.msra.mxu0 %v716
    %1225 = vmatpush.msra.mxu0 %v712
    %1226 = vmatpush.msra.mxu0 %v708
    %1227 = vmatpush.msra.mxu0 %v704
    %1228 = vmatpush.msra.mxu0 %v700
    %1229 = vmatpush.msra.mxu0 %v696
    %1230 = vmatpush.msra.mxu0 %v692
    %1231 = vmatpush.msra.mxu0 %v688
    %1232 = vmatpush.msra.mxu0 %v684
    %1233 = vmatpush.msra.mxu0 %v680
    %1234 = vmatpush.msra.mxu0 %v676
    %1235 = vmatmul.f32.gmra.mxu0 %v750
    %v1236 = vpop.f32.mrf.mxu0
    %v1237 = vadd.f32 %v1217, %v1236
    %1238 = vdwg.mxu0
    %1239 = vmatpush.msra.mxu0 %v289
    %1240 = vmatpush.msra.mxu0 %v285
    %1241 = vmatpush.msra.mxu0 %v281
    %1242 = vmatpush.msra.mxu0 %v277
    %1243 = vmatpush.msra.mxu0 %v273
    %1244 = vmatpush.msra.mxu0 %v269
    %1245 = vmatpush.msra.mxu0 %v265
    %1246 = vmatpush.msra.mxu0 %v261
    %1247 = vmatpush.msra.mxu0 %v257
    %1248 = vmatpush.msra.mxu0 %v253
    %1249 = vmatpush.msra.mxu0 %v249
    %1250 = vmatpush.msra.mxu0 %v245
    %1251 = vmatpush.msra.mxu0 %v241
    %1252 = vmatpush.msra.mxu0 %v237
    %1253 = vmatpush.msra.mxu0 %v233
    %1254 = vmatpush.msra.mxu0 %v229
    %1255 = vmatmul.f32.gmra.mxu0 %v743
    %v1256 = vpop.f32.mrf.mxu0
    %v1257 = vadd.f32 0.0, %v1256
    %1258 = vdwg.mxu0
    %1259 = vmatpush.msra.mxu0 %v353
    %1260 = vmatpush.msra.mxu0 %v349
    %1261 = vmatpush.msra.mxu0 %v345
    %1262 = vmatpush.msra.mxu0 %v341
    %1263 = vmatpush.msra.mxu0 %v337
    %1264 = vmatpush.msra.mxu0 %v333
    %1265 = vmatpush.msra.mxu0 %v329
    %1266 = vmatpush.msra.mxu0 %v325
    %1267 = vmatpush.msra.mxu0 %v321
    %1268 = vmatpush.msra.mxu0 %v317
    %1269 = vmatpush.msra.mxu0 %v313
    %1270 = vmatpush.msra.mxu0 %v309
    %1271 = vmatpush.msra.mxu0 %v305
    %1272 = vmatpush.msra.mxu0 %v301
    %1273 = vmatpush.msra.mxu0 %v297
    %1274 = vmatpush.msra.mxu0 %v293
    %1275 = vmatmul.f32.gmra.mxu0 %v744
    %v1276 = vpop.f32.mrf.mxu0
    %v1277 = vadd.f32 %v1257, %v1276
    %1278 = vdwg.mxu0
    %1279 = vmatpush.msra.mxu0 %v417
    %1280 = vmatpush.msra.mxu0 %v413
    %1281 = vmatpush.msra.mxu0 %v409
    %1282 = vmatpush.msra.mxu0 %v405
    %1283 = vmatpush.msra.mxu0 %v401
    %1284 = vmatpush.msra.mxu0 %v397
    %1285 = vmatpush.msra.mxu0 %v393
    %1286 = vmatpush.msra.mxu0 %v389
    %1287 = vmatpush.msra.mxu0 %v385
    %1288 = vmatpush.msra.mxu0 %v381
    %1289 = vmatpush.msra.mxu0 %v377
    %1290 = vmatpush.msra.mxu0 %v373
    %1291 = vmatpush.msra.mxu0 %v369
    %1292 = vmatpush.msra.mxu0 %v365
    %1293 = vmatpush.msra.mxu0 %v361
    %1294 = vmatpush.msra.mxu0 %v357
    %1295 = vmatmul.f32.gmra.mxu0 %v745
    %v1296 = vpop.f32.mrf.mxu0
    %v1297 = vadd.f32 %v1277, %v1296
    %1298 = vdwg.mxu0
    %1299 = vmatpush.msra.mxu0 %v481
    %1300 = vmatpush.msra.mxu0 %v477
    %1301 = vmatpush.msra.mxu0 %v473
    %1302 = vmatpush.msra.mxu0 %v469
    %1303 = vmatpush.msra.mxu0 %v465
    %1304 = vmatpush.msra.mxu0 %v461
    %1305 = vmatpush.msra.mxu0 %v457
    %1306 = vmatpush.msra.mxu0 %v453
    %1307 = vmatpush.msra.mxu0 %v449
    %1308 = vmatpush.msra.mxu0 %v445
    %1309 = vmatpush.msra.mxu0 %v441
    %1310 = vmatpush.msra.mxu0 %v437
    %1311 = vmatpush.msra.mxu0 %v433
    %1312 = vmatpush.msra.mxu0 %v429
    %1313 = vmatpush.msra.mxu0 %v425
    %1314 = vmatpush.msra.mxu0 %v421
    %1315 = vmatmul.f32.gmra.mxu0 %v746
    %v1316 = vpop.f32.mrf.mxu0
    %v1317 = vadd.f32 %v1297, %v1316
    %1318 = vdwg.mxu0
    %1319 = vmatpush.msra.mxu0 %v545
    %1320 = vmatpush.msra.mxu0 %v541
    %1321 = vmatpush.msra.mxu0 %v537
    %1322 = vmatpush.msra.mxu0 %v533
    %1323 = vmatpush.msra.mxu0 %v529
    %1324 = vmatpush.msra.mxu0 %v525
    %1325 = vmatpush.msra.mxu0 %v521
    %1326 = vmatpush.msra.mxu0 %v517
    %1327 = vmatpush.msra.mxu0 %v513
    %1328 = vmatpush.msra.mxu0 %v509
    %1329 = vmatpush.msra.mxu0 %v505
    %1330 = vmatpush.msra.mxu0 %v501
    %1331 = vmatpush.msra.mxu0 %v497
    %1332 = vmatpush.msra.mxu0 %v493
    %1333 = vmatpush.msra.mxu0 %v489
    %1334 = vmatpush.msra.mxu0 %v485
    %1335 = vmatmul.f32.gmra.mxu0 %v747
    %v1336 = vpop.f32.mrf.mxu0
    %v1337 = vadd.f32 %v1317, %v1336
    %1338 = vdwg.mxu0
    %1339 = vmatpush.msra.mxu0 %v609
    %1340 = vmatpush.msra.mxu0 %v605
    %1341 = vmatpush.msra.mxu0 %v601
    %1342 = vmatpush.msra.mxu0 %v597
    %1343 = vmatpush.msra.mxu0 %v593
    %1344 = vmatpush.msra.mxu0 %v589
    %1345 = vmatpush.msra.mxu0 %v585
    %1346 = vmatpush.msra.mxu0 %v581
    %1347 = vmatpush.msra.mxu0 %v577
    %1348 = vmatpush.msra.mxu0 %v573
    %1349 = vmatpush.msra.mxu0 %v569
    %1350 = vmatpush.msra.mxu0 %v565
    %1351 = vmatpush.msra.mxu0 %v561
    %1352 = vmatpush.msra.mxu0 %v557
    %1353 = vmatpush.msra.mxu0 %v553
    %1354 = vmatpush.msra.mxu0 %v549
    %1355 = vmatmul.f32.gmra.mxu0 %v748
    %v1356 = vpop.f32.mrf.mxu0
    %v1357 = vadd.f32 %v1337, %v1356
    %1358 = vdwg.mxu0
    %1359 = vmatpush.msra.mxu0 %v673
    %1360 = vmatpush.msra.mxu0 %v669
    %1361 = vmatpush.msra.mxu0 %v665
    %1362 = vmatpush.msra.mxu0 %v661
    %1363 = vmatpush.msra.mxu0 %v657
    %1364 = vmatpush.msra.mxu0 %v653
    %1365 = vmatpush.msra.mxu0 %v649
    %1366 = vmatpush.msra.mxu0 %v645
    %1367 = vmatpush.msra.mxu0 %v641
    %1368 = vmatpush.msra.mxu0 %v637
    %1369 = vmatpush.msra.mxu0 %v633
    %1370 = vmatpush.msra.mxu0 %v629
    %1371 = vmatpush.msra.mxu0 %v625
    %1372 = vmatpush.msra.mxu0 %v621
    %1373 = vmatpush.msra.mxu0 %v617
    %1374 = vmatpush.msra.mxu0 %v613
    %1375 = vmatmul.f32.gmra.mxu0 %v749
    %v1376 = vpop.f32.mrf.mxu0
    %v1377 = vadd.f32 %v1357, %v1376
    %1378 = vdwg.mxu0
    %1379 = vmatpush.msra.mxu0 %v737
    %1380 = vmatpush.msra.mxu0 %v733
    %1381 = vmatpush.msra.mxu0 %v729
    %1382 = vmatpush.msra.mxu0 %v725
    %1383 = vmatpush.msra.mxu0 %v721
    %1384 = vmatpush.msra.mxu0 %v717
    %1385 = vmatpush.msra.mxu0 %v713
    %1386 = vmatpush.msra.mxu0 %v709
    %1387 = vmatpush.msra.mxu0 %v705
    %1388 = vmatpush.msra.mxu0 %v701
    %1389 = vmatpush.msra.mxu0 %v697
    %1390 = vmatpush.msra.mxu0 %v693
    %1391 = vmatpush.msra.mxu0 %v689
    %1392 = vmatpush.msra.mxu0 %v685
    %1393 = vmatpush.msra.mxu0 %v681
    %1394 = vmatpush.msra.mxu0 %v677
    %1395 = vmatmul.f32.gmra.mxu0 %v750
    %v1396 = vpop.f32.mrf.mxu0
    %v1397 = vadd.f32 %v1377, %v1396
    %1398 = vdwg.mxu0
    %v1399 = vld [vmem:[#allocation7] sm:$0xff]
    %v1400 = vld [vmem:[#allocation7 + $0x8] sm:$0xff]
    %v1401 = vld [vmem:[#allocation7 + $0x10] sm:$0xff]
    %v1402 = vld [vmem:[#allocation7 + $0x18] sm:$0xff]
    %v1403 = vld [vmem:[#allocation7 + $0x20] sm:$0xff]
    %v1404 = vld [vmem:[#allocation7 + $0x28] sm:$0xff]
    %v1405 = vld [vmem:[#allocation7 + $0x30] sm:$0xff]
    %v1406 = vld [vmem:[#allocation7 + $0x38] sm:$0xff]
    %v1407 = vld [vmem:[%s3] sm:$0xff]
    %v1408 = vld [vmem:[%s3 + $0x8] sm:$0xff]
    %v1409 = vld [vmem:[%s3 + $0x10] sm:$0xff]
    %v1410 = vld [vmem:[%s3 + $0x18] sm:$0xff]
    %v1411 = vld [vmem:[%s3 + $0x20] sm:$0xff]
    %v1412 = vld [vmem:[%s3 + $0x28] sm:$0xff]
    %v1413 = vld [vmem:[%s3 + $0x30] sm:$0xff]
    %v1414 = vld [vmem:[%s3 + $0x38] sm:$0xff]
    %v1415 = vld [vmem:[#allocation8] sm:$0xff]
    %v1416 = vld [vmem:[#allocation8 + $0x8] sm:$0xff]
    %v1417 = vld [vmem:[#allocation10] sm:$0x1]
    %vm1418 = vcmask 523264
    %v1420 = vsel %vm1418, %v917, 0
    %1422 = vmatpush.msra.mxu0 0.0
    %1423 = vmatpush.msra.mxu0 0.0
    %1424 = vmatpush.msra.mxu0 0.0
    %1425 = vmatpush.msra.mxu0 0.0
    %1426 = vmatpush.msra.mxu0 0.0
    %1427 = vmatpush.msra.mxu0 0.0
    %1428 = vmatpush.msra.mxu0 0.0
    %1429 = vmatpush.msra.mxu0 0.0
    %1430 = vmatpush.msra.mxu0 %v1406
    %1431 = vmatpush.msra.mxu0 %v1405
    %1432 = vmatpush.msra.mxu0 %v1404
    %1433 = vmatpush.msra.mxu0 %v1403
    %1434 = vmatpush.msra.mxu0 %v1402
    %1435 = vmatpush.msra.mxu0 %v1401
    %1436 = vmatpush.msra.mxu0 %v1400
    %1437 = vmatpush.msra.mxu0 %v1399
    %1438 = vmatmul.f32.gmra.mxu0 %v1420
    %v1439 = vpop.f32.mrf.mxu0
    %v1440 = vadd.f32 0.0, %v1439
    %1441 = vdwg.mxu0
    %v1442 = vmul.f32 %v1440, %v1440
    %1444 = vrot.lane.b32.xlu0 %v1442, 64
    %v1445 = vpop.permute.xlu0 %1444
    %v1447 = vadd.f32 %v1442, %v1445
    %v1449 = vsel %vm1418, %v1447, 0
    %1451 = vmatpush.msra.mxu0 0.0
    %1452 = vmatpush.msra.mxu0 0.0
    %1453 = vmatpush.msra.mxu0 0.0
    %1454 = vmatpush.msra.mxu0 0.0
    %1455 = vmatpush.msra.mxu0 0.0
    %1456 = vmatpush.msra.mxu0 0.0
    %1457 = vmatpush.msra.mxu0 0.0
    %1458 = vmatpush.msra.mxu0 0.0
    %1459 = vmatpush.msra.mxu0 %v1414
    %1460 = vmatpush.msra.mxu0 %v1413
    %1461 = vmatpush.msra.mxu0 %v1412
    %1462 = vmatpush.msra.mxu0 %v1411
    %1463 = vmatpush.msra.mxu0 %v1410
    %1464 = vmatpush.msra.mxu0 %v1409
    %1465 = vmatpush.msra.mxu0 %v1408
    %1466 = vmatpush.msra.mxu0 %v1407
    %1467 = vmatmul.f32.gmra.mxu0 %v1449
    %v1468 = vpop.f32.mrf.mxu0
    %v1469 = vadd.f32 1e-06, %v1468
    %1470 = vdwg.mxu0
    %v1471 = vlog2.pop %v1469
    %v1472 = vmul.f32 %v1471, 0.6931472
    %v1474 = vperm.slane %v1417, 0
    %vm1476 = vcmask 130048
    %v1478 = vsel %vm1476, %v1472, 0
    %1480 = vmatpush.msra.mxu0 0.0
    %1481 = vmatpush.msra.mxu0 0.0
    %1482 = vmatpush.msra.mxu0 0.0
    %1483 = vmatpush.msra.mxu0 0.0
    %1484 = vmatpush.msra.mxu0 0.0
    %1485 = vmatpush.msra.mxu0 0.0
    %1486 = vmatpush.msra.mxu0 0.0
    %1487 = vmatpush.msra.mxu0 0.0
    %1488 = vmatpush.msra.mxu0 0.0
    %1489 = vmatpush.msra.mxu0 0.0
    %1490 = vmatpush.msra.mxu0 0.0
    %1491 = vmatpush.msra.mxu0 0.0
    %1492 = vmatpush.msra.mxu0 0.0
    %1493 = vmatpush.msra.mxu0 0.0
    %1494 = vmatpush.msra.mxu0 %v1416
    %1495 = vmatpush.msra.mxu0 %v1415
    %1496 = vmatmul.f32.gmra.mxu0 %v1478
    %v1497 = vpop.f32.mrf.mxu0
    %v1498 = vadd.f32 %v1474, %v1497
    %1499 = vdwg.mxu0
    %1500 = vrot.lane.b32.xlu0 %v917, 96
    %v1501 = vpop.permute.xlu0 %1500
    %v1502 = vsel %vm1418, %v1501, 0
    %1504 = vmatpush.msra.mxu0 0.0
    %1505 = vmatpush.msra.mxu0 0.0
    %1506 = vmatpush.msra.mxu0 0.0
    %1507 = vmatpush.msra.mxu0 0.0
    %1508 = vmatpush.msra.mxu0 0.0
    %1509 = vmatpush.msra.mxu0 0.0
    %1510 = vmatpush.msra.mxu0 0.0
    %1511 = vmatpush.msra.mxu0 0.0
    %1512 = vmatpush.msra.mxu0 %v1406
    %1513 = vmatpush.msra.mxu0 %v1405
    %1514 = vmatpush.msra.mxu0 %v1404
    %1515 = vmatpush.msra.mxu0 %v1403
    %1516 = vmatpush.msra.mxu0 %v1402
    %1517 = vmatpush.msra.mxu0 %v1401
    %1518 = vmatpush.msra.mxu0 %v1400
    %1519 = vmatpush.msra.mxu0 %v1399
    %1520 = vmatmul.f32.gmra.mxu0 %v1502
    %v1521 = vpop.f32.mrf.mxu0
    %v1522 = vadd.f32 0.0, %v1521
    %1523 = vdwg.mxu0
    %v1524 = vmul.f32 %v1522, %v1522
    %1526 = vrot.lane.b32.xlu0 %v1524, 64
    %v1527 = vpop.permute.xlu0 %1526
    %v1529 = vadd.f32 %v1524, %v1527
    %v1531 = vsel %vm1418, %v1529, 0
    %1533 = vmatpush.msra.mxu0 0.0
    %1534 = vmatpush.msra.mxu0 0.0
    %1535 = vmatpush.msra.mxu0 0.0
    %1536 = vmatpush.msra.mxu0 0.0
    %1537 = vmatpush.msra.mxu0 0.0
    %1538 = vmatpush.msra.mxu0 0.0
    %1539 = vmatpush.msra.mxu0 0.0
    %1540 = vmatpush.msra.mxu0 0.0
    %1541 = vmatpush.msra.mxu0 %v1414
    %1542 = vmatpush.msra.mxu0 %v1413
    %1543 = vmatpush.msra.mxu0 %v1412
    %1544 = vmatpush.msra.mxu0 %v1411
    %1545 = vmatpush.msra.mxu0 %v1410
    %1546 = vmatpush.msra.mxu0 %v1409
    %1547 = vmatpush.msra.mxu0 %v1408
    %1548 = vmatpush.msra.mxu0 %v1407
    %1549 = vmatmul.f32.gmra.mxu0 %v1531
    %v1550 = vpop.f32.mrf.mxu0
    %v1551 = vadd.f32 1e-06, %v1550
    %1552 = vdwg.mxu0
    %v1553 = vlog2.pop %v1551
    %v1554 = vmul.f32 %v1553, 0.6931472
    %v1556 = vsel %vm1476, %v1554, 0
    %1558 = vmatpush.msra.mxu0 0.0
    %1559 = vmatpush.msra.mxu0 0.0
    %1560 = vmatpush.msra.mxu0 0.0
    %1561 = vmatpush.msra.mxu0 0.0
    %1562 = vmatpush.msra.mxu0 0.0
    %1563 = vmatpush.msra.mxu0 0.0
    %1564 = vmatpush.msra.mxu0 0.0
    %1565 = vmatpush.msra.mxu0 0.0
    %1566 = vmatpush.msra.mxu0 0.0
    %1567 = vmatpush.msra.mxu0 0.0
    %1568 = vmatpush.msra.mxu0 0.0
    %1569 = vmatpush.msra.mxu0 0.0
    %1570 = vmatpush.msra.mxu0 0.0
    %1571 = vmatpush.msra.mxu0 0.0
    %1572 = vmatpush.msra.mxu0 %v1416
    %1573 = vmatpush.msra.mxu0 %v1415
    %1574 = vmatmul.f32.gmra.mxu0 %v1556
    %v1575 = vpop.f32.mrf.mxu0
    %v1576 = vadd.f32 %v1474, %v1575
    %1577 = vdwg.mxu0
    %1578 = vrot.lane.b32.xlu0 %v917, 64
    %v1579 = vpop.permute.xlu0 %1578
    %v1580 = vsel %vm1418, %v1579, 0
    %1582 = vmatpush.msra.mxu0 0.0
    %1583 = vmatpush.msra.mxu0 0.0
    %1584 = vmatpush.msra.mxu0 0.0
    %1585 = vmatpush.msra.mxu0 0.0
    %1586 = vmatpush.msra.mxu0 0.0
    %1587 = vmatpush.msra.mxu0 0.0
    %1588 = vmatpush.msra.mxu0 0.0
    %1589 = vmatpush.msra.mxu0 0.0
    %1590 = vmatpush.msra.mxu0 %v1406
    %1591 = vmatpush.msra.mxu0 %v1405
    %1592 = vmatpush.msra.mxu0 %v1404
    %1593 = vmatpush.msra.mxu0 %v1403
    %1594 = vmatpush.msra.mxu0 %v1402
    %1595 = vmatpush.msra.mxu0 %v1401
    %1596 = vmatpush.msra.mxu0 %v1400
    %1597 = vmatpush.msra.mxu0 %v1399
    %1598 = vmatmul.f32.gmra.mxu0 %v1580
    %v1599 = vpop.f32.mrf.mxu0
    %v1600 = vadd.f32 0.0, %v1599
    %1601 = vdwg.mxu0
    %v1602 = vmul.f32 %v1600, %v1600
    %1604 = vrot.lane.b32.xlu0 %v1602, 64
    %v1605 = vpop.permute.xlu0 %1604
    %v1607 = vadd.f32 %v1602, %v1605
    %v1609 = vsel %vm1418, %v1607, 0
    %1611 = vmatpush.msra.mxu0 0.0
    %1612 = vmatpush.msra.mxu0 0.0
    %1613 = vmatpush.msra.mxu0 0.0
    %1614 = vmatpush.msra.mxu0 0.0
    %1615 = vmatpush.msra.mxu0 0.0
    %1616 = vmatpush.msra.mxu0 0.0
    %1617 = vmatpush.msra.mxu0 0.0
    %1618 = vmatpush.msra.mxu0 0.0
    %1619 = vmatpush.msra.mxu0 %v1414
    %1620 = vmatpush.msra.mxu0 %v1413
    %1621 = vmatpush.msra.mxu0 %v1412
    %1622 = vmatpush.msra.mxu0 %v1411
    %1623 = vmatpush.msra.mxu0 %v1410
    %1624 = vmatpush.msra.mxu0 %v1409
    %1625 = vmatpush.msra.mxu0 %v1408
    %1626 = vmatpush.msra.mxu0 %v1407
    %1627 = vmatmul.f32.gmra.mxu0 %v1609
    %v1628 = vpop.f32.mrf.mxu0
    %v1629 = vadd.f32 1e-06, %v1628
    %1630 = vdwg.mxu0
    %v1631 = vlog2.pop %v1629
    %v1632 = vmul.f32 %v1631, 0.6931472
    %v1634 = vsel %vm1476, %v1632, 0
    %1636 = vmatpush.msra.mxu0 0.0
    %1637 = vmatpush.msra.mxu0 0.0
    %1638 = vmatpush.msra.mxu0 0.0
    %1639 = vmatpush.msra.mxu0 0.0
    %1640 = vmatpush.msra.mxu0 0.0
    %1641 = vmatpush.msra.mxu0 0.0
    %1642 = vmatpush.msra.mxu0 0.0
    %1643 = vmatpush.msra.mxu0 0.0
    %1644 = vmatpush.msra.mxu0 0.0
    %1645 = vmatpush.msra.mxu0 0.0
    %1646 = vmatpush.msra.mxu0 0.0
    %1647 = vmatpush.msra.mxu0 0.0
    %1648 = vmatpush.msra.mxu0 0.0
    %1649 = vmatpush.msra.mxu0 0.0
    %1650 = vmatpush.msra.mxu0 %v1416
    %1651 = vmatpush.msra.mxu0 %v1415
    %1652 = vmatmul.f32.gmra.mxu0 %v1634
    %v1653 = vpop.f32.mrf.mxu0
    %v1654 = vadd.f32 %v1474, %v1653
    %1655 = vdwg.mxu0
    %1657 = vrot.lane.b32.xlu0 %v917, 32
    %v1658 = vpop.permute.xlu0 %1657
    %1659 = vrot.lane.b32.xlu0 %v1077, 32
    %v1660 = vpop.permute.xlu0 %1659
    %vm1661 = vcmask 261120
    %v1662 = vsel %vm1661, %v1658, %v1660
    %v1663 = vsel %vm1418, %v1662, 0
    %1665 = vmatpush.msra.mxu0 0.0
    %1666 = vmatpush.msra.mxu0 0.0
    %1667 = vmatpush.msra.mxu0 0.0
    %1668 = vmatpush.msra.mxu0 0.0
    %1669 = vmatpush.msra.mxu0 0.0
    %1670 = vmatpush.msra.mxu0 0.0
    %1671 = vmatpush.msra.mxu0 0.0
    %1672 = vmatpush.msra.mxu0 0.0
    %1673 = vmatpush.msra.mxu0 %v1406
    %1674 = vmatpush.msra.mxu0 %v1405
    %1675 = vmatpush.msra.mxu0 %v1404
    %1676 = vmatpush.msra.mxu0 %v1403
    %1677 = vmatpush.msra.mxu0 %v1402
    %1678 = vmatpush.msra.mxu0 %v1401
    %1679 = vmatpush.msra.mxu0 %v1400
    %1680 = vmatpush.msra.mxu0 %v1399
    %1681 = vmatmul.f32.gmra.mxu0 %v1663
    %v1682 = vpop.f32.mrf.mxu0
    %v1683 = vadd.f32 0.0, %v1682
    %1684 = vdwg.mxu0
    %v1685 = vmul.f32 %v1683, %v1683
    %1687 = vrot.lane.b32.xlu0 %v1685, 64
    %v1688 = vpop.permute.xlu0 %1687
    %v1690 = vadd.f32 %v1685, %v1688
    %v1692 = vsel %vm1418, %v1690, 0
    %1694 = vmatpush.msra.mxu0 0.0
    %1695 = vmatpush.msra.mxu0 0.0
    %1696 = vmatpush.msra.mxu0 0.0
    %1697 = vmatpush.msra.mxu0 0.0
    %1698 = vmatpush.msra.mxu0 0.0
    %1699 = vmatpush.msra.mxu0 0.0
    %1700 = vmatpush.msra.mxu0 0.0
    %1701 = vmatpush.msra.mxu0 0.0
    %1702 = vmatpush.msra.mxu0 %v1414
    %1703 = vmatpush.msra.mxu0 %v1413
    %1704 = vmatpush.msra.mxu0 %v1412
    %1705 = vmatpush.msra.mxu0 %v1411
    %1706 = vmatpush.msra.mxu0 %v1410
    %1707 = vmatpush.msra.mxu0 %v1409
    %1708 = vmatpush.msra.mxu0 %v1408
    %1709 = vmatpush.msra.mxu0 %v1407
    %1710 = vmatmul.f32.gmra.mxu0 %v1692
    %v1711 = vpop.f32.mrf.mxu0
    %v1712 = vadd.f32 1e-06, %v1711
    %1713 = vdwg.mxu0
    %v1714 = vlog2.pop %v1712
    %v1715 = vmul.f32 %v1714, 0.6931472
    %v1717 = vsel %vm1476, %v1715, 0
    %1719 = vmatpush.msra.mxu0 0.0
    %1720 = vmatpush.msra.mxu0 0.0
    %1721 = vmatpush.msra.mxu0 0.0
    %1722 = vmatpush.msra.mxu0 0.0
    %1723 = vmatpush.msra.mxu0 0.0
    %1724 = vmatpush.msra.mxu0 0.0
    %1725 = vmatpush.msra.mxu0 0.0
    %1726 = vmatpush.msra.mxu0 0.0
    %1727 = vmatpush.msra.mxu0 0.0
    %1728 = vmatpush.msra.mxu0 0.0
    %1729 = vmatpush.msra.mxu0 0.0
    %1730 = vmatpush.msra.mxu0 0.0
    %1731 = vmatpush.msra.mxu0 0.0
    %1732 = vmatpush.msra.mxu0 0.0
    %1733 = vmatpush.msra.mxu0 %v1416
    %1734 = vmatpush.msra.mxu0 %v1415
    %1735 = vmatmul.f32.gmra.mxu0 %v1717
    %v1736 = vpop.f32.mrf.mxu0
    %v1737 = vadd.f32 %v1474, %v1736
    %1738 = vdwg.mxu0
    %v1739 = vsel %vm1418, %v1077, 0
    %1741 = vmatpush.msra.mxu0 0.0
    %1742 = vmatpush.msra.mxu0 0.0
    %1743 = vmatpush.msra.mxu0 0.0
    %1744 = vmatpush.msra.mxu0 0.0
    %1745 = vmatpush.msra.mxu0 0.0
    %1746 = vmatpush.msra.mxu0 0.0
    %1747 = vmatpush.msra.mxu0 0.0
    %1748 = vmatpush.msra.mxu0 0.0
    %1749 = vmatpush.msra.mxu0 %v1406
    %1750 = vmatpush.msra.mxu0 %v1405
    %1751 = vmatpush.msra.mxu0 %v1404
    %1752 = vmatpush.msra.mxu0 %v1403
    %1753 = vmatpush.msra.mxu0 %v1402
    %1754 = vmatpush.msra.mxu0 %v1401
    %1755 = vmatpush.msra.mxu0 %v1400
    %1756 = vmatpush.msra.mxu0 %v1399
    %1757 = vmatmul.f32.gmra.mxu0 %v1739
    %v1758 = vpop.f32.mrf.mxu0
    %v1759 = vadd.f32 0.0, %v1758
    %1760 = vdwg.mxu0
    %v1761 = vmul.f32 %v1759, %v1759
    %1763 = vrot.lane.b32.xlu0 %v1761, 64
    %v1764 = vpop.permute.xlu0 %1763
    %v1766 = vadd.f32 %v1761, %v1764
    %v1768 = vsel %vm1418, %v1766, 0
    %1770 = vmatpush.msra.mxu0 0.0
    %1771 = vmatpush.msra.mxu0 0.0
    %1772 = vmatpush.msra.mxu0 0.0
    %1773 = vmatpush.msra.mxu0 0.0
    %1774 = vmatpush.msra.mxu0 0.0
    %1775 = vmatpush.msra.mxu0 0.0
    %1776 = vmatpush.msra.mxu0 0.0
    %1777 = vmatpush.msra.mxu0 0.0
    %1778 = vmatpush.msra.mxu0 %v1414
    %1779 = vmatpush.msra.mxu0 %v1413
    %1780 = vmatpush.msra.mxu0 %v1412
    %1781 = vmatpush.msra.mxu0 %v1411
    %1782 = vmatpush.msra.mxu0 %v1410
    %1783 = vmatpush.msra.mxu0 %v1409
    %1784 = vmatpush.msra.mxu0 %v1408
    %1785 = vmatpush.msra.mxu0 %v1407
    %1786 = vmatmul.f32.gmra.mxu0 %v1768
    %v1787 = vpop.f32.mrf.mxu0
    %v1788 = vadd.f32 1e-06, %v1787
    %1789 = vdwg.mxu0
    %v1790 = vlog2.pop %v1788
    %v1791 = vmul.f32 %v1790, 0.6931472
    %v1793 = vsel %vm1476, %v1791, 0
    %1795 = vmatpush.msra.mxu0 0.0
    %1796 = vmatpush.msra.mxu0 0.0
    %1797 = vmatpush.msra.mxu0 0.0
    %1798 = vmatpush.msra.mxu0 0.0
    %1799 = vmatpush.msra.mxu0 0.0
    %1800 = vmatpush.msra.mxu0 0.0
    %1801 = vmatpush.msra.mxu0 0.0
    %1802 = vmatpush.msra.mxu0 0.0
    %1803 = vmatpush.msra.mxu0 0.0
    %1804 = vmatpush.msra.mxu0 0.0
    %1805 = vmatpush.msra.mxu0 0.0
    %1806 = vmatpush.msra.mxu0 0.0
    %1807 = vmatpush.msra.mxu0 0.0
    %1808 = vmatpush.msra.mxu0 0.0
    %1809 = vmatpush.msra.mxu0 %v1416
    %1810 = vmatpush.msra.mxu0 %v1415
    %1811 = vmatmul.f32.gmra.mxu0 %v1793
    %v1812 = vpop.f32.mrf.mxu0
    %v1813 = vadd.f32 %v1474, %v1812
    %1814 = vdwg.mxu0
    %1815 = vrot.lane.b32.xlu0 %v1077, 96
    %v1816 = vpop.permute.xlu0 %1815
    %v1817 = vsel %vm1418, %v1816, 0
    %1819 = vmatpush.msra.mxu0 0.0
    %1820 = vmatpush.msra.mxu0 0.0
    %1821 = vmatpush.msra.mxu0 0.0
    %1822 = vmatpush.msra.mxu0 0.0
    %1823 = vmatpush.msra.mxu0 0.0
    %1824 = vmatpush.msra.mxu0 0.0
    %1825 = vmatpush.msra.mxu0 0.0
    %1826 = vmatpush.msra.mxu0 0.0
    %1827 = vmatpush.msra.mxu0 %v1406
    %1828 = vmatpush.msra.mxu0 %v1405
    %1829 = vmatpush.msra.mxu0 %v1404
    %1830 = vmatpush.msra.mxu0 %v1403
    %1831 = vmatpush.msra.mxu0 %v1402
    %1832 = vmatpush.msra.mxu0 %v1401
    %1833 = vmatpush.msra.mxu0 %v1400
    %1834 = vmatpush.msra.mxu0 %v1399
    %1835 = vmatmul.f32.gmra.mxu0 %v1817
    %v1836 = vpop.f32.mrf.mxu0
    %v1837 = vadd.f32 0.0, %v1836
    %1838 = vdwg.mxu0
    %v1839 = vmul.f32 %v1837, %v1837
    %1841 = vrot.lane.b32.xlu0 %v1839, 64
    %v1842 = vpop.permute.xlu0 %1841
    %v1844 = vadd.f32 %v1839, %v1842
    %v1846 = vsel %vm1418, %v1844, 0
    %1848 = vmatpush.msra.mxu0 0.0
    %1849 = vmatpush.msra.mxu0 0.0
    %1850 = vmatpush.msra.mxu0 0.0
    %1851 = vmatpush.msra.mxu0 0.0
    %1852 = vmatpush.msra.mxu0 0.0
    %1853 = vmatpush.msra.mxu0 0.0
    %1854 = vmatpush.msra.mxu0 0.0
    %1855 = vmatpush.msra.mxu0 0.0
    %1856 = vmatpush.msra.mxu0 %v1414
    %1857 = vmatpush.msra.mxu0 %v1413
    %1858 = vmatpush.msra.mxu0 %v1412
    %1859 = vmatpush.msra.mxu0 %v1411
    %1860 = vmatpush.msra.mxu0 %v1410
    %1861 = vmatpush.msra.mxu0 %v1409
    %1862 = vmatpush.msra.mxu0 %v1408
    %1863 = vmatpush.msra.mxu0 %v1407
    %1864 = vmatmul.f32.gmra.mxu0 %v1846
    %v1865 = vpop.f32.mrf.mxu0
    %v1866 = vadd.f32 1e-06, %v1865
    %1867 = vdwg.mxu0
    %v1868 = vlog2.pop %v1866
    %v1869 = vmul.f32 %v1868, 0.6931472
    %v1871 = vsel %vm1476, %v1869, 0
    %1873 = vmatpush.msra.mxu0 0.0
    %1874 = vmatpush.msra.mxu0 0.0
    %1875 = vmatpush.msra.mxu0 0.0
    %1876 = vmatpush.msra.mxu0 0.0
    %1877 = vmatpush.msra.mxu0 0.0
    %1878 = vmatpush.msra.mxu0 0.0
    %1879 = vmatpush.msra.mxu0 0.0
    %1880 = vmatpush.msra.mxu0 0.0
    %1881 = vmatpush.msra.mxu0 0.0
    %1882 = vmatpush.msra.mxu0 0.0
    %1883 = vmatpush.msra.mxu0 0.0
    %1884 = vmatpush.msra.mxu0 0.0
    %1885 = vmatpush.msra.mxu0 0.0
    %1886 = vmatpush.msra.mxu0 0.0
    %1887 = vmatpush.msra.mxu0 %v1416
    %1888 = vmatpush.msra.mxu0 %v1415
    %1889 = vmatmul.f32.gmra.mxu0 %v1871
    %v1890 = vpop.f32.mrf.mxu0
    %v1891 = vadd.f32 %v1474, %v1890
    %1892 = vdwg.mxu0
    %1893 = vrot.lane.b32.xlu0 %v1077, 64
    %v1894 = vpop.permute.xlu0 %1893
    %v1895 = vsel %vm1418, %v1894, 0
    %1897 = vmatpush.msra.mxu0 0.0
    %1898 = vmatpush.msra.mxu0 0.0
    %1899 = vmatpush.msra.mxu0 0.0
    %1900 = vmatpush.msra.mxu0 0.0
    %1901 = vmatpush.msra.mxu0 0.0
    %1902 = vmatpush.msra.mxu0 0.0
    %1903 = vmatpush.msra.mxu0 0.0
    %1904 = vmatpush.msra.mxu0 0.0
    %1905 = vmatpush.msra.mxu0 %v1406
    %1906 = vmatpush.msra.mxu0 %v1405
    %1907 = vmatpush.msra.mxu0 %v1404
    %1908 = vmatpush.msra.mxu0 %v1403
    %1909 = vmatpush.msra.mxu0 %v1402
    %1910 = vmatpush.msra.mxu0 %v1401
    %1911 = vmatpush.msra.mxu0 %v1400
    %1912 = vmatpush.msra.mxu0 %v1399
    %1913 = vmatmul.f32.gmra.mxu0 %v1895
    %v1914 = vpop.f32.mrf.mxu0
    %v1915 = vadd.f32 0.0, %v1914
    %1916 = vdwg.mxu0
    %v1917 = vmul.f32 %v1915, %v1915
    %1919 = vrot.lane.b32.xlu0 %v1917, 64
    %v1920 = vpop.permute.xlu0 %1919
    %v1922 = vadd.f32 %v1917, %v1920
    %v1924 = vsel %vm1418, %v1922, 0
    %1926 = vmatpush.msra.mxu0 0.0
    %1927 = vmatpush.msra.mxu0 0.0
    %1928 = vmatpush.msra.mxu0 0.0
    %1929 = vmatpush.msra.mxu0 0.0
    %1930 = vmatpush.msra.mxu0 0.0
    %1931 = vmatpush.msra.mxu0 0.0
    %1932 = vmatpush.msra.mxu0 0.0
    %1933 = vmatpush.msra.mxu0 0.0
    %1934 = vmatpush.msra.mxu0 %v1414
    %1935 = vmatpush.msra.mxu0 %v1413
    %1936 = vmatpush.msra.mxu0 %v1412
    %1937 = vmatpush.msra.mxu0 %v1411
    %1938 = vmatpush.msra.mxu0 %v1410
    %1939 = vmatpush.msra.mxu0 %v1409
    %1940 = vmatpush.msra.mxu0 %v1408
    %1941 = vmatpush.msra.mxu0 %v1407
    %1942 = vmatmul.f32.gmra.mxu0 %v1924
    %v1943 = vpop.f32.mrf.mxu0
    %v1944 = vadd.f32 1e-06, %v1943
    %1945 = vdwg.mxu0
    %v1946 = vlog2.pop %v1944
    %v1947 = vmul.f32 %v1946, 0.6931472
    %v1949 = vsel %vm1476, %v1947, 0
    %1951 = vmatpush.msra.mxu0 0.0
    %1952 = vmatpush.msra.mxu0 0.0
    %1953 = vmatpush.msra.mxu0 0.0
    %1954 = vmatpush.msra.mxu0 0.0
    %1955 = vmatpush.msra.mxu0 0.0
    %1956 = vmatpush.msra.mxu0 0.0
    %1957 = vmatpush.msra.mxu0 0.0
    %1958 = vmatpush.msra.mxu0 0.0
    %1959 = vmatpush.msra.mxu0 0.0
    %1960 = vmatpush.msra.mxu0 0.0
    %1961 = vmatpush.msra.mxu0 0.0
    %1962 = vmatpush.msra.mxu0 0.0
    %1963 = vmatpush.msra.mxu0 0.0
    %1964 = vmatpush.msra.mxu0 0.0
    %1965 = vmatpush.msra.mxu0 %v1416
    %1966 = vmatpush.msra.mxu0 %v1415
    %1967 = vmatmul.f32.gmra.mxu0 %v1949
    %v1968 = vpop.f32.mrf.mxu0
    %v1969 = vadd.f32 %v1474, %v1968
    %1970 = vdwg.mxu0
    %1972 = vrot.lane.b32.xlu0 %v1237, 32
    %v1973 = vpop.permute.xlu0 %1972
    %v1974 = vsel %vm1661, %v1660, %v1973
    %v1975 = vsel %vm1418, %v1974, 0
    %1977 = vmatpush.msra.mxu0 0.0
    %1978 = vmatpush.msra.mxu0 0.0
    %1979 = vmatpush.msra.mxu0 0.0
    %1980 = vmatpush.msra.mxu0 0.0
    %1981 = vmatpush.msra.mxu0 0.0
    %1982 = vmatpush.msra.mxu0 0.0
    %1983 = vmatpush.msra.mxu0 0.0
    %1984 = vmatpush.msra.mxu0 0.0
    %1985 = vmatpush.msra.mxu0 %v1406
    %1986 = vmatpush.msra.mxu0 %v1405
    %1987 = vmatpush.msra.mxu0 %v1404
    %1988 = vmatpush.msra.mxu0 %v1403
    %1989 = vmatpush.msra.mxu0 %v1402
    %1990 = vmatpush.msra.mxu0 %v1401
    %1991 = vmatpush.msra.mxu0 %v1400
    %1992 = vmatpush.msra.mxu0 %v1399
    %1993 = vmatmul.f32.gmra.mxu0 %v1975
    %v1994 = vpop.f32.mrf.mxu0
    %v1995 = vadd.f32 0.0, %v1994
    %1996 = vdwg.mxu0
    %v1997 = vmul.f32 %v1995, %v1995
    %1999 = vrot.lane.b32.xlu0 %v1997, 64
    %v2000 = vpop.permute.xlu0 %1999
    %v2002 = vadd.f32 %v1997, %v2000
    %v2004 = vsel %vm1418, %v2002, 0
    %2006 = vmatpush.msra.mxu0 0.0
    %2007 = vmatpush.msra.mxu0 0.0
    %2008 = vmatpush.msra.mxu0 0.0
    %2009 = vmatpush.msra.mxu0 0.0
    %2010 = vmatpush.msra.mxu0 0.0
    %2011 = vmatpush.msra.mxu0 0.0
    %2012 = vmatpush.msra.mxu0 0.0
    %2013 = vmatpush.msra.mxu0 0.0
    %2014 = vmatpush.msra.mxu0 %v1414
    %2015 = vmatpush.msra.mxu0 %v1413
    %2016 = vmatpush.msra.mxu0 %v1412
    %2017 = vmatpush.msra.mxu0 %v1411
    %2018 = vmatpush.msra.mxu0 %v1410
    %2019 = vmatpush.msra.mxu0 %v1409
    %2020 = vmatpush.msra.mxu0 %v1408
    %2021 = vmatpush.msra.mxu0 %v1407
    %2022 = vmatmul.f32.gmra.mxu0 %v2004
    %v2023 = vpop.f32.mrf.mxu0
    %v2024 = vadd.f32 1e-06, %v2023
    %2025 = vdwg.mxu0
    %v2026 = vlog2.pop %v2024
    %v2027 = vmul.f32 %v2026, 0.6931472
    %v2029 = vsel %vm1476, %v2027, 0
    %2031 = vmatpush.msra.mxu0 0.0
    %2032 = vmatpush.msra.mxu0 0.0
    %2033 = vmatpush.msra.mxu0 0.0
    %2034 = vmatpush.msra.mxu0 0.0
    %2035 = vmatpush.msra.mxu0 0.0
    %2036 = vmatpush.msra.mxu0 0.0
    %2037 = vmatpush.msra.mxu0 0.0
    %2038 = vmatpush.msra.mxu0 0.0
    %2039 = vmatpush.msra.mxu0 0.0
    %2040 = vmatpush.msra.mxu0 0.0
    %2041 = vmatpush.msra.mxu0 0.0
    %2042 = vmatpush.msra.mxu0 0.0
    %2043 = vmatpush.msra.mxu0 0.0
    %2044 = vmatpush.msra.mxu0 0.0
    %2045 = vmatpush.msra.mxu0 %v1416
    %2046 = vmatpush.msra.mxu0 %v1415
    %2047 = vmatmul.f32.gmra.mxu0 %v2029
    %v2048 = vpop.f32.mrf.mxu0
    %v2049 = vadd.f32 %v1474, %v2048
    %2050 = vdwg.mxu0
    %v2051 = vsel %vm1418, %v1237, 0
    %2053 = vmatpush.msra.mxu0 0.0
    %2054 = vmatpush.msra.mxu0 0.0
    %2055 = vmatpush.msra.mxu0 0.0
    %2056 = vmatpush.msra.mxu0 0.0
    %2057 = vmatpush.msra.mxu0 0.0
    %2058 = vmatpush.msra.mxu0 0.0
    %2059 = vmatpush.msra.mxu0 0.0
    %2060 = vmatpush.msra.mxu0 0.0
    %2061 = vmatpush.msra.mxu0 %v1406
    %2062 = vmatpush.msra.mxu0 %v1405
    %2063 = vmatpush.msra.mxu0 %v1404
    %2064 = vmatpush.msra.mxu0 %v1403
    %2065 = vmatpush.msra.mxu0 %v1402
    %2066 = vmatpush.msra.mxu0 %v1401
    %2067 = vmatpush.msra.mxu0 %v1400
    %2068 = vmatpush.msra.mxu0 %v1399
    %2069 = vmatmul.f32.gmra.mxu0 %v2051
    %v2070 = vpop.f32.mrf.mxu0
    %v2071 = vadd.f32 0.0, %v2070
    %2072 = vdwg.mxu0
    %v2073 = vmul.f32 %v2071, %v2071
    %2075 = vrot.lane.b32.xlu0 %v2073, 64
    %v2076 = vpop.permute.xlu0 %2075
    %v2078 = vadd.f32 %v2073, %v2076
    %v2080 = vsel %vm1418, %v2078, 0
    %2082 = vmatpush.msra.mxu0 0.0
    %2083 = vmatpush.msra.mxu0 0.0
    %2084 = vmatpush.msra.mxu0 0.0
    %2085 = vmatpush.msra.mxu0 0.0
    %2086 = vmatpush.msra.mxu0 0.0
    %2087 = vmatpush.msra.mxu0 0.0
    %2088 = vmatpush.msra.mxu0 0.0
    %2089 = vmatpush.msra.mxu0 0.0
    %2090 = vmatpush.msra.mxu0 %v1414
    %2091 = vmatpush.msra.mxu0 %v1413
    %2092 = vmatpush.msra.mxu0 %v1412
    %2093 = vmatpush.msra.mxu0 %v1411
    %2094 = vmatpush.msra.mxu0 %v1410
    %2095 = vmatpush.msra.mxu0 %v1409
    %2096 = vmatpush.msra.mxu0 %v1408
    %2097 = vmatpush.msra.mxu0 %v1407
    %2098 = vmatmul.f32.gmra.mxu0 %v2080
    %v2099 = vpop.f32.mrf.mxu0
    %v2100 = vadd.f32 1e-06, %v2099
    %2101 = vdwg.mxu0
    %v2102 = vlog2.pop %v2100
    %v2103 = vmul.f32 %v2102, 0.6931472
    %v2105 = vsel %vm1476, %v2103, 0
    %2107 = vmatpush.msra.mxu0 0.0
    %2108 = vmatpush.msra.mxu0 0.0
    %2109 = vmatpush.msra.mxu0 0.0
    %2110 = vmatpush.msra.mxu0 0.0
    %2111 = vmatpush.msra.mxu0 0.0
    %2112 = vmatpush.msra.mxu0 0.0
    %2113 = vmatpush.msra.mxu0 0.0
    %2114 = vmatpush.msra.mxu0 0.0
    %2115 = vmatpush.msra.mxu0 0.0
    %2116 = vmatpush.msra.mxu0 0.0
    %2117 = vmatpush.msra.mxu0 0.0
    %2118 = vmatpush.msra.mxu0 0.0
    %2119 = vmatpush.msra.mxu0 0.0
    %2120 = vmatpush.msra.mxu0 0.0
    %2121 = vmatpush.msra.mxu0 %v1416
    %2122 = vmatpush.msra.mxu0 %v1415
    %2123 = vmatmul.f32.gmra.mxu0 %v2105
    %v2124 = vpop.f32.mrf.mxu0
    %v2125 = vadd.f32 %v1474, %v2124
    %2126 = vdwg.mxu0
    %2127 = vrot.lane.b32.xlu0 %v1237, 96
    %v2128 = vpop.permute.xlu0 %2127
    %v2129 = vsel %vm1418, %v2128, 0
    %2131 = vmatpush.msra.mxu0 0.0
    %2132 = vmatpush.msra.mxu0 0.0
    %2133 = vmatpush.msra.mxu0 0.0
    %2134 = vmatpush.msra.mxu0 0.0
    %2135 = vmatpush.msra.mxu0 0.0
    %2136 = vmatpush.msra.mxu0 0.0
    %2137 = vmatpush.msra.mxu0 0.0
    %2138 = vmatpush.msra.mxu0 0.0
    %2139 = vmatpush.msra.mxu0 %v1406
    %2140 = vmatpush.msra.mxu0 %v1405
    %2141 = vmatpush.msra.mxu0 %v1404
    %2142 = vmatpush.msra.mxu0 %v1403
    %2143 = vmatpush.msra.mxu0 %v1402
    %2144 = vmatpush.msra.mxu0 %v1401
    %2145 = vmatpush.msra.mxu0 %v1400
    %2146 = vmatpush.msra.mxu0 %v1399
    %2147 = vmatmul.f32.gmra.mxu0 %v2129
    %v2148 = vpop.f32.mrf.mxu0
    %v2149 = vadd.f32 0.0, %v2148
    %2150 = vdwg.mxu0
    %v2151 = vmul.f32 %v2149, %v2149
    %2153 = vrot.lane.b32.xlu0 %v2151, 64
    %v2154 = vpop.permute.xlu0 %2153
    %v2156 = vadd.f32 %v2151, %v2154
    %v2158 = vsel %vm1418, %v2156, 0
    %2160 = vmatpush.msra.mxu0 0.0
    %2161 = vmatpush.msra.mxu0 0.0
    %2162 = vmatpush.msra.mxu0 0.0
    %2163 = vmatpush.msra.mxu0 0.0
    %2164 = vmatpush.msra.mxu0 0.0
    %2165 = vmatpush.msra.mxu0 0.0
    %2166 = vmatpush.msra.mxu0 0.0
    %2167 = vmatpush.msra.mxu0 0.0
    %2168 = vmatpush.msra.mxu0 %v1414
    %2169 = vmatpush.msra.mxu0 %v1413
    %2170 = vmatpush.msra.mxu0 %v1412
    %2171 = vmatpush.msra.mxu0 %v1411
    %2172 = vmatpush.msra.mxu0 %v1410
    %2173 = vmatpush.msra.mxu0 %v1409
    %2174 = vmatpush.msra.mxu0 %v1408
    %2175 = vmatpush.msra.mxu0 %v1407
    %2176 = vmatmul.f32.gmra.mxu0 %v2158
    %v2177 = vpop.f32.mrf.mxu0
    %v2178 = vadd.f32 1e-06, %v2177
    %2179 = vdwg.mxu0
    %v2180 = vlog2.pop %v2178
    %v2181 = vmul.f32 %v2180, 0.6931472
    %v2183 = vsel %vm1476, %v2181, 0
    %2185 = vmatpush.msra.mxu0 0.0
    %2186 = vmatpush.msra.mxu0 0.0
    %2187 = vmatpush.msra.mxu0 0.0
    %2188 = vmatpush.msra.mxu0 0.0
    %2189 = vmatpush.msra.mxu0 0.0
    %2190 = vmatpush.msra.mxu0 0.0
    %2191 = vmatpush.msra.mxu0 0.0
    %2192 = vmatpush.msra.mxu0 0.0
    %2193 = vmatpush.msra.mxu0 0.0
    %2194 = vmatpush.msra.mxu0 0.0
    %2195 = vmatpush.msra.mxu0 0.0
    %2196 = vmatpush.msra.mxu0 0.0
    %2197 = vmatpush.msra.mxu0 0.0
    %2198 = vmatpush.msra.mxu0 0.0
    %2199 = vmatpush.msra.mxu0 %v1416
    %2200 = vmatpush.msra.mxu0 %v1415
    %2201 = vmatmul.f32.gmra.mxu0 %v2183
    %v2202 = vpop.f32.mrf.mxu0
    %v2203 = vadd.f32 %v1474, %v2202
    %2204 = vdwg.mxu0
    %2205 = vrot.lane.b32.xlu0 %v1237, 64
    %v2206 = vpop.permute.xlu0 %2205
    %v2207 = vsel %vm1418, %v2206, 0
    %2209 = vmatpush.msra.mxu0 0.0
    %2210 = vmatpush.msra.mxu0 0.0
    %2211 = vmatpush.msra.mxu0 0.0
    %2212 = vmatpush.msra.mxu0 0.0
    %2213 = vmatpush.msra.mxu0 0.0
    %2214 = vmatpush.msra.mxu0 0.0
    %2215 = vmatpush.msra.mxu0 0.0
    %2216 = vmatpush.msra.mxu0 0.0
    %2217 = vmatpush.msra.mxu0 %v1406
    %2218 = vmatpush.msra.mxu0 %v1405
    %2219 = vmatpush.msra.mxu0 %v1404
    %2220 = vmatpush.msra.mxu0 %v1403
    %2221 = vmatpush.msra.mxu0 %v1402
    %2222 = vmatpush.msra.mxu0 %v1401
    %2223 = vmatpush.msra.mxu0 %v1400
    %2224 = vmatpush.msra.mxu0 %v1399
    %2225 = vmatmul.f32.gmra.mxu0 %v2207
    %v2226 = vpop.f32.mrf.mxu0
    %v2227 = vadd.f32 0.0, %v2226
    %2228 = vdwg.mxu0
    %v2229 = vmul.f32 %v2227, %v2227
    %2231 = vrot.lane.b32.xlu0 %v2229, 64
    %v2232 = vpop.permute.xlu0 %2231
    %v2234 = vadd.f32 %v2229, %v2232
    %v2236 = vsel %vm1418, %v2234, 0
    %2238 = vmatpush.msra.mxu0 0.0
    %2239 = vmatpush.msra.mxu0 0.0
    %2240 = vmatpush.msra.mxu0 0.0
    %2241 = vmatpush.msra.mxu0 0.0
    %2242 = vmatpush.msra.mxu0 0.0
    %2243 = vmatpush.msra.mxu0 0.0
    %2244 = vmatpush.msra.mxu0 0.0
    %2245 = vmatpush.msra.mxu0 0.0
    %2246 = vmatpush.msra.mxu0 %v1414
    %2247 = vmatpush.msra.mxu0 %v1413
    %2248 = vmatpush.msra.mxu0 %v1412
    %2249 = vmatpush.msra.mxu0 %v1411
    %2250 = vmatpush.msra.mxu0 %v1410
    %2251 = vmatpush.msra.mxu0 %v1409
    %2252 = vmatpush.msra.mxu0 %v1408
    %2253 = vmatpush.msra.mxu0 %v1407
    %2254 = vmatmul.f32.gmra.mxu0 %v2236
    %v2255 = vpop.f32.mrf.mxu0
    %v2256 = vadd.f32 1e-06, %v2255
    %2257 = vdwg.mxu0
    %v2258 = vlog2.pop %v2256
    %v2259 = vmul.f32 %v2258, 0.6931472
    %v2261 = vsel %vm1476, %v2259, 0
    %2263 = vmatpush.msra.mxu0 0.0
    %2264 = vmatpush.msra.mxu0 0.0
    %2265 = vmatpush.msra.mxu0 0.0
    %2266 = vmatpush.msra.mxu0 0.0
    %2267 = vmatpush.msra.mxu0 0.0
    %2268 = vmatpush.msra.mxu0 0.0
    %2269 = vmatpush.msra.mxu0 0.0
    %2270 = vmatpush.msra.mxu0 0.0
    %2271 = vmatpush.msra.mxu0 0.0
    %2272 = vmatpush.msra.mxu0 0.0
    %2273 = vmatpush.msra.mxu0 0.0
    %2274 = vmatpush.msra.mxu0 0.0
    %2275 = vmatpush.msra.mxu0 0.0
    %2276 = vmatpush.msra.mxu0 0.0
    %2277 = vmatpush.msra.mxu0 %v1416
    %2278 = vmatpush.msra.mxu0 %v1415
    %2279 = vmatmul.f32.gmra.mxu0 %v2261
    %v2280 = vpop.f32.mrf.mxu0
    %v2281 = vadd.f32 %v1474, %v2280
    %2282 = vdwg.mxu0
    %2284 = vrot.lane.b32.xlu0 %v1397, 32
    %v2285 = vpop.permute.xlu0 %2284
    %v2286 = vsel %vm1661, %v1973, %v2285
    %v2287 = vsel %vm1418, %v2286, 0
    %2289 = vmatpush.msra.mxu0 0.0
    %2290 = vmatpush.msra.mxu0 0.0
    %2291 = vmatpush.msra.mxu0 0.0
    %2292 = vmatpush.msra.mxu0 0.0
    %2293 = vmatpush.msra.mxu0 0.0
    %2294 = vmatpush.msra.mxu0 0.0
    %2295 = vmatpush.msra.mxu0 0.0
    %2296 = vmatpush.msra.mxu0 0.0
    %2297 = vmatpush.msra.mxu0 %v1406
    %2298 = vmatpush.msra.mxu0 %v1405
    %2299 = vmatpush.msra.mxu0 %v1404
    %2300 = vmatpush.msra.mxu0 %v1403
    %2301 = vmatpush.msra.mxu0 %v1402
    %2302 = vmatpush.msra.mxu0 %v1401
    %2303 = vmatpush.msra.mxu0 %v1400
    %2304 = vmatpush.msra.mxu0 %v1399
    %2305 = vmatmul.f32.gmra.mxu0 %v2287
    %v2306 = vpop.f32.mrf.mxu0
    %v2307 = vadd.f32 0.0, %v2306
    %2308 = vdwg.mxu0
    %v2309 = vmul.f32 %v2307, %v2307
    %2311 = vrot.lane.b32.xlu0 %v2309, 64
    %v2312 = vpop.permute.xlu0 %2311
    %v2314 = vadd.f32 %v2309, %v2312
    %v2316 = vsel %vm1418, %v2314, 0
    %2318 = vmatpush.msra.mxu0 0.0
    %2319 = vmatpush.msra.mxu0 0.0
    %2320 = vmatpush.msra.mxu0 0.0
    %2321 = vmatpush.msra.mxu0 0.0
    %2322 = vmatpush.msra.mxu0 0.0
    %2323 = vmatpush.msra.mxu0 0.0
    %2324 = vmatpush.msra.mxu0 0.0
    %2325 = vmatpush.msra.mxu0 0.0
    %2326 = vmatpush.msra.mxu0 %v1414
    %2327 = vmatpush.msra.mxu0 %v1413
    %2328 = vmatpush.msra.mxu0 %v1412
    %2329 = vmatpush.msra.mxu0 %v1411
    %2330 = vmatpush.msra.mxu0 %v1410
    %2331 = vmatpush.msra.mxu0 %v1409
    %2332 = vmatpush.msra.mxu0 %v1408
    %2333 = vmatpush.msra.mxu0 %v1407
    %2334 = vmatmul.f32.gmra.mxu0 %v2316
    %v2335 = vpop.f32.mrf.mxu0
    %v2336 = vadd.f32 1e-06, %v2335
    %2337 = vdwg.mxu0
    %v2338 = vlog2.pop %v2336
    %v2339 = vmul.f32 %v2338, 0.6931472
    %v2341 = vsel %vm1476, %v2339, 0
    %2343 = vmatpush.msra.mxu0 0.0
    %2344 = vmatpush.msra.mxu0 0.0
    %2345 = vmatpush.msra.mxu0 0.0
    %2346 = vmatpush.msra.mxu0 0.0
    %2347 = vmatpush.msra.mxu0 0.0
    %2348 = vmatpush.msra.mxu0 0.0
    %2349 = vmatpush.msra.mxu0 0.0
    %2350 = vmatpush.msra.mxu0 0.0
    %2351 = vmatpush.msra.mxu0 0.0
    %2352 = vmatpush.msra.mxu0 0.0
    %2353 = vmatpush.msra.mxu0 0.0
    %2354 = vmatpush.msra.mxu0 0.0
    %2355 = vmatpush.msra.mxu0 0.0
    %2356 = vmatpush.msra.mxu0 0.0
    %2357 = vmatpush.msra.mxu0 %v1416
    %2358 = vmatpush.msra.mxu0 %v1415
    %2359 = vmatmul.f32.gmra.mxu0 %v2341
    %v2360 = vpop.f32.mrf.mxu0
    %v2361 = vadd.f32 %v1474, %v2360
    %2362 = vdwg.mxu0
    %v2363 = vsel %vm1418, %v1397, 0
    %2365 = vmatpush.msra.mxu0 0.0
    %2366 = vmatpush.msra.mxu0 0.0
    %2367 = vmatpush.msra.mxu0 0.0
    %2368 = vmatpush.msra.mxu0 0.0
    %2369 = vmatpush.msra.mxu0 0.0
    %2370 = vmatpush.msra.mxu0 0.0
    %2371 = vmatpush.msra.mxu0 0.0
    %2372 = vmatpush.msra.mxu0 0.0
    %2373 = vmatpush.msra.mxu0 %v1406
    %2374 = vmatpush.msra.mxu0 %v1405
    %2375 = vmatpush.msra.mxu0 %v1404
    %2376 = vmatpush.msra.mxu0 %v1403
    %2377 = vmatpush.msra.mxu0 %v1402
    %2378 = vmatpush.msra.mxu0 %v1401
    %2379 = vmatpush.msra.mxu0 %v1400
    %2380 = vmatpush.msra.mxu0 %v1399
    %2381 = vmatmul.f32.gmra.mxu0 %v2363
    %v2382 = vpop.f32.mrf.mxu0
    %v2383 = vadd.f32 0.0, %v2382
    %2384 = vdwg.mxu0
    %v2385 = vmul.f32 %v2383, %v2383
    %2387 = vrot.lane.b32.xlu0 %v2385, 64
    %v2388 = vpop.permute.xlu0 %2387
    %v2390 = vadd.f32 %v2385, %v2388
    %v2392 = vsel %vm1418, %v2390, 0
    %2394 = vmatpush.msra.mxu0 0.0
    %2395 = vmatpush.msra.mxu0 0.0
    %2396 = vmatpush.msra.mxu0 0.0
    %2397 = vmatpush.msra.mxu0 0.0
    %2398 = vmatpush.msra.mxu0 0.0
    %2399 = vmatpush.msra.mxu0 0.0
    %2400 = vmatpush.msra.mxu0 0.0
    %2401 = vmatpush.msra.mxu0 0.0
    %2402 = vmatpush.msra.mxu0 %v1414
    %2403 = vmatpush.msra.mxu0 %v1413
    %2404 = vmatpush.msra.mxu0 %v1412
    %2405 = vmatpush.msra.mxu0 %v1411
    %2406 = vmatpush.msra.mxu0 %v1410
    %2407 = vmatpush.msra.mxu0 %v1409
    %2408 = vmatpush.msra.mxu0 %v1408
    %2409 = vmatpush.msra.mxu0 %v1407
    %2410 = vmatmul.f32.gmra.mxu0 %v2392
    %v2411 = vpop.f32.mrf.mxu0
    %v2412 = vadd.f32 1e-06, %v2411
    %2413 = vdwg.mxu0
    %v2414 = vlog2.pop %v2412
    %v2415 = vmul.f32 %v2414, 0.6931472
    %v2417 = vsel %vm1476, %v2415, 0
    %2419 = vmatpush.msra.mxu0 0.0
    %2420 = vmatpush.msra.mxu0 0.0
    %2421 = vmatpush.msra.mxu0 0.0
    %2422 = vmatpush.msra.mxu0 0.0
    %2423 = vmatpush.msra.mxu0 0.0
    %2424 = vmatpush.msra.mxu0 0.0
    %2425 = vmatpush.msra.mxu0 0.0
    %2426 = vmatpush.msra.mxu0 0.0
    %2427 = vmatpush.msra.mxu0 0.0
    %2428 = vmatpush.msra.mxu0 0.0
    %2429 = vmatpush.msra.mxu0 0.0
    %2430 = vmatpush.msra.mxu0 0.0
    %2431 = vmatpush.msra.mxu0 0.0
    %2432 = vmatpush.msra.mxu0 0.0
    %2433 = vmatpush.msra.mxu0 %v1416
    %2434 = vmatpush.msra.mxu0 %v1415
    %2435 = vmatmul.f32.gmra.mxu0 %v2417
    %v2436 = vpop.f32.mrf.mxu0
    %v2437 = vadd.f32 %v1474, %v2436
    %2438 = vdwg.mxu0
    %2439 = vrot.lane.b32.xlu0 %v1397, 96
    %v2440 = vpop.permute.xlu0 %2439
    %v2441 = vsel %vm1418, %v2440, 0
    %2443 = vmatpush.msra.mxu0 0.0
    %2444 = vmatpush.msra.mxu0 0.0
    %2445 = vmatpush.msra.mxu0 0.0
    %2446 = vmatpush.msra.mxu0 0.0
    %2447 = vmatpush.msra.mxu0 0.0
    %2448 = vmatpush.msra.mxu0 0.0
    %2449 = vmatpush.msra.mxu0 0.0
    %2450 = vmatpush.msra.mxu0 0.0
    %2451 = vmatpush.msra.mxu0 %v1406
    %2452 = vmatpush.msra.mxu0 %v1405
    %2453 = vmatpush.msra.mxu0 %v1404
    %2454 = vmatpush.msra.mxu0 %v1403
    %2455 = vmatpush.msra.mxu0 %v1402
    %2456 = vmatpush.msra.mxu0 %v1401
    %2457 = vmatpush.msra.mxu0 %v1400
    %2458 = vmatpush.msra.mxu0 %v1399
    %2459 = vmatmul.f32.gmra.mxu0 %v2441
    %v2460 = vpop.f32.mrf.mxu0
    %v2461 = vadd.f32 0.0, %v2460
    %2462 = vdwg.mxu0
    %v2463 = vmul.f32 %v2461, %v2461
    %2465 = vrot.lane.b32.xlu0 %v2463, 64
    %v2466 = vpop.permute.xlu0 %2465
    %v2468 = vadd.f32 %v2463, %v2466
    %v2470 = vsel %vm1418, %v2468, 0
    %2472 = vmatpush.msra.mxu0 0.0
    %2473 = vmatpush.msra.mxu0 0.0
    %2474 = vmatpush.msra.mxu0 0.0
    %2475 = vmatpush.msra.mxu0 0.0
    %2476 = vmatpush.msra.mxu0 0.0
    %2477 = vmatpush.msra.mxu0 0.0
    %2478 = vmatpush.msra.mxu0 0.0
    %2479 = vmatpush.msra.mxu0 0.0
    %2480 = vmatpush.msra.mxu0 %v1414
    %2481 = vmatpush.msra.mxu0 %v1413
    %2482 = vmatpush.msra.mxu0 %v1412
    %2483 = vmatpush.msra.mxu0 %v1411
    %2484 = vmatpush.msra.mxu0 %v1410
    %2485 = vmatpush.msra.mxu0 %v1409
    %2486 = vmatpush.msra.mxu0 %v1408
    %2487 = vmatpush.msra.mxu0 %v1407
    %2488 = vmatmul.f32.gmra.mxu0 %v2470
    %v2489 = vpop.f32.mrf.mxu0
    %v2490 = vadd.f32 1e-06, %v2489
    %2491 = vdwg.mxu0
    %v2492 = vlog2.pop %v2490
    %v2493 = vmul.f32 %v2492, 0.6931472
    %v2495 = vsel %vm1476, %v2493, 0
    %2497 = vmatpush.msra.mxu0 0.0
    %2498 = vmatpush.msra.mxu0 0.0
    %2499 = vmatpush.msra.mxu0 0.0
    %2500 = vmatpush.msra.mxu0 0.0
    %2501 = vmatpush.msra.mxu0 0.0
    %2502 = vmatpush.msra.mxu0 0.0
    %2503 = vmatpush.msra.mxu0 0.0
    %2504 = vmatpush.msra.mxu0 0.0
    %2505 = vmatpush.msra.mxu0 0.0
    %2506 = vmatpush.msra.mxu0 0.0
    %2507 = vmatpush.msra.mxu0 0.0
    %2508 = vmatpush.msra.mxu0 0.0
    %2509 = vmatpush.msra.mxu0 0.0
    %2510 = vmatpush.msra.mxu0 0.0
    %2511 = vmatpush.msra.mxu0 %v1416
    %2512 = vmatpush.msra.mxu0 %v1415
    %2513 = vmatmul.f32.gmra.mxu0 %v2495
    %v2514 = vpop.f32.mrf.mxu0
    %v2515 = vadd.f32 %v1474, %v2514
    %2516 = vdwg.mxu0
    %2517 = vrot.lane.b32.xlu0 %v1397, 64
    %v2518 = vpop.permute.xlu0 %2517
    %v2519 = vsel %vm1418, %v2518, 0
    %2521 = vmatpush.msra.mxu0 0.0
    %2522 = vmatpush.msra.mxu0 0.0
    %2523 = vmatpush.msra.mxu0 0.0
    %2524 = vmatpush.msra.mxu0 0.0
    %2525 = vmatpush.msra.mxu0 0.0
    %2526 = vmatpush.msra.mxu0 0.0
    %2527 = vmatpush.msra.mxu0 0.0
    %2528 = vmatpush.msra.mxu0 0.0
    %2529 = vmatpush.msra.mxu0 %v1406
    %2530 = vmatpush.msra.mxu0 %v1405
    %2531 = vmatpush.msra.mxu0 %v1404
    %2532 = vmatpush.msra.mxu0 %v1403
    %2533 = vmatpush.msra.mxu0 %v1402
    %2534 = vmatpush.msra.mxu0 %v1401
    %2535 = vmatpush.msra.mxu0 %v1400
    %2536 = vmatpush.msra.mxu0 %v1399
    %2537 = vmatmul.f32.gmra.mxu0 %v2519
    %v2538 = vpop.f32.mrf.mxu0
    %v2539 = vadd.f32 0.0, %v2538
    %2540 = vdwg.mxu0
    %v2541 = vmul.f32 %v2539, %v2539
    %2543 = vrot.lane.b32.xlu0 %v2541, 64
    %v2544 = vpop.permute.xlu0 %2543
    %v2546 = vadd.f32 %v2541, %v2544
    %v2548 = vsel %vm1418, %v2546, 0
    %2550 = vmatpush.msra.mxu0 0.0
    %2551 = vmatpush.msra.mxu0 0.0
    %2552 = vmatpush.msra.mxu0 0.0
    %2553 = vmatpush.msra.mxu0 0.0
    %2554 = vmatpush.msra.mxu0 0.0
    %2555 = vmatpush.msra.mxu0 0.0
    %2556 = vmatpush.msra.mxu0 0.0
    %2557 = vmatpush.msra.mxu0 0.0
    %2558 = vmatpush.msra.mxu0 %v1414
    %2559 = vmatpush.msra.mxu0 %v1413
    %2560 = vmatpush.msra.mxu0 %v1412
    %2561 = vmatpush.msra.mxu0 %v1411
    %2562 = vmatpush.msra.mxu0 %v1410
    %2563 = vmatpush.msra.mxu0 %v1409
    %2564 = vmatpush.msra.mxu0 %v1408
    %2565 = vmatpush.msra.mxu0 %v1407
    %2566 = vmatmul.f32.gmra.mxu0 %v2548
    %v2567 = vpop.f32.mrf.mxu0
    %v2568 = vadd.f32 1e-06, %v2567
    %2569 = vdwg.mxu0
    %v2570 = vlog2.pop %v2568
    %v2571 = vmul.f32 %v2570, 0.6931472
    %v2573 = vsel %vm1476, %v2571, 0
    %2575 = vmatpush.msra.mxu0 0.0
    %2576 = vmatpush.msra.mxu0 0.0
    %2577 = vmatpush.msra.mxu0 0.0
    %2578 = vmatpush.msra.mxu0 0.0
    %2579 = vmatpush.msra.mxu0 0.0
    %2580 = vmatpush.msra.mxu0 0.0
    %2581 = vmatpush.msra.mxu0 0.0
    %2582 = vmatpush.msra.mxu0 0.0
    %2583 = vmatpush.msra.mxu0 0.0
    %2584 = vmatpush.msra.mxu0 0.0
    %2585 = vmatpush.msra.mxu0 0.0
    %2586 = vmatpush.msra.mxu0 0.0
    %2587 = vmatpush.msra.mxu0 0.0
    %2588 = vmatpush.msra.mxu0 0.0
    %2589 = vmatpush.msra.mxu0 %v1416
    %2590 = vmatpush.msra.mxu0 %v1415
    %2591 = vmatmul.f32.gmra.mxu0 %v2573
    %v2592 = vpop.f32.mrf.mxu0
    %v2593 = vadd.f32 %v1474, %v2592
    %2594 = vdwg.mxu0
    %v2595 = vld [vmem:[#allocation11] sm:$0xff]
    %v2596 = vld [vmem:[#allocation11 + $0x8] sm:$0xff]
    %v2597 = vld [vmem:[#allocation11 + $0x10] sm:$0xff]
    %v2598 = vld [vmem:[#allocation11 + $0x18] sm:$0xff]
    %v2599 = vld [vmem:[#allocation13] sm:$0xff]
    %v2600 = vld [vmem:[#allocation13 + $0x8] sm:$0xff]
    %v2601 = vld [vmem:[#allocation13 + $0x10] sm:$0xff]
    %v2602 = vld [vmem:[#allocation13 + $0x18] sm:$0xff]
    %v2603 = vld [vmem:[#allocation14] sm:$0xff]
    %v2604 = vld [vmem:[#allocation14 + $0x8] sm:$0xff]
    %v2605 = vld [vmem:[#allocation14 + $0x10] sm:$0xff]
    %v2606 = vld [vmem:[#allocation14 + $0x18] sm:$0xff]
    %v2607 = vld [vmem:[#allocation16] sm:$0xff]
    %v2608 = vld [vmem:[#allocation16 + $0x8] sm:$0xff]
    %v2609 = vld [vmem:[#allocation16 + $0x10] sm:$0xff]
    %v2610 = vld [vmem:[#allocation16 + $0x18] sm:$0xff]
    %v2612 = vsel %vm1661, 0.0, 0
    %2614 = vmatpush.msra.mxu0 0.0
    %2615 = vmatpush.msra.mxu0 0.0
    %2616 = vmatpush.msra.mxu0 0.0
    %2617 = vmatpush.msra.mxu0 0.0
    %2618 = vmatpush.msra.mxu0 0.0
    %2619 = vmatpush.msra.mxu0 0.0
    %2620 = vmatpush.msra.mxu0 0.0
    %2621 = vmatpush.msra.mxu0 0.0
    %2622 = vmatpush.msra.mxu0 0.0
    %2623 = vmatpush.msra.mxu0 0.0
    %2624 = vmatpush.msra.mxu0 0.0
    %2625 = vmatpush.msra.mxu0 0.0
    %2626 = vmatpush.msra.mxu0 %v2598
    %2627 = vmatpush.msra.mxu0 %v2597
    %2628 = vmatpush.msra.mxu0 %v2596
    %2629 = vmatpush.msra.mxu0 %v2595
    %2630 = vmatmul.f32.gmra.mxu0 %v2612
    %v2631 = vpop.f32.mrf.mxu0
    %v2632 = vadd.f32 0.0, %v2631
    %2633 = vdwg.mxu0
    %v2634 = vadd.f32 %v1498, %v2632
    %v2635 = vxor.u32 %v2634, 2147483648
    %v2636 = vmul.f32 %v2635, 1.442695
    %v2637 = vpow.pop %v2636
    %v2638 = vadd.f32 %v2637, 1.0
    %v2639 = vrcp.pop %v2638
    %v2640 = vmul.f32 %v2638, %v2639
    %v2641 = vsub.f32 1.0, %v2640
    %v2642 = vmul.f32 %v2639, %v2641
    %v2643 = vadd.f32 %v2639, %v2642
    %vm2644 = vweird.f32 %v2638
    %vm2645 = vweird.f32 %v2639
    %vm2646 = vmor %vm2644, %vm2645
    %v2647 = vsel %vm2646, %v2639, %v2643
    %v2648 = vand.u32 2147483647, %v2638
    %vm2649 = vcmp.eq.f32.partialorder %v2648, 8.507059e+37
    %v2650 = vand.u32 %v2638, 2147483648
    %v2651 = vor.u32 1.1754944e-38, %v2650
    %v2652 = vsel %vm2649, %v2651, %v2647
    %v2653 = vmul.f32 1.0, %v2652
    %2654 = vmatpush.msra.mxu0 0.0
    %2655 = vmatpush.msra.mxu0 0.0
    %2656 = vmatpush.msra.mxu0 0.0
    %2657 = vmatpush.msra.mxu0 0.0
    %2658 = vmatpush.msra.mxu0 0.0
    %2659 = vmatpush.msra.mxu0 0.0
    %2660 = vmatpush.msra.mxu0 0.0
    %2661 = vmatpush.msra.mxu0 0.0
    %2662 = vmatpush.msra.mxu0 0.0
    %2663 = vmatpush.msra.mxu0 0.0
    %2664 = vmatpush.msra.mxu0 0.0
    %2665 = vmatpush.msra.mxu0 0.0
    %2666 = vmatpush.msra.mxu0 %v2602
    %2667 = vmatpush.msra.mxu0 %v2601
    %2668 = vmatpush.msra.mxu0 %v2600
    %2669 = vmatpush.msra.mxu0 %v2599
    %2670 = vmatmul.f32.gmra.mxu0 %v2612
    %v2671 = vpop.f32.mrf.mxu0
    %v2672 = vadd.f32 0.0, %v2671
    %2673 = vdwg.mxu0
    %2675 = vrot.lane.b32.xlu0 %v2672, 32
    %v2676 = vpop.permute.xlu0 %2675
    %v2678 = vadd.f32 %v1498, %v2676
    %v2679 = vxor.u32 %v2678, 2147483648
    %v2680 = vmul.f32 %v2679, 1.442695
    %v2681 = vpow.pop %v2680
    %v2682 = vadd.f32 %v2681, 1.0
    %v2683 = vrcp.pop %v2682
    %v2684 = vmul.f32 %v2682, %v2683
    %v2685 = vsub.f32 1.0, %v2684
    %v2686 = vmul.f32 %v2683, %v2685
    %v2687 = vadd.f32 %v2683, %v2686
    %vm2688 = vweird.f32 %v2682
    %vm2689 = vweird.f32 %v2683
    %vm2690 = vmor %vm2688, %vm2689
    %v2691 = vsel %vm2690, %v2683, %v2687
    %v2692 = vand.u32 2147483647, %v2682
    %vm2693 = vcmp.eq.f32.partialorder %v2692, 8.507059e+37
    %v2694 = vand.u32 %v2682, 2147483648
    %v2695 = vor.u32 1.1754944e-38, %v2694
    %v2696 = vsel %vm2693, %v2695, %v2691
    %v2697 = vmul.f32 1.0, %v2696
    %2698 = vmatpush.msra.mxu0 0.0
    %2699 = vmatpush.msra.mxu0 0.0
    %2700 = vmatpush.msra.mxu0 0.0
    %2701 = vmatpush.msra.mxu0 0.0
    %2702 = vmatpush.msra.mxu0 0.0
    %2703 = vmatpush.msra.mxu0 0.0
    %2704 = vmatpush.msra.mxu0 0.0
    %2705 = vmatpush.msra.mxu0 0.0
    %2706 = vmatpush.msra.mxu0 0.0
    %2707 = vmatpush.msra.mxu0 0.0
    %2708 = vmatpush.msra.mxu0 0.0
    %2709 = vmatpush.msra.mxu0 0.0
    %2710 = vmatpush.msra.mxu0 %v2606
    %2711 = vmatpush.msra.mxu0 %v2605
    %2712 = vmatpush.msra.mxu0 %v2604
    %2713 = vmatpush.msra.mxu0 %v2603
    %2714 = vmatmul.f32.gmra.mxu0 %v2612
    %v2715 = vpop.f32.mrf.mxu0
    %v2716 = vadd.f32 0.0, %v2715
    %2717 = vdwg.mxu0
    %2719 = vrot.lane.b32.xlu0 %v2716, 64
    %v2720 = vpop.permute.xlu0 %2719
    %v2722 = vadd.f32 %v1498, %v2720
    %v2723 = vtanh.pop %v2722
    %2724 = vmatpush.msra.mxu0 0.0
    %2725 = vmatpush.msra.mxu0 0.0
    %2726 = vmatpush.msra.mxu0 0.0
    %2727 = vmatpush.msra.mxu0 0.0
    %2728 = vmatpush.msra.mxu0 0.0
    %2729 = vmatpush.msra.mxu0 0.0
    %2730 = vmatpush.msra.mxu0 0.0
    %2731 = vmatpush.msra.mxu0 0.0
    %2732 = vmatpush.msra.mxu0 0.0
    %2733 = vmatpush.msra.mxu0 0.0
    %2734 = vmatpush.msra.mxu0 0.0
    %2735 = vmatpush.msra.mxu0 0.0
    %2736 = vmatpush.msra.mxu0 %v2610
    %2737 = vmatpush.msra.mxu0 %v2609
    %2738 = vmatpush.msra.mxu0 %v2608
    %2739 = vmatpush.msra.mxu0 %v2607
    %2740 = vmatmul.f32.gmra.mxu0 %v2612
    %v2741 = vpop.f32.mrf.mxu0
    %v2742 = vadd.f32 0.0, %v2741
    %2743 = vdwg.mxu0
    %2745 = vrot.lane.b32.xlu0 %v2742, 96
    %v2746 = vpop.permute.xlu0 %2745
    %v2748 = vadd.f32 %v1498, %v2746
    %v2749 = vxor.u32 %v2748, 2147483648
    %v2750 = vmul.f32 %v2749, 1.442695
    %v2751 = vpow.pop %v2750
    %v2752 = vadd.f32 %v2751, 1.0
    %v2753 = vrcp.pop %v2752
    %v2754 = vmul.f32 %v2752, %v2753
    %v2755 = vsub.f32 1.0, %v2754
    %v2756 = vmul.f32 %v2753, %v2755
    %v2757 = vadd.f32 %v2753, %v2756
    %vm2758 = vweird.f32 %v2752
    %vm2759 = vweird.f32 %v2753
    %vm2760 = vmor %vm2758, %vm2759
    %v2761 = vsel %vm2760, %v2753, %v2757
    %v2762 = vand.u32 2147483647, %v2752
    %vm2763 = vcmp.eq.f32.partialorder %v2762, 8.507059e+37
    %v2764 = vand.u32 %v2752, 2147483648
    %v2765 = vor.u32 1.1754944e-38, %v2764
    %v2766 = vsel %vm2763, %v2765, %v2761
    %v2767 = vmul.f32 1.0, %v2766
    %v2768 = vmul.f32 %v2697, 0.0
    %2770 = vrot.lane.b32.xlu0 %v2723, 64
    %v2771 = vpop.permute.xlu0 %2770
    %v2773 = vmul.f32 %v2653, %v2771
    %2775 = vrot.lane.b32.xlu0 %v2773, 32
    %v2776 = vpop.permute.xlu0 %2775
    %v2778 = vadd.f32 %v2768, %v2776
    %v2779 = vtanh.pop %v2778
    %2781 = vrot.lane.b32.xlu0 %v2779, 64
    %v2782 = vpop.permute.xlu0 %2781
    %v2784 = vmul.f32 %v2767, %v2782
    %2786 = vrot.lane.b32.xlu0 %v2784, 32
    %v2787 = vpop.permute.xlu0 %2786
    %v2788 = vsel %vm1661, %v2787, 0
    %2790 = vmatpush.msra.mxu0 0.0
    %2791 = vmatpush.msra.mxu0 0.0
    %2792 = vmatpush.msra.mxu0 0.0
    %2793 = vmatpush.msra.mxu0 0.0
    %2794 = vmatpush.msra.mxu0 0.0
    %2795 = vmatpush.msra.mxu0 0.0
    %2796 = vmatpush.msra.mxu0 0.0
    %2797 = vmatpush.msra.mxu0 0.0
    %2798 = vmatpush.msra.mxu0 0.0
    %2799 = vmatpush.msra.mxu0 0.0
    %2800 = vmatpush.msra.mxu0 0.0
    %2801 = vmatpush.msra.mxu0 0.0
    %2802 = vmatpush.msra.mxu0 %v2598
    %2803 = vmatpush.msra.mxu0 %v2597
    %2804 = vmatpush.msra.mxu0 %v2596
    %2805 = vmatpush.msra.mxu0 %v2595
    %2806 = vmatmul.f32.gmra.mxu0 %v2788
    %v2807 = vpop.f32.mrf.mxu0
    %v2808 = vadd.f32 0.0, %v2807
    %2809 = vdwg.mxu0
    %v2810 = vadd.f32 %v1576, %v2808
    %v2811 = vxor.u32 %v2810, 2147483648
    %v2812 = vmul.f32 %v2811, 1.442695
    %v2813 = vpow.pop %v2812
    %v2814 = vadd.f32 %v2813, 1.0
    %v2815 = vrcp.pop %v2814
    %v2816 = vmul.f32 %v2814, %v2815
    %v2817 = vsub.f32 1.0, %v2816
    %v2818 = vmul.f32 %v2815, %v2817
    %v2819 = vadd.f32 %v2815, %v2818
    %vm2820 = vweird.f32 %v2814
    %vm2821 = vweird.f32 %v2815
    %vm2822 = vmor %vm2820, %vm2821
    %v2823 = vsel %vm2822, %v2815, %v2819
    %v2824 = vand.u32 2147483647, %v2814
    %vm2825 = vcmp.eq.f32.partialorder %v2824, 8.507059e+37
    %v2826 = vand.u32 %v2814, 2147483648
    %v2827 = vor.u32 1.1754944e-38, %v2826
    %v2828 = vsel %vm2825, %v2827, %v2823
    %v2829 = vmul.f32 1.0, %v2828
    %2830 = vmatpush.msra.mxu0 0.0
    %2831 = vmatpush.msra.mxu0 0.0
    %2832 = vmatpush.msra.mxu0 0.0
    %2833 = vmatpush.msra.mxu0 0.0
    %2834 = vmatpush.msra.mxu0 0.0
    %2835 = vmatpush.msra.mxu0 0.0
    %2836 = vmatpush.msra.mxu0 0.0
    %2837 = vmatpush.msra.mxu0 0.0
    %2838 = vmatpush.msra.mxu0 0.0
    %2839 = vmatpush.msra.mxu0 0.0
    %2840 = vmatpush.msra.mxu0 0.0
    %2841 = vmatpush.msra.mxu0 0.0
    %2842 = vmatpush.msra.mxu0 %v2602
    %2843 = vmatpush.msra.mxu0 %v2601
    %2844 = vmatpush.msra.mxu0 %v2600
    %2845 = vmatpush.msra.mxu0 %v2599
    %2846 = vmatmul.f32.gmra.mxu0 %v2788
    %v2847 = vpop.f32.mrf.mxu0
    %v2848 = vadd.f32 0.0, %v2847
    %2849 = vdwg.mxu0
    %2851 = vrot.lane.b32.xlu0 %v2848, 32
    %v2852 = vpop.permute.xlu0 %2851
    %v2854 = vadd.f32 %v1576, %v2852
    %v2855 = vxor.u32 %v2854, 2147483648
    %v2856 = vmul.f32 %v2855, 1.442695
    %v2857 = vpow.pop %v2856
    %v2858 = vadd.f32 %v2857, 1.0
    %v2859 = vrcp.pop %v2858
    %v2860 = vmul.f32 %v2858, %v2859
    %v2861 = vsub.f32 1.0, %v2860
    %v2862 = vmul.f32 %v2859, %v2861
    %v2863 = vadd.f32 %v2859, %v2862
    %vm2864 = vweird.f32 %v2858
    %vm2865 = vweird.f32 %v2859
    %vm2866 = vmor %vm2864, %vm2865
    %v2867 = vsel %vm2866, %v2859, %v2863
    %v2868 = vand.u32 2147483647, %v2858
    %vm2869 = vcmp.eq.f32.partialorder %v2868, 8.507059e+37
    %v2870 = vand.u32 %v2858, 2147483648
    %v2871 = vor.u32 1.1754944e-38, %v2870
    %v2872 = vsel %vm2869, %v2871, %v2867
    %v2873 = vmul.f32 1.0, %v2872
    %2874 = vmatpush.msra.mxu0 0.0
    %2875 = vmatpush.msra.mxu0 0.0
    %2876 = vmatpush.msra.mxu0 0.0
    %2877 = vmatpush.msra.mxu0 0.0
    %2878 = vmatpush.msra.mxu0 0.0
    %2879 = vmatpush.msra.mxu0 0.0
    %2880 = vmatpush.msra.mxu0 0.0
    %2881 = vmatpush.msra.mxu0 0.0
    %2882 = vmatpush.msra.mxu0 0.0
    %2883 = vmatpush.msra.mxu0 0.0
    %2884 = vmatpush.msra.mxu0 0.0
    %2885 = vmatpush.msra.mxu0 0.0
    %2886 = vmatpush.msra.mxu0 %v2606
    %2887 = vmatpush.msra.mxu0 %v2605
    %2888 = vmatpush.msra.mxu0 %v2604
    %2889 = vmatpush.msra.mxu0 %v2603
    %2890 = vmatmul.f32.gmra.mxu0 %v2788
    %v2891 = vpop.f32.mrf.mxu0
    %v2892 = vadd.f32 0.0, %v2891
    %2893 = vdwg.mxu0
    %2895 = vrot.lane.b32.xlu0 %v2892, 64
    %v2896 = vpop.permute.xlu0 %2895
    %v2898 = vadd.f32 %v1576, %v2896
    %v2899 = vtanh.pop %v2898
    %2900 = vmatpush.msra.mxu0 0.0
    %2901 = vmatpush.msra.mxu0 0.0
    %2902 = vmatpush.msra.mxu0 0.0
    %2903 = vmatpush.msra.mxu0 0.0
    %2904 = vmatpush.msra.mxu0 0.0
    %2905 = vmatpush.msra.mxu0 0.0
    %2906 = vmatpush.msra.mxu0 0.0
    %2907 = vmatpush.msra.mxu0 0.0
    %2908 = vmatpush.msra.mxu0 0.0
    %2909 = vmatpush.msra.mxu0 0.0
    %2910 = vmatpush.msra.mxu0 0.0
    %2911 = vmatpush.msra.mxu0 0.0
    %2912 = vmatpush.msra.mxu0 %v2610
    %2913 = vmatpush.msra.mxu0 %v2609
    %2914 = vmatpush.msra.mxu0 %v2608
    %2915 = vmatpush.msra.mxu0 %v2607
    %2916 = vmatmul.f32.gmra.mxu0 %v2788
    %v2917 = vpop.f32.mrf.mxu0
    %v2918 = vadd.f32 0.0, %v2917
    %2919 = vdwg.mxu0
    %2921 = vrot.lane.b32.xlu0 %v2918, 96
    %v2922 = vpop.permute.xlu0 %2921
    %v2924 = vadd.f32 %v1576, %v2922
    %v2925 = vxor.u32 %v2924, 2147483648
    %v2926 = vmul.f32 %v2925, 1.442695
    %v2927 = vpow.pop %v2926
    %v2928 = vadd.f32 %v2927, 1.0
    %v2929 = vrcp.pop %v2928
    %v2930 = vmul.f32 %v2928, %v2929
    %v2931 = vsub.f32 1.0, %v2930
    %v2932 = vmul.f32 %v2929, %v2931
    %v2933 = vadd.f32 %v2929, %v2932
    %vm2934 = vweird.f32 %v2928
    %vm2935 = vweird.f32 %v2929
    %vm2936 = vmor %vm2934, %vm2935
    %v2937 = vsel %vm2936, %v2929, %v2933
    %v2938 = vand.u32 2147483647, %v2928
    %vm2939 = vcmp.eq.f32.partialorder %v2938, 8.507059e+37
    %v2940 = vand.u32 %v2928, 2147483648
    %v2941 = vor.u32 1.1754944e-38, %v2940
    %v2942 = vsel %vm2939, %v2941, %v2937
    %v2943 = vmul.f32 1.0, %v2942
    %v2944 = vmul.f32 %v2873, %v2778
    %2946 = vrot.lane.b32.xlu0 %v2899, 64
    %v2947 = vpop.permute.xlu0 %2946
    %v2949 = vmul.f32 %v2829, %v2947
    %2951 = vrot.lane.b32.xlu0 %v2949, 32
    %v2952 = vpop.permute.xlu0 %2951
    %v2954 = vadd.f32 %v2944, %v2952
    %v2955 = vtanh.pop %v2954
    %2957 = vrot.lane.b32.xlu0 %v2955, 64
    %v2958 = vpop.permute.xlu0 %2957
    %v2960 = vmul.f32 %v2943, %v2958
    %2962 = vrot.lane.b32.xlu0 %v2960, 32
    %v2963 = vpop.permute.xlu0 %2962
    %v2964 = vsel %vm1661, %v2963, 0
    %2966 = vmatpush.msra.mxu0 0.0
    %2967 = vmatpush.msra.mxu0 0.0
    %2968 = vmatpush.msra.mxu0 0.0
    %2969 = vmatpush.msra.mxu0 0.0
    %2970 = vmatpush.msra.mxu0 0.0
    %2971 = vmatpush.msra.mxu0 0.0
    %2972 = vmatpush.msra.mxu0 0.0
    %2973 = vmatpush.msra.mxu0 0.0
    %2974 = vmatpush.msra.mxu0 0.0
    %2975 = vmatpush.msra.mxu0 0.0
    %2976 = vmatpush.msra.mxu0 0.0
    %2977 = vmatpush.msra.mxu0 0.0
    %2978 = vmatpush.msra.mxu0 %v2598
    %2979 = vmatpush.msra.mxu0 %v2597
    %2980 = vmatpush.msra.mxu0 %v2596
    %2981 = vmatpush.msra.mxu0 %v2595
    %2982 = vmatmul.f32.gmra.mxu0 %v2964
    %v2983 = vpop.f32.mrf.mxu0
    %v2984 = vadd.f32 0.0, %v2983
    %2985 = vdwg.mxu0
    %v2986 = vadd.f32 %v1654, %v2984
    %v2987 = vxor.u32 %v2986, 2147483648
    %v2988 = vmul.f32 %v2987, 1.442695
    %v2989 = vpow.pop %v2988
    %v2990 = vadd.f32 %v2989, 1.0
    %v2991 = vrcp.pop %v2990
    %v2992 = vmul.f32 %v2990, %v2991
    %v2993 = vsub.f32 1.0, %v2992
    %v2994 = vmul.f32 %v2991, %v2993
    %v2995 = vadd.f32 %v2991, %v2994
    %vm2996 = vweird.f32 %v2990
    %vm2997 = vweird.f32 %v2991
    %vm2998 = vmor %vm2996, %vm2997
    %v2999 = vsel %vm2998, %v2991, %v2995
    %v3000 = vand.u32 2147483647, %v2990
    %vm3001 = vcmp.eq.f32.partialorder %v3000, 8.507059e+37
    %v3002 = vand.u32 %v2990, 2147483648
    %v3003 = vor.u32 1.1754944e-38, %v3002
    %v3004 = vsel %vm3001, %v3003, %v2999
    %v3005 = vmul.f32 1.0, %v3004
    %3006 = vmatpush.msra.mxu0 0.0
    %3007 = vmatpush.msra.mxu0 0.0
    %3008 = vmatpush.msra.mxu0 0.0
    %3009 = vmatpush.msra.mxu0 0.0
    %3010 = vmatpush.msra.mxu0 0.0
    %3011 = vmatpush.msra.mxu0 0.0
    %3012 = vmatpush.msra.mxu0 0.0
    %3013 = vmatpush.msra.mxu0 0.0
    %3014 = vmatpush.msra.mxu0 0.0
    %3015 = vmatpush.msra.mxu0 0.0
    %3016 = vmatpush.msra.mxu0 0.0
    %3017 = vmatpush.msra.mxu0 0.0
    %3018 = vmatpush.msra.mxu0 %v2602
    %3019 = vmatpush.msra.mxu0 %v2601
    %3020 = vmatpush.msra.mxu0 %v2600
    %3021 = vmatpush.msra.mxu0 %v2599
    %3022 = vmatmul.f32.gmra.mxu0 %v2964
    %v3023 = vpop.f32.mrf.mxu0
    %v3024 = vadd.f32 0.0, %v3023
    %3025 = vdwg.mxu0
    %3027 = vrot.lane.b32.xlu0 %v3024, 32
    %v3028 = vpop.permute.xlu0 %3027
    %v3030 = vadd.f32 %v1654, %v3028
    %v3031 = vxor.u32 %v3030, 2147483648
    %v3032 = vmul.f32 %v3031, 1.442695
    %v3033 = vpow.pop %v3032
    %v3034 = vadd.f32 %v3033, 1.0
    %v3035 = vrcp.pop %v3034
    %v3036 = vmul.f32 %v3034, %v3035
    %v3037 = vsub.f32 1.0, %v3036
    %v3038 = vmul.f32 %v3035, %v3037
    %v3039 = vadd.f32 %v3035, %v3038
    %vm3040 = vweird.f32 %v3034
    %vm3041 = vweird.f32 %v3035
    %vm3042 = vmor %vm3040, %vm3041
    %v3043 = vsel %vm3042, %v3035, %v3039
    %v3044 = vand.u32 2147483647, %v3034
    %vm3045 = vcmp.eq.f32.partialorder %v3044, 8.507059e+37
    %v3046 = vand.u32 %v3034, 2147483648
    %v3047 = vor.u32 1.1754944e-38, %v3046
    %v3048 = vsel %vm3045, %v3047, %v3043
    %v3049 = vmul.f32 1.0, %v3048
    %3050 = vmatpush.msra.mxu0 0.0
    %3051 = vmatpush.msra.mxu0 0.0
    %3052 = vmatpush.msra.mxu0 0.0
    %3053 = vmatpush.msra.mxu0 0.0
    %3054 = vmatpush.msra.mxu0 0.0
    %3055 = vmatpush.msra.mxu0 0.0
    %3056 = vmatpush.msra.mxu0 0.0
    %3057 = vmatpush.msra.mxu0 0.0
    %3058 = vmatpush.msra.mxu0 0.0
    %3059 = vmatpush.msra.mxu0 0.0
    %3060 = vmatpush.msra.mxu0 0.0
    %3061 = vmatpush.msra.mxu0 0.0
    %3062 = vmatpush.msra.mxu0 %v2606
    %3063 = vmatpush.msra.mxu0 %v2605
    %3064 = vmatpush.msra.mxu0 %v2604
    %3065 = vmatpush.msra.mxu0 %v2603
    %3066 = vmatmul.f32.gmra.mxu0 %v2964
    %v3067 = vpop.f32.mrf.mxu0
    %v3068 = vadd.f32 0.0, %v3067
    %3069 = vdwg.mxu0
    %3071 = vrot.lane.b32.xlu0 %v3068, 64
    %v3072 = vpop.permute.xlu0 %3071
    %v3074 = vadd.f32 %v1654, %v3072
    %v3075 = vtanh.pop %v3074
    %3076 = vmatpush.msra.mxu0 0.0
    %3077 = vmatpush.msra.mxu0 0.0
    %3078 = vmatpush.msra.mxu0 0.0
    %3079 = vmatpush.msra.mxu0 0.0
    %3080 = vmatpush.msra.mxu0 0.0
    %3081 = vmatpush.msra.mxu0 0.0
    %3082 = vmatpush.msra.mxu0 0.0
    %3083 = vmatpush.msra.mxu0 0.0
    %3084 = vmatpush.msra.mxu0 0.0
    %3085 = vmatpush.msra.mxu0 0.0
    %3086 = vmatpush.msra.mxu0 0.0
    %3087 = vmatpush.msra.mxu0 0.0
    %3088 = vmatpush.msra.mxu0 %v2610
    %3089 = vmatpush.msra.mxu0 %v2609
    %3090 = vmatpush.msra.mxu0 %v2608
    %3091 = vmatpush.msra.mxu0 %v2607
    %3092 = vmatmul.f32.gmra.mxu0 %v2964
    %v3093 = vpop.f32.mrf.mxu0
    %v3094 = vadd.f32 0.0, %v3093
    %3095 = vdwg.mxu0
    %3097 = vrot.lane.b32.xlu0 %v3094, 96
    %v3098 = vpop.permute.xlu0 %3097
    %v3100 = vadd.f32 %v1654, %v3098
    %v3101 = vxor.u32 %v3100, 2147483648
    %v3102 = vmul.f32 %v3101, 1.442695
    %v3103 = vpow.pop %v3102
    %v3104 = vadd.f32 %v3103, 1.0
    %v3105 = vrcp.pop %v3104
    %v3106 = vmul.f32 %v3104, %v3105
    %v3107 = vsub.f32 1.0, %v3106
    %v3108 = vmul.f32 %v3105, %v3107
    %v3109 = vadd.f32 %v3105, %v3108
    %vm3110 = vweird.f32 %v3104
    %vm3111 = vweird.f32 %v3105
    %vm3112 = vmor %vm3110, %vm3111
    %v3113 = vsel %vm3112, %v3105, %v3109
    %v3114 = vand.u32 2147483647, %v3104
    %vm3115 = vcmp.eq.f32.partialorder %v3114, 8.507059e+37
    %v3116 = vand.u32 %v3104, 2147483648
    %v3117 = vor.u32 1.1754944e-38, %v3116
    %v3118 = vsel %vm3115, %v3117, %v3113
    %v3119 = vmul.f32 1.0, %v3118
    %v3120 = vmul.f32 %v3049, %v2954
    %3122 = vrot.lane.b32.xlu0 %v3075, 64
    %v3123 = vpop.permute.xlu0 %3122
    %v3125 = vmul.f32 %v3005, %v3123
    %3127 = vrot.lane.b32.xlu0 %v3125, 32
    %v3128 = vpop.permute.xlu0 %3127
    %v3130 = vadd.f32 %v3120, %v3128
    %v3131 = vtanh.pop %v3130
    %3133 = vrot.lane.b32.xlu0 %v3131, 64
    %v3134 = vpop.permute.xlu0 %3133
    %v3136 = vmul.f32 %v3119, %v3134
    %3138 = vrot.lane.b32.xlu0 %v3136, 32
    %v3139 = vpop.permute.xlu0 %3138
    %v3140 = vsel %vm1661, %v3139, 0
    %3142 = vmatpush.msra.mxu0 0.0
    %3143 = vmatpush.msra.mxu0 0.0
    %3144 = vmatpush.msra.mxu0 0.0
    %3145 = vmatpush.msra.mxu0 0.0
    %3146 = vmatpush.msra.mxu0 0.0
    %3147 = vmatpush.msra.mxu0 0.0
    %3148 = vmatpush.msra.mxu0 0.0
    %3149 = vmatpush.msra.mxu0 0.0
    %3150 = vmatpush.msra.mxu0 0.0
    %3151 = vmatpush.msra.mxu0 0.0
    %3152 = vmatpush.msra.mxu0 0.0
    %3153 = vmatpush.msra.mxu0 0.0
    %3154 = vmatpush.msra.mxu0 %v2598
    %3155 = vmatpush.msra.mxu0 %v2597
    %3156 = vmatpush.msra.mxu0 %v2596
    %3157 = vmatpush.msra.mxu0 %v2595
    %3158 = vmatmul.f32.gmra.mxu0 %v3140
    %v3159 = vpop.f32.mrf.mxu0
    %v3160 = vadd.f32 0.0, %v3159
    %3161 = vdwg.mxu0
    %v3162 = vadd.f32 %v1737, %v3160
    %v3163 = vxor.u32 %v3162, 2147483648
    %v3164 = vmul.f32 %v3163, 1.442695
    %v3165 = vpow.pop %v3164
    %v3166 = vadd.f32 %v3165, 1.0
    %v3167 = vrcp.pop %v3166
    %v3168 = vmul.f32 %v3166, %v3167
    %v3169 = vsub.f32 1.0, %v3168
    %v3170 = vmul.f32 %v3167, %v3169
    %v3171 = vadd.f32 %v3167, %v3170
    %vm3172 = vweird.f32 %v3166
    %vm3173 = vweird.f32 %v3167
    %vm3174 = vmor %vm3172, %vm3173
    %v3175 = vsel %vm3174, %v3167, %v3171
    %v3176 = vand.u32 2147483647, %v3166
    %vm3177 = vcmp.eq.f32.partialorder %v3176, 8.507059e+37
    %v3178 = vand.u32 %v3166, 2147483648
    %v3179 = vor.u32 1.1754944e-38, %v3178
    %v3180 = vsel %vm3177, %v3179, %v3175
    %v3181 = vmul.f32 1.0, %v3180
    %3182 = vmatpush.msra.mxu0 0.0
    %3183 = vmatpush.msra.mxu0 0.0
    %3184 = vmatpush.msra.mxu0 0.0
    %3185 = vmatpush.msra.mxu0 0.0
    %3186 = vmatpush.msra.mxu0 0.0
    %3187 = vmatpush.msra.mxu0 0.0
    %3188 = vmatpush.msra.mxu0 0.0
    %3189 = vmatpush.msra.mxu0 0.0
    %3190 = vmatpush.msra.mxu0 0.0
    %3191 = vmatpush.msra.mxu0 0.0
    %3192 = vmatpush.msra.mxu0 0.0
    %3193 = vmatpush.msra.mxu0 0.0
    %3194 = vmatpush.msra.mxu0 %v2602
    %3195 = vmatpush.msra.mxu0 %v2601
    %3196 = vmatpush.msra.mxu0 %v2600
    %3197 = vmatpush.msra.mxu0 %v2599
    %3198 = vmatmul.f32.gmra.mxu0 %v3140
    %v3199 = vpop.f32.mrf.mxu0
    %v3200 = vadd.f32 0.0, %v3199
    %3201 = vdwg.mxu0
    %3203 = vrot.lane.b32.xlu0 %v3200, 32
    %v3204 = vpop.permute.xlu0 %3203
    %v3206 = vadd.f32 %v1737, %v3204
    %v3207 = vxor.u32 %v3206, 2147483648
    %v3208 = vmul.f32 %v3207, 1.442695
    %v3209 = vpow.pop %v3208
    %v3210 = vadd.f32 %v3209, 1.0
    %v3211 = vrcp.pop %v3210
    %v3212 = vmul.f32 %v3210, %v3211
    %v3213 = vsub.f32 1.0, %v3212
    %v3214 = vmul.f32 %v3211, %v3213
    %v3215 = vadd.f32 %v3211, %v3214
    %vm3216 = vweird.f32 %v3210
    %vm3217 = vweird.f32 %v3211
    %vm3218 = vmor %vm3216, %vm3217
    %v3219 = vsel %vm3218, %v3211, %v3215
    %v3220 = vand.u32 2147483647, %v3210
    %vm3221 = vcmp.eq.f32.partialorder %v3220, 8.507059e+37
    %v3222 = vand.u32 %v3210, 2147483648
    %v3223 = vor.u32 1.1754944e-38, %v3222
    %v3224 = vsel %vm3221, %v3223, %v3219
    %v3225 = vmul.f32 1.0, %v3224
    %3226 = vmatpush.msra.mxu0 0.0
    %3227 = vmatpush.msra.mxu0 0.0
    %3228 = vmatpush.msra.mxu0 0.0
    %3229 = vmatpush.msra.mxu0 0.0
    %3230 = vmatpush.msra.mxu0 0.0
    %3231 = vmatpush.msra.mxu0 0.0
    %3232 = vmatpush.msra.mxu0 0.0
    %3233 = vmatpush.msra.mxu0 0.0
    %3234 = vmatpush.msra.mxu0 0.0
    %3235 = vmatpush.msra.mxu0 0.0
    %3236 = vmatpush.msra.mxu0 0.0
    %3237 = vmatpush.msra.mxu0 0.0
    %3238 = vmatpush.msra.mxu0 %v2606
    %3239 = vmatpush.msra.mxu0 %v2605
    %3240 = vmatpush.msra.mxu0 %v2604
    %3241 = vmatpush.msra.mxu0 %v2603
    %3242 = vmatmul.f32.gmra.mxu0 %v3140
    %v3243 = vpop.f32.mrf.mxu0
    %v3244 = vadd.f32 0.0, %v3243
    %3245 = vdwg.mxu0
    %3247 = vrot.lane.b32.xlu0 %v3244, 64
    %v3248 = vpop.permute.xlu0 %3247
    %v3250 = vadd.f32 %v1737, %v3248
    %v3251 = vtanh.pop %v3250
    %3252 = vmatpush.msra.mxu0 0.0
    %3253 = vmatpush.msra.mxu0 0.0
    %3254 = vmatpush.msra.mxu0 0.0
    %3255 = vmatpush.msra.mxu0 0.0
    %3256 = vmatpush.msra.mxu0 0.0
    %3257 = vmatpush.msra.mxu0 0.0
    %3258 = vmatpush.msra.mxu0 0.0
    %3259 = vmatpush.msra.mxu0 0.0
    %3260 = vmatpush.msra.mxu0 0.0
    %3261 = vmatpush.msra.mxu0 0.0
    %3262 = vmatpush.msra.mxu0 0.0
    %3263 = vmatpush.msra.mxu0 0.0
    %3264 = vmatpush.msra.mxu0 %v2610
    %3265 = vmatpush.msra.mxu0 %v2609
    %3266 = vmatpush.msra.mxu0 %v2608
    %3267 = vmatpush.msra.mxu0 %v2607
    %3268 = vmatmul.f32.gmra.mxu0 %v3140
    %v3269 = vpop.f32.mrf.mxu0
    %v3270 = vadd.f32 0.0, %v3269
    %3271 = vdwg.mxu0
    %3273 = vrot.lane.b32.xlu0 %v3270, 96
    %v3274 = vpop.permute.xlu0 %3273
    %v3276 = vadd.f32 %v1737, %v3274
    %v3277 = vxor.u32 %v3276, 2147483648
    %v3278 = vmul.f32 %v3277, 1.442695
    %v3279 = vpow.pop %v3278
    %v3280 = vadd.f32 %v3279, 1.0
    %v3281 = vrcp.pop %v3280
    %v3282 = vmul.f32 %v3280, %v3281
    %v3283 = vsub.f32 1.0, %v3282
    %v3284 = vmul.f32 %v3281, %v3283
    %v3285 = vadd.f32 %v3281, %v3284
    %vm3286 = vweird.f32 %v3280
    %vm3287 = vweird.f32 %v3281
    %vm3288 = vmor %vm3286, %vm3287
    %v3289 = vsel %vm3288, %v3281, %v3285
    %v3290 = vand.u32 2147483647, %v3280
    %vm3291 = vcmp.eq.f32.partialorder %v3290, 8.507059e+37
    %v3292 = vand.u32 %v3280, 2147483648
    %v3293 = vor.u32 1.1754944e-38, %v3292
    %v3294 = vsel %vm3291, %v3293, %v3289
    %v3295 = vmul.f32 1.0, %v3294
    %v3296 = vmul.f32 %v3225, %v3130
    %3298 = vrot.lane.b32.xlu0 %v3251, 64
    %v3299 = vpop.permute.xlu0 %3298
    %v3301 = vmul.f32 %v3181, %v3299
    %3303 = vrot.lane.b32.xlu0 %v3301, 32
    %v3304 = vpop.permute.xlu0 %3303
    %v3306 = vadd.f32 %v3296, %v3304
    %v3307 = vtanh.pop %v3306
    %3309 = vrot.lane.b32.xlu0 %v3307, 64
    %v3310 = vpop.permute.xlu0 %3309
    %v3312 = vmul.f32 %v3295, %v3310
    %3314 = vrot.lane.b32.xlu0 %v3312, 32
    %v3315 = vpop.permute.xlu0 %3314
    %v3316 = vsel %vm1661, %v3315, 0
    %3318 = vmatpush.msra.mxu0 0.0
    %3319 = vmatpush.msra.mxu0 0.0
    %3320 = vmatpush.msra.mxu0 0.0
    %3321 = vmatpush.msra.mxu0 0.0
    %3322 = vmatpush.msra.mxu0 0.0
    %3323 = vmatpush.msra.mxu0 0.0
    %3324 = vmatpush.msra.mxu0 0.0
    %3325 = vmatpush.msra.mxu0 0.0
    %3326 = vmatpush.msra.mxu0 0.0
    %3327 = vmatpush.msra.mxu0 0.0
    %3328 = vmatpush.msra.mxu0 0.0
    %3329 = vmatpush.msra.mxu0 0.0
    %3330 = vmatpush.msra.mxu0 %v2598
    %3331 = vmatpush.msra.mxu0 %v2597
    %3332 = vmatpush.msra.mxu0 %v2596
    %3333 = vmatpush.msra.mxu0 %v2595
    %3334 = vmatmul.f32.gmra.mxu0 %v3316
    %v3335 = vpop.f32.mrf.mxu0
    %v3336 = vadd.f32 0.0, %v3335
    %3337 = vdwg.mxu0
    %v3338 = vadd.f32 %v1813, %v3336
    %v3339 = vxor.u32 %v3338, 2147483648
    %v3340 = vmul.f32 %v3339, 1.442695
    %v3341 = vpow.pop %v3340
    %v3342 = vadd.f32 %v3341, 1.0
    %v3343 = vrcp.pop %v3342
    %v3344 = vmul.f32 %v3342, %v3343
    %v3345 = vsub.f32 1.0, %v3344
    %v3346 = vmul.f32 %v3343, %v3345
    %v3347 = vadd.f32 %v3343, %v3346
    %vm3348 = vweird.f32 %v3342
    %vm3349 = vweird.f32 %v3343
    %vm3350 = vmor %vm3348, %vm3349
    %v3351 = vsel %vm3350, %v3343, %v3347
    %v3352 = vand.u32 2147483647, %v3342
    %vm3353 = vcmp.eq.f32.partialorder %v3352, 8.507059e+37
    %v3354 = vand.u32 %v3342, 2147483648
    %v3355 = vor.u32 1.1754944e-38, %v3354
    %v3356 = vsel %vm3353, %v3355, %v3351
    %v3357 = vmul.f32 1.0, %v3356
    %3358 = vmatpush.msra.mxu0 0.0
    %3359 = vmatpush.msra.mxu0 0.0
    %3360 = vmatpush.msra.mxu0 0.0
    %3361 = vmatpush.msra.mxu0 0.0
    %3362 = vmatpush.msra.mxu0 0.0
    %3363 = vmatpush.msra.mxu0 0.0
    %3364 = vmatpush.msra.mxu0 0.0
    %3365 = vmatpush.msra.mxu0 0.0
    %3366 = vmatpush.msra.mxu0 0.0
    %3367 = vmatpush.msra.mxu0 0.0
    %3368 = vmatpush.msra.mxu0 0.0
    %3369 = vmatpush.msra.mxu0 0.0
    %3370 = vmatpush.msra.mxu0 %v2602
    %3371 = vmatpush.msra.mxu0 %v2601
    %3372 = vmatpush.msra.mxu0 %v2600
    %3373 = vmatpush.msra.mxu0 %v2599
    %3374 = vmatmul.f32.gmra.mxu0 %v3316
    %v3375 = vpop.f32.mrf.mxu0
    %v3376 = vadd.f32 0.0, %v3375
    %3377 = vdwg.mxu0
    %3379 = vrot.lane.b32.xlu0 %v3376, 32
    %v3380 = vpop.permute.xlu0 %3379
    %v3382 = vadd.f32 %v1813, %v3380
    %v3383 = vxor.u32 %v3382, 2147483648
    %v3384 = vmul.f32 %v3383, 1.442695
    %v3385 = vpow.pop %v3384
    %v3386 = vadd.f32 %v3385, 1.0
    %v3387 = vrcp.pop %v3386
    %v3388 = vmul.f32 %v3386, %v3387
    %v3389 = vsub.f32 1.0, %v3388
    %v3390 = vmul.f32 %v3387, %v3389
    %v3391 = vadd.f32 %v3387, %v3390
    %vm3392 = vweird.f32 %v3386
    %vm3393 = vweird.f32 %v3387
    %vm3394 = vmor %vm3392, %vm3393
    %v3395 = vsel %vm3394, %v3387, %v3391
    %v3396 = vand.u32 2147483647, %v3386
    %vm3397 = vcmp.eq.f32.partialorder %v3396, 8.507059e+37
    %v3398 = vand.u32 %v3386, 2147483648
    %v3399 = vor.u32 1.1754944e-38, %v3398
    %v3400 = vsel %vm3397, %v3399, %v3395
    %v3401 = vmul.f32 1.0, %v3400
    %3402 = vmatpush.msra.mxu0 0.0
    %3403 = vmatpush.msra.mxu0 0.0
    %3404 = vmatpush.msra.mxu0 0.0
    %3405 = vmatpush.msra.mxu0 0.0
    %3406 = vmatpush.msra.mxu0 0.0
    %3407 = vmatpush.msra.mxu0 0.0
    %3408 = vmatpush.msra.mxu0 0.0
    %3409 = vmatpush.msra.mxu0 0.0
    %3410 = vmatpush.msra.mxu0 0.0
    %3411 = vmatpush.msra.mxu0 0.0
    %3412 = vmatpush.msra.mxu0 0.0
    %3413 = vmatpush.msra.mxu0 0.0
    %3414 = vmatpush.msra.mxu0 %v2606
    %3415 = vmatpush.msra.mxu0 %v2605
    %3416 = vmatpush.msra.mxu0 %v2604
    %3417 = vmatpush.msra.mxu0 %v2603
    %3418 = vmatmul.f32.gmra.mxu0 %v3316
    %v3419 = vpop.f32.mrf.mxu0
    %v3420 = vadd.f32 0.0, %v3419
    %3421 = vdwg.mxu0
    %3423 = vrot.lane.b32.xlu0 %v3420, 64
    %v3424 = vpop.permute.xlu0 %3423
    %v3426 = vadd.f32 %v1813, %v3424
    %v3427 = vtanh.pop %v3426
    %3428 = vmatpush.msra.mxu0 0.0
    %3429 = vmatpush.msra.mxu0 0.0
    %3430 = vmatpush.msra.mxu0 0.0
    %3431 = vmatpush.msra.mxu0 0.0
    %3432 = vmatpush.msra.mxu0 0.0
    %3433 = vmatpush.msra.mxu0 0.0
    %3434 = vmatpush.msra.mxu0 0.0
    %3435 = vmatpush.msra.mxu0 0.0
    %3436 = vmatpush.msra.mxu0 0.0
    %3437 = vmatpush.msra.mxu0 0.0
    %3438 = vmatpush.msra.mxu0 0.0
    %3439 = vmatpush.msra.mxu0 0.0
    %3440 = vmatpush.msra.mxu0 %v2610
    %3441 = vmatpush.msra.mxu0 %v2609
    %3442 = vmatpush.msra.mxu0 %v2608
    %3443 = vmatpush.msra.mxu0 %v2607
    %3444 = vmatmul.f32.gmra.mxu0 %v3316
    %v3445 = vpop.f32.mrf.mxu0
    %v3446 = vadd.f32 0.0, %v3445
    %3447 = vdwg.mxu0
    %3449 = vrot.lane.b32.xlu0 %v3446, 96
    %v3450 = vpop.permute.xlu0 %3449
    %v3452 = vadd.f32 %v1813, %v3450
    %v3453 = vxor.u32 %v3452, 2147483648
    %v3454 = vmul.f32 %v3453, 1.442695
    %v3455 = vpow.pop %v3454
    %v3456 = vadd.f32 %v3455, 1.0
    %v3457 = vrcp.pop %v3456
    %v3458 = vmul.f32 %v3456, %v3457
    %v3459 = vsub.f32 1.0, %v3458
    %v3460 = vmul.f32 %v3457, %v3459
    %v3461 = vadd.f32 %v3457, %v3460
    %vm3462 = vweird.f32 %v3456
    %vm3463 = vweird.f32 %v3457
    %vm3464 = vmor %vm3462, %vm3463
    %v3465 = vsel %vm3464, %v3457, %v3461
    %v3466 = vand.u32 2147483647, %v3456
    %vm3467 = vcmp.eq.f32.partialorder %v3466, 8.507059e+37
    %v3468 = vand.u32 %v3456, 2147483648
    %v3469 = vor.u32 1.1754944e-38, %v3468
    %v3470 = vsel %vm3467, %v3469, %v3465
    %v3471 = vmul.f32 1.0, %v3470
    %v3472 = vmul.f32 %v3401, %v3306
    %3474 = vrot.lane.b32.xlu0 %v3427, 64
    %v3475 = vpop.permute.xlu0 %3474
    %v3477 = vmul.f32 %v3357, %v3475
    %3479 = vrot.lane.b32.xlu0 %v3477, 32
    %v3480 = vpop.permute.xlu0 %3479
    %v3482 = vadd.f32 %v3472, %v3480
    %v3483 = vtanh.pop %v3482
    %3485 = vrot.lane.b32.xlu0 %v3483, 64
    %v3486 = vpop.permute.xlu0 %3485
    %v3488 = vmul.f32 %v3471, %v3486
    %3490 = vrot.lane.b32.xlu0 %v3488, 32
    %v3491 = vpop.permute.xlu0 %3490
    %v3492 = vsel %vm1661, %v3491, 0
    %3494 = vmatpush.msra.mxu0 0.0
    %3495 = vmatpush.msra.mxu0 0.0
    %3496 = vmatpush.msra.mxu0 0.0
    %3497 = vmatpush.msra.mxu0 0.0
    %3498 = vmatpush.msra.mxu0 0.0
    %3499 = vmatpush.msra.mxu0 0.0
    %3500 = vmatpush.msra.mxu0 0.0
    %3501 = vmatpush.msra.mxu0 0.0
    %3502 = vmatpush.msra.mxu0 0.0
    %3503 = vmatpush.msra.mxu0 0.0
    %3504 = vmatpush.msra.mxu0 0.0
    %3505 = vmatpush.msra.mxu0 0.0
    %3506 = vmatpush.msra.mxu0 %v2598
    %3507 = vmatpush.msra.mxu0 %v2597
    %3508 = vmatpush.msra.mxu0 %v2596
    %3509 = vmatpush.msra.mxu0 %v2595
    %3510 = vmatmul.f32.gmra.mxu0 %v3492
    %v3511 = vpop.f32.mrf.mxu0
    %v3512 = vadd.f32 0.0, %v3511
    %3513 = vdwg.mxu0
    %v3514 = vadd.f32 %v1891, %v3512
    %v3515 = vxor.u32 %v3514, 2147483648
    %v3516 = vmul.f32 %v3515, 1.442695
    %v3517 = vpow.pop %v3516
    %v3518 = vadd.f32 %v3517, 1.0
    %v3519 = vrcp.pop %v3518
    %v3520 = vmul.f32 %v3518, %v3519
    %v3521 = vsub.f32 1.0, %v3520
    %v3522 = vmul.f32 %v3519, %v3521
    %v3523 = vadd.f32 %v3519, %v3522
    %vm3524 = vweird.f32 %v3518
    %vm3525 = vweird.f32 %v3519
    %vm3526 = vmor %vm3524, %vm3525
    %v3527 = vsel %vm3526, %v3519, %v3523
    %v3528 = vand.u32 2147483647, %v3518
    %vm3529 = vcmp.eq.f32.partialorder %v3528, 8.507059e+37
    %v3530 = vand.u32 %v3518, 2147483648
    %v3531 = vor.u32 1.1754944e-38, %v3530
    %v3532 = vsel %vm3529, %v3531, %v3527
    %v3533 = vmul.f32 1.0, %v3532
    %3534 = vmatpush.msra.mxu0 0.0
    %3535 = vmatpush.msra.mxu0 0.0
    %3536 = vmatpush.msra.mxu0 0.0
    %3537 = vmatpush.msra.mxu0 0.0
    %3538 = vmatpush.msra.mxu0 0.0
    %3539 = vmatpush.msra.mxu0 0.0
    %3540 = vmatpush.msra.mxu0 0.0
    %3541 = vmatpush.msra.mxu0 0.0
    %3542 = vmatpush.msra.mxu0 0.0
    %3543 = vmatpush.msra.mxu0 0.0
    %3544 = vmatpush.msra.mxu0 0.0
    %3545 = vmatpush.msra.mxu0 0.0
    %3546 = vmatpush.msra.mxu0 %v2602
    %3547 = vmatpush.msra.mxu0 %v2601
    %3548 = vmatpush.msra.mxu0 %v2600
    %3549 = vmatpush.msra.mxu0 %v2599
    %3550 = vmatmul.f32.gmra.mxu0 %v3492
    %v3551 = vpop.f32.mrf.mxu0
    %v3552 = vadd.f32 0.0, %v3551
    %3553 = vdwg.mxu0
    %3555 = vrot.lane.b32.xlu0 %v3552, 32
    %v3556 = vpop.permute.xlu0 %3555
    %v3558 = vadd.f32 %v1891, %v3556
    %v3559 = vxor.u32 %v3558, 2147483648
    %v3560 = vmul.f32 %v3559, 1.442695
    %v3561 = vpow.pop %v3560
    %v3562 = vadd.f32 %v3561, 1.0
    %v3563 = vrcp.pop %v3562
    %v3564 = vmul.f32 %v3562, %v3563
    %v3565 = vsub.f32 1.0, %v3564
    %v3566 = vmul.f32 %v3563, %v3565
    %v3567 = vadd.f32 %v3563, %v3566
    %vm3568 = vweird.f32 %v3562
    %vm3569 = vweird.f32 %v3563
    %vm3570 = vmor %vm3568, %vm3569
    %v3571 = vsel %vm3570, %v3563, %v3567
    %v3572 = vand.u32 2147483647, %v3562
    %vm3573 = vcmp.eq.f32.partialorder %v3572, 8.507059e+37
    %v3574 = vand.u32 %v3562, 2147483648
    %v3575 = vor.u32 1.1754944e-38, %v3574
    %v3576 = vsel %vm3573, %v3575, %v3571
    %v3577 = vmul.f32 1.0, %v3576
    %3578 = vmatpush.msra.mxu0 0.0
    %3579 = vmatpush.msra.mxu0 0.0
    %3580 = vmatpush.msra.mxu0 0.0
    %3581 = vmatpush.msra.mxu0 0.0
    %3582 = vmatpush.msra.mxu0 0.0
    %3583 = vmatpush.msra.mxu0 0.0
    %3584 = vmatpush.msra.mxu0 0.0
    %3585 = vmatpush.msra.mxu0 0.0
    %3586 = vmatpush.msra.mxu0 0.0
    %3587 = vmatpush.msra.mxu0 0.0
    %3588 = vmatpush.msra.mxu0 0.0
    %3589 = vmatpush.msra.mxu0 0.0
    %3590 = vmatpush.msra.mxu0 %v2606
    %3591 = vmatpush.msra.mxu0 %v2605
    %3592 = vmatpush.msra.mxu0 %v2604
    %3593 = vmatpush.msra.mxu0 %v2603
    %3594 = vmatmul.f32.gmra.mxu0 %v3492
    %v3595 = vpop.f32.mrf.mxu0
    %v3596 = vadd.f32 0.0, %v3595
    %3597 = vdwg.mxu0
    %3599 = vrot.lane.b32.xlu0 %v3596, 64
    %v3600 = vpop.permute.xlu0 %3599
    %v3602 = vadd.f32 %v1891, %v3600
    %v3603 = vtanh.pop %v3602
    %3604 = vmatpush.msra.mxu0 0.0
    %3605 = vmatpush.msra.mxu0 0.0
    %3606 = vmatpush.msra.mxu0 0.0
    %3607 = vmatpush.msra.mxu0 0.0
    %3608 = vmatpush.msra.mxu0 0.0
    %3609 = vmatpush.msra.mxu0 0.0
    %3610 = vmatpush.msra.mxu0 0.0
    %3611 = vmatpush.msra.mxu0 0.0
    %3612 = vmatpush.msra.mxu0 0.0
    %3613 = vmatpush.msra.mxu0 0.0
    %3614 = vmatpush.msra.mxu0 0.0
    %3615 = vmatpush.msra.mxu0 0.0
    %3616 = vmatpush.msra.mxu0 %v2610
    %3617 = vmatpush.msra.mxu0 %v2609
    %3618 = vmatpush.msra.mxu0 %v2608
    %3619 = vmatpush.msra.mxu0 %v2607
    %3620 = vmatmul.f32.gmra.mxu0 %v3492
    %v3621 = vpop.f32.mrf.mxu0
    %v3622 = vadd.f32 0.0, %v3621
    %3623 = vdwg.mxu0
    %3625 = vrot.lane.b32.xlu0 %v3622, 96
    %v3626 = vpop.permute.xlu0 %3625
    %v3628 = vadd.f32 %v1891, %v3626
    %v3629 = vxor.u32 %v3628, 2147483648
    %v3630 = vmul.f32 %v3629, 1.442695
    %v3631 = vpow.pop %v3630
    %v3632 = vadd.f32 %v3631, 1.0
    %v3633 = vrcp.pop %v3632
    %v3634 = vmul.f32 %v3632, %v3633
    %v3635 = vsub.f32 1.0, %v3634
    %v3636 = vmul.f32 %v3633, %v3635
    %v3637 = vadd.f32 %v3633, %v3636
    %vm3638 = vweird.f32 %v3632
    %vm3639 = vweird.f32 %v3633
    %vm3640 = vmor %vm3638, %vm3639
    %v3641 = vsel %vm3640, %v3633, %v3637
    %v3642 = vand.u32 2147483647, %v3632
    %vm3643 = vcmp.eq.f32.partialorder %v3642, 8.507059e+37
    %v3644 = vand.u32 %v3632, 2147483648
    %v3645 = vor.u32 1.1754944e-38, %v3644
    %v3646 = vsel %vm3643, %v3645, %v3641
    %v3647 = vmul.f32 1.0, %v3646
    %v3648 = vmul.f32 %v3577, %v3482
    %3650 = vrot.lane.b32.xlu0 %v3603, 64
    %v3651 = vpop.permute.xlu0 %3650
    %v3653 = vmul.f32 %v3533, %v3651
    %3655 = vrot.lane.b32.xlu0 %v3653, 32
    %v3656 = vpop.permute.xlu0 %3655
    %v3658 = vadd.f32 %v3648, %v3656
    %v3659 = vtanh.pop %v3658
    %3661 = vrot.lane.b32.xlu0 %v3659, 64
    %v3662 = vpop.permute.xlu0 %3661
    %v3664 = vmul.f32 %v3647, %v3662
    %3666 = vrot.lane.b32.xlu0 %v3664, 32
    %v3667 = vpop.permute.xlu0 %3666
    %v3668 = vsel %vm1661, %v3667, 0
    %3670 = vmatpush.msra.mxu0 0.0
    %3671 = vmatpush.msra.mxu0 0.0
    %3672 = vmatpush.msra.mxu0 0.0
    %3673 = vmatpush.msra.mxu0 0.0
    %3674 = vmatpush.msra.mxu0 0.0
    %3675 = vmatpush.msra.mxu0 0.0
    %3676 = vmatpush.msra.mxu0 0.0
    %3677 = vmatpush.msra.mxu0 0.0
    %3678 = vmatpush.msra.mxu0 0.0
    %3679 = vmatpush.msra.mxu0 0.0
    %3680 = vmatpush.msra.mxu0 0.0
    %3681 = vmatpush.msra.mxu0 0.0
    %3682 = vmatpush.msra.mxu0 %v2598
    %3683 = vmatpush.msra.mxu0 %v2597
    %3684 = vmatpush.msra.mxu0 %v2596
    %3685 = vmatpush.msra.mxu0 %v2595
    %3686 = vmatmul.f32.gmra.mxu0 %v3668
    %v3687 = vpop.f32.mrf.mxu0
    %v3688 = vadd.f32 0.0, %v3687
    %3689 = vdwg.mxu0
    %v3690 = vadd.f32 %v1969, %v3688
    %v3691 = vxor.u32 %v3690, 2147483648
    %v3692 = vmul.f32 %v3691, 1.442695
    %v3693 = vpow.pop %v3692
    %v3694 = vadd.f32 %v3693, 1.0
    %v3695 = vrcp.pop %v3694
    %v3696 = vmul.f32 %v3694, %v3695
    %v3697 = vsub.f32 1.0, %v3696
    %v3698 = vmul.f32 %v3695, %v3697
    %v3699 = vadd.f32 %v3695, %v3698
    %vm3700 = vweird.f32 %v3694
    %vm3701 = vweird.f32 %v3695
    %vm3702 = vmor %vm3700, %vm3701
    %v3703 = vsel %vm3702, %v3695, %v3699
    %v3704 = vand.u32 2147483647, %v3694
    %vm3705 = vcmp.eq.f32.partialorder %v3704, 8.507059e+37
    %v3706 = vand.u32 %v3694, 2147483648
    %v3707 = vor.u32 1.1754944e-38, %v3706
    %v3708 = vsel %vm3705, %v3707, %v3703
    %v3709 = vmul.f32 1.0, %v3708
    %3710 = vmatpush.msra.mxu0 0.0
    %3711 = vmatpush.msra.mxu0 0.0
    %3712 = vmatpush.msra.mxu0 0.0
    %3713 = vmatpush.msra.mxu0 0.0
    %3714 = vmatpush.msra.mxu0 0.0
    %3715 = vmatpush.msra.mxu0 0.0
    %3716 = vmatpush.msra.mxu0 0.0
    %3717 = vmatpush.msra.mxu0 0.0
    %3718 = vmatpush.msra.mxu0 0.0
    %3719 = vmatpush.msra.mxu0 0.0
    %3720 = vmatpush.msra.mxu0 0.0
    %3721 = vmatpush.msra.mxu0 0.0
    %3722 = vmatpush.msra.mxu0 %v2602
    %3723 = vmatpush.msra.mxu0 %v2601
    %3724 = vmatpush.msra.mxu0 %v2600
    %3725 = vmatpush.msra.mxu0 %v2599
    %3726 = vmatmul.f32.gmra.mxu0 %v3668
    %v3727 = vpop.f32.mrf.mxu0
    %v3728 = vadd.f32 0.0, %v3727
    %3729 = vdwg.mxu0
    %3731 = vrot.lane.b32.xlu0 %v3728, 32
    %v3732 = vpop.permute.xlu0 %3731
    %v3734 = vadd.f32 %v1969, %v3732
    %v3735 = vxor.u32 %v3734, 2147483648
    %v3736 = vmul.f32 %v3735, 1.442695
    %v3737 = vpow.pop %v3736
    %v3738 = vadd.f32 %v3737, 1.0
    %v3739 = vrcp.pop %v3738
    %v3740 = vmul.f32 %v3738, %v3739
    %v3741 = vsub.f32 1.0, %v3740
    %v3742 = vmul.f32 %v3739, %v3741
    %v3743 = vadd.f32 %v3739, %v3742
    %vm3744 = vweird.f32 %v3738
    %vm3745 = vweird.f32 %v3739
    %vm3746 = vmor %vm3744, %vm3745
    %v3747 = vsel %vm3746, %v3739, %v3743
    %v3748 = vand.u32 2147483647, %v3738
    %vm3749 = vcmp.eq.f32.partialorder %v3748, 8.507059e+37
    %v3750 = vand.u32 %v3738, 2147483648
    %v3751 = vor.u32 1.1754944e-38, %v3750
    %v3752 = vsel %vm3749, %v3751, %v3747
    %v3753 = vmul.f32 1.0, %v3752
    %3754 = vmatpush.msra.mxu0 0.0
    %3755 = vmatpush.msra.mxu0 0.0
    %3756 = vmatpush.msra.mxu0 0.0
    %3757 = vmatpush.msra.mxu0 0.0
    %3758 = vmatpush.msra.mxu0 0.0
    %3759 = vmatpush.msra.mxu0 0.0
    %3760 = vmatpush.msra.mxu0 0.0
    %3761 = vmatpush.msra.mxu0 0.0
    %3762 = vmatpush.msra.mxu0 0.0
    %3763 = vmatpush.msra.mxu0 0.0
    %3764 = vmatpush.msra.mxu0 0.0
    %3765 = vmatpush.msra.mxu0 0.0
    %3766 = vmatpush.msra.mxu0 %v2606
    %3767 = vmatpush.msra.mxu0 %v2605
    %3768 = vmatpush.msra.mxu0 %v2604
    %3769 = vmatpush.msra.mxu0 %v2603
    %3770 = vmatmul.f32.gmra.mxu0 %v3668
    %v3771 = vpop.f32.mrf.mxu0
    %v3772 = vadd.f32 0.0, %v3771
    %3773 = vdwg.mxu0
    %3775 = vrot.lane.b32.xlu0 %v3772, 64
    %v3776 = vpop.permute.xlu0 %3775
    %v3778 = vadd.f32 %v1969, %v3776
    %v3779 = vtanh.pop %v3778
    %3780 = vmatpush.msra.mxu0 0.0
    %3781 = vmatpush.msra.mxu0 0.0
    %3782 = vmatpush.msra.mxu0 0.0
    %3783 = vmatpush.msra.mxu0 0.0
    %3784 = vmatpush.msra.mxu0 0.0
    %3785 = vmatpush.msra.mxu0 0.0
    %3786 = vmatpush.msra.mxu0 0.0
    %3787 = vmatpush.msra.mxu0 0.0
    %3788 = vmatpush.msra.mxu0 0.0
    %3789 = vmatpush.msra.mxu0 0.0
    %3790 = vmatpush.msra.mxu0 0.0
    %3791 = vmatpush.msra.mxu0 0.0
    %3792 = vmatpush.msra.mxu0 %v2610
    %3793 = vmatpush.msra.mxu0 %v2609
    %3794 = vmatpush.msra.mxu0 %v2608
    %3795 = vmatpush.msra.mxu0 %v2607
    %3796 = vmatmul.f32.gmra.mxu0 %v3668
    %v3797 = vpop.f32.mrf.mxu0
    %v3798 = vadd.f32 0.0, %v3797
    %3799 = vdwg.mxu0
    %3801 = vrot.lane.b32.xlu0 %v3798, 96
    %v3802 = vpop.permute.xlu0 %3801
    %v3804 = vadd.f32 %v1969, %v3802
    %v3805 = vxor.u32 %v3804, 2147483648
    %v3806 = vmul.f32 %v3805, 1.442695
    %v3807 = vpow.pop %v3806
    %v3808 = vadd.f32 %v3807, 1.0
    %v3809 = vrcp.pop %v3808
    %v3810 = vmul.f32 %v3808, %v3809
    %v3811 = vsub.f32 1.0, %v3810
    %v3812 = vmul.f32 %v3809, %v3811
    %v3813 = vadd.f32 %v3809, %v3812
    %vm3814 = vweird.f32 %v3808
    %vm3815 = vweird.f32 %v3809
    %vm3816 = vmor %vm3814, %vm3815
    %v3817 = vsel %vm3816, %v3809, %v3813
    %v3818 = vand.u32 2147483647, %v3808
    %vm3819 = vcmp.eq.f32.partialorder %v3818, 8.507059e+37
    %v3820 = vand.u32 %v3808, 2147483648
    %v3821 = vor.u32 1.1754944e-38, %v3820
    %v3822 = vsel %vm3819, %v3821, %v3817
    %v3823 = vmul.f32 1.0, %v3822
    %v3824 = vmul.f32 %v3753, %v3658
    %3826 = vrot.lane.b32.xlu0 %v3779, 64
    %v3827 = vpop.permute.xlu0 %3826
    %v3829 = vmul.f32 %v3709, %v3827
    %3831 = vrot.lane.b32.xlu0 %v3829, 32
    %v3832 = vpop.permute.xlu0 %3831
    %v3834 = vadd.f32 %v3824, %v3832
    %v3835 = vtanh.pop %v3834
    %3837 = vrot.lane.b32.xlu0 %v3835, 64
    %v3838 = vpop.permute.xlu0 %3837
    %v3840 = vmul.f32 %v3823, %v3838
    %3842 = vrot.lane.b32.xlu0 %v3840, 32
    %v3843 = vpop.permute.xlu0 %3842
    %v3844 = vsel %vm1661, %v3843, 0
    %3846 = vmatpush.msra.mxu0 0.0
    %3847 = vmatpush.msra.mxu0 0.0
    %3848 = vmatpush.msra.mxu0 0.0
    %3849 = vmatpush.msra.mxu0 0.0
    %3850 = vmatpush.msra.mxu0 0.0
    %3851 = vmatpush.msra.mxu0 0.0
    %3852 = vmatpush.msra.mxu0 0.0
    %3853 = vmatpush.msra.mxu0 0.0
    %3854 = vmatpush.msra.mxu0 0.0
    %3855 = vmatpush.msra.mxu0 0.0
    %3856 = vmatpush.msra.mxu0 0.0
    %3857 = vmatpush.msra.mxu0 0.0
    %3858 = vmatpush.msra.mxu0 %v2598
    %3859 = vmatpush.msra.mxu0 %v2597
    %3860 = vmatpush.msra.mxu0 %v2596
    %3861 = vmatpush.msra.mxu0 %v2595
    %3862 = vmatmul.f32.gmra.mxu0 %v3844
    %v3863 = vpop.f32.mrf.mxu0
    %v3864 = vadd.f32 0.0, %v3863
    %3865 = vdwg.mxu0
    %v3866 = vadd.f32 %v2049, %v3864
    %v3867 = vxor.u32 %v3866, 2147483648
    %v3868 = vmul.f32 %v3867, 1.442695
    %v3869 = vpow.pop %v3868
    %v3870 = vadd.f32 %v3869, 1.0
    %v3871 = vrcp.pop %v3870
    %v3872 = vmul.f32 %v3870, %v3871
    %v3873 = vsub.f32 1.0, %v3872
    %v3874 = vmul.f32 %v3871, %v3873
    %v3875 = vadd.f32 %v3871, %v3874
    %vm3876 = vweird.f32 %v3870
    %vm3877 = vweird.f32 %v3871
    %vm3878 = vmor %vm3876, %vm3877
    %v3879 = vsel %vm3878, %v3871, %v3875
    %v3880 = vand.u32 2147483647, %v3870
    %vm3881 = vcmp.eq.f32.partialorder %v3880, 8.507059e+37
    %v3882 = vand.u32 %v3870, 2147483648
    %v3883 = vor.u32 1.1754944e-38, %v3882
    %v3884 = vsel %vm3881, %v3883, %v3879
    %v3885 = vmul.f32 1.0, %v3884
    %3886 = vmatpush.msra.mxu0 0.0
    %3887 = vmatpush.msra.mxu0 0.0
    %3888 = vmatpush.msra.mxu0 0.0
    %3889 = vmatpush.msra.mxu0 0.0
    %3890 = vmatpush.msra.mxu0 0.0
    %3891 = vmatpush.msra.mxu0 0.0
    %3892 = vmatpush.msra.mxu0 0.0
    %3893 = vmatpush.msra.mxu0 0.0
    %3894 = vmatpush.msra.mxu0 0.0
    %3895 = vmatpush.msra.mxu0 0.0
    %3896 = vmatpush.msra.mxu0 0.0
    %3897 = vmatpush.msra.mxu0 0.0
    %3898 = vmatpush.msra.mxu0 %v2602
    %3899 = vmatpush.msra.mxu0 %v2601
    %3900 = vmatpush.msra.mxu0 %v2600
    %3901 = vmatpush.msra.mxu0 %v2599
    %3902 = vmatmul.f32.gmra.mxu0 %v3844
    %v3903 = vpop.f32.mrf.mxu0
    %v3904 = vadd.f32 0.0, %v3903
    %3905 = vdwg.mxu0
    %3907 = vrot.lane.b32.xlu0 %v3904, 32
    %v3908 = vpop.permute.xlu0 %3907
    %v3910 = vadd.f32 %v2049, %v3908
    %v3911 = vxor.u32 %v3910, 2147483648
    %v3912 = vmul.f32 %v3911, 1.442695
    %v3913 = vpow.pop %v3912
    %v3914 = vadd.f32 %v3913, 1.0
    %v3915 = vrcp.pop %v3914
    %v3916 = vmul.f32 %v3914, %v3915
    %v3917 = vsub.f32 1.0, %v3916
    %v3918 = vmul.f32 %v3915, %v3917
    %v3919 = vadd.f32 %v3915, %v3918
    %vm3920 = vweird.f32 %v3914
    %vm3921 = vweird.f32 %v3915
    %vm3922 = vmor %vm3920, %vm3921
    %v3923 = vsel %vm3922, %v3915, %v3919
    %v3924 = vand.u32 2147483647, %v3914
    %vm3925 = vcmp.eq.f32.partialorder %v3924, 8.507059e+37
    %v3926 = vand.u32 %v3914, 2147483648
    %v3927 = vor.u32 1.1754944e-38, %v3926
    %v3928 = vsel %vm3925, %v3927, %v3923
    %v3929 = vmul.f32 1.0, %v3928
    %3930 = vmatpush.msra.mxu0 0.0
    %3931 = vmatpush.msra.mxu0 0.0
    %3932 = vmatpush.msra.mxu0 0.0
    %3933 = vmatpush.msra.mxu0 0.0
    %3934 = vmatpush.msra.mxu0 0.0
    %3935 = vmatpush.msra.mxu0 0.0
    %3936 = vmatpush.msra.mxu0 0.0
    %3937 = vmatpush.msra.mxu0 0.0
    %3938 = vmatpush.msra.mxu0 0.0
    %3939 = vmatpush.msra.mxu0 0.0
    %3940 = vmatpush.msra.mxu0 0.0
    %3941 = vmatpush.msra.mxu0 0.0
    %3942 = vmatpush.msra.mxu0 %v2606
    %3943 = vmatpush.msra.mxu0 %v2605
    %3944 = vmatpush.msra.mxu0 %v2604
    %3945 = vmatpush.msra.mxu0 %v2603
    %3946 = vmatmul.f32.gmra.mxu0 %v3844
    %v3947 = vpop.f32.mrf.mxu0
    %v3948 = vadd.f32 0.0, %v3947
    %3949 = vdwg.mxu0
    %3951 = vrot.lane.b32.xlu0 %v3948, 64
    %v3952 = vpop.permute.xlu0 %3951
    %v3954 = vadd.f32 %v2049, %v3952
    %v3955 = vtanh.pop %v3954
    %3956 = vmatpush.msra.mxu0 0.0
    %3957 = vmatpush.msra.mxu0 0.0
    %3958 = vmatpush.msra.mxu0 0.0
    %3959 = vmatpush.msra.mxu0 0.0
    %3960 = vmatpush.msra.mxu0 0.0
    %3961 = vmatpush.msra.mxu0 0.0
    %3962 = vmatpush.msra.mxu0 0.0
    %3963 = vmatpush.msra.mxu0 0.0
    %3964 = vmatpush.msra.mxu0 0.0
    %3965 = vmatpush.msra.mxu0 0.0
    %3966 = vmatpush.msra.mxu0 0.0
    %3967 = vmatpush.msra.mxu0 0.0
    %3968 = vmatpush.msra.mxu0 %v2610
    %3969 = vmatpush.msra.mxu0 %v2609
    %3970 = vmatpush.msra.mxu0 %v2608
    %3971 = vmatpush.msra.mxu0 %v2607
    %3972 = vmatmul.f32.gmra.mxu0 %v3844
    %v3973 = vpop.f32.mrf.mxu0
    %v3974 = vadd.f32 0.0, %v3973
    %3975 = vdwg.mxu0
    %3977 = vrot.lane.b32.xlu0 %v3974, 96
    %v3978 = vpop.permute.xlu0 %3977
    %v3980 = vadd.f32 %v2049, %v3978
    %v3981 = vxor.u32 %v3980, 2147483648
    %v3982 = vmul.f32 %v3981, 1.442695
    %v3983 = vpow.pop %v3982
    %v3984 = vadd.f32 %v3983, 1.0
    %v3985 = vrcp.pop %v3984
    %v3986 = vmul.f32 %v3984, %v3985
    %v3987 = vsub.f32 1.0, %v3986
    %v3988 = vmul.f32 %v3985, %v3987
    %v3989 = vadd.f32 %v3985, %v3988
    %vm3990 = vweird.f32 %v3984
    %vm3991 = vweird.f32 %v3985
    %vm3992 = vmor %vm3990, %vm3991
    %v3993 = vsel %vm3992, %v3985, %v3989
    %v3994 = vand.u32 2147483647, %v3984
    %vm3995 = vcmp.eq.f32.partialorder %v3994, 8.507059e+37
    %v3996 = vand.u32 %v3984, 2147483648
    %v3997 = vor.u32 1.1754944e-38, %v3996
    %v3998 = vsel %vm3995, %v3997, %v3993
    %v3999 = vmul.f32 1.0, %v3998
    %v4000 = vmul.f32 %v3929, %v3834
    %4002 = vrot.lane.b32.xlu0 %v3955, 64
    %v4003 = vpop.permute.xlu0 %4002
    %v4005 = vmul.f32 %v3885, %v4003
    %4007 = vrot.lane.b32.xlu0 %v4005, 32
    %v4008 = vpop.permute.xlu0 %4007
    %v4010 = vadd.f32 %v4000, %v4008
    %v4011 = vtanh.pop %v4010
    %4013 = vrot.lane.b32.xlu0 %v4011, 64
    %v4014 = vpop.permute.xlu0 %4013
    %v4016 = vmul.f32 %v3999, %v4014
    %4018 = vrot.lane.b32.xlu0 %v4016, 32
    %v4019 = vpop.permute.xlu0 %4018
    %v4020 = vsel %vm1661, %v4019, 0
    %4022 = vmatpush.msra.mxu0 0.0
    %4023 = vmatpush.msra.mxu0 0.0
    %4024 = vmatpush.msra.mxu0 0.0
    %4025 = vmatpush.msra.mxu0 0.0
    %4026 = vmatpush.msra.mxu0 0.0
    %4027 = vmatpush.msra.mxu0 0.0
    %4028 = vmatpush.msra.mxu0 0.0
    %4029 = vmatpush.msra.mxu0 0.0
    %4030 = vmatpush.msra.mxu0 0.0
    %4031 = vmatpush.msra.mxu0 0.0
    %4032 = vmatpush.msra.mxu0 0.0
    %4033 = vmatpush.msra.mxu0 0.0
    %4034 = vmatpush.msra.mxu0 %v2598
    %4035 = vmatpush.msra.mxu0 %v2597
    %4036 = vmatpush.msra.mxu0 %v2596
    %4037 = vmatpush.msra.mxu0 %v2595
    %4038 = vmatmul.f32.gmra.mxu0 %v4020
    %v4039 = vpop.f32.mrf.mxu0
    %v4040 = vadd.f32 0.0, %v4039
    %4041 = vdwg.mxu0
    %v4042 = vadd.f32 %v2125, %v4040
    %v4043 = vxor.u32 %v4042, 2147483648
    %v4044 = vmul.f32 %v4043, 1.442695
    %v4045 = vpow.pop %v4044
    %v4046 = vadd.f32 %v4045, 1.0
    %v4047 = vrcp.pop %v4046
    %v4048 = vmul.f32 %v4046, %v4047
    %v4049 = vsub.f32 1.0, %v4048
    %v4050 = vmul.f32 %v4047, %v4049
    %v4051 = vadd.f32 %v4047, %v4050
    %vm4052 = vweird.f32 %v4046
    %vm4053 = vweird.f32 %v4047
    %vm4054 = vmor %vm4052, %vm4053
    %v4055 = vsel %vm4054, %v4047, %v4051
    %v4056 = vand.u32 2147483647, %v4046
    %vm4057 = vcmp.eq.f32.partialorder %v4056, 8.507059e+37
    %v4058 = vand.u32 %v4046, 2147483648
    %v4059 = vor.u32 1.1754944e-38, %v4058
    %v4060 = vsel %vm4057, %v4059, %v4055
    %v4061 = vmul.f32 1.0, %v4060
    %4062 = vmatpush.msra.mxu0 0.0
    %4063 = vmatpush.msra.mxu0 0.0
    %4064 = vmatpush.msra.mxu0 0.0
    %4065 = vmatpush.msra.mxu0 0.0
    %4066 = vmatpush.msra.mxu0 0.0
    %4067 = vmatpush.msra.mxu0 0.0
    %4068 = vmatpush.msra.mxu0 0.0
    %4069 = vmatpush.msra.mxu0 0.0
    %4070 = vmatpush.msra.mxu0 0.0
    %4071 = vmatpush.msra.mxu0 0.0
    %4072 = vmatpush.msra.mxu0 0.0
    %4073 = vmatpush.msra.mxu0 0.0
    %4074 = vmatpush.msra.mxu0 %v2602
    %4075 = vmatpush.msra.mxu0 %v2601
    %4076 = vmatpush.msra.mxu0 %v2600
    %4077 = vmatpush.msra.mxu0 %v2599
    %4078 = vmatmul.f32.gmra.mxu0 %v4020
    %v4079 = vpop.f32.mrf.mxu0
    %v4080 = vadd.f32 0.0, %v4079
    %4081 = vdwg.mxu0
    %4083 = vrot.lane.b32.xlu0 %v4080, 32
    %v4084 = vpop.permute.xlu0 %4083
    %v4086 = vadd.f32 %v2125, %v4084
    %v4087 = vxor.u32 %v4086, 2147483648
    %v4088 = vmul.f32 %v4087, 1.442695
    %v4089 = vpow.pop %v4088
    %v4090 = vadd.f32 %v4089, 1.0
    %v4091 = vrcp.pop %v4090
    %v4092 = vmul.f32 %v4090, %v4091
    %v4093 = vsub.f32 1.0, %v4092
    %v4094 = vmul.f32 %v4091, %v4093
    %v4095 = vadd.f32 %v4091, %v4094
    %vm4096 = vweird.f32 %v4090
    %vm4097 = vweird.f32 %v4091
    %vm4098 = vmor %vm4096, %vm4097
    %v4099 = vsel %vm4098, %v4091, %v4095
    %v4100 = vand.u32 2147483647, %v4090
    %vm4101 = vcmp.eq.f32.partialorder %v4100, 8.507059e+37
    %v4102 = vand.u32 %v4090, 2147483648
    %v4103 = vor.u32 1.1754944e-38, %v4102
    %v4104 = vsel %vm4101, %v4103, %v4099
    %v4105 = vmul.f32 1.0, %v4104
    %4106 = vmatpush.msra.mxu0 0.0
    %4107 = vmatpush.msra.mxu0 0.0
    %4108 = vmatpush.msra.mxu0 0.0
    %4109 = vmatpush.msra.mxu0 0.0
    %4110 = vmatpush.msra.mxu0 0.0
    %4111 = vmatpush.msra.mxu0 0.0
    %4112 = vmatpush.msra.mxu0 0.0
    %4113 = vmatpush.msra.mxu0 0.0
    %4114 = vmatpush.msra.mxu0 0.0
    %4115 = vmatpush.msra.mxu0 0.0
    %4116 = vmatpush.msra.mxu0 0.0
    %4117 = vmatpush.msra.mxu0 0.0
    %4118 = vmatpush.msra.mxu0 %v2606
    %4119 = vmatpush.msra.mxu0 %v2605
    %4120 = vmatpush.msra.mxu0 %v2604
    %4121 = vmatpush.msra.mxu0 %v2603
    %4122 = vmatmul.f32.gmra.mxu0 %v4020
    %v4123 = vpop.f32.mrf.mxu0
    %v4124 = vadd.f32 0.0, %v4123
    %4125 = vdwg.mxu0
    %4127 = vrot.lane.b32.xlu0 %v4124, 64
    %v4128 = vpop.permute.xlu0 %4127
    %v4130 = vadd.f32 %v2125, %v4128
    %v4131 = vtanh.pop %v4130
    %4132 = vmatpush.msra.mxu0 0.0
    %4133 = vmatpush.msra.mxu0 0.0
    %4134 = vmatpush.msra.mxu0 0.0
    %4135 = vmatpush.msra.mxu0 0.0
    %4136 = vmatpush.msra.mxu0 0.0
    %4137 = vmatpush.msra.mxu0 0.0
    %4138 = vmatpush.msra.mxu0 0.0
    %4139 = vmatpush.msra.mxu0 0.0
    %4140 = vmatpush.msra.mxu0 0.0
    %4141 = vmatpush.msra.mxu0 0.0
    %4142 = vmatpush.msra.mxu0 0.0
    %4143 = vmatpush.msra.mxu0 0.0
    %4144 = vmatpush.msra.mxu0 %v2610
    %4145 = vmatpush.msra.mxu0 %v2609
    %4146 = vmatpush.msra.mxu0 %v2608
    %4147 = vmatpush.msra.mxu0 %v2607
    %4148 = vmatmul.f32.gmra.mxu0 %v4020
    %v4149 = vpop.f32.mrf.mxu0
    %v4150 = vadd.f32 0.0, %v4149
    %4151 = vdwg.mxu0
    %4153 = vrot.lane.b32.xlu0 %v4150, 96
    %v4154 = vpop.permute.xlu0 %4153
    %v4156 = vadd.f32 %v2125, %v4154
    %v4157 = vxor.u32 %v4156, 2147483648
    %v4158 = vmul.f32 %v4157, 1.442695
    %v4159 = vpow.pop %v4158
    %v4160 = vadd.f32 %v4159, 1.0
    %v4161 = vrcp.pop %v4160
    %v4162 = vmul.f32 %v4160, %v4161
    %v4163 = vsub.f32 1.0, %v4162
    %v4164 = vmul.f32 %v4161, %v4163
    %v4165 = vadd.f32 %v4161, %v4164
    %vm4166 = vweird.f32 %v4160
    %vm4167 = vweird.f32 %v4161
    %vm4168 = vmor %vm4166, %vm4167
    %v4169 = vsel %vm4168, %v4161, %v4165
    %v4170 = vand.u32 2147483647, %v4160
    %vm4171 = vcmp.eq.f32.partialorder %v4170, 8.507059e+37
    %v4172 = vand.u32 %v4160, 2147483648
    %v4173 = vor.u32 1.1754944e-38, %v4172
    %v4174 = vsel %vm4171, %v4173, %v4169
    %v4175 = vmul.f32 1.0, %v4174
    %v4176 = vmul.f32 %v4105, %v4010
    %4178 = vrot.lane.b32.xlu0 %v4131, 64
    %v4179 = vpop.permute.xlu0 %4178
    %v4181 = vmul.f32 %v4061, %v4179
    %4183 = vrot.lane.b32.xlu0 %v4181, 32
    %v4184 = vpop.permute.xlu0 %4183
    %v4186 = vadd.f32 %v4176, %v4184
    %v4187 = vtanh.pop %v4186
    %4189 = vrot.lane.b32.xlu0 %v4187, 64
    %v4190 = vpop.permute.xlu0 %4189
    %v4192 = vmul.f32 %v4175, %v4190
    %4194 = vrot.lane.b32.xlu0 %v4192, 32
    %v4195 = vpop.permute.xlu0 %4194
    %v4196 = vsel %vm1661, %v4195, 0
    %4198 = vmatpush.msra.mxu0 0.0
    %4199 = vmatpush.msra.mxu0 0.0
    %4200 = vmatpush.msra.mxu0 0.0
    %4201 = vmatpush.msra.mxu0 0.0
    %4202 = vmatpush.msra.mxu0 0.0
    %4203 = vmatpush.msra.mxu0 0.0
    %4204 = vmatpush.msra.mxu0 0.0
    %4205 = vmatpush.msra.mxu0 0.0
    %4206 = vmatpush.msra.mxu0 0.0
    %4207 = vmatpush.msra.mxu0 0.0
    %4208 = vmatpush.msra.mxu0 0.0
    %4209 = vmatpush.msra.mxu0 0.0
    %4210 = vmatpush.msra.mxu0 %v2598
    %4211 = vmatpush.msra.mxu0 %v2597
    %4212 = vmatpush.msra.mxu0 %v2596
    %4213 = vmatpush.msra.mxu0 %v2595
    %4214 = vmatmul.f32.gmra.mxu0 %v4196
    %v4215 = vpop.f32.mrf.mxu0
    %v4216 = vadd.f32 0.0, %v4215
    %4217 = vdwg.mxu0
    %v4218 = vadd.f32 %v2203, %v4216
    %v4219 = vxor.u32 %v4218, 2147483648
    %v4220 = vmul.f32 %v4219, 1.442695
    %v4221 = vpow.pop %v4220
    %v4222 = vadd.f32 %v4221, 1.0
    %v4223 = vrcp.pop %v4222
    %v4224 = vmul.f32 %v4222, %v4223
    %v4225 = vsub.f32 1.0, %v4224
    %v4226 = vmul.f32 %v4223, %v4225
    %v4227 = vadd.f32 %v4223, %v4226
    %vm4228 = vweird.f32 %v4222
    %vm4229 = vweird.f32 %v4223
    %vm4230 = vmor %vm4228, %vm4229
    %v4231 = vsel %vm4230, %v4223, %v4227
    %v4232 = vand.u32 2147483647, %v4222
    %vm4233 = vcmp.eq.f32.partialorder %v4232, 8.507059e+37
    %v4234 = vand.u32 %v4222, 2147483648
    %v4235 = vor.u32 1.1754944e-38, %v4234
    %v4236 = vsel %vm4233, %v4235, %v4231
    %v4237 = vmul.f32 1.0, %v4236
    %4238 = vmatpush.msra.mxu0 0.0
    %4239 = vmatpush.msra.mxu0 0.0
    %4240 = vmatpush.msra.mxu0 0.0
    %4241 = vmatpush.msra.mxu0 0.0
    %4242 = vmatpush.msra.mxu0 0.0
    %4243 = vmatpush.msra.mxu0 0.0
    %4244 = vmatpush.msra.mxu0 0.0
    %4245 = vmatpush.msra.mxu0 0.0
    %4246 = vmatpush.msra.mxu0 0.0
    %4247 = vmatpush.msra.mxu0 0.0
    %4248 = vmatpush.msra.mxu0 0.0
    %4249 = vmatpush.msra.mxu0 0.0
    %4250 = vmatpush.msra.mxu0 %v2602
    %4251 = vmatpush.msra.mxu0 %v2601
    %4252 = vmatpush.msra.mxu0 %v2600
    %4253 = vmatpush.msra.mxu0 %v2599
    %4254 = vmatmul.f32.gmra.mxu0 %v4196
    %v4255 = vpop.f32.mrf.mxu0
    %v4256 = vadd.f32 0.0, %v4255
    %4257 = vdwg.mxu0
    %4259 = vrot.lane.b32.xlu0 %v4256, 32
    %v4260 = vpop.permute.xlu0 %4259
    %v4262 = vadd.f32 %v2203, %v4260
    %v4263 = vxor.u32 %v4262, 2147483648
    %v4264 = vmul.f32 %v4263, 1.442695
    %v4265 = vpow.pop %v4264
    %v4266 = vadd.f32 %v4265, 1.0
    %v4267 = vrcp.pop %v4266
    %v4268 = vmul.f32 %v4266, %v4267
    %v4269 = vsub.f32 1.0, %v4268
    %v4270 = vmul.f32 %v4267, %v4269
    %v4271 = vadd.f32 %v4267, %v4270
    %vm4272 = vweird.f32 %v4266
    %vm4273 = vweird.f32 %v4267
    %vm4274 = vmor %vm4272, %vm4273
    %v4275 = vsel %vm4274, %v4267, %v4271
    %v4276 = vand.u32 2147483647, %v4266
    %vm4277 = vcmp.eq.f32.partialorder %v4276, 8.507059e+37
    %v4278 = vand.u32 %v4266, 2147483648
    %v4279 = vor.u32 1.1754944e-38, %v4278
    %v4280 = vsel %vm4277, %v4279, %v4275
    %v4281 = vmul.f32 1.0, %v4280
    %4282 = vmatpush.msra.mxu0 0.0
    %4283 = vmatpush.msra.mxu0 0.0
    %4284 = vmatpush.msra.mxu0 0.0
    %4285 = vmatpush.msra.mxu0 0.0
    %4286 = vmatpush.msra.mxu0 0.0
    %4287 = vmatpush.msra.mxu0 0.0
    %4288 = vmatpush.msra.mxu0 0.0
    %4289 = vmatpush.msra.mxu0 0.0
    %4290 = vmatpush.msra.mxu0 0.0
    %4291 = vmatpush.msra.mxu0 0.0
    %4292 = vmatpush.msra.mxu0 0.0
    %4293 = vmatpush.msra.mxu0 0.0
    %4294 = vmatpush.msra.mxu0 %v2606
    %4295 = vmatpush.msra.mxu0 %v2605
    %4296 = vmatpush.msra.mxu0 %v2604
    %4297 = vmatpush.msra.mxu0 %v2603
    %4298 = vmatmul.f32.gmra.mxu0 %v4196
    %v4299 = vpop.f32.mrf.mxu0
    %v4300 = vadd.f32 0.0, %v4299
    %4301 = vdwg.mxu0
    %4303 = vrot.lane.b32.xlu0 %v4300, 64
    %v4304 = vpop.permute.xlu0 %4303
    %v4306 = vadd.f32 %v2203, %v4304
    %v4307 = vtanh.pop %v4306
    %4308 = vmatpush.msra.mxu0 0.0
    %4309 = vmatpush.msra.mxu0 0.0
    %4310 = vmatpush.msra.mxu0 0.0
    %4311 = vmatpush.msra.mxu0 0.0
    %4312 = vmatpush.msra.mxu0 0.0
    %4313 = vmatpush.msra.mxu0 0.0
    %4314 = vmatpush.msra.mxu0 0.0
    %4315 = vmatpush.msra.mxu0 0.0
    %4316 = vmatpush.msra.mxu0 0.0
    %4317 = vmatpush.msra.mxu0 0.0
    %4318 = vmatpush.msra.mxu0 0.0
    %4319 = vmatpush.msra.mxu0 0.0
    %4320 = vmatpush.msra.mxu0 %v2610
    %4321 = vmatpush.msra.mxu0 %v2609
    %4322 = vmatpush.msra.mxu0 %v2608
    %4323 = vmatpush.msra.mxu0 %v2607
    %4324 = vmatmul.f32.gmra.mxu0 %v4196
    %v4325 = vpop.f32.mrf.mxu0
    %v4326 = vadd.f32 0.0, %v4325
    %4327 = vdwg.mxu0
    %4329 = vrot.lane.b32.xlu0 %v4326, 96
    %v4330 = vpop.permute.xlu0 %4329
    %v4332 = vadd.f32 %v2203, %v4330
    %v4333 = vxor.u32 %v4332, 2147483648
    %v4334 = vmul.f32 %v4333, 1.442695
    %v4335 = vpow.pop %v4334
    %v4336 = vadd.f32 %v4335, 1.0
    %v4337 = vrcp.pop %v4336
    %v4338 = vmul.f32 %v4336, %v4337
    %v4339 = vsub.f32 1.0, %v4338
    %v4340 = vmul.f32 %v4337, %v4339
    %v4341 = vadd.f32 %v4337, %v4340
    %vm4342 = vweird.f32 %v4336
    %vm4343 = vweird.f32 %v4337
    %vm4344 = vmor %vm4342, %vm4343
    %v4345 = vsel %vm4344, %v4337, %v4341
    %v4346 = vand.u32 2147483647, %v4336
    %vm4347 = vcmp.eq.f32.partialorder %v4346, 8.507059e+37
    %v4348 = vand.u32 %v4336, 2147483648
    %v4349 = vor.u32 1.1754944e-38, %v4348
    %v4350 = vsel %vm4347, %v4349, %v4345
    %v4351 = vmul.f32 1.0, %v4350
    %v4352 = vmul.f32 %v4281, %v4186
    %4354 = vrot.lane.b32.xlu0 %v4307, 64
    %v4355 = vpop.permute.xlu0 %4354
    %v4357 = vmul.f32 %v4237, %v4355
    %4359 = vrot.lane.b32.xlu0 %v4357, 32
    %v4360 = vpop.permute.xlu0 %4359
    %v4362 = vadd.f32 %v4352, %v4360
    %v4363 = vtanh.pop %v4362
    %4365 = vrot.lane.b32.xlu0 %v4363, 64
    %v4366 = vpop.permute.xlu0 %4365
    %v4368 = vmul.f32 %v4351, %v4366
    %4370 = vrot.lane.b32.xlu0 %v4368, 32
    %v4371 = vpop.permute.xlu0 %4370
    %v4372 = vsel %vm1661, %v4371, 0
    %4374 = vmatpush.msra.mxu0 0.0
    %4375 = vmatpush.msra.mxu0 0.0
    %4376 = vmatpush.msra.mxu0 0.0
    %4377 = vmatpush.msra.mxu0 0.0
    %4378 = vmatpush.msra.mxu0 0.0
    %4379 = vmatpush.msra.mxu0 0.0
    %4380 = vmatpush.msra.mxu0 0.0
    %4381 = vmatpush.msra.mxu0 0.0
    %4382 = vmatpush.msra.mxu0 0.0
    %4383 = vmatpush.msra.mxu0 0.0
    %4384 = vmatpush.msra.mxu0 0.0
    %4385 = vmatpush.msra.mxu0 0.0
    %4386 = vmatpush.msra.mxu0 %v2598
    %4387 = vmatpush.msra.mxu0 %v2597
    %4388 = vmatpush.msra.mxu0 %v2596
    %4389 = vmatpush.msra.mxu0 %v2595
    %4390 = vmatmul.f32.gmra.mxu0 %v4372
    %v4391 = vpop.f32.mrf.mxu0
    %v4392 = vadd.f32 0.0, %v4391
    %4393 = vdwg.mxu0
    %v4394 = vadd.f32 %v2281, %v4392
    %v4395 = vxor.u32 %v4394, 2147483648
    %v4396 = vmul.f32 %v4395, 1.442695
    %v4397 = vpow.pop %v4396
    %v4398 = vadd.f32 %v4397, 1.0
    %v4399 = vrcp.pop %v4398
    %v4400 = vmul.f32 %v4398, %v4399
    %v4401 = vsub.f32 1.0, %v4400
    %v4402 = vmul.f32 %v4399, %v4401
    %v4403 = vadd.f32 %v4399, %v4402
    %vm4404 = vweird.f32 %v4398
    %vm4405 = vweird.f32 %v4399
    %vm4406 = vmor %vm4404, %vm4405
    %v4407 = vsel %vm4406, %v4399, %v4403
    %v4408 = vand.u32 2147483647, %v4398
    %vm4409 = vcmp.eq.f32.partialorder %v4408, 8.507059e+37
    %v4410 = vand.u32 %v4398, 2147483648
    %v4411 = vor.u32 1.1754944e-38, %v4410
    %v4412 = vsel %vm4409, %v4411, %v4407
    %v4413 = vmul.f32 1.0, %v4412
    %4414 = vmatpush.msra.mxu0 0.0
    %4415 = vmatpush.msra.mxu0 0.0
    %4416 = vmatpush.msra.mxu0 0.0
    %4417 = vmatpush.msra.mxu0 0.0
    %4418 = vmatpush.msra.mxu0 0.0
    %4419 = vmatpush.msra.mxu0 0.0
    %4420 = vmatpush.msra.mxu0 0.0
    %4421 = vmatpush.msra.mxu0 0.0
    %4422 = vmatpush.msra.mxu0 0.0
    %4423 = vmatpush.msra.mxu0 0.0
    %4424 = vmatpush.msra.mxu0 0.0
    %4425 = vmatpush.msra.mxu0 0.0
    %4426 = vmatpush.msra.mxu0 %v2602
    %4427 = vmatpush.msra.mxu0 %v2601
    %4428 = vmatpush.msra.mxu0 %v2600
    %4429 = vmatpush.msra.mxu0 %v2599
    %4430 = vmatmul.f32.gmra.mxu0 %v4372
    %v4431 = vpop.f32.mrf.mxu0
    %v4432 = vadd.f32 0.0, %v4431
    %4433 = vdwg.mxu0
    %4435 = vrot.lane.b32.xlu0 %v4432, 32
    %v4436 = vpop.permute.xlu0 %4435
    %v4438 = vadd.f32 %v2281, %v4436
    %v4439 = vxor.u32 %v4438, 2147483648
    %v4440 = vmul.f32 %v4439, 1.442695
    %v4441 = vpow.pop %v4440
    %v4442 = vadd.f32 %v4441, 1.0
    %v4443 = vrcp.pop %v4442
    %v4444 = vmul.f32 %v4442, %v4443
    %v4445 = vsub.f32 1.0, %v4444
    %v4446 = vmul.f32 %v4443, %v4445
    %v4447 = vadd.f32 %v4443, %v4446
    %vm4448 = vweird.f32 %v4442
    %vm4449 = vweird.f32 %v4443
    %vm4450 = vmor %vm4448, %vm4449
    %v4451 = vsel %vm4450, %v4443, %v4447
    %v4452 = vand.u32 2147483647, %v4442
    %vm4453 = vcmp.eq.f32.partialorder %v4452, 8.507059e+37
    %v4454 = vand.u32 %v4442, 2147483648
    %v4455 = vor.u32 1.1754944e-38, %v4454
    %v4456 = vsel %vm4453, %v4455, %v4451
    %v4457 = vmul.f32 1.0, %v4456
    %4458 = vmatpush.msra.mxu0 0.0
    %4459 = vmatpush.msra.mxu0 0.0
    %4460 = vmatpush.msra.mxu0 0.0
    %4461 = vmatpush.msra.mxu0 0.0
    %4462 = vmatpush.msra.mxu0 0.0
    %4463 = vmatpush.msra.mxu0 0.0
    %4464 = vmatpush.msra.mxu0 0.0
    %4465 = vmatpush.msra.mxu0 0.0
    %4466 = vmatpush.msra.mxu0 0.0
    %4467 = vmatpush.msra.mxu0 0.0
    %4468 = vmatpush.msra.mxu0 0.0
    %4469 = vmatpush.msra.mxu0 0.0
    %4470 = vmatpush.msra.mxu0 %v2606
    %4471 = vmatpush.msra.mxu0 %v2605
    %4472 = vmatpush.msra.mxu0 %v2604
    %4473 = vmatpush.msra.mxu0 %v2603
    %4474 = vmatmul.f32.gmra.mxu0 %v4372
    %v4475 = vpop.f32.mrf.mxu0
    %v4476 = vadd.f32 0.0, %v4475
    %4477 = vdwg.mxu0
    %4479 = vrot.lane.b32.xlu0 %v4476, 64
    %v4480 = vpop.permute.xlu0 %4479
    %v4482 = vadd.f32 %v2281, %v4480
    %v4483 = vtanh.pop %v4482
    %4484 = vmatpush.msra.mxu0 0.0
    %4485 = vmatpush.msra.mxu0 0.0
    %4486 = vmatpush.msra.mxu0 0.0
    %4487 = vmatpush.msra.mxu0 0.0
    %4488 = vmatpush.msra.mxu0 0.0
    %4489 = vmatpush.msra.mxu0 0.0
    %4490 = vmatpush.msra.mxu0 0.0
    %4491 = vmatpush.msra.mxu0 0.0
    %4492 = vmatpush.msra.mxu0 0.0
    %4493 = vmatpush.msra.mxu0 0.0
    %4494 = vmatpush.msra.mxu0 0.0
    %4495 = vmatpush.msra.mxu0 0.0
    %4496 = vmatpush.msra.mxu0 %v2610
    %4497 = vmatpush.msra.mxu0 %v2609
    %4498 = vmatpush.msra.mxu0 %v2608
    %4499 = vmatpush.msra.mxu0 %v2607
    %4500 = vmatmul.f32.gmra.mxu0 %v4372
    %v4501 = vpop.f32.mrf.mxu0
    %v4502 = vadd.f32 0.0, %v4501
    %4503 = vdwg.mxu0
    %4505 = vrot.lane.b32.xlu0 %v4502, 96
    %v4506 = vpop.permute.xlu0 %4505
    %v4508 = vadd.f32 %v2281, %v4506
    %v4509 = vxor.u32 %v4508, 2147483648
    %v4510 = vmul.f32 %v4509, 1.442695
    %v4511 = vpow.pop %v4510
    %v4512 = vadd.f32 %v4511, 1.0
    %v4513 = vrcp.pop %v4512
    %v4514 = vmul.f32 %v4512, %v4513
    %v4515 = vsub.f32 1.0, %v4514
    %v4516 = vmul.f32 %v4513, %v4515
    %v4517 = vadd.f32 %v4513, %v4516
    %vm4518 = vweird.f32 %v4512
    %vm4519 = vweird.f32 %v4513
    %vm4520 = vmor %vm4518, %vm4519
    %v4521 = vsel %vm4520, %v4513, %v4517
    %v4522 = vand.u32 2147483647, %v4512
    %vm4523 = vcmp.eq.f32.partialorder %v4522, 8.507059e+37
    %v4524 = vand.u32 %v4512, 2147483648
    %v4525 = vor.u32 1.1754944e-38, %v4524
    %v4526 = vsel %vm4523, %v4525, %v4521
    %v4527 = vmul.f32 1.0, %v4526
    %v4528 = vmul.f32 %v4457, %v4362
    %4530 = vrot.lane.b32.xlu0 %v4483, 64
    %v4531 = vpop.permute.xlu0 %4530
    %v4533 = vmul.f32 %v4413, %v4531
    %4535 = vrot.lane.b32.xlu0 %v4533, 32
    %v4536 = vpop.permute.xlu0 %4535
    %v4538 = vadd.f32 %v4528, %v4536
    %v4539 = vtanh.pop %v4538
    %4541 = vrot.lane.b32.xlu0 %v4539, 64
    %v4542 = vpop.permute.xlu0 %4541
    %v4544 = vmul.f32 %v4527, %v4542
    %4546 = vrot.lane.b32.xlu0 %v4544, 32
    %v4547 = vpop.permute.xlu0 %4546
    %v4548 = vsel %vm1661, %v4547, 0
    %4550 = vmatpush.msra.mxu0 0.0
    %4551 = vmatpush.msra.mxu0 0.0
    %4552 = vmatpush.msra.mxu0 0.0
    %4553 = vmatpush.msra.mxu0 0.0
    %4554 = vmatpush.msra.mxu0 0.0
    %4555 = vmatpush.msra.mxu0 0.0
    %4556 = vmatpush.msra.mxu0 0.0
    %4557 = vmatpush.msra.mxu0 0.0
    %4558 = vmatpush.msra.mxu0 0.0
    %4559 = vmatpush.msra.mxu0 0.0
    %4560 = vmatpush.msra.mxu0 0.0
    %4561 = vmatpush.msra.mxu0 0.0
    %4562 = vmatpush.msra.mxu0 %v2598
    %4563 = vmatpush.msra.mxu0 %v2597
    %4564 = vmatpush.msra.mxu0 %v2596
    %4565 = vmatpush.msra.mxu0 %v2595
    %4566 = vmatmul.f32.gmra.mxu0 %v4548
    %v4567 = vpop.f32.mrf.mxu0
    %v4568 = vadd.f32 0.0, %v4567
    %4569 = vdwg.mxu0
    %v4570 = vadd.f32 %v2361, %v4568
    %v4571 = vxor.u32 %v4570, 2147483648
    %v4572 = vmul.f32 %v4571, 1.442695
    %v4573 = vpow.pop %v4572
    %v4574 = vadd.f32 %v4573, 1.0
    %v4575 = vrcp.pop %v4574
    %v4576 = vmul.f32 %v4574, %v4575
    %v4577 = vsub.f32 1.0, %v4576
    %v4578 = vmul.f32 %v4575, %v4577
    %v4579 = vadd.f32 %v4575, %v4578
    %vm4580 = vweird.f32 %v4574
    %vm4581 = vweird.f32 %v4575
    %vm4582 = vmor %vm4580, %vm4581
    %v4583 = vsel %vm4582, %v4575, %v4579
    %v4584 = vand.u32 2147483647, %v4574
    %vm4585 = vcmp.eq.f32.partialorder %v4584, 8.507059e+37
    %v4586 = vand.u32 %v4574, 2147483648
    %v4587 = vor.u32 1.1754944e-38, %v4586
    %v4588 = vsel %vm4585, %v4587, %v4583
    %v4589 = vmul.f32 1.0, %v4588
    %4590 = vmatpush.msra.mxu0 0.0
    %4591 = vmatpush.msra.mxu0 0.0
    %4592 = vmatpush.msra.mxu0 0.0
    %4593 = vmatpush.msra.mxu0 0.0
    %4594 = vmatpush.msra.mxu0 0.0
    %4595 = vmatpush.msra.mxu0 0.0
    %4596 = vmatpush.msra.mxu0 0.0
    %4597 = vmatpush.msra.mxu0 0.0
    %4598 = vmatpush.msra.mxu0 0.0
    %4599 = vmatpush.msra.mxu0 0.0
    %4600 = vmatpush.msra.mxu0 0.0
    %4601 = vmatpush.msra.mxu0 0.0
    %4602 = vmatpush.msra.mxu0 %v2602
    %4603 = vmatpush.msra.mxu0 %v2601
    %4604 = vmatpush.msra.mxu0 %v2600
    %4605 = vmatpush.msra.mxu0 %v2599
    %4606 = vmatmul.f32.gmra.mxu0 %v4548
    %v4607 = vpop.f32.mrf.mxu0
    %v4608 = vadd.f32 0.0, %v4607
    %4609 = vdwg.mxu0
    %4611 = vrot.lane.b32.xlu0 %v4608, 32
    %v4612 = vpop.permute.xlu0 %4611
    %v4614 = vadd.f32 %v2361, %v4612
    %v4615 = vxor.u32 %v4614, 2147483648
    %v4616 = vmul.f32 %v4615, 1.442695
    %v4617 = vpow.pop %v4616
    %v4618 = vadd.f32 %v4617, 1.0
    %v4619 = vrcp.pop %v4618
    %v4620 = vmul.f32 %v4618, %v4619
    %v4621 = vsub.f32 1.0, %v4620
    %v4622 = vmul.f32 %v4619, %v4621
    %v4623 = vadd.f32 %v4619, %v4622
    %vm4624 = vweird.f32 %v4618
    %vm4625 = vweird.f32 %v4619
    %vm4626 = vmor %vm4624, %vm4625
    %v4627 = vsel %vm4626, %v4619, %v4623
    %v4628 = vand.u32 2147483647, %v4618
    %vm4629 = vcmp.eq.f32.partialorder %v4628, 8.507059e+37
    %v4630 = vand.u32 %v4618, 2147483648
    %v4631 = vor.u32 1.1754944e-38, %v4630
    %v4632 = vsel %vm4629, %v4631, %v4627
    %v4633 = vmul.f32 1.0, %v4632
    %4634 = vmatpush.msra.mxu0 0.0
    %4635 = vmatpush.msra.mxu0 0.0
    %4636 = vmatpush.msra.mxu0 0.0
    %4637 = vmatpush.msra.mxu0 0.0
    %4638 = vmatpush.msra.mxu0 0.0
    %4639 = vmatpush.msra.mxu0 0.0
    %4640 = vmatpush.msra.mxu0 0.0
    %4641 = vmatpush.msra.mxu0 0.0
    %4642 = vmatpush.msra.mxu0 0.0
    %4643 = vmatpush.msra.mxu0 0.0
    %4644 = vmatpush.msra.mxu0 0.0
    %4645 = vmatpush.msra.mxu0 0.0
    %4646 = vmatpush.msra.mxu0 %v2606
    %4647 = vmatpush.msra.mxu0 %v2605
    %4648 = vmatpush.msra.mxu0 %v2604
    %4649 = vmatpush.msra.mxu0 %v2603
    %4650 = vmatmul.f32.gmra.mxu0 %v4548
    %v4651 = vpop.f32.mrf.mxu0
    %v4652 = vadd.f32 0.0, %v4651
    %4653 = vdwg.mxu0
    %4655 = vrot.lane.b32.xlu0 %v4652, 64
    %v4656 = vpop.permute.xlu0 %4655
    %v4658 = vadd.f32 %v2361, %v4656
    %v4659 = vtanh.pop %v4658
    %4660 = vmatpush.msra.mxu0 0.0
    %4661 = vmatpush.msra.mxu0 0.0
    %4662 = vmatpush.msra.mxu0 0.0
    %4663 = vmatpush.msra.mxu0 0.0
    %4664 = vmatpush.msra.mxu0 0.0
    %4665 = vmatpush.msra.mxu0 0.0
    %4666 = vmatpush.msra.mxu0 0.0
    %4667 = vmatpush.msra.mxu0 0.0
    %4668 = vmatpush.msra.mxu0 0.0
    %4669 = vmatpush.msra.mxu0 0.0
    %4670 = vmatpush.msra.mxu0 0.0
    %4671 = vmatpush.msra.mxu0 0.0
    %4672 = vmatpush.msra.mxu0 %v2610
    %4673 = vmatpush.msra.mxu0 %v2609
    %4674 = vmatpush.msra.mxu0 %v2608
    %4675 = vmatpush.msra.mxu0 %v2607
    %4676 = vmatmul.f32.gmra.mxu0 %v4548
    %v4677 = vpop.f32.mrf.mxu0
    %v4678 = vadd.f32 0.0, %v4677
    %4679 = vdwg.mxu0
    %4681 = vrot.lane.b32.xlu0 %v4678, 96
    %v4682 = vpop.permute.xlu0 %4681
    %v4684 = vadd.f32 %v2361, %v4682
    %v4685 = vxor.u32 %v4684, 2147483648
    %v4686 = vmul.f32 %v4685, 1.442695
    %v4687 = vpow.pop %v4686
    %v4688 = vadd.f32 %v4687, 1.0
    %v4689 = vrcp.pop %v4688
    %v4690 = vmul.f32 %v4688, %v4689
    %v4691 = vsub.f32 1.0, %v4690
    %v4692 = vmul.f32 %v4689, %v4691
    %v4693 = vadd.f32 %v4689, %v4692
    %vm4694 = vweird.f32 %v4688
    %vm4695 = vweird.f32 %v4689
    %vm4696 = vmor %vm4694, %vm4695
    %v4697 = vsel %vm4696, %v4689, %v4693
    %v4698 = vand.u32 2147483647, %v4688
    %vm4699 = vcmp.eq.f32.partialorder %v4698, 8.507059e+37
    %v4700 = vand.u32 %v4688, 2147483648
    %v4701 = vor.u32 1.1754944e-38, %v4700
    %v4702 = vsel %vm4699, %v4701, %v4697
    %v4703 = vmul.f32 1.0, %v4702
    %v4704 = vmul.f32 %v4633, %v4538
    %4706 = vrot.lane.b32.xlu0 %v4659, 64
    %v4707 = vpop.permute.xlu0 %4706
    %v4709 = vmul.f32 %v4589, %v4707
    %4711 = vrot.lane.b32.xlu0 %v4709, 32
    %v4712 = vpop.permute.xlu0 %4711
    %v4714 = vadd.f32 %v4704, %v4712
    %v4715 = vtanh.pop %v4714
    %4717 = vrot.lane.b32.xlu0 %v4715, 64
    %v4718 = vpop.permute.xlu0 %4717
    %v4720 = vmul.f32 %v4703, %v4718
    %4722 = vrot.lane.b32.xlu0 %v4720, 32
    %v4723 = vpop.permute.xlu0 %4722
    %v4724 = vsel %vm1661, %v4723, 0
    %4726 = vmatpush.msra.mxu0 0.0
    %4727 = vmatpush.msra.mxu0 0.0
    %4728 = vmatpush.msra.mxu0 0.0
    %4729 = vmatpush.msra.mxu0 0.0
    %4730 = vmatpush.msra.mxu0 0.0
    %4731 = vmatpush.msra.mxu0 0.0
    %4732 = vmatpush.msra.mxu0 0.0
    %4733 = vmatpush.msra.mxu0 0.0
    %4734 = vmatpush.msra.mxu0 0.0
    %4735 = vmatpush.msra.mxu0 0.0
    %4736 = vmatpush.msra.mxu0 0.0
    %4737 = vmatpush.msra.mxu0 0.0
    %4738 = vmatpush.msra.mxu0 %v2598
    %4739 = vmatpush.msra.mxu0 %v2597
    %4740 = vmatpush.msra.mxu0 %v2596
    %4741 = vmatpush.msra.mxu0 %v2595
    %4742 = vmatmul.f32.gmra.mxu0 %v4724
    %v4743 = vpop.f32.mrf.mxu0
    %v4744 = vadd.f32 0.0, %v4743
    %4745 = vdwg.mxu0
    %v4746 = vadd.f32 %v2437, %v4744
    %v4747 = vxor.u32 %v4746, 2147483648
    %v4748 = vmul.f32 %v4747, 1.442695
    %v4749 = vpow.pop %v4748
    %v4750 = vadd.f32 %v4749, 1.0
    %v4751 = vrcp.pop %v4750
    %v4752 = vmul.f32 %v4750, %v4751
    %v4753 = vsub.f32 1.0, %v4752
    %v4754 = vmul.f32 %v4751, %v4753
    %v4755 = vadd.f32 %v4751, %v4754
    %vm4756 = vweird.f32 %v4750
    %vm4757 = vweird.f32 %v4751
    %vm4758 = vmor %vm4756, %vm4757
    %v4759 = vsel %vm4758, %v4751, %v4755
    %v4760 = vand.u32 2147483647, %v4750
    %vm4761 = vcmp.eq.f32.partialorder %v4760, 8.507059e+37
    %v4762 = vand.u32 %v4750, 2147483648
    %v4763 = vor.u32 1.1754944e-38, %v4762
    %v4764 = vsel %vm4761, %v4763, %v4759
    %v4765 = vmul.f32 1.0, %v4764
    %4766 = vmatpush.msra.mxu0 0.0
    %4767 = vmatpush.msra.mxu0 0.0
    %4768 = vmatpush.msra.mxu0 0.0
    %4769 = vmatpush.msra.mxu0 0.0
    %4770 = vmatpush.msra.mxu0 0.0
    %4771 = vmatpush.msra.mxu0 0.0
    %4772 = vmatpush.msra.mxu0 0.0
    %4773 = vmatpush.msra.mxu0 0.0
    %4774 = vmatpush.msra.mxu0 0.0
    %4775 = vmatpush.msra.mxu0 0.0
    %4776 = vmatpush.msra.mxu0 0.0
    %4777 = vmatpush.msra.mxu0 0.0
    %4778 = vmatpush.msra.mxu0 %v2602
    %4779 = vmatpush.msra.mxu0 %v2601
    %4780 = vmatpush.msra.mxu0 %v2600
    %4781 = vmatpush.msra.mxu0 %v2599
    %4782 = vmatmul.f32.gmra.mxu0 %v4724
    %v4783 = vpop.f32.mrf.mxu0
    %v4784 = vadd.f32 0.0, %v4783
    %4785 = vdwg.mxu0
    %4787 = vrot.lane.b32.xlu0 %v4784, 32
    %v4788 = vpop.permute.xlu0 %4787
    %v4790 = vadd.f32 %v2437, %v4788
    %v4791 = vxor.u32 %v4790, 2147483648
    %v4792 = vmul.f32 %v4791, 1.442695
    %v4793 = vpow.pop %v4792
    %v4794 = vadd.f32 %v4793, 1.0
    %v4795 = vrcp.pop %v4794
    %v4796 = vmul.f32 %v4794, %v4795
    %v4797 = vsub.f32 1.0, %v4796
    %v4798 = vmul.f32 %v4795, %v4797
    %v4799 = vadd.f32 %v4795, %v4798
    %vm4800 = vweird.f32 %v4794
    %vm4801 = vweird.f32 %v4795
    %vm4802 = vmor %vm4800, %vm4801
    %v4803 = vsel %vm4802, %v4795, %v4799
    %v4804 = vand.u32 2147483647, %v4794
    %vm4805 = vcmp.eq.f32.partialorder %v4804, 8.507059e+37
    %v4806 = vand.u32 %v4794, 2147483648
    %v4807 = vor.u32 1.1754944e-38, %v4806
    %v4808 = vsel %vm4805, %v4807, %v4803
    %v4809 = vmul.f32 1.0, %v4808
    %4810 = vmatpush.msra.mxu0 0.0
    %4811 = vmatpush.msra.mxu0 0.0
    %4812 = vmatpush.msra.mxu0 0.0
    %4813 = vmatpush.msra.mxu0 0.0
    %4814 = vmatpush.msra.mxu0 0.0
    %4815 = vmatpush.msra.mxu0 0.0
    %4816 = vmatpush.msra.mxu0 0.0
    %4817 = vmatpush.msra.mxu0 0.0
    %4818 = vmatpush.msra.mxu0 0.0
    %4819 = vmatpush.msra.mxu0 0.0
    %4820 = vmatpush.msra.mxu0 0.0
    %4821 = vmatpush.msra.mxu0 0.0
    %4822 = vmatpush.msra.mxu0 %v2606
    %4823 = vmatpush.msra.mxu0 %v2605
    %4824 = vmatpush.msra.mxu0 %v2604
    %4825 = vmatpush.msra.mxu0 %v2603
    %4826 = vmatmul.f32.gmra.mxu0 %v4724
    %v4827 = vpop.f32.mrf.mxu0
    %v4828 = vadd.f32 0.0, %v4827
    %4829 = vdwg.mxu0
    %4831 = vrot.lane.b32.xlu0 %v4828, 64
    %v4832 = vpop.permute.xlu0 %4831
    %v4834 = vadd.f32 %v2437, %v4832
    %v4835 = vtanh.pop %v4834
    %4836 = vmatpush.msra.mxu0 0.0
    %4837 = vmatpush.msra.mxu0 0.0
    %4838 = vmatpush.msra.mxu0 0.0
    %4839 = vmatpush.msra.mxu0 0.0
    %4840 = vmatpush.msra.mxu0 0.0
    %4841 = vmatpush.msra.mxu0 0.0
    %4842 = vmatpush.msra.mxu0 0.0
    %4843 = vmatpush.msra.mxu0 0.0
    %4844 = vmatpush.msra.mxu0 0.0
    %4845 = vmatpush.msra.mxu0 0.0
    %4846 = vmatpush.msra.mxu0 0.0
    %4847 = vmatpush.msra.mxu0 0.0
    %4848 = vmatpush.msra.mxu0 %v2610
    %4849 = vmatpush.msra.mxu0 %v2609
    %4850 = vmatpush.msra.mxu0 %v2608
    %4851 = vmatpush.msra.mxu0 %v2607
    %4852 = vmatmul.f32.gmra.mxu0 %v4724
    %v4853 = vpop.f32.mrf.mxu0
    %v4854 = vadd.f32 0.0, %v4853
    %4855 = vdwg.mxu0
    %4857 = vrot.lane.b32.xlu0 %v4854, 96
    %v4858 = vpop.permute.xlu0 %4857
    %v4860 = vadd.f32 %v2437, %v4858
    %v4861 = vxor.u32 %v4860, 2147483648
    %v4862 = vmul.f32 %v4861, 1.442695
    %v4863 = vpow.pop %v4862
    %v4864 = vadd.f32 %v4863, 1.0
    %v4865 = vrcp.pop %v4864
    %v4866 = vmul.f32 %v4864, %v4865
    %v4867 = vsub.f32 1.0, %v4866
    %v4868 = vmul.f32 %v4865, %v4867
    %v4869 = vadd.f32 %v4865, %v4868
    %vm4870 = vweird.f32 %v4864
    %vm4871 = vweird.f32 %v4865
    %vm4872 = vmor %vm4870, %vm4871
    %v4873 = vsel %vm4872, %v4865, %v4869
    %v4874 = vand.u32 2147483647, %v4864
    %vm4875 = vcmp.eq.f32.partialorder %v4874, 8.507059e+37
    %v4876 = vand.u32 %v4864, 2147483648
    %v4877 = vor.u32 1.1754944e-38, %v4876
    %v4878 = vsel %vm4875, %v4877, %v4873
    %v4879 = vmul.f32 1.0, %v4878
    %v4880 = vmul.f32 %v4809, %v4714
    %4882 = vrot.lane.b32.xlu0 %v4835, 64
    %v4883 = vpop.permute.xlu0 %4882
    %v4885 = vmul.f32 %v4765, %v4883
    %4887 = vrot.lane.b32.xlu0 %v4885, 32
    %v4888 = vpop.permute.xlu0 %4887
    %v4890 = vadd.f32 %v4880, %v4888
    %v4891 = vtanh.pop %v4890
    %4893 = vrot.lane.b32.xlu0 %v4891, 64
    %v4894 = vpop.permute.xlu0 %4893
    %v4896 = vmul.f32 %v4879, %v4894
    %4898 = vrot.lane.b32.xlu0 %v4896, 32
    %v4899 = vpop.permute.xlu0 %4898
    %v4900 = vsel %vm1661, %v4899, 0
    %4902 = vmatpush.msra.mxu0 0.0
    %4903 = vmatpush.msra.mxu0 0.0
    %4904 = vmatpush.msra.mxu0 0.0
    %4905 = vmatpush.msra.mxu0 0.0
    %4906 = vmatpush.msra.mxu0 0.0
    %4907 = vmatpush.msra.mxu0 0.0
    %4908 = vmatpush.msra.mxu0 0.0
    %4909 = vmatpush.msra.mxu0 0.0
    %4910 = vmatpush.msra.mxu0 0.0
    %4911 = vmatpush.msra.mxu0 0.0
    %4912 = vmatpush.msra.mxu0 0.0
    %4913 = vmatpush.msra.mxu0 0.0
    %4914 = vmatpush.msra.mxu0 %v2598
    %4915 = vmatpush.msra.mxu0 %v2597
    %4916 = vmatpush.msra.mxu0 %v2596
    %4917 = vmatpush.msra.mxu0 %v2595
    %4918 = vmatmul.f32.gmra.mxu0 %v4900
    %v4919 = vpop.f32.mrf.mxu0
    %v4920 = vadd.f32 0.0, %v4919
    %4921 = vdwg.mxu0
    %v4922 = vadd.f32 %v2515, %v4920
    %v4923 = vxor.u32 %v4922, 2147483648
    %v4924 = vmul.f32 %v4923, 1.442695
    %v4925 = vpow.pop %v4924
    %v4926 = vadd.f32 %v4925, 1.0
    %v4927 = vrcp.pop %v4926
    %v4928 = vmul.f32 %v4926, %v4927
    %v4929 = vsub.f32 1.0, %v4928
    %v4930 = vmul.f32 %v4927, %v4929
    %v4931 = vadd.f32 %v4927, %v4930
    %vm4932 = vweird.f32 %v4926
    %vm4933 = vweird.f32 %v4927
    %vm4934 = vmor %vm4932, %vm4933
    %v4935 = vsel %vm4934, %v4927, %v4931
    %v4936 = vand.u32 2147483647, %v4926
    %vm4937 = vcmp.eq.f32.partialorder %v4936, 8.507059e+37
    %v4938 = vand.u32 %v4926, 2147483648
    %v4939 = vor.u32 1.1754944e-38, %v4938
    %v4940 = vsel %vm4937, %v4939, %v4935
    %v4941 = vmul.f32 1.0, %v4940
    %4942 = vmatpush.msra.mxu0 0.0
    %4943 = vmatpush.msra.mxu0 0.0
    %4944 = vmatpush.msra.mxu0 0.0
    %4945 = vmatpush.msra.mxu0 0.0
    %4946 = vmatpush.msra.mxu0 0.0
    %4947 = vmatpush.msra.mxu0 0.0
    %4948 = vmatpush.msra.mxu0 0.0
    %4949 = vmatpush.msra.mxu0 0.0
    %4950 = vmatpush.msra.mxu0 0.0
    %4951 = vmatpush.msra.mxu0 0.0
    %4952 = vmatpush.msra.mxu0 0.0
    %4953 = vmatpush.msra.mxu0 0.0
    %4954 = vmatpush.msra.mxu0 %v2602
    %4955 = vmatpush.msra.mxu0 %v2601
    %4956 = vmatpush.msra.mxu0 %v2600
    %4957 = vmatpush.msra.mxu0 %v2599
    %4958 = vmatmul.f32.gmra.mxu0 %v4900
    %v4959 = vpop.f32.mrf.mxu0
    %v4960 = vadd.f32 0.0, %v4959
    %4961 = vdwg.mxu0
    %4963 = vrot.lane.b32.xlu0 %v4960, 32
    %v4964 = vpop.permute.xlu0 %4963
    %v4966 = vadd.f32 %v2515, %v4964
    %v4967 = vxor.u32 %v4966, 2147483648
    %v4968 = vmul.f32 %v4967, 1.442695
    %v4969 = vpow.pop %v4968
    %v4970 = vadd.f32 %v4969, 1.0
    %v4971 = vrcp.pop %v4970
    %v4972 = vmul.f32 %v4970, %v4971
    %v4973 = vsub.f32 1.0, %v4972
    %v4974 = vmul.f32 %v4971, %v4973
    %v4975 = vadd.f32 %v4971, %v4974
    %vm4976 = vweird.f32 %v4970
    %vm4977 = vweird.f32 %v4971
    %vm4978 = vmor %vm4976, %vm4977
    %v4979 = vsel %vm4978, %v4971, %v4975
    %v4980 = vand.u32 2147483647, %v4970
    %vm4981 = vcmp.eq.f32.partialorder %v4980, 8.507059e+37
    %v4982 = vand.u32 %v4970, 2147483648
    %v4983 = vor.u32 1.1754944e-38, %v4982
    %v4984 = vsel %vm4981, %v4983, %v4979
    %v4985 = vmul.f32 1.0, %v4984
    %4986 = vmatpush.msra.mxu0 0.0
    %4987 = vmatpush.msra.mxu0 0.0
    %4988 = vmatpush.msra.mxu0 0.0
    %4989 = vmatpush.msra.mxu0 0.0
    %4990 = vmatpush.msra.mxu0 0.0
    %4991 = vmatpush.msra.mxu0 0.0
    %4992 = vmatpush.msra.mxu0 0.0
    %4993 = vmatpush.msra.mxu0 0.0
    %4994 = vmatpush.msra.mxu0 0.0
    %4995 = vmatpush.msra.mxu0 0.0
    %4996 = vmatpush.msra.mxu0 0.0
    %4997 = vmatpush.msra.mxu0 0.0
    %4998 = vmatpush.msra.mxu0 %v2606
    %4999 = vmatpush.msra.mxu0 %v2605
    %5000 = vmatpush.msra.mxu0 %v2604
    %5001 = vmatpush.msra.mxu0 %v2603
    %5002 = vmatmul.f32.gmra.mxu0 %v4900
    %v5003 = vpop.f32.mrf.mxu0
    %v5004 = vadd.f32 0.0, %v5003
    %5005 = vdwg.mxu0
    %5007 = vrot.lane.b32.xlu0 %v5004, 64
    %v5008 = vpop.permute.xlu0 %5007
    %v5010 = vadd.f32 %v2515, %v5008
    %v5011 = vtanh.pop %v5010
    %5012 = vmatpush.msra.mxu0 0.0
    %5013 = vmatpush.msra.mxu0 0.0
    %5014 = vmatpush.msra.mxu0 0.0
    %5015 = vmatpush.msra.mxu0 0.0
    %5016 = vmatpush.msra.mxu0 0.0
    %5017 = vmatpush.msra.mxu0 0.0
    %5018 = vmatpush.msra.mxu0 0.0
    %5019 = vmatpush.msra.mxu0 0.0
    %5020 = vmatpush.msra.mxu0 0.0
    %5021 = vmatpush.msra.mxu0 0.0
    %5022 = vmatpush.msra.mxu0 0.0
    %5023 = vmatpush.msra.mxu0 0.0
    %5024 = vmatpush.msra.mxu0 %v2610
    %5025 = vmatpush.msra.mxu0 %v2609
    %5026 = vmatpush.msra.mxu0 %v2608
    %5027 = vmatpush.msra.mxu0 %v2607
    %5028 = vmatmul.f32.gmra.mxu0 %v4900
    %v5029 = vpop.f32.mrf.mxu0
    %v5030 = vadd.f32 0.0, %v5029
    %5031 = vdwg.mxu0
    %5033 = vrot.lane.b32.xlu0 %v5030, 96
    %v5034 = vpop.permute.xlu0 %5033
    %v5036 = vadd.f32 %v2515, %v5034
    %v5037 = vxor.u32 %v5036, 2147483648
    %v5038 = vmul.f32 %v5037, 1.442695
    %v5039 = vpow.pop %v5038
    %v5040 = vadd.f32 %v5039, 1.0
    %v5041 = vrcp.pop %v5040
    %v5042 = vmul.f32 %v5040, %v5041
    %v5043 = vsub.f32 1.0, %v5042
    %v5044 = vmul.f32 %v5041, %v5043
    %v5045 = vadd.f32 %v5041, %v5044
    %vm5046 = vweird.f32 %v5040
    %vm5047 = vweird.f32 %v5041
    %vm5048 = vmor %vm5046, %vm5047
    %v5049 = vsel %vm5048, %v5041, %v5045
    %v5050 = vand.u32 2147483647, %v5040
    %vm5051 = vcmp.eq.f32.partialorder %v5050, 8.507059e+37
    %v5052 = vand.u32 %v5040, 2147483648
    %v5053 = vor.u32 1.1754944e-38, %v5052
    %v5054 = vsel %vm5051, %v5053, %v5049
    %v5055 = vmul.f32 1.0, %v5054
    %v5056 = vmul.f32 %v4985, %v4890
    %5058 = vrot.lane.b32.xlu0 %v5011, 64
    %v5059 = vpop.permute.xlu0 %5058
    %v5061 = vmul.f32 %v4941, %v5059
    %5063 = vrot.lane.b32.xlu0 %v5061, 32
    %v5064 = vpop.permute.xlu0 %5063
    %v5066 = vadd.f32 %v5056, %v5064
    %v5067 = vtanh.pop %v5066
    %5069 = vrot.lane.b32.xlu0 %v5067, 64
    %v5070 = vpop.permute.xlu0 %5069
    %v5072 = vmul.f32 %v5055, %v5070
    %5074 = vrot.lane.b32.xlu0 %v5072, 32
    %v5075 = vpop.permute.xlu0 %5074
    %v5076 = vsel %vm1661, %v5075, 0
    %5078 = vmatpush.msra.mxu0 0.0
    %5079 = vmatpush.msra.mxu0 0.0
    %5080 = vmatpush.msra.mxu0 0.0
    %5081 = vmatpush.msra.mxu0 0.0
    %5082 = vmatpush.msra.mxu0 0.0
    %5083 = vmatpush.msra.mxu0 0.0
    %5084 = vmatpush.msra.mxu0 0.0
    %5085 = vmatpush.msra.mxu0 0.0
    %5086 = vmatpush.msra.mxu0 0.0
    %5087 = vmatpush.msra.mxu0 0.0
    %5088 = vmatpush.msra.mxu0 0.0
    %5089 = vmatpush.msra.mxu0 0.0
    %5090 = vmatpush.msra.mxu0 %v2598
    %5091 = vmatpush.msra.mxu0 %v2597
    %5092 = vmatpush.msra.mxu0 %v2596
    %5093 = vmatpush.msra.mxu0 %v2595
    %5094 = vmatmul.f32.gmra.mxu0 %v5076
    %v5095 = vpop.f32.mrf.mxu0
    %v5096 = vadd.f32 0.0, %v5095
    %5097 = vdwg.mxu0
    %v5098 = vadd.f32 %v2593, %v5096
    %v5099 = vxor.u32 %v5098, 2147483648
    %v5100 = vmul.f32 %v5099, 1.442695
    %v5101 = vpow.pop %v5100
    %v5102 = vadd.f32 %v5101, 1.0
    %v5103 = vrcp.pop %v5102
    %v5104 = vmul.f32 %v5102, %v5103
    %v5105 = vsub.f32 1.0, %v5104
    %v5106 = vmul.f32 %v5103, %v5105
    %v5107 = vadd.f32 %v5103, %v5106
    %vm5108 = vweird.f32 %v5102
    %vm5109 = vweird.f32 %v5103
    %vm5110 = vmor %vm5108, %vm5109
    %v5111 = vsel %vm5110, %v5103, %v5107
    %v5112 = vand.u32 2147483647, %v5102
    %vm5113 = vcmp.eq.f32.partialorder %v5112, 8.507059e+37
    %v5114 = vand.u32 %v5102, 2147483648
    %v5115 = vor.u32 1.1754944e-38, %v5114
    %v5116 = vsel %vm5113, %v5115, %v5111
    %v5117 = vmul.f32 1.0, %v5116
    %5118 = vmatpush.msra.mxu0 0.0
    %5119 = vmatpush.msra.mxu0 0.0
    %5120 = vmatpush.msra.mxu0 0.0
    %5121 = vmatpush.msra.mxu0 0.0
    %5122 = vmatpush.msra.mxu0 0.0
    %5123 = vmatpush.msra.mxu0 0.0
    %5124 = vmatpush.msra.mxu0 0.0
    %5125 = vmatpush.msra.mxu0 0.0
    %5126 = vmatpush.msra.mxu0 0.0
    %5127 = vmatpush.msra.mxu0 0.0
    %5128 = vmatpush.msra.mxu0 0.0
    %5129 = vmatpush.msra.mxu0 0.0
    %5130 = vmatpush.msra.mxu0 %v2602
    %5131 = vmatpush.msra.mxu0 %v2601
    %5132 = vmatpush.msra.mxu0 %v2600
    %5133 = vmatpush.msra.mxu0 %v2599
    %5134 = vmatmul.f32.gmra.mxu0 %v5076
    %v5135 = vpop.f32.mrf.mxu0
    %v5136 = vadd.f32 0.0, %v5135
    %5137 = vdwg.mxu0
    %5139 = vrot.lane.b32.xlu0 %v5136, 32
    %v5140 = vpop.permute.xlu0 %5139
    %v5142 = vadd.f32 %v2593, %v5140
    %v5143 = vxor.u32 %v5142, 2147483648
    %v5144 = vmul.f32 %v5143, 1.442695
    %v5145 = vpow.pop %v5144
    %v5146 = vadd.f32 %v5145, 1.0
    %v5147 = vrcp.pop %v5146
    %v5148 = vmul.f32 %v5146, %v5147
    %v5149 = vsub.f32 1.0, %v5148
    %v5150 = vmul.f32 %v5147, %v5149
    %v5151 = vadd.f32 %v5147, %v5150
    %vm5152 = vweird.f32 %v5146
    %vm5153 = vweird.f32 %v5147
    %vm5154 = vmor %vm5152, %vm5153
    %v5155 = vsel %vm5154, %v5147, %v5151
    %v5156 = vand.u32 2147483647, %v5146
    %vm5157 = vcmp.eq.f32.partialorder %v5156, 8.507059e+37
    %v5158 = vand.u32 %v5146, 2147483648
    %v5159 = vor.u32 1.1754944e-38, %v5158
    %v5160 = vsel %vm5157, %v5159, %v5155
    %v5161 = vmul.f32 1.0, %v5160
    %5162 = vmatpush.msra.mxu0 0.0
    %5163 = vmatpush.msra.mxu0 0.0
    %5164 = vmatpush.msra.mxu0 0.0
    %5165 = vmatpush.msra.mxu0 0.0
    %5166 = vmatpush.msra.mxu0 0.0
    %5167 = vmatpush.msra.mxu0 0.0
    %5168 = vmatpush.msra.mxu0 0.0
    %5169 = vmatpush.msra.mxu0 0.0
    %5170 = vmatpush.msra.mxu0 0.0
    %5171 = vmatpush.msra.mxu0 0.0
    %5172 = vmatpush.msra.mxu0 0.0
    %5173 = vmatpush.msra.mxu0 0.0
    %5174 = vmatpush.msra.mxu0 %v2606
    %5175 = vmatpush.msra.mxu0 %v2605
    %5176 = vmatpush.msra.mxu0 %v2604
    %5177 = vmatpush.msra.mxu0 %v2603
    %5178 = vmatmul.f32.gmra.mxu0 %v5076
    %v5179 = vpop.f32.mrf.mxu0
    %v5180 = vadd.f32 0.0, %v5179
    %5181 = vdwg.mxu0
    %5183 = vrot.lane.b32.xlu0 %v5180, 64
    %v5184 = vpop.permute.xlu0 %5183
    %v5186 = vadd.f32 %v2593, %v5184
    %v5187 = vtanh.pop %v5186
    %5188 = vmatpush.msra.mxu0 0.0
    %5189 = vmatpush.msra.mxu0 0.0
    %5190 = vmatpush.msra.mxu0 0.0
    %5191 = vmatpush.msra.mxu0 0.0
    %5192 = vmatpush.msra.mxu0 0.0
    %5193 = vmatpush.msra.mxu0 0.0
    %5194 = vmatpush.msra.mxu0 0.0
    %5195 = vmatpush.msra.mxu0 0.0
    %5196 = vmatpush.msra.mxu0 0.0
    %5197 = vmatpush.msra.mxu0 0.0
    %5198 = vmatpush.msra.mxu0 0.0
    %5199 = vmatpush.msra.mxu0 0.0
    %5200 = vmatpush.msra.mxu0 %v2610
    %5201 = vmatpush.msra.mxu0 %v2609
    %5202 = vmatpush.msra.mxu0 %v2608
    %5203 = vmatpush.msra.mxu0 %v2607
    %5204 = vmatmul.f32.gmra.mxu0 %v5076
    %v5205 = vpop.f32.mrf.mxu0
    %v5206 = vadd.f32 0.0, %v5205
    %5207 = vdwg.mxu0
    %5209 = vrot.lane.b32.xlu0 %v5206, 96
    %v5210 = vpop.permute.xlu0 %5209
    %v5212 = vadd.f32 %v2593, %v5210
    %v5213 = vxor.u32 %v5212, 2147483648
    %v5214 = vmul.f32 %v5213, 1.442695
    %v5215 = vpow.pop %v5214
    %v5216 = vadd.f32 %v5215, 1.0
    %v5217 = vrcp.pop %v5216
    %v5218 = vmul.f32 %v5216, %v5217
    %v5219 = vsub.f32 1.0, %v5218
    %v5220 = vmul.f32 %v5217, %v5219
    %v5221 = vadd.f32 %v5217, %v5220
    %vm5222 = vweird.f32 %v5216
    %vm5223 = vweird.f32 %v5217
    %vm5224 = vmor %vm5222, %vm5223
    %v5225 = vsel %vm5224, %v5217, %v5221
    %v5226 = vand.u32 2147483647, %v5216
    %vm5227 = vcmp.eq.f32.partialorder %v5226, 8.507059e+37
    %v5228 = vand.u32 %v5216, 2147483648
    %v5229 = vor.u32 1.1754944e-38, %v5228
    %v5230 = vsel %vm5227, %v5229, %v5225
    %v5231 = vmul.f32 1.0, %v5230
    %v5232 = vmul.f32 %v5161, %v5066
    %5234 = vrot.lane.b32.xlu0 %v5187, 64
    %v5235 = vpop.permute.xlu0 %5234
    %v5237 = vmul.f32 %v5117, %v5235
    %5239 = vrot.lane.b32.xlu0 %v5237, 32
    %v5240 = vpop.permute.xlu0 %5239
    %v5242 = vadd.f32 %v5232, %v5240
    %v5243 = vtanh.pop %v5242
    %5245 = vrot.lane.b32.xlu0 %v5243, 64
    %v5246 = vpop.permute.xlu0 %5245
    %v5248 = vmul.f32 %v5231, %v5246
    %v5249 = vld [vmem:[#allocation17] sm:$0xff]
    %v5250 = vld [vmem:[#allocation17 + $0x8] sm:$0xff]
    %v5251 = vld [vmem:[#allocation17 + $0x10] sm:$0xff]
    %v5252 = vld [vmem:[#allocation17 + $0x18] sm:$0xff]
    %v5253 = vld [vmem:[#allocation19] sm:$0x1]
    %v5255 = vperm.slane %v5253, 0
    %5258 = vrot.lane.b32.xlu0 %v5248, 32
    %v5259 = vpop.permute.xlu0 %5258
    %v5260 = vsel %vm1661, %v5259, 0
    %5262 = vmatpush.msra.mxu0 0.0
    %5263 = vmatpush.msra.mxu0 0.0
    %5264 = vmatpush.msra.mxu0 0.0
    %5265 = vmatpush.msra.mxu0 0.0
    %5266 = vmatpush.msra.mxu0 0.0
    %5267 = vmatpush.msra.mxu0 0.0
    %5268 = vmatpush.msra.mxu0 0.0
    %5269 = vmatpush.msra.mxu0 0.0
    %5270 = vmatpush.msra.mxu0 0.0
    %5271 = vmatpush.msra.mxu0 0.0
    %5272 = vmatpush.msra.mxu0 0.0
    %5273 = vmatpush.msra.mxu0 0.0
    %5274 = vmatpush.msra.mxu0 %v5252
    %5275 = vmatpush.msra.mxu0 %v5251
    %5276 = vmatpush.msra.mxu0 %v5250
    %5277 = vmatpush.msra.mxu0 %v5249
    %5278 = vmatmul.f32.gmra.mxu0 %v5260
    %v5279 = vpop.f32.mrf.mxu0
    %v5280 = vadd.f32 %v5255, %v5279
    %5281 = vdwg.mxu0
    %v5282 = vmul.f32 %v5280, %v5280
    %vm5283 = vcmask 254976
    %v5284 = vsel %vm5283, %v5282, 0.0
    %5285 = vadd.xlane.f32.xlu0 %v5284
    %v5286 = vpop.xlane.xlu0 %5285
    %v5287 = vadd.f32 %v5286, 1e-12
    %v5288 = vrsqrt.pop %v5287
    %v5289 = vmul.f32 %v5288, %v5287
    %v5290 = vmul.f32 %v5289, %v5288
    %v5291 = vmul.f32 0.5, %v5290
    %v5292 = vsub.f32 1.5, %v5291
    %v5293 = vmul.f32 %v5288, %v5292
    %vm5294 = vweird.f32 %v5287
    %vm5295 = vweird.f32 %v5288
    %vm5296 = vmor %vm5294, %vm5295
    %v5297 = vsel %vm5296, %v5288, %v5293
    %v5298 = vmul.f32 %v5280, %v5297
    %v5299 = vld [vmem:[#allocation20] sm:$0x3]
    %v5300 = vsub.f32 %v5298, %v5299
    %v5301 = vmul.f32 %v5300, %v5300
    %v5302 = vsel %vm5283, %v5301, 0.0
    %5303 = vadd.xlane.f32.xlu0 %v5302
    %v5304 = vpop.xlane.xlu0 %5303
    %v5305 = vrot.slane %v5304, 4
    %v5306 = vadd.f32 %v5304, %v5305
    %v5307 = vrot.slane %v5306, 2
    %v5308 = vadd.f32 %v5306, %v5307
    %v5309 = vrot.slane %v5308, 1
    %v5310 = vadd.f32 %v5308, %v5309
    %s5311 = vtos %v5310
    %v5312 = vstv %s5311
    %v5313 = vmul.f32 %v5312, 0.015625
    %vm5314 = vcmask 0
    %5315 = vst.msk [vmem:[#allocation22] sm:$0x1] %vm5314, %v5313
    // Predicated region
    $region102: #{tpu_custom_call.1} parent=1 // pred_check
      _
    $region103: #{tpu_custom_call.1} parent=1 // pred_check_branch
      %5317 = sbr.rel (0) target = $region105
    $region104: #{tpu_custom_call.1} parent=1 // pred_region
      %5319 = vsyncadd [#allocation4], 0
      %s5321 = sshll.u32 [#allocation22], 4
      %s5322 = int_to_ptr.vmem [resolvable:$true] %s5321
      %s5323 = sshll.u32 %s13, 4
      %s5324 = int_to_ptr.hbm [resolvable:$true] %s5323
      %5326 = dma.vmem_to_hbm [thread:$0]  %s5322, 16, %s5324, [#allocation4]
    $region105: #{tpu_custom_call.1} parent=1 // pred_fallthru
      _
    // Predicated region
    $region106: #{tpu_custom_call.1} parent=1 // pred_check
      _
    $region107: #{tpu_custom_call.1} parent=1 // pred_check_branch
      %5328 = sbr.rel (0) target = $region109
    $region108: #{tpu_custom_call.1} parent=1 // pred_region
      %5330 = dma.done [#allocation4], 16
    $region109: #{tpu_custom_call.1} parent=1 // pred_fallthru
      _
    %5331 = vsyncpa [#allocation3], 1
    %5332 = vsyncpa [#allocation6], 1
    %5333 = vsyncpa [#allocation9], 1
    %5334 = vsyncpa [#allocation12], 1
    %5335 = vsyncpa [#allocation15], 1
    %5336 = vsyncpa [#allocation18], 1
    %5337 = vsyncpa [#allocation21], 1
    %5338 = vsyncpa [#allocation4], 1

</llo_original>
